<compile_context>
chip_gen: v5e
topology: v5e:2x2
jax: 0.10.0
libtpu: 0.0.40
codegen_flags: <defaults>
</compile_context>

<pallas_src>
import jax
import jax.numpy as jnp
from jax import lax
from jax.experimental import pallas as pl
from jax.experimental.pallas import tpu as pltpu


# --------------------------------------------------------------------------- #
# Kernel 1: conv1 block = conv(as matmul) + folded BN + LeakyReLU + SE + MaxPool(2,1)
# --------------------------------------------------------------------------- #

def _conv1_block_kernel(p_ref, w_ref, shift_ref, sw1_ref, sw2t_ref, o_ref):
    """One sample per grid step.

    p_ref:    (1, 480, 45) im2col patches; rows ordered (hp, h2, w) so the (2,1)
              max-pool partners sit exactly 240 rows apart (clean, aligned split).
    w_ref:    (45, 64)     conv weight with the eval-mode BN scale pre-folded in.
    shift:    (1, 64)      folded conv-bias / BN shift.
    sw1_ref:  (4, 64)      SE squeeze weight (PyTorch (Cr, C) layout).
    sw2t_ref: (4, 64)      SE excite weight, transposed to (Cr, C) (lane-dense).
    o_ref:    (1, 240, 64) pooled output, rows ordered (h2, w).
    """
    y = jnp.dot(p_ref[0], w_ref[...], preferred_element_type=jnp.float32)
    y = y + shift_ref[...]
    y = jnp.where(y > 0.0, y, 0.01 * y)                        # LeakyReLU(0.01)

    # SEBlock: squeeze (global mean) -> FC -> ReLU -> FC -> sigmoid, all VPU/XLU/EUP
    # (no M=1 MXU matmuls on the critical path).
    pooled = jnp.mean(y, axis=0, keepdims=True)                # (1, 64)
    h = jnp.sum(sw1_ref[...] * pooled, axis=1, keepdims=True)  # (4, 1)
    h = jnp.maximum(h, 0.0)
    z = jnp.sum(sw2t_ref[...] * h, axis=0, keepdims=True)      # (1, 64)
    s = pl.reciprocal(1.0 + jnp.exp(-z), approx=True)          # sigmoid, EUP reciprocal
    ye = y * s                                                 # channel excitation

    # Fused MaxPool2d((2,1)): partners are rows r and r+240 in this row order.
    o_ref[0] = jnp.maximum(ye[0:240, :], ye[240:480, :])


# --------------------------------------------------------------------------- #
# Kernel 2: conv2 block (in-kernel im2col) + SE + MaxPool(2,1) + fused Linear(15360, 2)
# --------------------------------------------------------------------------- #

def _conv2_block_fc_kernel(xf_ref, w_ref, shift_ref, sw1_ref, sw2t_ref,
                           maskw_ref, fcw_ref, fcb_ref, o_ref, ye_ref):
    """One sample per grid step; emits the final logits directly.

    xf_ref:   (1, 340, 64)  zero-padded sample with spatial dims flattened (20*17, C).
    w_ref:    (15, 64, 128) conv weight per (kh, kw) tap, BN scale pre-folded.
    shift:    (1, 128)
    sw1_ref:  (8, 128)      SE squeeze weight (Cr, C).
    sw2t_ref: (8, 128)      SE excite weight transposed to (Cr, C).
    maskw:    (270, 1)      1/240 at valid flat rows (padded-W columns are 0).
    fcw_ref:  (2, 253, 128) Linear(15360,2) weight reordered to the pooled flat layout,
                            zero at the rows that correspond to padded-W columns.
    fcb_ref:  (1, 2)
    o_ref:    (1, 1, 2)     logits for this sample.
    ye_ref:   (270, 128)    VMEM scratch (post-SE activations, flat spatial layout).
    """
    # In-kernel im2col: output flat row r = h*17 + w; tap (kh, kw) contributes the
    # contiguous slice xf[kh*17 + kw : kh*17 + kw + 270] -> no patch matrix in HBM.
    acc = jnp.zeros((270, 128), jnp.float32)
    for kh in range(5):
        for kw in range(3):
            off = kh * 17 + kw
            sl = xf_ref[0, off:off + 270, :]                   # (270, 64)
            acc = acc + jnp.dot(sl, w_ref[kh * 3 + kw],
                                preferred_element_type=jnp.float32)
    y = acc + shift_ref[...]
    y = jnp.where(y > 0.0, y, 0.01 * y)                        # LeakyReLU(0.01)

    # SE: mean over the 240 valid spatial positions (maskw folds the 1/240 and zeroes
    # the rows belonging to padded-W columns).
    pooled = jnp.sum(y * maskw_ref[...], axis=0, keepdims=True)    # (1, 128)
    h = jnp.sum(sw1_ref[...] * pooled, axis=1, keepdims=True)      # (8, 1)
    h = jnp.maximum(h, 0.0)
    z = jnp.sum(sw2t_ref[...] * h, axis=0, keepdims=True)          # (1, 128)
    s = pl.reciprocal(1.0 + jnp.exp(-z), approx=True)
    ye_ref[...] = y * s

    # Fused MaxPool2d((2,1)): partners are rows r and r+17 in the flat layout.
    # (Stage through the VMEM scratch so the off-by-17 slice is a plain ref load.)
    b = jnp.maximum(ye_ref[0:253, :], ye_ref[17:270, :])           # (253, 128)

    # Fused Linear(15360, 2): the weight is pre-reordered (zeros at invalid rows), so
    # the contraction is a VPU multiply + full reduction — no MXU, no HBM round trip.
    l0 = jnp.sum(jnp.sum(b * fcw_ref[0], axis=1, keepdims=True), axis=0, keepdims=True)
    l1 = jnp.sum(jnp.sum(b * fcw_ref[1], axis=1, keepdims=True), axis=0, keepdims=True)
    col = lax.broadcasted_iota(jnp.int32, (1, 2), 1)
    o_ref[0] = jnp.where(col == 0, l0, l1) + fcb_ref[...]


# --------------------------------------------------------------------------- #
# Wrappers (thin JAX glue feeding the Pallas kernels)
# --------------------------------------------------------------------------- #

def conv1_block(x_nhwc, p):
    """x_nhwc: (N, 32, 15, 3) -> pooled block output (N, 240, 64), rows in (h2, w) order."""
    N, H, W, C = x_nhwc.shape
    KH, KW = 5, 3
    K = KH * KW * C
    Cout, Cr = 64, 4

    xp = jnp.pad(x_nhwc, ((0, 0), (2, 2), (1, 1), (0, 0)))
    cols = [xp[:, i:i + H, j:j + W, :] for i in range(KH) for j in range(KW)]
    patches = jnp.stack(cols, axis=3).reshape(N, H, W, K)           # K order (kh, kw, cin)
    # Reorder rows to (hp, h2, w) so the in-kernel (2,1) max-pool is a clean half-split.
    patches = patches.reshape(N, H // 2, 2, W, K)
    patches = jnp.transpose(patches, (0, 2, 1, 3, 4)).reshape(N, H * W, K)

    return pl.pallas_call(
        _conv1_block_kernel,
        grid=(N,),
        out_shape=jax.ShapeDtypeStruct((N, (H // 2) * W, Cout), jnp.float32),
        in_specs=[
            pl.BlockSpec((1, H * W, K), lambda n: (n, 0, 0)),
            pl.BlockSpec((K, Cout), lambda n: (0, 0)),
            pl.BlockSpec((1, Cout), lambda n: (0, 0)),
            pl.BlockSpec((Cr, Cout), lambda n: (0, 0)),
            pl.BlockSpec((Cr, Cout), lambda n: (0, 0)),
        ],
        out_specs=pl.BlockSpec((1, (H // 2) * W, Cout), lambda n: (n, 0, 0)),
        compiler_params=pltpu.CompilerParams(dimension_semantics=("parallel",)),
    )(patches, p["w"], p["shift"], p["se_w1"], p["se_w2t"])


def conv2_block_fc(h1, p, fcw_flat, fcb):
    """h1: (N, 240, 64) pooled conv1 output -> logits (N, 2)."""
    N = h1.shape[0]
    H, W, C = 16, 15, 64
    Cout, Cr = 128, 8

    x = h1.reshape(N, H, W, C)
    xp = jnp.pad(x, ((0, 0), (2, 2), (1, 1), (0, 0)))               # (N, 20, 17, 64)
    xf = xp.reshape(N, 20 * 17, C)                                   # (N, 340, 64)

    # 1/240 at flat rows whose padded-W column is < 15, else 0 (constant-folded by XLA).
    maskw = (((jnp.arange(270) % 17) < 15).astype(jnp.float32) / 240.0).reshape(270, 1)

    logits = pl.pallas_call(
        _conv2_block_fc_kernel,
        grid=(N,),
        out_shape=jax.ShapeDtypeStruct((N, 1, 2), jnp.float32),
        in_specs=[
            pl.BlockSpec((1, 340, C), lambda n: (n, 0, 0)),
            pl.BlockSpec((15, C, Cout), lambda n: (0, 0, 0)),
            pl.BlockSpec((1, Cout), lambda n: (0, 0)),
            pl.BlockSpec((Cr, Cout), lambda n: (0, 0)),
            pl.BlockSpec((Cr, Cout), lambda n: (0, 0)),
            pl.BlockSpec((270, 1), lambda n: (0, 0)),
            pl.BlockSpec((2, 253, Cout), lambda n: (0, 0, 0)),
            pl.BlockSpec((1, 2), lambda n: (0, 0)),
        ],
        out_specs=pl.BlockSpec((1, 1, 2), lambda n: (n, 0, 0)),
        scratch_shapes=[pltpu.VMEM((270, Cout), jnp.float32)],
        compiler_params=pltpu.CompilerParams(dimension_semantics=("parallel",)),
    )(xf, p["w"], p["shift"], p["se_w1"], p["se_w2t"], maskw, fcw_flat, fcb)
    return logits.reshape(N, 2)


# --------------------------------------------------------------------------- #
# Parameter construction (deterministic, synthetic; eval-mode BN folded)
# --------------------------------------------------------------------------- #

class KeyGen:
    def __init__(self, key):
        self._key = key

    def __call__(self):
        self._key, sub = jax.random.split(self._key)
        return sub


def make_conv_se_block(kg, cin, cout, reduction=16):
    KH, KW = 5, 3
    w = 0.05 * jax.random.normal(kg(), (KH, KW, cin, cout), jnp.float32)
    bias = jnp.full((cout,), 0.01, jnp.float32)                  # init_weights: bias.fill_(0.01)
    gamma = 1.0 + 0.1 * jax.random.normal(kg(), (cout,), jnp.float32)
    beta = 0.1 * jax.random.normal(kg(), (cout,), jnp.float32)
    mean = 0.1 * jax.random.normal(kg(), (cout,), jnp.float32)
    var = 1.0 + 0.1 * jnp.abs(jax.random.normal(kg(), (cout,), jnp.float32))
    # Fold eval-mode BatchNorm (eps=1e-5) + conv bias: scale into the weights, shift added
    # inside the kernel. (Real PyTorch Conv2d weights (Cout,Cin,KH,KW) / Linear (out,in)
    # would need permuting/transposing into these layouts before folding.)
    scale = gamma / jnp.sqrt(var + 1e-5)
    w_folded = w * scale                                         # (KH, KW, cin, cout)
    shift = (beta + (bias - mean) * scale).reshape(1, cout)
    cr = max(cout // reduction, 1)
    se_w1 = 0.1 * jax.random.normal(kg(), (cr, cout), jnp.float32)   # Linear(C, Cr, bias=False)
    se_w2 = 0.1 * jax.random.normal(kg(), (cout, cr), jnp.float32)   # Linear(Cr, C, bias=False)
    return {"w": w_folded, "shift": shift, "se_w1": se_w1,
            "se_w2t": jnp.transpose(se_w2)}                      # (Cr, C), lane-dense


def _reorder_fc_weight(w_fc, c=128, h2=8, w=15, wp=17):
    """PyTorch fc weight (2, c*h2*w), NCHW-flatten order (c, h2, w) -> (2, 253, c)
    matching the fused kernel's pooled flat layout (row = 34*h2 + w), zero elsewhere."""
    wr = w_fc.reshape(2, c, h2, w)
    wt = jnp.transpose(wr, (0, 2, 3, 1))                         # (2, h2, w, c)
    tmp = jnp.zeros((2, h2, 2 * wp, c), jnp.float32).at[:, :, :w, :].set(wt)
    return tmp.reshape(2, h2 * 2 * wp, c)[:, :(h2 - 1) * 2 * wp + w, :]   # (2, 253, c)


def make_params(key, stt_chnl=3, num_classes=2):
    kg = KeyGen(key)
    c1 = make_conv_se_block(kg, stt_chnl, 64)
    c1["w"] = c1["w"].reshape(5 * 3 * stt_chnl, 64)              # (45, 64)
    c2 = make_conv_se_block(kg, 64, 128)
    c2["w"] = c2["w"].reshape(5 * 3, 64, 128)                    # (15, 64, 128)
    fc_w = 0.02 * jax.random.normal(kg(), (num_classes, 128 * 8 * 15), jnp.float32)
    fc_b = jnp.full((num_classes,), 0.01, jnp.float32)
    return {
        "conv1": c1,
        "conv2": c2,
        "fc_w_flat": _reorder_fc_weight(fc_w),                   # (2, 253, 128)
        "fc_b": fc_b.reshape(1, num_classes),
    }


# --------------------------------------------------------------------------- #
# Full forward
# --------------------------------------------------------------------------- #

def senet_cnn_5day_forward(params, x_nchw):
    # Accepts NCHW like the PyTorch module; channels-last internally (lanes = channels).
    x = jnp.transpose(x_nchw, (0, 2, 3, 1)).astype(jnp.float32)  # (N, 32, 15, 3)
    h1 = conv1_block(x, params["conv1"])                         # (N, 240, 64) pooled
    # TODO(synk): nn.Dropout is identity in inference; training-mode masking not implemented.
    return conv2_block_fc(h1, params["conv2"],
                          params["fc_w_flat"], params["fc_b"])   # (N, 2) logits


# --------------------------------------------------------------------------- #

if __name__ == "__main__":
    key = jax.random.PRNGKey(0)
    pkey, xkey = jax.random.split(key)

    # Input consistent with fc = Linear(15360, 2): 128 * (32/4) * 15 = 15360
    # -> (N=2, C=3, H=32, W=15), the standard 5-day chart-image shape.
    params = make_params(pkey, stt_chnl=3, num_classes=2)
    x = jax.random.normal(xkey, (2, 3, 32, 15), jnp.float32)

    logits = jax.jit(senet_cnn_5day_forward)(params, x)
    logits = jax.block_until_ready(logits)

    assert logits.shape == (2, 2), logits.shape
    assert bool(jnp.all(jnp.isfinite(logits)))
    print("KERNEL_OK")
</pallas_src>

<mosaic_0001>
module attributes {stable_mosaic.version = 11 : i64} {
  func.func @_conv1_block_kernel(%arg0: i32, %arg1: memref<1x480x45xf32, #tpu.memory_space<vmem>>, %arg2: memref<45x64xf32, #tpu.memory_space<vmem>>, %arg3: memref<1x64xf32, #tpu.memory_space<vmem>>, %arg4: memref<4x64xf32, #tpu.memory_space<vmem>>, %arg5: memref<4x64xf32, #tpu.memory_space<vmem>>, %arg6: memref<1x240x64xf32, #tpu.memory_space<vmem>>) attributes {dimension_semantics = [#tpu.dimension_semantics<parallel>], iteration_bounds = array<i64: 2>, scalar_prefetch = 0 : i64, scratch_operands = 0 : i64, tpu.core_type = #tpu.core_type<tc>, window_params = [{transform_indices = @transform_0, window_bounds = array<i64: 1, 480, 45>}, {pipeline_mode = #tpu.pipeline_mode<synchronous>, transform_indices = @transform_1, window_bounds = array<i64: 45, 64>}, {pipeline_mode = #tpu.pipeline_mode<synchronous>, transform_indices = @transform_2, window_bounds = array<i64: 1, 64>}, {pipeline_mode = #tpu.pipeline_mode<synchronous>, transform_indices = @transform_3, window_bounds = array<i64: 4, 64>}, {pipeline_mode = #tpu.pipeline_mode<synchronous>, transform_indices = @transform_4, window_bounds = array<i64: 4, 64>}, {transform_indices = @transform_5, window_bounds = array<i64: 1, 240, 64>}]} {
    %c0 = arith.constant 0 : index
    %c0_0 = arith.constant 0 : index
    %c0_1 = arith.constant 0 : index
    %0 = vector.load %arg1[%c0, %c0_0, %c0_1] : memref<1x480x45xf32, #tpu.memory_space<vmem>>, vector<1x480x45xf32>
    %1 = vector.shape_cast %0 : vector<1x480x45xf32> to vector<480x45xf32>
    %c0_2 = arith.constant 0 : index
    %c0_3 = arith.constant 0 : index
    %2 = vector.load %arg2[%c0_2, %c0_3] : memref<45x64xf32, #tpu.memory_space<vmem>>, vector<45x64xf32>
    %cst = arith.constant dense<0.000000e+00> : vector<480x64xf32>
    %3 = tpu.matmul %1, %2, %cst {dimension_numbers = #tpu.dot_dimension_numbers<[1], [0], [0], [1], [0, 0, 1, 1], [], []>} : vector<480x45xf32>, vector<45x64xf32>, vector<480x64xf32> -> vector<480x64xf32>
    %c0_4 = arith.constant 0 : index
    %c0_5 = arith.constant 0 : index
    %4 = vector.load %arg3[%c0_4, %c0_5] : memref<1x64xf32, #tpu.memory_space<vmem>>, vector<1x64xf32>
    %5 = vector.broadcast %4 : vector<1x64xf32> to vector<480x64xf32>
    %6 = arith.addf %3, %5 : vector<480x64xf32>
    %cst_6 = arith.constant 0.000000e+00 : f32
    %7 = vector.broadcast %cst_6 : f32 to vector<480x64xf32>
    %8 = arith.cmpf ogt, %6, %7 : vector<480x64xf32>
    %cst_7 = arith.constant 0.00999999977 : f32
    %9 = vector.broadcast %cst_7 : f32 to vector<480x64xf32>
    %10 = arith.mulf %9, %6 : vector<480x64xf32>
    %11 = arith.select %8, %6, %10 : vector<480x64xi1>, vector<480x64xf32>
    %cst_8 = arith.constant dense<0.000000e+00> : vector<64xf32>
    %12 = vector.multi_reduction <add>, %11, %cst_8 [0] : vector<480x64xf32> to vector<64xf32>
    %13 = vector.shape_cast %12 : vector<64xf32> to vector<1x64xf32>
    %cst_9 = arith.constant 4.800000e+02 : f32
    %14 = vector.broadcast %cst_9 : f32 to vector<1x64xf32>
    %15 = arith.divf %13, %14 : vector<1x64xf32>
    %c0_10 = arith.constant 0 : index
    %c0_11 = arith.constant 0 : index
    %16 = vector.load %arg4[%c0_10, %c0_11] : memref<4x64xf32, #tpu.memory_space<vmem>>, vector<4x64xf32>
    %17 = vector.broadcast %15 : vector<1x64xf32> to vector<4x64xf32>
    %18 = arith.mulf %16, %17 : vector<4x64xf32>
    %cst_12 = arith.constant dense<0.000000e+00> : vector<4xf32>
    %19 = vector.multi_reduction <add>, %18, %cst_12 [1] : vector<4x64xf32> to vector<4xf32>
    %20 = vector.shape_cast %19 : vector<4xf32> to vector<4x1xf32>
    %cst_13 = arith.constant 0.000000e+00 : f32
    %21 = vector.broadcast %cst_13 : f32 to vector<4x1xf32>
    %22 = arith.maximumf %20, %21 : vector<4x1xf32>
    %c0_14 = arith.constant 0 : index
    %c0_15 = arith.constant 0 : index
    %23 = vector.load %arg5[%c0_14, %c0_15] : memref<4x64xf32, #tpu.memory_space<vmem>>, vector<4x64xf32>
    %24 = vector.broadcast %22 : vector<4x1xf32> to vector<4x64xf32>
    %25 = arith.mulf %23, %24 : vector<4x64xf32>
    %cst_16 = arith.constant dense<0.000000e+00> : vector<64xf32>
    %26 = vector.multi_reduction <add>, %25, %cst_16 [0] : vector<4x64xf32> to vector<64xf32>
    %27 = vector.shape_cast %26 : vector<64xf32> to vector<1x64xf32>
    %cst_17 = arith.constant 0.000000e+00 : f32
    %28 = vector.broadcast %cst_17 : f32 to vector<1x64xf32>
    %29 = arith.subf %28, %27 : vector<1x64xf32>
    %30 = math.exp %29 : vector<1x64xf32>
    %cst_18 = arith.constant 1.000000e+00 : f32
    %31 = vector.broadcast %cst_18 : f32 to vector<1x64xf32>
    %32 = arith.addf %31, %30 : vector<1x64xf32>
    %33 = tpu.reciprocal %32 {approx = true} : vector<1x64xf32> -> vector<1x64xf32>
    %34 = vector.broadcast %33 : vector<1x64xf32> to vector<480x64xf32>
    %35 = arith.mulf %11, %34 : vector<480x64xf32>
    %36 = vector.extract_strided_slice %35 {offsets = [0, 0], sizes = [240, 64], strides = [1, 1]} : vector<480x64xf32> to vector<240x64xf32>
    %37 = vector.extract_strided_slice %35 {offsets = [240, 0], sizes = [240, 64], strides = [1, 1]} : vector<480x64xf32> to vector<240x64xf32>
    %38 = arith.maximumf %36, %37 : vector<240x64xf32>
    %c0_19 = arith.constant 0 : index
    %c0_20 = arith.constant 0 : index
    %c0_21 = arith.constant 0 : index
    %39 = vector.load %arg6[%c0_19, %c0_20, %c0_21] : memref<1x240x64xf32, #tpu.memory_space<vmem>>, vector<1x240x64xf32>
    %40 = vector.shape_cast %39 : vector<1x240x64xf32> to vector<240x64xf32>
    %41 = vector.shape_cast %38 : vector<240x64xf32> to vector<1x240x64xf32>
    tpu.vector_store %arg6[%c0_19, %c0_20, %c0_21], %41 {strides = array<i32>} : memref<1x240x64xf32, #tpu.memory_space<vmem>>, vector<1x240x64xf32>,
    return
  }
  func.func @transform_0(%arg0: i32) -> (i32, i32, i32) {
    %c0_i32 = arith.constant 0 : i32
    %c0_i32_0 = arith.constant 0 : i32
    %c0_i32_1 = arith.constant 0 : i32
    return %arg0, %c0_i32, %c0_i32_0 : i32, i32, i32
  }
  func.func @transform_1(%arg0: i32) -> (i32, i32) {
    %c0_i32 = arith.constant 0 : i32
    %c0_i32_0 = arith.constant 0 : i32
    %c0_i32_1 = arith.constant 0 : i32
    return %c0_i32, %c0_i32_0 : i32, i32
  }
  func.func @transform_2(%arg0: i32) -> (i32, i32) {
    %c0_i32 = arith.constant 0 : i32
    %c0_i32_0 = arith.constant 0 : i32
    %c0_i32_1 = arith.constant 0 : i32
    return %c0_i32, %c0_i32_0 : i32, i32
  }
  func.func @transform_3(%arg0: i32) -> (i32, i32) {
    %c0_i32 = arith.constant 0 : i32
    %c0_i32_0 = arith.constant 0 : i32
    %c0_i32_1 = arith.constant 0 : i32
    return %c0_i32, %c0_i32_0 : i32, i32
  }
  func.func @transform_4(%arg0: i32) -> (i32, i32) {
    %c0_i32 = arith.constant 0 : i32
    %c0_i32_0 = arith.constant 0 : i32
    %c0_i32_1 = arith.constant 0 : i32
    return %c0_i32, %c0_i32_0 : i32, i32
  }
  func.func @transform_5(%arg0: i32) -> (i32, i32, i32) {
    %c0_i32 = arith.constant 0 : i32
    %c0_i32_0 = arith.constant 0 : i32
    %c0_i32_1 = arith.constant 0 : i32
    return %arg0, %c0_i32, %c0_i32_0 : i32, i32, i32
  }
}

module attributes {stable_mosaic.version = 11 : i64} {
  func.func @_conv2_block_fc_kernel(%arg0: i32, %arg1: memref<1x340x64xf32, #tpu.memory_space<vmem>>, %arg2: memref<15x64x128xf32, #tpu.memory_space<vmem>>, %arg3: memref<1x128xf32, #tpu.memory_space<vmem>>, %arg4: memref<8x128xf32, #tpu.memory_space<vmem>>, %arg5: memref<8x128xf32, #tpu.memory_space<vmem>>, %arg6: memref<270x1xf32, #tpu.memory_space<vmem>>, %arg7: memref<2x253x128xf32, #tpu.memory_space<vmem>>, %arg8: memref<1x2xf32, #tpu.memory_space<vmem>>, %arg9: memref<1x1x2xf32, #tpu.memory_space<vmem>>, %arg10: memref<270x128xf32, #tpu.memory_space<vmem>>) attributes {dimension_semantics = [#tpu.dimension_semantics<parallel>], iteration_bounds = array<i64: 2>, scalar_prefetch = 0 : i64, scratch_operands = 1 : i64, tpu.core_type = #tpu.core_type<tc>, window_params = [{transform_indices = @transform_0, window_bounds = array<i64: 1, 340, 64>}, {pipeline_mode = #tpu.pipeline_mode<synchronous>, transform_indices = @transform_1, window_bounds = array<i64: 15, 64, 128>}, {pipeline_mode = #tpu.pipeline_mode<synchronous>, transform_indices = @transform_2, window_bounds = array<i64: 1, 128>}, {pipeline_mode = #tpu.pipeline_mode<synchronous>, transform_indices = @transform_3, window_bounds = array<i64: 8, 128>}, {pipeline_mode = #tpu.pipeline_mode<synchronous>, transform_indices = @transform_4, window_bounds = array<i64: 8, 128>}, {pipeline_mode = #tpu.pipeline_mode<synchronous>, transform_indices = @transform_5, window_bounds = array<i64: 270, 1>}, {pipeline_mode = #tpu.pipeline_mode<synchronous>, transform_indices = @transform_6, window_bounds = array<i64: 2, 253, 128>}, {pipeline_mode = #tpu.pipeline_mode<synchronous>, transform_indices = @transform_7, window_bounds = array<i64: 1, 2>}, {transform_indices = @transform_8, window_bounds = array<i64: 1, 1, 2>}]} {
    %cst = arith.constant 0.000000e+00 : f32
    %0 = vector.broadcast %cst : f32 to vector<270x128xf32>
    %c0 = arith.constant 0 : index
    %c0_0 = arith.constant 0 : index
    %c0_1 = arith.constant 0 : index
    %1 = vector.load %arg1[%c0, %c0_0, %c0_1] : memref<1x340x64xf32, #tpu.memory_space<vmem>>, vector<1x270x64xf32>
    %2 = vector.shape_cast %1 : vector<1x270x64xf32> to vector<270x64xf32>
    %c0_2 = arith.constant 0 : index
    %c0_3 = arith.constant 0 : index
    %c0_4 = arith.constant 0 : index
    %3 = vector.load %arg2[%c0_2, %c0_3, %c0_4] : memref<15x64x128xf32, #tpu.memory_space<vmem>>, vector<1x64x128xf32>
    %4 = vector.shape_cast %3 : vector<1x64x128xf32> to vector<64x128xf32>
    %cst_5 = arith.constant dense<0.000000e+00> : vector<270x128xf32>
    %5 = tpu.matmul %2, %4, %cst_5 {dimension_numbers = #tpu.dot_dimension_numbers<[1], [0], [0], [1], [0, 0, 1, 1], [], []>} : vector<270x64xf32>, vector<64x128xf32>, vector<270x128xf32> -> vector<270x128xf32>
    %6 = arith.addf %0, %5 : vector<270x128xf32>
    %c0_6 = arith.constant 0 : index
    %c1 = arith.constant 1 : index
    %c0_7 = arith.constant 0 : index
    %7 = vector.load %arg1[%c0_6, %c1, %c0_7] : memref<1x340x64xf32, #tpu.memory_space<vmem>>, vector<1x270x64xf32>
    %8 = vector.shape_cast %7 : vector<1x270x64xf32> to vector<270x64xf32>
    %c1_8 = arith.constant 1 : index
    %c0_9 = arith.constant 0 : index
    %c0_10 = arith.constant 0 : index
    %9 = vector.load %arg2[%c1_8, %c0_9, %c0_10] : memref<15x64x128xf32, #tpu.memory_space<vmem>>, vector<1x64x128xf32>
    %10 = vector.shape_cast %9 : vector<1x64x128xf32> to vector<64x128xf32>
    %cst_11 = arith.constant dense<0.000000e+00> : vector<270x128xf32>
    %11 = tpu.matmul %8, %10, %cst_11 {dimension_numbers = #tpu.dot_dimension_numbers<[1], [0], [0], [1], [0, 0, 1, 1], [], []>} : vector<270x64xf32>, vector<64x128xf32>, vector<270x128xf32> -> vector<270x128xf32>
    %12 = arith.addf %6, %11 : vector<270x128xf32>
    %c0_12 = arith.constant 0 : index
    %c2 = arith.constant 2 : index
    %c0_13 = arith.constant 0 : index
    %13 = vector.load %arg1[%c0_12, %c2, %c0_13] : memref<1x340x64xf32, #tpu.memory_space<vmem>>, vector<1x270x64xf32>
    %14 = vector.shape_cast %13 : vector<1x270x64xf32> to vector<270x64xf32>
    %c2_14 = arith.constant 2 : index
    %c0_15 = arith.constant 0 : index
    %c0_16 = arith.constant 0 : index
    %15 = vector.load %arg2[%c2_14, %c0_15, %c0_16] : memref<15x64x128xf32, #tpu.memory_space<vmem>>, vector<1x64x128xf32>
    %16 = vector.shape_cast %15 : vector<1x64x128xf32> to vector<64x128xf32>
    %cst_17 = arith.constant dense<0.000000e+00> : vector<270x128xf32>
    %17 = tpu.matmul %14, %16, %cst_17 {dimension_numbers = #tpu.dot_dimension_numbers<[1], [0], [0], [1], [0, 0, 1, 1], [], []>} : vector<270x64xf32>, vector<64x128xf32>, vector<270x128xf32> -> vector<270x128xf32>
    %18 = arith.addf %12, %17 : vector<270x128xf32>
    %c0_18 = arith.constant 0 : index
    %c17 = arith.constant 17 : index
    %c0_19 = arith.constant 0 : index
    %19 = vector.load %arg1[%c0_18, %c17, %c0_19] : memref<1x340x64xf32, #tpu.memory_space<vmem>>, vector<1x270x64xf32>
    %20 = vector.shape_cast %19 : vector<1x270x64xf32> to vector<270x64xf32>
    %c3 = arith.constant 3 : index
    %c0_20 = arith.constant 0 : index
    %c0_21 = arith.constant 0 : index
    %21 = vector.load %arg2[%c3, %c0_20, %c0_21] : memref<15x64x128xf32, #tpu.memory_space<vmem>>, vector<1x64x128xf32>
    %22 = vector.shape_cast %21 : vector<1x64x128xf32> to vector<64x128xf32>
    %cst_22 = arith.constant dense<0.000000e+00> : vector<270x128xf32>
    %23 = tpu.matmul %20, %22, %cst_22 {dimension_numbers = #tpu.dot_dimension_numbers<[1], [0], [0], [1], [0, 0, 1, 1], [], []>} : vector<270x64xf32>, vector<64x128xf32>, vector<270x128xf32> -> vector<270x128xf32>
    %24 = arith.addf %18, %23 : vector<270x128xf32>
    %c0_23 = arith.constant 0 : index
    %c18 = arith.constant 18 : index
    %c0_24 = arith.constant 0 : index
    %25 = vector.load %arg1[%c0_23, %c18, %c0_24] : memref<1x340x64xf32, #tpu.memory_space<vmem>>, vector<1x270x64xf32>
    %26 = vector.shape_cast %25 : vector<1x270x64xf32> to vector<270x64xf32>
    %c4 = arith.constant 4 : index
    %c0_25 = arith.constant 0 : index
    %c0_26 = arith.constant 0 : index
    %27 = vector.load %arg2[%c4, %c0_25, %c0_26] : memref<15x64x128xf32, #tpu.memory_space<vmem>>, vector<1x64x128xf32>
    %28 = vector.shape_cast %27 : vector<1x64x128xf32> to vector<64x128xf32>
    %cst_27 = arith.constant dense<0.000000e+00> : vector<270x128xf32>
    %29 = tpu.matmul %26, %28, %cst_27 {dimension_numbers = #tpu.dot_dimension_numbers<[1], [0], [0], [1], [0, 0, 1, 1], [], []>} : vector<270x64xf32>, vector<64x128xf32>, vector<270x128xf32> -> vector<270x128xf32>
    %30 = arith.addf %24, %29 : vector<270x128xf32>
    %c0_28 = arith.constant 0 : index
    %c19 = arith.constant 19 : index
    %c0_29 = arith.constant 0 : index
    %31 = vector.load %arg1[%c0_28, %c19, %c0_29] : memref<1x340x64xf32, #tpu.memory_space<vmem>>, vector<1x270x64xf32>
    %32 = vector.shape_cast %31 : vector<1x270x64xf32> to vector<270x64xf32>
    %c5 = arith.constant 5 : index
    %c0_30 = arith.constant 0 : index
    %c0_31 = arith.constant 0 : index
    %33 = vector.load %arg2[%c5, %c0_30, %c0_31] : memref<15x64x128xf32, #tpu.memory_space<vmem>>, vector<1x64x128xf32>
    %34 = vector.shape_cast %33 : vector<1x64x128xf32> to vector<64x128xf32>
    %cst_32 = arith.constant dense<0.000000e+00> : vector<270x128xf32>
    %35 = tpu.matmul %32, %34, %cst_32 {dimension_numbers = #tpu.dot_dimension_numbers<[1], [0], [0], [1], [0, 0, 1, 1], [], []>} : vector<270x64xf32>, vector<64x128xf32>, vector<270x128xf32> -> vector<270x128xf32>
    %36 = arith.addf %30, %35 : vector<270x128xf32>
    %c0_33 = arith.constant 0 : index
    %c34 = arith.constant 34 : index
    %c0_34 = arith.constant 0 : index
    %37 = vector.load %arg1[%c0_33, %c34, %c0_34] : memref<1x340x64xf32, #tpu.memory_space<vmem>>, vector<1x270x64xf32>
    %38 = vector.shape_cast %37 : vector<1x270x64xf32> to vector<270x64xf32>
    %c6 = arith.constant 6 : index
    %c0_35 = arith.constant 0 : index
    %c0_36 = arith.constant 0 : index
    %39 = vector.load %arg2[%c6, %c0_35, %c0_36] : memref<15x64x128xf32, #tpu.memory_space<vmem>>, vector<1x64x128xf32>
    %40 = vector.shape_cast %39 : vector<1x64x128xf32> to vector<64x128xf32>
    %cst_37 = arith.constant dense<0.000000e+00> : vector<270x128xf32>
    %41 = tpu.matmul %38, %40, %cst_37 {dimension_numbers = #tpu.dot_dimension_numbers<[1], [0], [0], [1], [0, 0, 1, 1], [], []>} : vector<270x64xf32>, vector<64x128xf32>, vector<270x128xf32> -> vector<270x128xf32>
    %42 = arith.addf %36, %41 : vector<270x128xf32>
    %c0_38 = arith.constant 0 : index
    %c35 = arith.constant 35 : index
    %c0_39 = arith.constant 0 : index
    %43 = vector.load %arg1[%c0_38, %c35, %c0_39] : memref<1x340x64xf32, #tpu.memory_space<vmem>>, vector<1x270x64xf32>
    %44 = vector.shape_cast %43 : vector<1x270x64xf32> to vector<270x64xf32>
    %c7 = arith.constant 7 : index
    %c0_40 = arith.constant 0 : index
    %c0_41 = arith.constant 0 : index
    %45 = vector.load %arg2[%c7, %c0_40, %c0_41] : memref<15x64x128xf32, #tpu.memory_space<vmem>>, vector<1x64x128xf32>
    %46 = vector.shape_cast %45 : vector<1x64x128xf32> to vector<64x128xf32>
    %cst_42 = arith.constant dense<0.000000e+00> : vector<270x128xf32>
    %47 = tpu.matmul %44, %46, %cst_42 {dimension_numbers = #tpu.dot_dimension_numbers<[1], [0], [0], [1], [0, 0, 1, 1], [], []>} : vector<270x64xf32>, vector<64x128xf32>, vector<270x128xf32> -> vector<270x128xf32>
    %48 = arith.addf %42, %47 : vector<270x128xf32>
    %c0_43 = arith.constant 0 : index
    %c36 = arith.constant 36 : index
    %c0_44 = arith.constant 0 : index
    %49 = vector.load %arg1[%c0_43, %c36, %c0_44] : memref<1x340x64xf32, #tpu.memory_space<vmem>>, vector<1x270x64xf32>
    %50 = vector.shape_cast %49 : vector<1x270x64xf32> to vector<270x64xf32>
    %c8 = arith.constant 8 : index
    %c0_45 = arith.constant 0 : index
    %c0_46 = arith.constant 0 : index
    %51 = vector.load %arg2[%c8, %c0_45, %c0_46] : memref<15x64x128xf32, #tpu.memory_space<vmem>>, vector<1x64x128xf32>
    %52 = vector.shape_cast %51 : vector<1x64x128xf32> to vector<64x128xf32>
    %cst_47 = arith.constant dense<0.000000e+00> : vector<270x128xf32>
    %53 = tpu.matmul %50, %52, %cst_47 {dimension_numbers = #tpu.dot_dimension_numbers<[1], [0], [0], [1], [0, 0, 1, 1], [], []>} : vector<270x64xf32>, vector<64x128xf32>, vector<270x128xf32> -> vector<270x128xf32>
    %54 = arith.addf %48, %53 : vector<270x128xf32>
    %c0_48 = arith.constant 0 : index
    %c51 = arith.constant 51 : index
    %c0_49 = arith.constant 0 : index
    %55 = vector.load %arg1[%c0_48, %c51, %c0_49] : memref<1x340x64xf32, #tpu.memory_space<vmem>>, vector<1x270x64xf32>
    %56 = vector.shape_cast %55 : vector<1x270x64xf32> to vector<270x64xf32>
    %c9 = arith.constant 9 : index
    %c0_50 = arith.constant 0 : index
    %c0_51 = arith.constant 0 : index
    %57 = vector.load %arg2[%c9, %c0_50, %c0_51] : memref<15x64x128xf32, #tpu.memory_space<vmem>>, vector<1x64x128xf32>
    %58 = vector.shape_cast %57 : vector<1x64x128xf32> to vector<64x128xf32>
    %cst_52 = arith.constant dense<0.000000e+00> : vector<270x128xf32>
    %59 = tpu.matmul %56, %58, %cst_52 {dimension_numbers = #tpu.dot_dimension_numbers<[1], [0], [0], [1], [0, 0, 1, 1], [], []>} : vector<270x64xf32>, vector<64x128xf32>, vector<270x128xf32> -> vector<270x128xf32>
    %60 = arith.addf %54, %59 : vector<270x128xf32>
    %c0_53 = arith.constant 0 : index
    %c52 = arith.constant 52 : index
    %c0_54 = arith.constant 0 : index
    %61 = vector.load %arg1[%c0_53, %c52, %c0_54] : memref<1x340x64xf32, #tpu.memory_space<vmem>>, vector<1x270x64xf32>
    %62 = vector.shape_cast %61 : vector<1x270x64xf32> to vector<270x64xf32>
    %c10 = arith.constant 10 : index
    %c0_55 = arith.constant 0 : index
    %c0_56 = arith.constant 0 : index
    %63 = vector.load %arg2[%c10, %c0_55, %c0_56] : memref<15x64x128xf32, #tpu.memory_space<vmem>>, vector<1x64x128xf32>
    %64 = vector.shape_cast %63 : vector<1x64x128xf32> to vector<64x128xf32>
    %cst_57 = arith.constant dense<0.000000e+00> : vector<270x128xf32>
    %65 = tpu.matmul %62, %64, %cst_57 {dimension_numbers = #tpu.dot_dimension_numbers<[1], [0], [0], [1], [0, 0, 1, 1], [], []>} : vector<270x64xf32>, vector<64x128xf32>, vector<270x128xf32> -> vector<270x128xf32>
    %66 = arith.addf %60, %65 : vector<270x128xf32>
    %c0_58 = arith.constant 0 : index
    %c53 = arith.constant 53 : index
    %c0_59 = arith.constant 0 : index
    %67 = vector.load %arg1[%c0_58, %c53, %c0_59] : memref<1x340x64xf32, #tpu.memory_space<vmem>>, vector<1x270x64xf32>
    %68 = vector.shape_cast %67 : vector<1x270x64xf32> to vector<270x64xf32>
    %c11 = arith.constant 11 : index
    %c0_60 = arith.constant 0 : index
    %c0_61 = arith.constant 0 : index
    %69 = vector.load %arg2[%c11, %c0_60, %c0_61] : memref<15x64x128xf32, #tpu.memory_space<vmem>>, vector<1x64x128xf32>
    %70 = vector.shape_cast %69 : vector<1x64x128xf32> to vector<64x128xf32>
    %cst_62 = arith.constant dense<0.000000e+00> : vector<270x128xf32>
    %71 = tpu.matmul %68, %70, %cst_62 {dimension_numbers = #tpu.dot_dimension_numbers<[1], [0], [0], [1], [0, 0, 1, 1], [], []>} : vector<270x64xf32>, vector<64x128xf32>, vector<270x128xf32> -> vector<270x128xf32>
    %72 = arith.addf %66, %71 : vector<270x128xf32>
    %c0_63 = arith.constant 0 : index
    %c68 = arith.constant 68 : index
    %c0_64 = arith.constant 0 : index
    %73 = vector.load %arg1[%c0_63, %c68, %c0_64] : memref<1x340x64xf32, #tpu.memory_space<vmem>>, vector<1x270x64xf32>
    %74 = vector.shape_cast %73 : vector<1x270x64xf32> to vector<270x64xf32>
    %c12 = arith.constant 12 : index
    %c0_65 = arith.constant 0 : index
    %c0_66 = arith.constant 0 : index
    %75 = vector.load %arg2[%c12, %c0_65, %c0_66] : memref<15x64x128xf32, #tpu.memory_space<vmem>>, vector<1x64x128xf32>
    %76 = vector.shape_cast %75 : vector<1x64x128xf32> to vector<64x128xf32>
    %cst_67 = arith.constant dense<0.000000e+00> : vector<270x128xf32>
    %77 = tpu.matmul %74, %76, %cst_67 {dimension_numbers = #tpu.dot_dimension_numbers<[1], [0], [0], [1], [0, 0, 1, 1], [], []>} : vector<270x64xf32>, vector<64x128xf32>, vector<270x128xf32> -> vector<270x128xf32>
    %78 = arith.addf %72, %77 : vector<270x128xf32>
    %c0_68 = arith.constant 0 : index
    %c69 = arith.constant 69 : index
    %c0_69 = arith.constant 0 : index
    %79 = vector.load %arg1[%c0_68, %c69, %c0_69] : memref<1x340x64xf32, #tpu.memory_space<vmem>>, vector<1x270x64xf32>
    %80 = vector.shape_cast %79 : vector<1x270x64xf32> to vector<270x64xf32>
    %c13 = arith.constant 13 : index
    %c0_70 = arith.constant 0 : index
    %c0_71 = arith.constant 0 : index
    %81 = vector.load %arg2[%c13, %c0_70, %c0_71] : memref<15x64x128xf32, #tpu.memory_space<vmem>>, vector<1x64x128xf32>
    %82 = vector.shape_cast %81 : vector<1x64x128xf32> to vector<64x128xf32>
    %cst_72 = arith.constant dense<0.000000e+00> : vector<270x128xf32>
    %83 = tpu.matmul %80, %82, %cst_72 {dimension_numbers = #tpu.dot_dimension_numbers<[1], [0], [0], [1], [0, 0, 1, 1], [], []>} : vector<270x64xf32>, vector<64x128xf32>, vector<270x128xf32> -> vector<270x128xf32>
    %84 = arith.addf %78, %83 : vector<270x128xf32>
    %c0_73 = arith.constant 0 : index
    %c70 = arith.constant 70 : index
    %c0_74 = arith.constant 0 : index
    %85 = vector.load %arg1[%c0_73, %c70, %c0_74] : memref<1x340x64xf32, #tpu.memory_space<vmem>>, vector<1x270x64xf32>
    %86 = vector.shape_cast %85 : vector<1x270x64xf32> to vector<270x64xf32>
    %c14 = arith.constant 14 : index
    %c0_75 = arith.constant 0 : index
    %c0_76 = arith.constant 0 : index
    %87 = vector.load %arg2[%c14, %c0_75, %c0_76] : memref<15x64x128xf32, #tpu.memory_space<vmem>>, vector<1x64x128xf32>
    %88 = vector.shape_cast %87 : vector<1x64x128xf32> to vector<64x128xf32>
    %cst_77 = arith.constant dense<0.000000e+00> : vector<270x128xf32>
    %89 = tpu.matmul %86, %88, %cst_77 {dimension_numbers = #tpu.dot_dimension_numbers<[1], [0], [0], [1], [0, 0, 1, 1], [], []>} : vector<270x64xf32>, vector<64x128xf32>, vector<270x128xf32> -> vector<270x128xf32>
    %90 = arith.addf %84, %89 : vector<270x128xf32>
    %c0_78 = arith.constant 0 : index
    %c0_79 = arith.constant 0 : index
    %91 = vector.load %arg3[%c0_78, %c0_79] : memref<1x128xf32, #tpu.memory_space<vmem>>, vector<1x128xf32>
    %92 = vector.broadcast %91 : vector<1x128xf32> to vector<270x128xf32>
    %93 = arith.addf %90, %92 : vector<270x128xf32>
    %cst_80 = arith.constant 0.000000e+00 : f32
    %94 = vector.broadcast %cst_80 : f32 to vector<270x128xf32>
    %95 = arith.cmpf ogt, %93, %94 : vector<270x128xf32>
    %cst_81 = arith.constant 0.00999999977 : f32
    %96 = vector.broadcast %cst_81 : f32 to vector<270x128xf32>
    %97 = arith.mulf %96, %93 : vector<270x128xf32>
    %98 = arith.select %95, %93, %97 : vector<270x128xi1>, vector<270x128xf32>
    %c0_82 = arith.constant 0 : index
    %c0_83 = arith.constant 0 : index
    %99 = vector.load %arg6[%c0_82, %c0_83] : memref<270x1xf32, #tpu.memory_space<vmem>>, vector<270x1xf32>
    %100 = vector.broadcast %99 : vector<270x1xf32> to vector<270x128xf32>
    %101 = arith.mulf %98, %100 : vector<270x128xf32>
    %cst_84 = arith.constant dense<0.000000e+00> : vector<128xf32>
    %102 = vector.multi_reduction <add>, %101, %cst_84 [0] : vector<270x128xf32> to vector<128xf32>
    %103 = vector.shape_cast %102 : vector<128xf32> to vector<1x128xf32>
    %c0_85 = arith.constant 0 : index
    %c0_86 = arith.constant 0 : index
    %104 = vector.load %arg4[%c0_85, %c0_86] : memref<8x128xf32, #tpu.memory_space<vmem>>, vector<8x128xf32>
    %105 = vector.broadcast %103 : vector<1x128xf32> to vector<8x128xf32>
    %106 = arith.mulf %104, %105 : vector<8x128xf32>
    %cst_87 = arith.constant dense<0.000000e+00> : vector<8xf32>
    %107 = vector.multi_reduction <add>, %106, %cst_87 [1] : vector<8x128xf32> to vector<8xf32>
    %108 = vector.shape_cast %107 : vector<8xf32> to vector<8x1xf32>
    %cst_88 = arith.constant 0.000000e+00 : f32
    %109 = vector.broadcast %cst_88 : f32 to vector<8x1xf32>
    %110 = arith.maximumf %108, %109 : vector<8x1xf32>
    %c0_89 = arith.constant 0 : index
    %c0_90 = arith.constant 0 : index
    %111 = vector.load %arg5[%c0_89, %c0_90] : memref<8x128xf32, #tpu.memory_space<vmem>>, vector<8x128xf32>
    %112 = vector.broadcast %110 : vector<8x1xf32> to vector<8x128xf32>
    %113 = arith.mulf %111, %112 : vector<8x128xf32>
    %cst_91 = arith.constant dense<0.000000e+00> : vector<128xf32>
    %114 = vector.multi_reduction <add>, %113, %cst_91 [0] : vector<8x128xf32> to vector<128xf32>
    %115 = vector.shape_cast %114 : vector<128xf32> to vector<1x128xf32>
    %cst_92 = arith.constant 0.000000e+00 : f32
    %116 = vector.broadcast %cst_92 : f32 to vector<1x128xf32>
    %117 = arith.subf %116, %115 : vector<1x128xf32>
    %118 = math.exp %117 : vector<1x128xf32>
    %cst_93 = arith.constant 1.000000e+00 : f32
    %119 = vector.broadcast %cst_93 : f32 to vector<1x128xf32>
    %120 = arith.addf %119, %118 : vector<1x128xf32>
    %121 = tpu.reciprocal %120 {approx = true} : vector<1x128xf32> -> vector<1x128xf32>
    %122 = vector.broadcast %121 : vector<1x128xf32> to vector<270x128xf32>
    %123 = arith.mulf %98, %122 : vector<270x128xf32>
    %c0_94 = arith.constant 0 : index
    %c0_95 = arith.constant 0 : index
    %124 = vector.load %arg10[%c0_94, %c0_95] : memref<270x128xf32, #tpu.memory_space<vmem>>, vector<270x128xf32>
    tpu.vector_store %arg10[%c0_94, %c0_95], %123 {strides = array<i32>} : memref<270x128xf32, #tpu.memory_space<vmem>>, vector<270x128xf32>,
    %c0_96 = arith.constant 0 : index
    %c0_97 = arith.constant 0 : index
    %125 = vector.load %arg10[%c0_96, %c0_97] : memref<270x128xf32, #tpu.memory_space<vmem>>, vector<253x128xf32>
    %c17_98 = arith.constant 17 : index
    %c0_99 = arith.constant 0 : index
    %126 = vector.load %arg10[%c17_98, %c0_99] : memref<270x128xf32, #tpu.memory_space<vmem>>, vector<253x128xf32>
    %127 = arith.maximumf %125, %126 : vector<253x128xf32>
    %c0_100 = arith.constant 0 : index
    %c0_101 = arith.constant 0 : index
    %c0_102 = arith.constant 0 : index
    %128 = vector.load %arg7[%c0_100, %c0_101, %c0_102] : memref<2x253x128xf32, #tpu.memory_space<vmem>>, vector<1x253x128xf32>
    %129 = vector.shape_cast %128 : vector<1x253x128xf32> to vector<253x128xf32>
    %130 = arith.mulf %127, %129 : vector<253x128xf32>
    %cst_103 = arith.constant dense<0.000000e+00> : vector<253xf32>
    %131 = vector.multi_reduction <add>, %130, %cst_103 [1] : vector<253x128xf32> to vector<253xf32>
    %132 = vector.shape_cast %131 : vector<253xf32> to vector<253x1xf32>
    %cst_104 = arith.constant dense<0.000000e+00> : vector<1xf32>
    %133 = vector.multi_reduction <add>, %132, %cst_104 [0] : vector<253x1xf32> to vector<1xf32>
    %134 = vector.shape_cast %133 : vector<1xf32> to vector<1x1xf32>
    %c1_105 = arith.constant 1 : index
    %c0_106 = arith.constant 0 : index
    %c0_107 = arith.constant 0 : index
    %135 = vector.load %arg7[%c1_105, %c0_106, %c0_107] : memref<2x253x128xf32, #tpu.memory_space<vmem>>, vector<1x253x128xf32>
    %136 = vector.shape_cast %135 : vector<1x253x128xf32> to vector<253x128xf32>
    %137 = arith.mulf %127, %136 : vector<253x128xf32>
    %cst_108 = arith.constant dense<0.000000e+00> : vector<253xf32>
    %138 = vector.multi_reduction <add>, %137, %cst_108 [1] : vector<253x128xf32> to vector<253xf32>
    %139 = vector.shape_cast %138 : vector<253xf32> to vector<253x1xf32>
    %cst_109 = arith.constant dense<0.000000e+00> : vector<1xf32>
    %140 = vector.multi_reduction <add>, %139, %cst_109 [0] : vector<253x1xf32> to vector<1xf32>
    %141 = vector.shape_cast %140 : vector<1xf32> to vector<1x1xf32>
    %142 = tpu.iota {dimensions = array<i32: 1>} : vector<1x2xi32>
    %c0_i32 = arith.constant 0 : i32
    %143 = vector.broadcast %c0_i32 : i32 to vector<1x2xi32>
    %144 = arith.cmpi eq, %142, %143 : vector<1x2xi32>
    %145 = vector.shape_cast %134 : vector<1x1xf32> to vector<1x1xf32>
    %146 = vector.broadcast %145 : vector<1x1xf32> to vector<1x2xf32>
    %147 = vector.shape_cast %141 : vector<1x1xf32> to vector<1x1xf32>
    %148 = vector.broadcast %147 : vector<1x1xf32> to vector<1x2xf32>
    %149 = arith.select %144, %146, %148 : vector<1x2xi1>, vector<1x2xf32>
    %c0_110 = arith.constant 0 : index
    %c0_111 = arith.constant 0 : index
    %150 = vector.load %arg8[%c0_110, %c0_111] : memref<1x2xf32, #tpu.memory_space<vmem>>, vector<1x2xf32>
    %151 = arith.addf %149, %150 : vector<1x2xf32>
    %c0_112 = arith.constant 0 : index
    %c0_113 = arith.constant 0 : index
    %c0_114 = arith.constant 0 : index
    %152 = vector.load %arg9[%c0_112, %c0_113, %c0_114] : memref<1x1x2xf32, #tpu.memory_space<vmem>>, vector<1x1x2xf32>
    %153 = vector.shape_cast %152 : vector<1x1x2xf32> to vector<1x2xf32>
    %154 = vector.shape_cast %151 : vector<1x2xf32> to vector<1x1x2xf32>
    tpu.vector_store %arg9[%c0_112, %c0_113, %c0_114], %154 {strides = array<i32>} : memref<1x1x2xf32, #tpu.memory_space<vmem>>, vector<1x1x2xf32>,
    return
  }
  func.func @transform_0(%arg0: i32) -> (i32, i32, i32) {
    %c0_i32 = arith.constant 0 : i32
    %c0_i32_0 = arith.constant 0 : i32
    %c0_i32_1 = arith.constant 0 : i32
    return %arg0, %c0_i32, %c0_i32_0 : i32, i32, i32
  }
  func.func @transform_1(%arg0: i32) -> (i32, i32, i32) {
    %c0_i32 = arith.constant 0 : i32
    %c0_i32_0 = arith.constant 0 : i32
    %c0_i32_1 = arith.constant 0 : i32
    %c0_i32_2 = arith.constant 0 : i32
    return %c0_i32, %c0_i32_0, %c0_i32_1 : i32, i32, i32
  }
  func.func @transform_2(%arg0: i32) -> (i32, i32) {
    %c0_i32 = arith.constant 0 : i32
    %c0_i32_0 = arith.constant 0 : i32
    %c0_i32_1 = arith.constant 0 : i32
    return %c0_i32, %c0_i32_0 : i32, i32
  }
  func.func @transform_3(%arg0: i32) -> (i32, i32) {
    %c0_i32 = arith.constant 0 : i32
    %c0_i32_0 = arith.constant 0 : i32
    %c0_i32_1 = arith.constant 0 : i32
    return %c0_i32, %c0_i32_0 : i32, i32
  }
  func.func @transform_4(%arg0: i32) -> (i32, i32) {
    %c0_i32 = arith.constant 0 : i32
    %c0_i32_0 = arith.constant 0 : i32
    %c0_i32_1 = arith.constant 0 : i32
    return %c0_i32, %c0_i32_0 : i32, i32
  }
  func.func @transform_5(%arg0: i32) -> (i32, i32) {
    %c0_i32 = arith.constant 0 : i32
    %c0_i32_0 = arith.constant 0 : i32
    %c0_i32_1 = arith.constant 0 : i32
    return %c0_i32, %c0_i32_0 : i32, i32
  }
  func.func @transform_6(%arg0: i32) -> (i32, i32, i32) {
    %c0_i32 = arith.constant 0 : i32
    %c0_i32_0 = arith.constant 0 : i32
    %c0_i32_1 = arith.constant 0 : i32
    %c0_i32_2 = arith.constant 0 : i32
    return %c0_i32, %c0_i32_0, %c0_i32_1 : i32, i32, i32
  }
  func.func @transform_7(%arg0: i32) -> (i32, i32) {
    %c0_i32 = arith.constant 0 : i32
    %c0_i32_0 = arith.constant 0 : i32
    %c0_i32_1 = arith.constant 0 : i32
    return %c0_i32, %c0_i32_0 : i32, i32
  }
  func.func @transform_8(%arg0: i32) -> (i32, i32, i32) {
    %c0_i32 = arith.constant 0 : i32
    %c0_i32_0 = arith.constant 0 : i32
    %c0_i32_1 = arith.constant 0 : i32
    return %arg0, %c0_i32, %c0_i32_0 : i32, i32, i32
  }
}

</mosaic_0001>

<llo_original>
// kernel: senet_cnn_5day_forward.2
$region0: #{senet_cnn_5day_forward.2}
  #allocation0 [shape = 'u32[]', space=smem, size = 0x4, offset = 0x4, fixed_abs, tag = 'smem constant byte address 0x4 - core index']
  #allocation1 [shape = 'u32[72,128]{1,0:T(1,128)}', space=vmem, size = 0x9000, scoped, tag = 'internal scratch']
  %s0 = inlined_call_operand.vmem [shape: f32[2,480,45], index: 0, kind: input, shape index: {}]
  %s1 = inlined_call_operand.vmem [shape: f32[45,64], index: 1, kind: input, shape index: {}]
  %s2 = inlined_call_operand.vmem [shape: f32[1,64], index: 2, kind: input, shape index: {}]
  %s3 = inlined_call_operand.vmem [shape: f32[4,64], index: 3, kind: input, shape index: {}]
  %s4 = inlined_call_operand.vmem [shape: f32[4,64], index: 4, kind: input, shape index: {}]
  %s5 = inlined_call_operand.vmem [shape: f32[2,240,64], index: 5, kind: output, shape index: {}]
  %s6 = sld [smem:[#allocation0]]
  $region53: #{senet_cnn_5day_forward.2} parent=0
    _
  %s8 = ssub.s32 1, %s6
  %s9 = scalar_select 0, %s8, %s6
  loop: start=0, step=1, limit=4
  $region2: #{senet_cnn_5day_forward.2} parent=0 // loop_pre_header
    _
  $region3: #{senet_cnn_5day_forward.2} parent=0 // loop_header
    %s11 = sphi 0, %s15
    %p12 = scmp.ge.s32.totalorder %s11, 4
    %s21 = sphi 0, %s23
    %s24 = sphi 0, %s21
    %s25 = sphi 0, %s24
    %s41 = sphi 0, %s25
    %s45 = sphi 0, %s45
    %s47 = sphi 0, %s45
    %s48 = sphi 0, %s47
    %s62 = sphi 0, %s48
    %s66 = sphi 0, %s66
    %s68 = sphi 0, %s66
    %s69 = sphi 0, %s68
    %s83 = sphi 0, %s69
    %s87 = sphi 0, %s87
    %s89 = sphi 0, %s87
    %s90 = sphi 0, %s89
    %s104 = sphi 0, %s90
    %s108 = sphi 0, %s108
    %s110 = sphi 0, %s108
    %s111 = sphi 0, %s110
    %s125 = sphi 0, %s111
    %s131 = sphi 0, %s133
    %s134 = sphi 0, %s131
    %s135 = sphi 0, %s134
    %s151 = sphi 0, %s135
  $region4: #{senet_cnn_5day_forward.2} parent=0 // loop_header_branch
    %14 = sbr.rel (%p12) target = $region8
  $region5: #{senet_cnn_5day_forward.2} parent=0 // loop_body
    %s16 = ssub.s32 %s11, 1
    %s17 = ssub.s32 %s11, 2
    %s18 = sadd.s32 %s11, 1
    %s19 = ssub.s32 %s11, %s18
    %p20 = scmp.eq.s32.totalorder %s19, 0
    %s22 = sadd.s32 %s21, 1
    %s23 = scalar_select %p20, %s21, %s22
    %p26 = pneg %p20
    %p27 = scmp.eq.s32.totalorder %s11, 1
    %p28 = por %p26, %p27
    %p29 = scmp.ne.s32.totalorder %s21, %s24
    %p30 = scmp.eq.s32.totalorder %s11, 0
    %p31 = por %p29, %p30
    %p32 = scmp.ne.s32.totalorder %s21, %s24
    %p33 = scmp.eq.s32.totalorder %s16, 1
    %p34 = por %p32, %p33
    %p35 = scmp.ne.s32.totalorder %s24, %s25
    %p36 = scmp.eq.s32.totalorder %s16, 0
    %p37 = por %p35, %p36
    %p38 = scmp.ne.s32.totalorder %s24, %s25
    %p39 = scmp.eq.s32.totalorder %s17, 1
    %p40 = por %p38, %p39
    %p42 = scmp.ne.s32.totalorder %s25, %s41
    %p43 = scmp.eq.s32.totalorder %s17, 0
    %p44 = por %p42, %p43
    %s46 = sadd.s32 %s45, 1
    %p49 = scmp.eq.s32.totalorder %s11, 1
    %p50 = scmp.ne.s32.totalorder %s45, %s47
    %p51 = scmp.eq.s32.totalorder %s11, 0
    %p52 = por %p50, %p51
    %p53 = scmp.ne.s32.totalorder %s45, %s47
    %p54 = scmp.eq.s32.totalorder %s16, 1
    %p55 = por %p53, %p54
    %p56 = scmp.ne.s32.totalorder %s47, %s48
    %p57 = scmp.eq.s32.totalorder %s16, 0
    %p58 = por %p56, %p57
    %p59 = scmp.ne.s32.totalorder %s47, %s48
    %p60 = scmp.eq.s32.totalorder %s17, 1
    %p61 = por %p59, %p60
    %p63 = scmp.ne.s32.totalorder %s48, %s62
    %p64 = scmp.eq.s32.totalorder %s17, 0
    %p65 = por %p63, %p64
    %s67 = sadd.s32 %s66, 1
    %p70 = scmp.eq.s32.totalorder %s11, 1
    %p71 = scmp.ne.s32.totalorder %s66, %s68
    %p72 = scmp.eq.s32.totalorder %s11, 0
    %p73 = por %p71, %p72
    %p74 = scmp.ne.s32.totalorder %s66, %s68
    %p75 = scmp.eq.s32.totalorder %s16, 1
    %p76 = por %p74, %p75
    %p77 = scmp.ne.s32.totalorder %s68, %s69
    %p78 = scmp.eq.s32.totalorder %s16, 0
    %p79 = por %p77, %p78
    %p80 = scmp.ne.s32.totalorder %s68, %s69
    %p81 = scmp.eq.s32.totalorder %s17, 1
    %p82 = por %p80, %p81
    %p84 = scmp.ne.s32.totalorder %s69, %s83
    %p85 = scmp.eq.s32.totalorder %s17, 0
    %p86 = por %p84, %p85
    %s88 = sadd.s32 %s87, 1
    %p91 = scmp.eq.s32.totalorder %s11, 1
    %p92 = scmp.ne.s32.totalorder %s87, %s89
    %p93 = scmp.eq.s32.totalorder %s11, 0
    %p94 = por %p92, %p93
    %p95 = scmp.ne.s32.totalorder %s87, %s89
    %p96 = scmp.eq.s32.totalorder %s16, 1
    %p97 = por %p95, %p96
    %p98 = scmp.ne.s32.totalorder %s89, %s90
    %p99 = scmp.eq.s32.totalorder %s16, 0
    %p100 = por %p98, %p99
    %p101 = scmp.ne.s32.totalorder %s89, %s90
    %p102 = scmp.eq.s32.totalorder %s17, 1
    %p103 = por %p101, %p102
    %p105 = scmp.ne.s32.totalorder %s90, %s104
    %p106 = scmp.eq.s32.totalorder %s17, 0
    %p107 = por %p105, %p106
    %s109 = sadd.s32 %s108, 1
    %p112 = scmp.eq.s32.totalorder %s11, 1
    %p113 = scmp.ne.s32.totalorder %s108, %s110
    %p114 = scmp.eq.s32.totalorder %s11, 0
    %p115 = por %p113, %p114
    %p116 = scmp.ne.s32.totalorder %s108, %s110
    %p117 = scmp.eq.s32.totalorder %s16, 1
    %p118 = por %p116, %p117
    %p119 = scmp.ne.s32.totalorder %s110, %s111
    %p120 = scmp.eq.s32.totalorder %s16, 0
    %p121 = por %p119, %p120
    %p122 = scmp.ne.s32.totalorder %s110, %s111
    %p123 = scmp.eq.s32.totalorder %s17, 1
    %p124 = por %p122, %p123
    %p126 = scmp.ne.s32.totalorder %s111, %s125
    %p127 = scmp.eq.s32.totalorder %s17, 0
    %p128 = por %p126, %p127
    %s129 = ssub.s32 %s11, %s18
    %p130 = scmp.eq.s32.totalorder %s129, 0
    %s132 = sadd.s32 %s131, 1
    %s133 = scalar_select %p130, %s131, %s132
    %p136 = pneg %p130
    %p137 = scmp.eq.s32.totalorder %s11, 1
    %p138 = por %p136, %p137
    %p139 = scmp.ne.s32.totalorder %s131, %s134
    %p140 = scmp.eq.s32.totalorder %s11, 0
    %p141 = por %p139, %p140
    %p142 = scmp.ne.s32.totalorder %s131, %s134
    %p143 = scmp.eq.s32.totalorder %s16, 1
    %p144 = por %p142, %p143
    %p145 = scmp.ne.s32.totalorder %s134, %s135
    %p146 = scmp.eq.s32.totalorder %s16, 0
    %p147 = por %p145, %p146
    %p148 = scmp.ne.s32.totalorder %s134, %s135
    %p149 = scmp.eq.s32.totalorder %s17, 1
    %p150 = por %p148, %p149
    %p152 = scmp.ne.s32.totalorder %s135, %s151
    %p153 = scmp.eq.s32.totalorder %s17, 0
    %p154 = por %p152, %p153
    %p155 = scmp.le.s32.totalorder 1, %s11
    %p156 = scmp.lt.s32.totalorder %s11, 3
    %p157 = pnand %p155, %p156
    %p158 = pneg %p157
    // Predicated region
    $region9: #{senet_cnn_5day_forward.2} parent=5 // pred_check
      _
    $region10: #{senet_cnn_5day_forward.2} parent=5 // pred_check_branch
      %160 = sbr.rel (%p157) target = $region12
    $region11: #{senet_cnn_5day_forward.2} parent=5 // pred_region
      %s161 = ssub.s32 %s11, 1
      // Predicated region
      $region13: #{senet_cnn_5day_forward.2} parent=11 // pred_check
        %p162 = pneg %p58
      $region14: #{senet_cnn_5day_forward.2} parent=11 // pred_check_branch
        %164 = sbr.rel (%p162) target = $region16
      $region15: #{senet_cnn_5day_forward.2} parent=11 // pred_region
        _
      $region16: #{senet_cnn_5day_forward.2} parent=11 // pred_fallthru
        _
      // Predicated region
      $region17: #{senet_cnn_5day_forward.2} parent=11 // pred_check
        %p165 = pneg %p79
      $region18: #{senet_cnn_5day_forward.2} parent=11 // pred_check_branch
        %167 = sbr.rel (%p165) target = $region20
      $region19: #{senet_cnn_5day_forward.2} parent=11 // pred_region
        _
      $region20: #{senet_cnn_5day_forward.2} parent=11 // pred_fallthru
        _
      // Predicated region
      $region21: #{senet_cnn_5day_forward.2} parent=11 // pred_check
        %p168 = pneg %p100
      $region22: #{senet_cnn_5day_forward.2} parent=11 // pred_check_branch
        %170 = sbr.rel (%p168) target = $region24
      $region23: #{senet_cnn_5day_forward.2} parent=11 // pred_region
        _
      $region24: #{senet_cnn_5day_forward.2} parent=11 // pred_fallthru
        _
      // Predicated region
      $region25: #{senet_cnn_5day_forward.2} parent=11 // pred_check
        %p171 = pneg %p121
      $region26: #{senet_cnn_5day_forward.2} parent=11 // pred_check_branch
        %173 = sbr.rel (%p171) target = $region28
      $region27: #{senet_cnn_5day_forward.2} parent=11 // pred_region
        _
      $region28: #{senet_cnn_5day_forward.2} parent=11 // pred_fallthru
        _
    $region12: #{senet_cnn_5day_forward.2} parent=5 // pred_fallthru
      _
    %p174 = scmp.lt.s32.totalorder %s11, 2
    // Predicated region
    $region29: #{senet_cnn_5day_forward.2} parent=5 // pred_check
      %p175 = pneg %p174
    $region30: #{senet_cnn_5day_forward.2} parent=5 // pred_check_branch
      %177 = sbr.rel (%p175) target = $region32
    $region31: #{senet_cnn_5day_forward.2} parent=5 // pred_region
      // Predicated region
      $region33: #{senet_cnn_5day_forward.2} parent=31 // pred_check
        %p178 = pneg %p31
      $region34: #{senet_cnn_5day_forward.2} parent=31 // pred_check_branch
        %180 = sbr.rel (%p178) target = $region36
      $region35: #{senet_cnn_5day_forward.2} parent=31 // pred_region
        %p181 = scmp.lt.s32.totalorder %s11, 1
        %s182 = scalar_select %p181, %s11, 1
        %s183 = smul.addr %s182, 60
        %s184 = smul.addr %s183, 8
        %s185 = scalar_lea.vmem %s0, %s184
      $region36: #{senet_cnn_5day_forward.2} parent=31 // pred_fallthru
        _
    $region32: #{senet_cnn_5day_forward.2} parent=5 // pred_fallthru
      _
    %p186 = scmp.le.s32.totalorder 1, %s11
    %p187 = scmp.lt.s32.totalorder %s11, 3
    %p188 = pnand %p186, %p187
    %p189 = pneg %p188
    // Predicated region
    $region37: #{senet_cnn_5day_forward.2} parent=5 // pred_check
      _
    $region38: #{senet_cnn_5day_forward.2} parent=5 // pred_check_branch
      %191 = sbr.rel (%p188) target = $region40
    $region39: #{senet_cnn_5day_forward.2} parent=5 // pred_region
      %s192 = ssub.s32 %s11, 1
      %p193 = scmp.lt.s32.totalorder %s16, 1
      %s194 = scalar_select %p193, %s16, 1
      %s195 = smul.addr %s194, 60
      %s196 = smul.addr %s195, 8
      %s197 = scalar_lea.vmem %s0, %s196
      %p198 = pneg %p37
      %p199 = pneg %p34
      %p200 = pneg %p58
      %p201 = pneg %p55
      %p202 = pneg %p79
      %p203 = pneg %p76
      %p204 = pneg %p100
      %p205 = pneg %p97
      %p206 = pneg %p121
      %p207 = pneg %p118
      %p208 = pneg %p147
      %p209 = pneg %p144
      %p210 = scmp.lt.s32.totalorder %s16, 1
      %s211 = scalar_select %p210, %s16, 1
      %s212 = smul.addr %s211, 30
      %s213 = smul.addr %s212, 8
      %s214 = scalar_lea.vmem %s5, %s213
      %p215 = scmp.lt.s32.totalorder %s16, 1
      %s216 = scalar_select %p215, %s16, 1
      %s217 = smul.addr %s216, 60
      %s218 = smul.addr %s217, 8
      %s219 = scalar_lea.vmem %s0, %s218
      %p220 = scmp.lt.s32.totalorder %s16, 1
      %s221 = scalar_select %p220, %s16, 1
      %s222 = smul.addr %s221, 30
      %s223 = smul.addr %s222, 8
      %s224 = scalar_lea.vmem %s5, %s223
      %v225 = vld [vmem:[%s219] sm:$0xff]
      %v226 = vld [vmem:[%s219 + $0x8] sm:$0xff]
      %v227 = vld [vmem:[%s219 + $0x10] sm:$0xff]
      %v228 = vld [vmem:[%s219 + $0x18] sm:$0xff]
      %v229 = vld [vmem:[%s219 + $0x20] sm:$0xff]
      %v230 = vld [vmem:[%s219 + $0x28] sm:$0xff]
      %v231 = vld [vmem:[%s219 + $0x30] sm:$0xff]
      %v232 = vld [vmem:[%s219 + $0x38] sm:$0xff]
      %v233 = vld [vmem:[%s219 + $0x40] sm:$0xff]
      %v234 = vld [vmem:[%s219 + $0x48] sm:$0xff]
      %v235 = vld [vmem:[%s219 + $0x50] sm:$0xff]
      %v236 = vld [vmem:[%s219 + $0x58] sm:$0xff]
      %v237 = vld [vmem:[%s219 + $0x60] sm:$0xff]
      %v238 = vld [vmem:[%s219 + $0x68] sm:$0xff]
      %v239 = vld [vmem:[%s219 + $0x70] sm:$0xff]
      %v240 = vld [vmem:[%s219 + $0x78] sm:$0xff]
      %v241 = vld [vmem:[%s219 + $0x80] sm:$0xff]
      %v242 = vld [vmem:[%s219 + $0x88] sm:$0xff]
      %v243 = vld [vmem:[%s219 + $0x90] sm:$0xff]
      %v244 = vld [vmem:[%s219 + $0x98] sm:$0xff]
      %v245 = vld [vmem:[%s219 + $0xa0] sm:$0xff]
      %v246 = vld [vmem:[%s219 + $0xa8] sm:$0xff]
      %v247 = vld [vmem:[%s219 + $0xb0] sm:$0xff]
      %v248 = vld [vmem:[%s219 + $0xb8] sm:$0xff]
      %v249 = vld [vmem:[%s219 + $0xc0] sm:$0xff]
      %v250 = vld [vmem:[%s219 + $0xc8] sm:$0xff]
      %v251 = vld [vmem:[%s219 + $0xd0] sm:$0xff]
      %v252 = vld [vmem:[%s219 + $0xd8] sm:$0xff]
      %v253 = vld [vmem:[%s219 + $0xe0] sm:$0xff]
      %v254 = vld [vmem:[%s219 + $0xe8] sm:$0xff]
      %v255 = vld [vmem:[%s219 + $0xf0] sm:$0xff]
      %v256 = vld [vmem:[%s219 + $0xf8] sm:$0xff]
      %v257 = vld [vmem:[%s219 + $0x100] sm:$0xff]
      %v258 = vld [vmem:[%s219 + $0x108] sm:$0xff]
      %v259 = vld [vmem:[%s219 + $0x110] sm:$0xff]
      %v260 = vld [vmem:[%s219 + $0x118] sm:$0xff]
      %v261 = vld [vmem:[%s219 + $0x120] sm:$0xff]
      %v262 = vld [vmem:[%s219 + $0x128] sm:$0xff]
      %v263 = vld [vmem:[%s219 + $0x130] sm:$0xff]
      %v264 = vld [vmem:[%s219 + $0x138] sm:$0xff]
      %v265 = vld [vmem:[%s219 + $0x140] sm:$0xff]
      %v266 = vld [vmem:[%s219 + $0x148] sm:$0xff]
      %v267 = vld [vmem:[%s219 + $0x150] sm:$0xff]
      %v268 = vld [vmem:[%s219 + $0x158] sm:$0xff]
      %v269 = vld [vmem:[%s219 + $0x160] sm:$0xff]
      %v270 = vld [vmem:[%s219 + $0x168] sm:$0xff]
      %v271 = vld [vmem:[%s219 + $0x170] sm:$0xff]
      %v272 = vld [vmem:[%s219 + $0x178] sm:$0xff]
      %v273 = vld [vmem:[%s219 + $0x180] sm:$0xff]
      %v274 = vld [vmem:[%s219 + $0x188] sm:$0xff]
      %v275 = vld [vmem:[%s219 + $0x190] sm:$0xff]
      %v276 = vld [vmem:[%s219 + $0x198] sm:$0xff]
      %v277 = vld [vmem:[%s219 + $0x1a0] sm:$0xff]
      %v278 = vld [vmem:[%s219 + $0x1a8] sm:$0xff]
      %v279 = vld [vmem:[%s219 + $0x1b0] sm:$0xff]
      %v280 = vld [vmem:[%s219 + $0x1b8] sm:$0xff]
      %v281 = vld [vmem:[%s219 + $0x1c0] sm:$0xff]
      %v282 = vld [vmem:[%s219 + $0x1c8] sm:$0xff]
      %v283 = vld [vmem:[%s219 + $0x1d0] sm:$0xff]
      %v284 = vld [vmem:[%s219 + $0x1d8] sm:$0xff]
      %v285 = vld [vmem:[%s1] sm:$0xff]
      %v286 = vld [vmem:[%s1 + $0x8] sm:$0xff]
      %v287 = vld [vmem:[%s1 + $0x10] sm:$0xff]
      %v288 = vld [vmem:[%s1 + $0x18] sm:$0xff]
      %v289 = vld [vmem:[%s1 + $0x20] sm:$0xff]
      %v290 = vld [vmem:[%s1 + $0x28] sm:$0x1f]
      %v291 = vld [vmem:[%s2] sm:$0x1]
      %v293 = vperm.slane %v291, 0
      %vm295 = vcmask 367616
      %v297 = vsel %vm295, %v225, 0
      %v300 = vsel %vm295, %v226, 0
      %v303 = vsel %vm295, %v227, 0
      %v306 = vsel %vm295, %v228, 0
      %v309 = vsel %vm295, %v229, 0
      %v312 = vsel %vm295, %v230, 0
      %v315 = vsel %vm295, %v231, 0
      %v318 = vsel %vm295, %v232, 0
      %v321 = vsel %vm295, %v233, 0
      %v324 = vsel %vm295, %v234, 0
      %v327 = vsel %vm295, %v235, 0
      %v330 = vsel %vm295, %v236, 0
      %v333 = vsel %vm295, %v237, 0
      %v336 = vsel %vm295, %v238, 0
      %v339 = vsel %vm295, %v239, 0
      %v342 = vsel %vm295, %v240, 0
      %v345 = vsel %vm295, %v241, 0
      %v348 = vsel %vm295, %v242, 0
      %v351 = vsel %vm295, %v243, 0
      %v354 = vsel %vm295, %v244, 0
      %v357 = vsel %vm295, %v245, 0
      %v360 = vsel %vm295, %v246, 0
      %v363 = vsel %vm295, %v247, 0
      %v366 = vsel %vm295, %v248, 0
      %v369 = vsel %vm295, %v249, 0
      %v372 = vsel %vm295, %v250, 0
      %v375 = vsel %vm295, %v251, 0
      %v378 = vsel %vm295, %v252, 0
      %v381 = vsel %vm295, %v253, 0
      %v384 = vsel %vm295, %v254, 0
      %v387 = vsel %vm295, %v255, 0
      %v390 = vsel %vm295, %v256, 0
      %v393 = vsel %vm295, %v257, 0
      %v396 = vsel %vm295, %v258, 0
      %v399 = vsel %vm295, %v259, 0
      %v402 = vsel %vm295, %v260, 0
      %v405 = vsel %vm295, %v261, 0
      %v408 = vsel %vm295, %v262, 0
      %v411 = vsel %vm295, %v263, 0
      %v414 = vsel %vm295, %v264, 0
      %v417 = vsel %vm295, %v265, 0
      %v420 = vsel %vm295, %v266, 0
      %v423 = vsel %vm295, %v267, 0
      %v426 = vsel %vm295, %v268, 0
      %v429 = vsel %vm295, %v269, 0
      %v432 = vsel %vm295, %v270, 0
      %v435 = vsel %vm295, %v271, 0
      %v438 = vsel %vm295, %v272, 0
      %v441 = vsel %vm295, %v273, 0
      %v444 = vsel %vm295, %v274, 0
      %v447 = vsel %vm295, %v275, 0
      %v450 = vsel %vm295, %v276, 0
      %v453 = vsel %vm295, %v277, 0
      %v456 = vsel %vm295, %v278, 0
      %v459 = vsel %vm295, %v279, 0
      %v462 = vsel %vm295, %v280, 0
      %v465 = vsel %vm295, %v281, 0
      %v468 = vsel %vm295, %v282, 0
      %v471 = vsel %vm295, %v283, 0
      %v474 = vsel %vm295, %v284, 0
      %vm476 = vcmask 1044480
      %v478 = vsel %vm476, %v290, 0
      %480 = vmatpush.msra.mxu0 0.0
      %481 = vmatpush.msra.mxu0 0.0
      %482 = vmatpush.msra.mxu0 0.0
      %483 = vmatpush.msra.mxu0 0.0
      %484 = vmatpush.msra.mxu0 0.0
      %485 = vmatpush.msra.mxu0 0.0
      %486 = vmatpush.msra.mxu0 0.0
      %487 = vmatpush.msra.mxu0 0.0
      %488 = vmatpush.msra.mxu0 0.0
      %489 = vmatpush.msra.mxu0 0.0
      %490 = vmatpush.msra.mxu0 %v478
      %491 = vmatpush.msra.mxu0 %v289
      %492 = vmatpush.msra.mxu0 %v288
      %493 = vmatpush.msra.mxu0 %v287
      %494 = vmatpush.msra.mxu0 %v286
      %495 = vmatpush.msra.mxu0 %v285
      %496 = vmatmul.f32.gmra.mxu0 %v297
      %v497 = vpop.f32.mrf.mxu0
      %v498 = vadd.f32 %v293, %v497
      %499 = vmatmul.f32.gmra.mxu0 %v300
      %v500 = vpop.f32.mrf.mxu0
      %v501 = vadd.f32 %v293, %v500
      %502 = vmatmul.f32.gmra.mxu0 %v303
      %v503 = vpop.f32.mrf.mxu0
      %v504 = vadd.f32 %v293, %v503
      %505 = vmatmul.f32.gmra.mxu0 %v306
      %v506 = vpop.f32.mrf.mxu0
      %v507 = vadd.f32 %v293, %v506
      %508 = vmatmul.f32.gmra.mxu0 %v309
      %v509 = vpop.f32.mrf.mxu0
      %v510 = vadd.f32 %v293, %v509
      %511 = vmatmul.f32.gmra.mxu0 %v312
      %v512 = vpop.f32.mrf.mxu0
      %v513 = vadd.f32 %v293, %v512
      %514 = vmatmul.f32.gmra.mxu0 %v315
      %v515 = vpop.f32.mrf.mxu0
      %v516 = vadd.f32 %v293, %v515
      %517 = vmatmul.f32.gmra.mxu0 %v318
      %v518 = vpop.f32.mrf.mxu0
      %v519 = vadd.f32 %v293, %v518
      %520 = vmatmul.f32.gmra.mxu0 %v321
      %v521 = vpop.f32.mrf.mxu0
      %v522 = vadd.f32 %v293, %v521
      %523 = vmatmul.f32.gmra.mxu0 %v324
      %v524 = vpop.f32.mrf.mxu0
      %v525 = vadd.f32 %v293, %v524
      %526 = vmatmul.f32.gmra.mxu0 %v327
      %v527 = vpop.f32.mrf.mxu0
      %v528 = vadd.f32 %v293, %v527
      %529 = vmatmul.f32.gmra.mxu0 %v330
      %v530 = vpop.f32.mrf.mxu0
      %v531 = vadd.f32 %v293, %v530
      %532 = vmatmul.f32.gmra.mxu0 %v333
      %v533 = vpop.f32.mrf.mxu0
      %v534 = vadd.f32 %v293, %v533
      %535 = vmatmul.f32.gmra.mxu0 %v336
      %v536 = vpop.f32.mrf.mxu0
      %v537 = vadd.f32 %v293, %v536
      %538 = vmatmul.f32.gmra.mxu0 %v339
      %v539 = vpop.f32.mrf.mxu0
      %v540 = vadd.f32 %v293, %v539
      %541 = vmatmul.f32.gmra.mxu0 %v342
      %v542 = vpop.f32.mrf.mxu0
      %v543 = vadd.f32 %v293, %v542
      %544 = vmatmul.f32.gmra.mxu0 %v345
      %v545 = vpop.f32.mrf.mxu0
      %v546 = vadd.f32 %v293, %v545
      %547 = vmatmul.f32.gmra.mxu0 %v348
      %v548 = vpop.f32.mrf.mxu0
      %v549 = vadd.f32 %v293, %v548
      %550 = vmatmul.f32.gmra.mxu0 %v351
      %v551 = vpop.f32.mrf.mxu0
      %v552 = vadd.f32 %v293, %v551
      %553 = vmatmul.f32.gmra.mxu0 %v354
      %v554 = vpop.f32.mrf.mxu0
      %v555 = vadd.f32 %v293, %v554
      %556 = vmatmul.f32.gmra.mxu0 %v357
      %v557 = vpop.f32.mrf.mxu0
      %v558 = vadd.f32 %v293, %v557
      %559 = vmatmul.f32.gmra.mxu0 %v360
      %v560 = vpop.f32.mrf.mxu0
      %v561 = vadd.f32 %v293, %v560
      %562 = vmatmul.f32.gmra.mxu0 %v363
      %v563 = vpop.f32.mrf.mxu0
      %v564 = vadd.f32 %v293, %v563
      %565 = vmatmul.f32.gmra.mxu0 %v366
      %v566 = vpop.f32.mrf.mxu0
      %v567 = vadd.f32 %v293, %v566
      %568 = vmatmul.f32.gmra.mxu0 %v369
      %v569 = vpop.f32.mrf.mxu0
      %v570 = vadd.f32 %v293, %v569
      %571 = vmatmul.f32.gmra.mxu0 %v372
      %v572 = vpop.f32.mrf.mxu0
      %v573 = vadd.f32 %v293, %v572
      %574 = vmatmul.f32.gmra.mxu0 %v375
      %v575 = vpop.f32.mrf.mxu0
      %v576 = vadd.f32 %v293, %v575
      %577 = vmatmul.f32.gmra.mxu0 %v378
      %v578 = vpop.f32.mrf.mxu0
      %v579 = vadd.f32 %v293, %v578
      %580 = vmatmul.f32.gmra.mxu0 %v381
      %v581 = vpop.f32.mrf.mxu0
      %v582 = vadd.f32 %v293, %v581
      %583 = vmatmul.f32.gmra.mxu0 %v384
      %v584 = vpop.f32.mrf.mxu0
      %v585 = vadd.f32 %v293, %v584
      %586 = vmatmul.f32.gmra.mxu0 %v387
      %v587 = vpop.f32.mrf.mxu0
      %v588 = vadd.f32 %v293, %v587
      %589 = vmatmul.f32.gmra.mxu0 %v390
      %v590 = vpop.f32.mrf.mxu0
      %v591 = vadd.f32 %v293, %v590
      %592 = vmatmul.f32.gmra.mxu0 %v393
      %v593 = vpop.f32.mrf.mxu0
      %v594 = vadd.f32 %v293, %v593
      %595 = vmatmul.f32.gmra.mxu0 %v396
      %v596 = vpop.f32.mrf.mxu0
      %v597 = vadd.f32 %v293, %v596
      %598 = vmatmul.f32.gmra.mxu0 %v399
      %v599 = vpop.f32.mrf.mxu0
      %v600 = vadd.f32 %v293, %v599
      %601 = vmatmul.f32.gmra.mxu0 %v402
      %v602 = vpop.f32.mrf.mxu0
      %v603 = vadd.f32 %v293, %v602
      %604 = vmatmul.f32.gmra.mxu0 %v405
      %v605 = vpop.f32.mrf.mxu0
      %v606 = vadd.f32 %v293, %v605
      %607 = vmatmul.f32.gmra.mxu0 %v408
      %v608 = vpop.f32.mrf.mxu0
      %v609 = vadd.f32 %v293, %v608
      %610 = vmatmul.f32.gmra.mxu0 %v411
      %v611 = vpop.f32.mrf.mxu0
      %v612 = vadd.f32 %v293, %v611
      %613 = vmatmul.f32.gmra.mxu0 %v414
      %v614 = vpop.f32.mrf.mxu0
      %v615 = vadd.f32 %v293, %v614
      %616 = vmatmul.f32.gmra.mxu0 %v417
      %v617 = vpop.f32.mrf.mxu0
      %v618 = vadd.f32 %v293, %v617
      %619 = vmatmul.f32.gmra.mxu0 %v420
      %v620 = vpop.f32.mrf.mxu0
      %v621 = vadd.f32 %v293, %v620
      %622 = vmatmul.f32.gmra.mxu0 %v423
      %v623 = vpop.f32.mrf.mxu0
      %v624 = vadd.f32 %v293, %v623
      %625 = vmatmul.f32.gmra.mxu0 %v426
      %v626 = vpop.f32.mrf.mxu0
      %v627 = vadd.f32 %v293, %v626
      %628 = vmatmul.f32.gmra.mxu0 %v429
      %v629 = vpop.f32.mrf.mxu0
      %v630 = vadd.f32 %v293, %v629
      %631 = vmatmul.f32.gmra.mxu0 %v432
      %v632 = vpop.f32.mrf.mxu0
      %v633 = vadd.f32 %v293, %v632
      %634 = vmatmul.f32.gmra.mxu0 %v435
      %v635 = vpop.f32.mrf.mxu0
      %v636 = vadd.f32 %v293, %v635
      %637 = vmatmul.f32.gmra.mxu0 %v438
      %v638 = vpop.f32.mrf.mxu0
      %v639 = vadd.f32 %v293, %v638
      %640 = vmatmul.f32.gmra.mxu0 %v441
      %v641 = vpop.f32.mrf.mxu0
      %v642 = vadd.f32 %v293, %v641
      %643 = vmatmul.f32.gmra.mxu0 %v444
      %v644 = vpop.f32.mrf.mxu0
      %v645 = vadd.f32 %v293, %v644
      %646 = vmatmul.f32.gmra.mxu0 %v447
      %v647 = vpop.f32.mrf.mxu0
      %v648 = vadd.f32 %v293, %v647
      %649 = vmatmul.f32.gmra.mxu0 %v450
      %v650 = vpop.f32.mrf.mxu0
      %v651 = vadd.f32 %v293, %v650
      %652 = vmatmul.f32.gmra.mxu0 %v453
      %v653 = vpop.f32.mrf.mxu0
      %v654 = vadd.f32 %v293, %v653
      %655 = vmatmul.f32.gmra.mxu0 %v456
      %v656 = vpop.f32.mrf.mxu0
      %v657 = vadd.f32 %v293, %v656
      %658 = vmatmul.f32.gmra.mxu0 %v459
      %v659 = vpop.f32.mrf.mxu0
      %v660 = vadd.f32 %v293, %v659
      %661 = vmatmul.f32.gmra.mxu0 %v462
      %v662 = vpop.f32.mrf.mxu0
      %v663 = vadd.f32 %v293, %v662
      %664 = vmatmul.f32.gmra.mxu0 %v465
      %v665 = vpop.f32.mrf.mxu0
      %v666 = vadd.f32 %v293, %v665
      %667 = vmatmul.f32.gmra.mxu0 %v468
      %v668 = vpop.f32.mrf.mxu0
      %v669 = vadd.f32 %v293, %v668
      %670 = vmatmul.f32.gmra.mxu0 %v471
      %v671 = vpop.f32.mrf.mxu0
      %v672 = vadd.f32 %v293, %v671
      %673 = vmatmul.f32.gmra.mxu0 %v474
      %v674 = vpop.f32.mrf.mxu0
      %v675 = vadd.f32 %v293, %v674
      %676 = vdwg.mxu0
      %vm677 = vcmp.gt.f32.partialorder %v498, 0.0
      %vm678 = vcmp.gt.f32.partialorder %v501, 0.0
      %vm679 = vcmp.gt.f32.partialorder %v504, 0.0
      %vm680 = vcmp.gt.f32.partialorder %v507, 0.0
      %vm681 = vcmp.gt.f32.partialorder %v510, 0.0
      %vm682 = vcmp.gt.f32.partialorder %v513, 0.0
      %vm683 = vcmp.gt.f32.partialorder %v516, 0.0
      %vm684 = vcmp.gt.f32.partialorder %v519, 0.0
      %vm685 = vcmp.gt.f32.partialorder %v522, 0.0
      %vm686 = vcmp.gt.f32.partialorder %v525, 0.0
      %vm687 = vcmp.gt.f32.partialorder %v528, 0.0
      %vm688 = vcmp.gt.f32.partialorder %v531, 0.0
      %vm689 = vcmp.gt.f32.partialorder %v534, 0.0
      %vm690 = vcmp.gt.f32.partialorder %v537, 0.0
      %vm691 = vcmp.gt.f32.partialorder %v540, 0.0
      %vm692 = vcmp.gt.f32.partialorder %v543, 0.0
      %vm693 = vcmp.gt.f32.partialorder %v546, 0.0
      %vm694 = vcmp.gt.f32.partialorder %v549, 0.0
      %vm695 = vcmp.gt.f32.partialorder %v552, 0.0
      %vm696 = vcmp.gt.f32.partialorder %v555, 0.0
      %vm697 = vcmp.gt.f32.partialorder %v558, 0.0
      %vm698 = vcmp.gt.f32.partialorder %v561, 0.0
      %vm699 = vcmp.gt.f32.partialorder %v564, 0.0
      %vm700 = vcmp.gt.f32.partialorder %v567, 0.0
      %vm701 = vcmp.gt.f32.partialorder %v570, 0.0
      %vm702 = vcmp.gt.f32.partialorder %v573, 0.0
      %vm703 = vcmp.gt.f32.partialorder %v576, 0.0
      %vm704 = vcmp.gt.f32.partialorder %v579, 0.0
      %vm705 = vcmp.gt.f32.partialorder %v582, 0.0
      %vm706 = vcmp.gt.f32.partialorder %v585, 0.0
      %vm707 = vcmp.gt.f32.partialorder %v588, 0.0
      %vm708 = vcmp.gt.f32.partialorder %v591, 0.0
      %vm709 = vcmp.gt.f32.partialorder %v594, 0.0
      %vm710 = vcmp.gt.f32.partialorder %v597, 0.0
      %vm711 = vcmp.gt.f32.partialorder %v600, 0.0
      %vm712 = vcmp.gt.f32.partialorder %v603, 0.0
      %vm713 = vcmp.gt.f32.partialorder %v606, 0.0
      %vm714 = vcmp.gt.f32.partialorder %v609, 0.0
      %vm715 = vcmp.gt.f32.partialorder %v612, 0.0
      %vm716 = vcmp.gt.f32.partialorder %v615, 0.0
      %vm717 = vcmp.gt.f32.partialorder %v618, 0.0
      %vm718 = vcmp.gt.f32.partialorder %v621, 0.0
      %vm719 = vcmp.gt.f32.partialorder %v624, 0.0
      %vm720 = vcmp.gt.f32.partialorder %v627, 0.0
      %vm721 = vcmp.gt.f32.partialorder %v630, 0.0
      %vm722 = vcmp.gt.f32.partialorder %v633, 0.0
      %vm723 = vcmp.gt.f32.partialorder %v636, 0.0
      %vm724 = vcmp.gt.f32.partialorder %v639, 0.0
      %vm725 = vcmp.gt.f32.partialorder %v642, 0.0
      %vm726 = vcmp.gt.f32.partialorder %v645, 0.0
      %vm727 = vcmp.gt.f32.partialorder %v648, 0.0
      %vm728 = vcmp.gt.f32.partialorder %v651, 0.0
      %vm729 = vcmp.gt.f32.partialorder %v654, 0.0
      %vm730 = vcmp.gt.f32.partialorder %v657, 0.0
      %vm731 = vcmp.gt.f32.partialorder %v660, 0.0
      %vm732 = vcmp.gt.f32.partialorder %v663, 0.0
      %vm733 = vcmp.gt.f32.partialorder %v666, 0.0
      %vm734 = vcmp.gt.f32.partialorder %v669, 0.0
      %vm735 = vcmp.gt.f32.partialorder %v672, 0.0
      %vm736 = vcmp.gt.f32.partialorder %v675, 0.0
      %v737 = vmul.f32 %v498, 0.01
      %v738 = vmul.f32 %v501, 0.01
      %v739 = vmul.f32 %v504, 0.01
      %v740 = vmul.f32 %v507, 0.01
      %v741 = vmul.f32 %v510, 0.01
      %v742 = vmul.f32 %v513, 0.01
      %v743 = vmul.f32 %v516, 0.01
      %v744 = vmul.f32 %v519, 0.01
      %v745 = vmul.f32 %v522, 0.01
      %v746 = vmul.f32 %v525, 0.01
      %v747 = vmul.f32 %v528, 0.01
      %v748 = vmul.f32 %v531, 0.01
      %v749 = vmul.f32 %v534, 0.01
      %v750 = vmul.f32 %v537, 0.01
      %v751 = vmul.f32 %v540, 0.01
      %v752 = vmul.f32 %v543, 0.01
      %v753 = vmul.f32 %v546, 0.01
      %v754 = vmul.f32 %v549, 0.01
      %v755 = vmul.f32 %v552, 0.01
      %v756 = vmul.f32 %v555, 0.01
      %v757 = vmul.f32 %v558, 0.01
      %v758 = vmul.f32 %v561, 0.01
      %v759 = vmul.f32 %v564, 0.01
      %v760 = vmul.f32 %v567, 0.01
      %v761 = vmul.f32 %v570, 0.01
      %v762 = vmul.f32 %v573, 0.01
      %v763 = vmul.f32 %v576, 0.01
      %v764 = vmul.f32 %v579, 0.01
      %v765 = vmul.f32 %v582, 0.01
      %v766 = vmul.f32 %v585, 0.01
      %v767 = vmul.f32 %v588, 0.01
      %v768 = vmul.f32 %v591, 0.01
      %v769 = vmul.f32 %v594, 0.01
      %v770 = vmul.f32 %v597, 0.01
      %v771 = vmul.f32 %v600, 0.01
      %v772 = vmul.f32 %v603, 0.01
      %v773 = vmul.f32 %v606, 0.01
      %v774 = vmul.f32 %v609, 0.01
      %v775 = vmul.f32 %v612, 0.01
      %v776 = vmul.f32 %v615, 0.01
      %v777 = vmul.f32 %v618, 0.01
      %v778 = vmul.f32 %v621, 0.01
      %v779 = vmul.f32 %v624, 0.01
      %v780 = vmul.f32 %v627, 0.01
      %v781 = vmul.f32 %v630, 0.01
      %v782 = vmul.f32 %v633, 0.01
      %v783 = vmul.f32 %v636, 0.01
      %v784 = vmul.f32 %v639, 0.01
      %v785 = vmul.f32 %v642, 0.01
      %v786 = vmul.f32 %v645, 0.01
      %v787 = vmul.f32 %v648, 0.01
      %v788 = vmul.f32 %v651, 0.01
      %v789 = vmul.f32 %v654, 0.01
      %v790 = vmul.f32 %v657, 0.01
      %v791 = vmul.f32 %v660, 0.01
      %v792 = vmul.f32 %v663, 0.01
      %v793 = vmul.f32 %v666, 0.01
      %v794 = vmul.f32 %v669, 0.01
      %v795 = vmul.f32 %v672, 0.01
      %v796 = vmul.f32 %v675, 0.01
      %v797 = vsel %vm677, %v498, %v737
      %v798 = vsel %vm678, %v501, %v738
      %v799 = vsel %vm679, %v504, %v739
      %v800 = vsel %vm680, %v507, %v740
      %v801 = vsel %vm681, %v510, %v741
      %v802 = vsel %vm682, %v513, %v742
      %v803 = vsel %vm683, %v516, %v743
      %v804 = vsel %vm684, %v519, %v744
      %v805 = vsel %vm685, %v522, %v745
      %v806 = vsel %vm686, %v525, %v746
      %v807 = vsel %vm687, %v528, %v747
      %v808 = vsel %vm688, %v531, %v748
      %v809 = vsel %vm689, %v534, %v749
      %v810 = vsel %vm690, %v537, %v750
      %v811 = vsel %vm691, %v540, %v751
      %v812 = vsel %vm692, %v543, %v752
      %v813 = vsel %vm693, %v546, %v753
      %v814 = vsel %vm694, %v549, %v754
      %v815 = vsel %vm695, %v552, %v755
      %v816 = vsel %vm696, %v555, %v756
      %v817 = vsel %vm697, %v558, %v757
      %v818 = vsel %vm698, %v561, %v758
      %v819 = vsel %vm699, %v564, %v759
      %v820 = vsel %vm700, %v567, %v760
      %v821 = vsel %vm701, %v570, %v761
      %v822 = vsel %vm702, %v573, %v762
      %v823 = vsel %vm703, %v576, %v763
      %v824 = vsel %vm704, %v579, %v764
      %v825 = vsel %vm705, %v582, %v765
      %v826 = vsel %vm706, %v585, %v766
      %v827 = vsel %vm707, %v588, %v767
      %v828 = vsel %vm708, %v591, %v768
      %v829 = vsel %vm709, %v594, %v769
      %v830 = vsel %vm710, %v597, %v770
      %v831 = vsel %vm711, %v600, %v771
      %v832 = vsel %vm712, %v603, %v772
      %v833 = vsel %vm713, %v606, %v773
      %v834 = vsel %vm714, %v609, %v774
      %v835 = vsel %vm715, %v612, %v775
      %v836 = vsel %vm716, %v615, %v776
      %v837 = vsel %vm717, %v618, %v777
      %v838 = vsel %vm718, %v621, %v778
      %v839 = vsel %vm719, %v624, %v779
      %v840 = vsel %vm720, %v627, %v780
      %v841 = vsel %vm721, %v630, %v781
      %v842 = vsel %vm722, %v633, %v782
      %v843 = vsel %vm723, %v636, %v783
      %v844 = vsel %vm724, %v639, %v784
      %v845 = vsel %vm725, %v642, %v785
      %v846 = vsel %vm726, %v645, %v786
      %v847 = vsel %vm727, %v648, %v787
      %v848 = vsel %vm728, %v651, %v788
      %v849 = vsel %vm729, %v654, %v789
      %v850 = vsel %vm730, %v657, %v790
      %v851 = vsel %vm731, %v660, %v791
      %v852 = vsel %vm732, %v663, %v792
      %v853 = vsel %vm733, %v666, %v793
      %v854 = vsel %vm734, %v669, %v794
      %v855 = vsel %vm735, %v672, %v795
      %v856 = vsel %vm736, %v675, %v796
      %vm857 = vcmask 523264
      %v858 = vsel %vm857, %v797, 0.0
      %v859 = vsel %vm857, %v798, 0.0
      %v860 = vadd.f32 %v858, %v859
      %v861 = vsel %vm857, %v799, 0.0
      %v862 = vadd.f32 %v860, %v861
      %v863 = vsel %vm857, %v800, 0.0
      %v864 = vadd.f32 %v862, %v863
      %v865 = vsel %vm857, %v801, 0.0
      %v866 = vadd.f32 %v864, %v865
      %v867 = vsel %vm857, %v802, 0.0
      %v868 = vadd.f32 %v866, %v867
      %v869 = vsel %vm857, %v803, 0.0
      %v870 = vadd.f32 %v868, %v869
      %v871 = vsel %vm857, %v804, 0.0
      %v872 = vadd.f32 %v870, %v871
      %v873 = vsel %vm857, %v805, 0.0
      %v874 = vadd.f32 %v872, %v873
      %v875 = vsel %vm857, %v806, 0.0
      %v876 = vadd.f32 %v874, %v875
      %v877 = vsel %vm857, %v807, 0.0
      %v878 = vadd.f32 %v876, %v877
      %v879 = vsel %vm857, %v808, 0.0
      %v880 = vadd.f32 %v878, %v879
      %v881 = vsel %vm857, %v809, 0.0
      %v882 = vadd.f32 %v880, %v881
      %v883 = vsel %vm857, %v810, 0.0
      %v884 = vadd.f32 %v882, %v883
      %v885 = vsel %vm857, %v811, 0.0
      %v886 = vadd.f32 %v884, %v885
      %v887 = vsel %vm857, %v812, 0.0
      %v888 = vadd.f32 %v886, %v887
      %v889 = vsel %vm857, %v813, 0.0
      %v890 = vadd.f32 %v888, %v889
      %v891 = vsel %vm857, %v814, 0.0
      %v892 = vadd.f32 %v890, %v891
      %v893 = vsel %vm857, %v815, 0.0
      %v894 = vadd.f32 %v892, %v893
      %v895 = vsel %vm857, %v816, 0.0
      %v896 = vadd.f32 %v894, %v895
      %v897 = vsel %vm857, %v817, 0.0
      %v898 = vadd.f32 %v896, %v897
      %v899 = vsel %vm857, %v818, 0.0
      %v900 = vadd.f32 %v898, %v899
      %v901 = vsel %vm857, %v819, 0.0
      %v902 = vadd.f32 %v900, %v901
      %v903 = vsel %vm857, %v820, 0.0
      %v904 = vadd.f32 %v902, %v903
      %v905 = vsel %vm857, %v821, 0.0
      %v906 = vadd.f32 %v904, %v905
      %v907 = vsel %vm857, %v822, 0.0
      %v908 = vadd.f32 %v906, %v907
      %v909 = vsel %vm857, %v823, 0.0
      %v910 = vadd.f32 %v908, %v909
      %v911 = vsel %vm857, %v824, 0.0
      %v912 = vadd.f32 %v910, %v911
      %v913 = vsel %vm857, %v825, 0.0
      %v914 = vadd.f32 %v912, %v913
      %v915 = vsel %vm857, %v826, 0.0
      %v916 = vadd.f32 %v914, %v915
      %v917 = vsel %vm857, %v827, 0.0
      %v918 = vadd.f32 %v916, %v917
      %v919 = vsel %vm857, %v828, 0.0
      %v920 = vadd.f32 %v918, %v919
      %v921 = vsel %vm857, %v829, 0.0
      %v922 = vadd.f32 %v920, %v921
      %v923 = vsel %vm857, %v830, 0.0
      %v924 = vadd.f32 %v922, %v923
      %v925 = vsel %vm857, %v831, 0.0
      %v926 = vadd.f32 %v924, %v925
      %v927 = vsel %vm857, %v832, 0.0
      %v928 = vadd.f32 %v926, %v927
      %v929 = vsel %vm857, %v833, 0.0
      %v930 = vadd.f32 %v928, %v929
      %v931 = vsel %vm857, %v834, 0.0
      %v932 = vadd.f32 %v930, %v931
      %v933 = vsel %vm857, %v835, 0.0
      %v934 = vadd.f32 %v932, %v933
      %v935 = vsel %vm857, %v836, 0.0
      %v936 = vadd.f32 %v934, %v935
      %v937 = vsel %vm857, %v837, 0.0
      %v938 = vadd.f32 %v936, %v937
      %v939 = vsel %vm857, %v838, 0.0
      %v940 = vadd.f32 %v938, %v939
      %v941 = vsel %vm857, %v839, 0.0
      %v942 = vadd.f32 %v940, %v941
      %v943 = vsel %vm857, %v840, 0.0
      %v944 = vadd.f32 %v942, %v943
      %v945 = vsel %vm857, %v841, 0.0
      %v946 = vadd.f32 %v944, %v945
      %v947 = vsel %vm857, %v842, 0.0
      %v948 = vadd.f32 %v946, %v947
      %v949 = vsel %vm857, %v843, 0.0
      %v950 = vadd.f32 %v948, %v949
      %v951 = vsel %vm857, %v844, 0.0
      %v952 = vadd.f32 %v950, %v951
      %v953 = vsel %vm857, %v845, 0.0
      %v954 = vadd.f32 %v952, %v953
      %v955 = vsel %vm857, %v846, 0.0
      %v956 = vadd.f32 %v954, %v955
      %v957 = vsel %vm857, %v847, 0.0
      %v958 = vadd.f32 %v956, %v957
      %v959 = vsel %vm857, %v848, 0.0
      %v960 = vadd.f32 %v958, %v959
      %v961 = vsel %vm857, %v849, 0.0
      %v962 = vadd.f32 %v960, %v961
      %v963 = vsel %vm857, %v850, 0.0
      %v964 = vadd.f32 %v962, %v963
      %v965 = vsel %vm857, %v851, 0.0
      %v966 = vadd.f32 %v964, %v965
      %v967 = vsel %vm857, %v852, 0.0
      %v968 = vadd.f32 %v966, %v967
      %v969 = vsel %vm857, %v853, 0.0
      %v970 = vadd.f32 %v968, %v969
      %v971 = vsel %vm857, %v854, 0.0
      %v972 = vadd.f32 %v970, %v971
      %v973 = vsel %vm857, %v855, 0.0
      %v974 = vadd.f32 %v972, %v973
      %v975 = vsel %vm857, %v856, 0.0
      %v976 = vadd.f32 %v974, %v975
      %v977 = vrot.slane %v976, 4
      %v978 = vadd.f32 %v976, %v977
      %v979 = vrot.slane %v978, 2
      %v980 = vadd.f32 %v978, %v979
      %v981 = vrot.slane %v980, 1
      %v982 = vadd.f32 %v980, %v981
      %v983 = vrcp.pop 480.0
      %v984 = vmul.f32 480.0, %v983
      %v985 = vsub.f32 1.0, %v984
      %v986 = vmul.f32 %v983, %v985
      %v987 = vadd.f32 %v983, %v986
      %vm988 = vweird.f32 %v983
      %v989 = vsel %vm988, %v983, %v987
      %v990 = vmul.f32 %v982, %v989
      %v991 = vld [vmem:[%s3] sm:$0xf]
      %v992 = vmul.f32 %v991, %v990
      %vm993 = vcmask 519168
      %v994 = vsel %vm993, %v992, 0.0
      %995 = vadd.xlane.f32.xlu0 %v994
      %v996 = vpop.xlane.xlu0 %995
      %v997 = vmax.f32 %v996, 0.0
      %v998 = vld [vmem:[%s4] sm:$0xf]
      %v999 = vmul.f32 %v998, %v997
      %v1000 = vsel %vm993, %v999, 0.0
      %v1001 = vrot.slane %v1000, 4
      %v1002 = vadd.f32 %v1000, %v1001
      %v1003 = vrot.slane %v1002, 2
      %v1004 = vadd.f32 %v1002, %v1003
      %v1005 = vrot.slane %v1004, 1
      %v1006 = vadd.f32 %v1004, %v1005
      %v1007 = vsub.f32 0.0, %v1006
      %v1008 = vmul.f32 %v1007, 1.442695
      %v1009 = vpow.pop %v1008
      %v1010 = vadd.f32 %v1009, 1.0
      %v1011 = vrcp.pop %v1010
      %v1012 = vmul.f32 %v797, %v1011
      %v1013 = vmul.f32 %v798, %v1011
      %v1014 = vmul.f32 %v799, %v1011
      %v1015 = vmul.f32 %v800, %v1011
      %v1016 = vmul.f32 %v801, %v1011
      %v1017 = vmul.f32 %v802, %v1011
      %v1018 = vmul.f32 %v803, %v1011
      %v1019 = vmul.f32 %v804, %v1011
      %v1020 = vmul.f32 %v805, %v1011
      %v1021 = vmul.f32 %v806, %v1011
      %v1022 = vmul.f32 %v807, %v1011
      %v1023 = vmul.f32 %v808, %v1011
      %v1024 = vmul.f32 %v809, %v1011
      %v1025 = vmul.f32 %v810, %v1011
      %v1026 = vmul.f32 %v811, %v1011
      %v1027 = vmul.f32 %v812, %v1011
      %v1028 = vmul.f32 %v813, %v1011
      %v1029 = vmul.f32 %v814, %v1011
      %v1030 = vmul.f32 %v815, %v1011
      %v1031 = vmul.f32 %v816, %v1011
      %v1032 = vmul.f32 %v817, %v1011
      %v1033 = vmul.f32 %v818, %v1011
      %v1034 = vmul.f32 %v819, %v1011
      %v1035 = vmul.f32 %v820, %v1011
      %v1036 = vmul.f32 %v821, %v1011
      %v1037 = vmul.f32 %v822, %v1011
      %v1038 = vmul.f32 %v823, %v1011
      %v1039 = vmul.f32 %v824, %v1011
      %v1040 = vmul.f32 %v825, %v1011
      %v1041 = vmul.f32 %v826, %v1011
      %v1042 = vmul.f32 %v827, %v1011
      %v1043 = vmul.f32 %v828, %v1011
      %v1044 = vmul.f32 %v829, %v1011
      %v1045 = vmul.f32 %v830, %v1011
      %v1046 = vmul.f32 %v831, %v1011
      %v1047 = vmul.f32 %v832, %v1011
      %v1048 = vmul.f32 %v833, %v1011
      %v1049 = vmul.f32 %v834, %v1011
      %v1050 = vmul.f32 %v835, %v1011
      %v1051 = vmul.f32 %v836, %v1011
      %v1052 = vmul.f32 %v837, %v1011
      %v1053 = vmul.f32 %v838, %v1011
      %v1054 = vmul.f32 %v839, %v1011
      %v1055 = vmul.f32 %v840, %v1011
      %v1056 = vmul.f32 %v841, %v1011
      %v1057 = vmul.f32 %v842, %v1011
      %v1058 = vmul.f32 %v843, %v1011
      %v1059 = vmul.f32 %v844, %v1011
      %v1060 = vmul.f32 %v845, %v1011
      %v1061 = vmul.f32 %v846, %v1011
      %v1062 = vmul.f32 %v847, %v1011
      %v1063 = vmul.f32 %v848, %v1011
      %v1064 = vmul.f32 %v849, %v1011
      %v1065 = vmul.f32 %v850, %v1011
      %v1066 = vmul.f32 %v851, %v1011
      %v1067 = vmul.f32 %v852, %v1011
      %v1068 = vmul.f32 %v853, %v1011
      %v1069 = vmul.f32 %v854, %v1011
      %v1070 = vmul.f32 %v855, %v1011
      %v1071 = vmul.f32 %v856, %v1011
      %v1072 = vmax.f32 %v1012, %v1042
      %v1073 = vmax.f32 %v1013, %v1043
      %v1074 = vmax.f32 %v1014, %v1044
      %v1075 = vmax.f32 %v1015, %v1045
      %v1076 = vmax.f32 %v1016, %v1046
      %v1077 = vmax.f32 %v1017, %v1047
      %v1078 = vmax.f32 %v1018, %v1048
      %v1079 = vmax.f32 %v1019, %v1049
      %v1080 = vmax.f32 %v1020, %v1050
      %v1081 = vmax.f32 %v1021, %v1051
      %v1082 = vmax.f32 %v1022, %v1052
      %v1083 = vmax.f32 %v1023, %v1053
      %v1084 = vmax.f32 %v1024, %v1054
      %v1085 = vmax.f32 %v1025, %v1055
      %v1086 = vmax.f32 %v1026, %v1056
      %v1087 = vmax.f32 %v1027, %v1057
      %v1088 = vmax.f32 %v1028, %v1058
      %v1089 = vmax.f32 %v1029, %v1059
      %v1090 = vmax.f32 %v1030, %v1060
      %v1091 = vmax.f32 %v1031, %v1061
      %v1092 = vmax.f32 %v1032, %v1062
      %v1093 = vmax.f32 %v1033, %v1063
      %v1094 = vmax.f32 %v1034, %v1064
      %v1095 = vmax.f32 %v1035, %v1065
      %v1096 = vmax.f32 %v1036, %v1066
      %v1097 = vmax.f32 %v1037, %v1067
      %v1098 = vmax.f32 %v1038, %v1068
      %v1099 = vmax.f32 %v1039, %v1069
      %v1100 = vmax.f32 %v1040, %v1070
      %v1101 = vmax.f32 %v1041, %v1071
      %1102 = vst.msk [vmem:[%s224] sm:$0xff] %vm857, %v1072
      %1103 = vst.msk [vmem:[%s224 + $0x8] sm:$0xff] %vm857, %v1073
      %1104 = vst.msk [vmem:[%s224 + $0x10] sm:$0xff] %vm857, %v1074
      %1105 = vst.msk [vmem:[%s224 + $0x18] sm:$0xff] %vm857, %v1075
      %1106 = vst.msk [vmem:[%s224 + $0x20] sm:$0xff] %vm857, %v1076
      %1107 = vst.msk [vmem:[%s224 + $0x28] sm:$0xff] %vm857, %v1077
      %1108 = vst.msk [vmem:[%s224 + $0x30] sm:$0xff] %vm857, %v1078
      %1109 = vst.msk [vmem:[%s224 + $0x38] sm:$0xff] %vm857, %v1079
      %1110 = vst.msk [vmem:[%s224 + $0x40] sm:$0xff] %vm857, %v1080
      %1111 = vst.msk [vmem:[%s224 + $0x48] sm:$0xff] %vm857, %v1081
      %1112 = vst.msk [vmem:[%s224 + $0x50] sm:$0xff] %vm857, %v1082
      %1113 = vst.msk [vmem:[%s224 + $0x58] sm:$0xff] %vm857, %v1083
      %1114 = vst.msk [vmem:[%s224 + $0x60] sm:$0xff] %vm857, %v1084
      %1115 = vst.msk [vmem:[%s224 + $0x68] sm:$0xff] %vm857, %v1085
      %1116 = vst.msk [vmem:[%s224 + $0x70] sm:$0xff] %vm857, %v1086
      %1117 = vst.msk [vmem:[%s224 + $0x78] sm:$0xff] %vm857, %v1087
      %1118 = vst.msk [vmem:[%s224 + $0x80] sm:$0xff] %vm857, %v1088
      %1119 = vst.msk [vmem:[%s224 + $0x88] sm:$0xff] %vm857, %v1089
      %1120 = vst.msk [vmem:[%s224 + $0x90] sm:$0xff] %vm857, %v1090
      %1121 = vst.msk [vmem:[%s224 + $0x98] sm:$0xff] %vm857, %v1091
      %1122 = vst.msk [vmem:[%s224 + $0xa0] sm:$0xff] %vm857, %v1092
      %1123 = vst.msk [vmem:[%s224 + $0xa8] sm:$0xff] %vm857, %v1093
      %1124 = vst.msk [vmem:[%s224 + $0xb0] sm:$0xff] %vm857, %v1094
      %1125 = vst.msk [vmem:[%s224 + $0xb8] sm:$0xff] %vm857, %v1095
      %1126 = vst.msk [vmem:[%s224 + $0xc0] sm:$0xff] %vm857, %v1096
      %1127 = vst.msk [vmem:[%s224 + $0xc8] sm:$0xff] %vm857, %v1097
      %1128 = vst.msk [vmem:[%s224 + $0xd0] sm:$0xff] %vm857, %v1098
      %1129 = vst.msk [vmem:[%s224 + $0xd8] sm:$0xff] %vm857, %v1099
      %1130 = vst.msk [vmem:[%s224 + $0xe0] sm:$0xff] %vm857, %v1100
      %1131 = vst.msk [vmem:[%s224 + $0xe8] sm:$0xff] %vm857, %v1101
      %p1132 = scmp.lt.s32.totalorder %s16, 1
      %s1133 = scalar_select %p1132, %s16, 1
      %s1134 = smul.addr %s1133, 30
      %s1135 = smul.addr %s1134, 8
      %s1136 = scalar_lea.vmem %s5, %s1135
      // Predicated region
      $region41: #{senet_cnn_5day_forward.2} parent=39 // pred_check
        %p1137 = pneg %p144
      $region42: #{senet_cnn_5day_forward.2} parent=39 // pred_check_branch
        %1139 = sbr.rel (%p1137) target = $region44
      $region43: #{senet_cnn_5day_forward.2} parent=39 // pred_region
        _
      $region44: #{senet_cnn_5day_forward.2} parent=39 // pred_fallthru
        _
    $region40: #{senet_cnn_5day_forward.2} parent=5 // pred_fallthru
      _
    %p1140 = scmp.le.s32.totalorder 2, %s11
    // Predicated region
    $region45: #{senet_cnn_5day_forward.2} parent=5 // pred_check
      %p1141 = pneg %p1140
    $region46: #{senet_cnn_5day_forward.2} parent=5 // pred_check_branch
      %1143 = sbr.rel (%p1141) target = $region48
    $region47: #{senet_cnn_5day_forward.2} parent=5 // pred_region
      %s1144 = ssub.s32 %s11, 2
      // Predicated region
      $region49: #{senet_cnn_5day_forward.2} parent=47 // pred_check
        %p1145 = pneg %p150
      $region50: #{senet_cnn_5day_forward.2} parent=47 // pred_check_branch
        %1147 = sbr.rel (%p1145) target = $region52
      $region51: #{senet_cnn_5day_forward.2} parent=47 // pred_region
        %p1148 = scmp.lt.s32.totalorder %s17, 1
        %s1149 = scalar_select %p1148, %s17, 1
        %s1150 = smul.addr %s1149, 30
        %s1151 = smul.addr %s1150, 8
        %s1152 = scalar_lea.vmem %s5, %s1151
      $region52: #{senet_cnn_5day_forward.2} parent=47 // pred_fallthru
        _
    $region48: #{senet_cnn_5day_forward.2} parent=5 // pred_fallthru
      _
  $region6: #{senet_cnn_5day_forward.2} parent=0 // loop_footer
    %s15 = sadd.s32 1, %s11
  $region7: #{senet_cnn_5day_forward.2} parent=0 // loop_footer_branch
    %10 = sbr.rel target = $region3
  $region8: #{senet_cnn_5day_forward.2} parent=0 // loop_exit
    _

// kernel: senet_cnn_5day_forward.3
$region0: #{senet_cnn_5day_forward.3}
  #allocation0 [shape = 'u32[]', space=smem, size = 0x4, offset = 0x4, fixed_abs, tag = 'smem constant byte address 0x4 - core index']
  #allocation1 [shape = 'u32[72,128]{1,0:T(1,128)}', space=vmem, size = 0x9000, scoped, tag = 'internal scratch']
  #allocation2 [shape = 'f32[270,128]{1,0:T(8,128)}', space=vmem, size = 0x22000, scoped, tag = 'scratch operand']
  %s0 = inlined_call_operand.vmem [shape: f32[2,340,64], index: 0, kind: input, shape index: {}]
  %s1 = inlined_call_operand.vmem [shape: f32[15,64,128], index: 1, kind: input, shape index: {}]
  %s2 = inlined_call_operand.vmem [shape: f32[1,128], index: 2, kind: input, shape index: {}]
  %s3 = inlined_call_operand.vmem [shape: f32[8,128], index: 3, kind: input, shape index: {}]
  %s4 = inlined_call_operand.vmem [shape: f32[8,128], index: 4, kind: input, shape index: {}]
  %s5 = inlined_call_operand.vmem [shape: f32[270,1], index: 5, kind: input, shape index: {}]
  %s6 = inlined_call_operand.vmem [shape: f32[2,253,128], index: 6, kind: input, shape index: {}]
  %s7 = inlined_call_operand.vmem [shape: f32[1,2], index: 7, kind: input, shape index: {}]
  %s8 = inlined_call_operand.hbm [shape: f32[2,1,2], index: 8, kind: output, shape index: {}]
  %s9 = sld [smem:[#allocation0]]
  $region65: #{senet_cnn_5day_forward.3} parent=0
    _
  %s11 = ssub.s32 1, %s9
  %s12 = scalar_select 0, %s11, %s9
  $region1: #{senet_cnn_5day_forward.3} parent=0
    #allocation3 [shape = 'u8[1024]{0}', space=vmem, size = 0x400, scoped, tag = 'output window, operand 0']
    #allocation4 [shape = 's32[2]{0}', space=sflag, size = 0x8, scoped, tag = 'scoped memory for senet_cnn_5day_forward.3']
    %13 = vsyncpa [#allocation4], 0
    %s14 = scalar_lea.sflag [#allocation4], 1
    %15 = vsyncpa %s14, 0
    loop: start=0, step=1, limit=4
    $region2: #{senet_cnn_5day_forward.3} parent=1 // loop_pre_header
      _
    $region3: #{senet_cnn_5day_forward.3} parent=1 // loop_header
      %s17 = sphi 0, %s21
      %p18 = scmp.ge.s32.totalorder %s17, 4
      %s27 = sphi 0, %s29
      %s30 = sphi 0, %s27
      %s31 = sphi 0, %s30
      %s47 = sphi 0, %s31
      %s51 = sphi 0, %s51
      %s53 = sphi 0, %s51
      %s54 = sphi 0, %s53
      %s68 = sphi 0, %s54
      %s72 = sphi 0, %s72
      %s74 = sphi 0, %s72
      %s75 = sphi 0, %s74
      %s89 = sphi 0, %s75
      %s93 = sphi 0, %s93
      %s95 = sphi 0, %s93
      %s96 = sphi 0, %s95
      %s110 = sphi 0, %s96
      %s114 = sphi 0, %s114
      %s116 = sphi 0, %s114
      %s117 = sphi 0, %s116
      %s131 = sphi 0, %s117
      %s135 = sphi 0, %s135
      %s137 = sphi 0, %s135
      %s138 = sphi 0, %s137
      %s152 = sphi 0, %s138
      %s156 = sphi 0, %s156
      %s158 = sphi 0, %s156
      %s159 = sphi 0, %s158
      %s173 = sphi 0, %s159
      %s177 = sphi 0, %s177
      %s179 = sphi 0, %s177
      %s180 = sphi 0, %s179
      %s194 = sphi 0, %s180
      %s200 = sphi 0, %s202
      %s203 = sphi 0, %s200
      %s204 = sphi 0, %s203
      %s220 = sphi 0, %s204
    $region4: #{senet_cnn_5day_forward.3} parent=1 // loop_header_branch
      %20 = sbr.rel (%p18) target = $region8
    $region5: #{senet_cnn_5day_forward.3} parent=1 // loop_body
      %s22 = ssub.s32 %s17, 1
      %s23 = ssub.s32 %s17, 2
      %s24 = sadd.s32 %s17, 1
      %s25 = ssub.s32 %s17, %s24
      %p26 = scmp.eq.s32.totalorder %s25, 0
      %s28 = sadd.s32 %s27, 1
      %s29 = scalar_select %p26, %s27, %s28
      %p32 = pneg %p26
      %p33 = scmp.eq.s32.totalorder %s17, 1
      %p34 = por %p32, %p33
      %p35 = scmp.ne.s32.totalorder %s27, %s30
      %p36 = scmp.eq.s32.totalorder %s17, 0
      %p37 = por %p35, %p36
      %p38 = scmp.ne.s32.totalorder %s27, %s30
      %p39 = scmp.eq.s32.totalorder %s22, 1
      %p40 = por %p38, %p39
      %p41 = scmp.ne.s32.totalorder %s30, %s31
      %p42 = scmp.eq.s32.totalorder %s22, 0
      %p43 = por %p41, %p42
      %p44 = scmp.ne.s32.totalorder %s30, %s31
      %p45 = scmp.eq.s32.totalorder %s23, 1
      %p46 = por %p44, %p45
      %p48 = scmp.ne.s32.totalorder %s31, %s47
      %p49 = scmp.eq.s32.totalorder %s23, 0
      %p50 = por %p48, %p49
      %s52 = sadd.s32 %s51, 1
      %p55 = scmp.eq.s32.totalorder %s17, 1
      %p56 = scmp.ne.s32.totalorder %s51, %s53
      %p57 = scmp.eq.s32.totalorder %s17, 0
      %p58 = por %p56, %p57
      %p59 = scmp.ne.s32.totalorder %s51, %s53
      %p60 = scmp.eq.s32.totalorder %s22, 1
      %p61 = por %p59, %p60
      %p62 = scmp.ne.s32.totalorder %s53, %s54
      %p63 = scmp.eq.s32.totalorder %s22, 0
      %p64 = por %p62, %p63
      %p65 = scmp.ne.s32.totalorder %s53, %s54
      %p66 = scmp.eq.s32.totalorder %s23, 1
      %p67 = por %p65, %p66
      %p69 = scmp.ne.s32.totalorder %s54, %s68
      %p70 = scmp.eq.s32.totalorder %s23, 0
      %p71 = por %p69, %p70
      %s73 = sadd.s32 %s72, 1
      %p76 = scmp.eq.s32.totalorder %s17, 1
      %p77 = scmp.ne.s32.totalorder %s72, %s74
      %p78 = scmp.eq.s32.totalorder %s17, 0
      %p79 = por %p77, %p78
      %p80 = scmp.ne.s32.totalorder %s72, %s74
      %p81 = scmp.eq.s32.totalorder %s22, 1
      %p82 = por %p80, %p81
      %p83 = scmp.ne.s32.totalorder %s74, %s75
      %p84 = scmp.eq.s32.totalorder %s22, 0
      %p85 = por %p83, %p84
      %p86 = scmp.ne.s32.totalorder %s74, %s75
      %p87 = scmp.eq.s32.totalorder %s23, 1
      %p88 = por %p86, %p87
      %p90 = scmp.ne.s32.totalorder %s75, %s89
      %p91 = scmp.eq.s32.totalorder %s23, 0
      %p92 = por %p90, %p91
      %s94 = sadd.s32 %s93, 1
      %p97 = scmp.eq.s32.totalorder %s17, 1
      %p98 = scmp.ne.s32.totalorder %s93, %s95
      %p99 = scmp.eq.s32.totalorder %s17, 0
      %p100 = por %p98, %p99
      %p101 = scmp.ne.s32.totalorder %s93, %s95
      %p102 = scmp.eq.s32.totalorder %s22, 1
      %p103 = por %p101, %p102
      %p104 = scmp.ne.s32.totalorder %s95, %s96
      %p105 = scmp.eq.s32.totalorder %s22, 0
      %p106 = por %p104, %p105
      %p107 = scmp.ne.s32.totalorder %s95, %s96
      %p108 = scmp.eq.s32.totalorder %s23, 1
      %p109 = por %p107, %p108
      %p111 = scmp.ne.s32.totalorder %s96, %s110
      %p112 = scmp.eq.s32.totalorder %s23, 0
      %p113 = por %p111, %p112
      %s115 = sadd.s32 %s114, 1
      %p118 = scmp.eq.s32.totalorder %s17, 1
      %p119 = scmp.ne.s32.totalorder %s114, %s116
      %p120 = scmp.eq.s32.totalorder %s17, 0
      %p121 = por %p119, %p120
      %p122 = scmp.ne.s32.totalorder %s114, %s116
      %p123 = scmp.eq.s32.totalorder %s22, 1
      %p124 = por %p122, %p123
      %p125 = scmp.ne.s32.totalorder %s116, %s117
      %p126 = scmp.eq.s32.totalorder %s22, 0
      %p127 = por %p125, %p126
      %p128 = scmp.ne.s32.totalorder %s116, %s117
      %p129 = scmp.eq.s32.totalorder %s23, 1
      %p130 = por %p128, %p129
      %p132 = scmp.ne.s32.totalorder %s117, %s131
      %p133 = scmp.eq.s32.totalorder %s23, 0
      %p134 = por %p132, %p133
      %s136 = sadd.s32 %s135, 1
      %p139 = scmp.eq.s32.totalorder %s17, 1
      %p140 = scmp.ne.s32.totalorder %s135, %s137
      %p141 = scmp.eq.s32.totalorder %s17, 0
      %p142 = por %p140, %p141
      %p143 = scmp.ne.s32.totalorder %s135, %s137
      %p144 = scmp.eq.s32.totalorder %s22, 1
      %p145 = por %p143, %p144
      %p146 = scmp.ne.s32.totalorder %s137, %s138
      %p147 = scmp.eq.s32.totalorder %s22, 0
      %p148 = por %p146, %p147
      %p149 = scmp.ne.s32.totalorder %s137, %s138
      %p150 = scmp.eq.s32.totalorder %s23, 1
      %p151 = por %p149, %p150
      %p153 = scmp.ne.s32.totalorder %s138, %s152
      %p154 = scmp.eq.s32.totalorder %s23, 0
      %p155 = por %p153, %p154
      %s157 = sadd.s32 %s156, 1
      %p160 = scmp.eq.s32.totalorder %s17, 1
      %p161 = scmp.ne.s32.totalorder %s156, %s158
      %p162 = scmp.eq.s32.totalorder %s17, 0
      %p163 = por %p161, %p162
      %p164 = scmp.ne.s32.totalorder %s156, %s158
      %p165 = scmp.eq.s32.totalorder %s22, 1
      %p166 = por %p164, %p165
      %p167 = scmp.ne.s32.totalorder %s158, %s159
      %p168 = scmp.eq.s32.totalorder %s22, 0
      %p169 = por %p167, %p168
      %p170 = scmp.ne.s32.totalorder %s158, %s159
      %p171 = scmp.eq.s32.totalorder %s23, 1
      %p172 = por %p170, %p171
      %p174 = scmp.ne.s32.totalorder %s159, %s173
      %p175 = scmp.eq.s32.totalorder %s23, 0
      %p176 = por %p174, %p175
      %s178 = sadd.s32 %s177, 1
      %p181 = scmp.eq.s32.totalorder %s17, 1
      %p182 = scmp.ne.s32.totalorder %s177, %s179
      %p183 = scmp.eq.s32.totalorder %s17, 0
      %p184 = por %p182, %p183
      %p185 = scmp.ne.s32.totalorder %s177, %s179
      %p186 = scmp.eq.s32.totalorder %s22, 1
      %p187 = por %p185, %p186
      %p188 = scmp.ne.s32.totalorder %s179, %s180
      %p189 = scmp.eq.s32.totalorder %s22, 0
      %p190 = por %p188, %p189
      %p191 = scmp.ne.s32.totalorder %s179, %s180
      %p192 = scmp.eq.s32.totalorder %s23, 1
      %p193 = por %p191, %p192
      %p195 = scmp.ne.s32.totalorder %s180, %s194
      %p196 = scmp.eq.s32.totalorder %s23, 0
      %p197 = por %p195, %p196
      %s198 = ssub.s32 %s17, %s24
      %p199 = scmp.eq.s32.totalorder %s198, 0
      %s201 = sadd.s32 %s200, 1
      %s202 = scalar_select %p199, %s200, %s201
      %p205 = pneg %p199
      %p206 = scmp.eq.s32.totalorder %s17, 1
      %p207 = por %p205, %p206
      %p208 = scmp.ne.s32.totalorder %s200, %s203
      %p209 = scmp.eq.s32.totalorder %s17, 0
      %p210 = por %p208, %p209
      %p211 = scmp.ne.s32.totalorder %s200, %s203
      %p212 = scmp.eq.s32.totalorder %s22, 1
      %p213 = por %p211, %p212
      %p214 = scmp.ne.s32.totalorder %s203, %s204
      %p215 = scmp.eq.s32.totalorder %s22, 0
      %p216 = por %p214, %p215
      %p217 = scmp.ne.s32.totalorder %s203, %s204
      %p218 = scmp.eq.s32.totalorder %s23, 1
      %p219 = por %p217, %p218
      %p221 = scmp.ne.s32.totalorder %s204, %s220
      %p222 = scmp.eq.s32.totalorder %s23, 0
      %p223 = por %p221, %p222
      %p224 = scmp.le.s32.totalorder 1, %s17
      %p225 = scmp.lt.s32.totalorder %s17, 3
      %p226 = pnand %p224, %p225
      %p227 = pneg %p226
      // Predicated region
      $region9: #{senet_cnn_5day_forward.3} parent=5 // pred_check
        _
      $region10: #{senet_cnn_5day_forward.3} parent=5 // pred_check_branch
        %229 = sbr.rel (%p226) target = $region12
      $region11: #{senet_cnn_5day_forward.3} parent=5 // pred_region
        %s230 = ssub.s32 %s17, 1
        // Predicated region
        $region13: #{senet_cnn_5day_forward.3} parent=11 // pred_check
          %p231 = pneg %p64
        $region14: #{senet_cnn_5day_forward.3} parent=11 // pred_check_branch
          %233 = sbr.rel (%p231) target = $region16
        $region15: #{senet_cnn_5day_forward.3} parent=11 // pred_region
          _
        $region16: #{senet_cnn_5day_forward.3} parent=11 // pred_fallthru
          _
        // Predicated region
        $region17: #{senet_cnn_5day_forward.3} parent=11 // pred_check
          %p234 = pneg %p85
        $region18: #{senet_cnn_5day_forward.3} parent=11 // pred_check_branch
          %236 = sbr.rel (%p234) target = $region20
        $region19: #{senet_cnn_5day_forward.3} parent=11 // pred_region
          _
        $region20: #{senet_cnn_5day_forward.3} parent=11 // pred_fallthru
          _
        // Predicated region
        $region21: #{senet_cnn_5day_forward.3} parent=11 // pred_check
          %p237 = pneg %p106
        $region22: #{senet_cnn_5day_forward.3} parent=11 // pred_check_branch
          %239 = sbr.rel (%p237) target = $region24
        $region23: #{senet_cnn_5day_forward.3} parent=11 // pred_region
          _
        $region24: #{senet_cnn_5day_forward.3} parent=11 // pred_fallthru
          _
        // Predicated region
        $region25: #{senet_cnn_5day_forward.3} parent=11 // pred_check
          %p240 = pneg %p127
        $region26: #{senet_cnn_5day_forward.3} parent=11 // pred_check_branch
          %242 = sbr.rel (%p240) target = $region28
        $region27: #{senet_cnn_5day_forward.3} parent=11 // pred_region
          _
        $region28: #{senet_cnn_5day_forward.3} parent=11 // pred_fallthru
          _
        // Predicated region
        $region29: #{senet_cnn_5day_forward.3} parent=11 // pred_check
          %p243 = pneg %p148
        $region30: #{senet_cnn_5day_forward.3} parent=11 // pred_check_branch
          %245 = sbr.rel (%p243) target = $region32
        $region31: #{senet_cnn_5day_forward.3} parent=11 // pred_region
          _
        $region32: #{senet_cnn_5day_forward.3} parent=11 // pred_fallthru
          _
        // Predicated region
        $region33: #{senet_cnn_5day_forward.3} parent=11 // pred_check
          %p246 = pneg %p169
        $region34: #{senet_cnn_5day_forward.3} parent=11 // pred_check_branch
          %248 = sbr.rel (%p246) target = $region36
        $region35: #{senet_cnn_5day_forward.3} parent=11 // pred_region
          _
        $region36: #{senet_cnn_5day_forward.3} parent=11 // pred_fallthru
          _
        // Predicated region
        $region37: #{senet_cnn_5day_forward.3} parent=11 // pred_check
          %p249 = pneg %p190
        $region38: #{senet_cnn_5day_forward.3} parent=11 // pred_check_branch
          %251 = sbr.rel (%p249) target = $region40
        $region39: #{senet_cnn_5day_forward.3} parent=11 // pred_region
          _
        $region40: #{senet_cnn_5day_forward.3} parent=11 // pred_fallthru
          _
      $region12: #{senet_cnn_5day_forward.3} parent=5 // pred_fallthru
        _
      %p252 = scmp.lt.s32.totalorder %s17, 2
      // Predicated region
      $region41: #{senet_cnn_5day_forward.3} parent=5 // pred_check
        %p253 = pneg %p252
      $region42: #{senet_cnn_5day_forward.3} parent=5 // pred_check_branch
        %255 = sbr.rel (%p253) target = $region44
      $region43: #{senet_cnn_5day_forward.3} parent=5 // pred_region
        // Predicated region
        $region45: #{senet_cnn_5day_forward.3} parent=43 // pred_check
          %p256 = pneg %p37
        $region46: #{senet_cnn_5day_forward.3} parent=43 // pred_check_branch
          %258 = sbr.rel (%p256) target = $region48
        $region47: #{senet_cnn_5day_forward.3} parent=43 // pred_region
          %p259 = scmp.lt.s32.totalorder %s17, 1
          %s260 = scalar_select %p259, %s17, 1
          %s261 = smul.addr %s260, 43
          %s262 = smul.addr %s261, 8
          %s263 = scalar_lea.vmem %s0, %s262
        $region48: #{senet_cnn_5day_forward.3} parent=43 // pred_fallthru
          _
      $region44: #{senet_cnn_5day_forward.3} parent=5 // pred_fallthru
        _
      %p264 = scmp.le.s32.totalorder 1, %s17
      %p265 = scmp.lt.s32.totalorder %s17, 3
      %p266 = pnand %p264, %p265
      %p267 = pneg %p266
      // Predicated region
      $region49: #{senet_cnn_5day_forward.3} parent=5 // pred_check
        _
      $region50: #{senet_cnn_5day_forward.3} parent=5 // pred_check_branch
        %269 = sbr.rel (%p266) target = $region52
      $region51: #{senet_cnn_5day_forward.3} parent=5 // pred_region
        %s270 = ssub.s32 %s17, 1
        %p271 = scmp.lt.s32.totalorder %s22, 1
        %s272 = scalar_select %p271, %s22, 1
        %s273 = smul.addr %s272, 43
        %s274 = smul.addr %s273, 8
        %s275 = scalar_lea.vmem %s0, %s274
        %p276 = pneg %p43
        %p277 = pneg %p40
        %p278 = pneg %p64
        %p279 = pneg %p61
        %p280 = pneg %p85
        %p281 = pneg %p82
        %p282 = pneg %p106
        %p283 = pneg %p103
        %p284 = pneg %p127
        %p285 = pneg %p124
        %p286 = pneg %p148
        %p287 = pneg %p145
        %p288 = pneg %p169
        %p289 = pneg %p166
        %p290 = pneg %p190
        %p291 = pneg %p187
        %p292 = pneg %p216
        %p293 = pneg %p213
        %s294 = sand.u32 %s203, 1
        %s295 = scalar_lea.sflag [#allocation4], %s294
        %s296 = sand.u32 %s203, 1
        %s297 = scalar_lea.vmem [#allocation3], %s296
        %p298 = scmp.lt.s32.totalorder %s22, 1
        %s299 = scalar_select %p298, %s22, 1
        %s300 = smul.addr %s299, 43
        %s301 = smul.addr %s300, 8
        %s302 = scalar_lea.vmem %s0, %s301
        %v303 = vld [vmem:[%s302] sm:$0xff]
        %v304 = vld [vmem:[%s302 + $0x8] sm:$0xff]
        %v305 = vld [vmem:[%s302 + $0x10] sm:$0xff]
        %v306 = vld [vmem:[%s302 + $0x18] sm:$0xff]
        %v307 = vld [vmem:[%s302 + $0x20] sm:$0xff]
        %v308 = vld [vmem:[%s302 + $0x28] sm:$0xff]
        %v309 = vld [vmem:[%s302 + $0x30] sm:$0xff]
        %v310 = vld [vmem:[%s302 + $0x38] sm:$0xff]
        %v311 = vld [vmem:[%s302 + $0x40] sm:$0xff]
        %v312 = vld [vmem:[%s302 + $0x48] sm:$0xff]
        %v313 = vld [vmem:[%s302 + $0x50] sm:$0xff]
        %v314 = vld [vmem:[%s302 + $0x58] sm:$0xff]
        %v315 = vld [vmem:[%s302 + $0x60] sm:$0xff]
        %v316 = vld [vmem:[%s302 + $0x68] sm:$0xff]
        %v317 = vld [vmem:[%s302 + $0x70] sm:$0xff]
        %v318 = vld [vmem:[%s302 + $0x78] sm:$0xff]
        %v319 = vld [vmem:[%s302 + $0x80] sm:$0xff]
        %v320 = vld [vmem:[%s302 + $0x88] sm:$0xff]
        %v321 = vld [vmem:[%s302 + $0x90] sm:$0xff]
        %v322 = vld [vmem:[%s302 + $0x98] sm:$0xff]
        %v323 = vld [vmem:[%s302 + $0xa0] sm:$0xff]
        %v324 = vld [vmem:[%s302 + $0xa8] sm:$0xff]
        %v325 = vld [vmem:[%s302 + $0xb0] sm:$0xff]
        %v326 = vld [vmem:[%s302 + $0xb8] sm:$0xff]
        %v327 = vld [vmem:[%s302 + $0xc0] sm:$0xff]
        %v328 = vld [vmem:[%s302 + $0xc8] sm:$0xff]
        %v329 = vld [vmem:[%s302 + $0xd0] sm:$0xff]
        %v330 = vld [vmem:[%s302 + $0xd8] sm:$0xff]
        %v331 = vld [vmem:[%s302 + $0xe0] sm:$0xff]
        %v332 = vld [vmem:[%s302 + $0xe8] sm:$0xff]
        %v333 = vld [vmem:[%s302 + $0xf0] sm:$0xff]
        %v334 = vld [vmem:[%s302 + $0xf8] sm:$0xff]
        %v335 = vld [vmem:[%s302 + $0x100] sm:$0xff]
        %v336 = vld [vmem:[%s302 + $0x108] sm:$0x3f]
        %v337 = vld [vmem:[%s1] sm:$0xff]
        %v338 = vld [vmem:[%s1 + $0x8] sm:$0xff]
        %v339 = vld [vmem:[%s1 + $0x10] sm:$0xff]
        %v340 = vld [vmem:[%s1 + $0x18] sm:$0xff]
        %v341 = vld [vmem:[%s1 + $0x20] sm:$0xff]
        %v342 = vld [vmem:[%s1 + $0x28] sm:$0xff]
        %v343 = vld [vmem:[%s1 + $0x30] sm:$0xff]
        %v344 = vld [vmem:[%s1 + $0x38] sm:$0xff]
        %v345 = vld [vmem:[%s302 + $0x1] sm:$0xff]
        %v346 = vld [vmem:[%s302 + $0x9] sm:$0xff]
        %v347 = vld [vmem:[%s302 + $0x11] sm:$0xff]
        %v348 = vld [vmem:[%s302 + $0x19] sm:$0xff]
        %v349 = vld [vmem:[%s302 + $0x21] sm:$0xff]
        %v350 = vld [vmem:[%s302 + $0x29] sm:$0xff]
        %v351 = vld [vmem:[%s302 + $0x31] sm:$0xff]
        %v352 = vld [vmem:[%s302 + $0x39] sm:$0xff]
        %v353 = vld [vmem:[%s302 + $0x41] sm:$0xff]
        %v354 = vld [vmem:[%s302 + $0x49] sm:$0xff]
        %v355 = vld [vmem:[%s302 + $0x51] sm:$0xff]
        %v356 = vld [vmem:[%s302 + $0x59] sm:$0xff]
        %v357 = vld [vmem:[%s302 + $0x61] sm:$0xff]
        %v358 = vld [vmem:[%s302 + $0x69] sm:$0xff]
        %v359 = vld [vmem:[%s302 + $0x71] sm:$0xff]
        %v360 = vld [vmem:[%s302 + $0x79] sm:$0xff]
        %v361 = vld [vmem:[%s302 + $0x81] sm:$0xff]
        %v362 = vld [vmem:[%s302 + $0x89] sm:$0xff]
        %v363 = vld [vmem:[%s302 + $0x91] sm:$0xff]
        %v364 = vld [vmem:[%s302 + $0x99] sm:$0xff]
        %v365 = vld [vmem:[%s302 + $0xa1] sm:$0xff]
        %v366 = vld [vmem:[%s302 + $0xa9] sm:$0xff]
        %v367 = vld [vmem:[%s302 + $0xb1] sm:$0xff]
        %v368 = vld [vmem:[%s302 + $0xb9] sm:$0xff]
        %v369 = vld [vmem:[%s302 + $0xc1] sm:$0xff]
        %v370 = vld [vmem:[%s302 + $0xc9] sm:$0xff]
        %v371 = vld [vmem:[%s302 + $0xd1] sm:$0xff]
        %v372 = vld [vmem:[%s302 + $0xd9] sm:$0xff]
        %v373 = vld [vmem:[%s302 + $0xe1] sm:$0xff]
        %v374 = vld [vmem:[%s302 + $0xe9] sm:$0xff]
        %v375 = vld [vmem:[%s302 + $0xf1] sm:$0xff]
        %v376 = vld [vmem:[%s302 + $0xf9] sm:$0xff]
        %v377 = vld [vmem:[%s302 + $0x101] sm:$0xff]
        %v378 = vld [vmem:[%s302 + $0x109] sm:$0x3f]
        %s379 = scalar_lea.vmem %s1, 64
        %v380 = vld [vmem:[%s379] sm:$0xff]
        %v381 = vld [vmem:[%s379 + $0x8] sm:$0xff]
        %v382 = vld [vmem:[%s379 + $0x10] sm:$0xff]
        %v383 = vld [vmem:[%s379 + $0x18] sm:$0xff]
        %v384 = vld [vmem:[%s379 + $0x20] sm:$0xff]
        %v385 = vld [vmem:[%s379 + $0x28] sm:$0xff]
        %v386 = vld [vmem:[%s379 + $0x30] sm:$0xff]
        %v387 = vld [vmem:[%s379 + $0x38] sm:$0xff]
        %vm388 = vcmask 523264
        %v390 = vsel %vm388, %v345, 0
        %v393 = vsel %vm388, %v346, 0
        %v396 = vsel %vm388, %v347, 0
        %v399 = vsel %vm388, %v348, 0
        %v402 = vsel %vm388, %v349, 0
        %v405 = vsel %vm388, %v350, 0
        %v408 = vsel %vm388, %v351, 0
        %v411 = vsel %vm388, %v352, 0
        %v414 = vsel %vm388, %v353, 0
        %v417 = vsel %vm388, %v354, 0
        %v420 = vsel %vm388, %v355, 0
        %v423 = vsel %vm388, %v356, 0
        %v426 = vsel %vm388, %v357, 0
        %v429 = vsel %vm388, %v358, 0
        %v432 = vsel %vm388, %v359, 0
        %v435 = vsel %vm388, %v360, 0
        %v438 = vsel %vm388, %v361, 0
        %v441 = vsel %vm388, %v362, 0
        %v444 = vsel %vm388, %v363, 0
        %v447 = vsel %vm388, %v364, 0
        %v450 = vsel %vm388, %v365, 0
        %v453 = vsel %vm388, %v366, 0
        %v456 = vsel %vm388, %v367, 0
        %v459 = vsel %vm388, %v368, 0
        %v462 = vsel %vm388, %v369, 0
        %v465 = vsel %vm388, %v370, 0
        %v468 = vsel %vm388, %v371, 0
        %v471 = vsel %vm388, %v372, 0
        %v474 = vsel %vm388, %v373, 0
        %v477 = vsel %vm388, %v374, 0
        %v480 = vsel %vm388, %v375, 0
        %v483 = vsel %vm388, %v376, 0
        %v486 = vsel %vm388, %v377, 0
        %v489 = vsel %vm388, %v378, 0
        %491 = vmatpush.msra.mxu0 0.0
        %492 = vmatpush.msra.mxu0 0.0
        %493 = vmatpush.msra.mxu0 0.0
        %494 = vmatpush.msra.mxu0 0.0
        %495 = vmatpush.msra.mxu0 0.0
        %496 = vmatpush.msra.mxu0 0.0
        %497 = vmatpush.msra.mxu0 0.0
        %498 = vmatpush.msra.mxu0 0.0
        %499 = vmatpush.msra.mxu0 %v387
        %500 = vmatpush.msra.mxu0 %v386
        %501 = vmatpush.msra.mxu0 %v385
        %502 = vmatpush.msra.mxu0 %v384
        %503 = vmatpush.msra.mxu0 %v383
        %504 = vmatpush.msra.mxu0 %v382
        %505 = vmatpush.msra.mxu0 %v381
        %506 = vmatpush.msra.mxu0 %v380
        %507 = vmatmul.f32.gmra.mxu0 %v390
        %v508 = vpop.f32.mrf.mxu0
        %v509 = vadd.f32 0.0, %v508
        %510 = vmatmul.f32.gmra.mxu0 %v393
        %v511 = vpop.f32.mrf.mxu0
        %v512 = vadd.f32 0.0, %v511
        %513 = vmatmul.f32.gmra.mxu0 %v396
        %v514 = vpop.f32.mrf.mxu0
        %v515 = vadd.f32 0.0, %v514
        %516 = vmatmul.f32.gmra.mxu0 %v399
        %v517 = vpop.f32.mrf.mxu0
        %v518 = vadd.f32 0.0, %v517
        %519 = vmatmul.f32.gmra.mxu0 %v402
        %v520 = vpop.f32.mrf.mxu0
        %v521 = vadd.f32 0.0, %v520
        %522 = vmatmul.f32.gmra.mxu0 %v405
        %v523 = vpop.f32.mrf.mxu0
        %v524 = vadd.f32 0.0, %v523
        %525 = vmatmul.f32.gmra.mxu0 %v408
        %v526 = vpop.f32.mrf.mxu0
        %v527 = vadd.f32 0.0, %v526
        %528 = vmatmul.f32.gmra.mxu0 %v411
        %v529 = vpop.f32.mrf.mxu0
        %v530 = vadd.f32 0.0, %v529
        %531 = vmatmul.f32.gmra.mxu0 %v414
        %v532 = vpop.f32.mrf.mxu0
        %v533 = vadd.f32 0.0, %v532
        %534 = vmatmul.f32.gmra.mxu0 %v417
        %v535 = vpop.f32.mrf.mxu0
        %v536 = vadd.f32 0.0, %v535
        %537 = vmatmul.f32.gmra.mxu0 %v420
        %v538 = vpop.f32.mrf.mxu0
        %v539 = vadd.f32 0.0, %v538
        %540 = vmatmul.f32.gmra.mxu0 %v423
        %v541 = vpop.f32.mrf.mxu0
        %v542 = vadd.f32 0.0, %v541
        %543 = vmatmul.f32.gmra.mxu0 %v426
        %v544 = vpop.f32.mrf.mxu0
        %v545 = vadd.f32 0.0, %v544
        %546 = vmatmul.f32.gmra.mxu0 %v429
        %v547 = vpop.f32.mrf.mxu0
        %v548 = vadd.f32 0.0, %v547
        %549 = vmatmul.f32.gmra.mxu0 %v432
        %v550 = vpop.f32.mrf.mxu0
        %v551 = vadd.f32 0.0, %v550
        %552 = vmatmul.f32.gmra.mxu0 %v435
        %v553 = vpop.f32.mrf.mxu0
        %v554 = vadd.f32 0.0, %v553
        %555 = vmatmul.f32.gmra.mxu0 %v438
        %v556 = vpop.f32.mrf.mxu0
        %v557 = vadd.f32 0.0, %v556
        %558 = vmatmul.f32.gmra.mxu0 %v441
        %v559 = vpop.f32.mrf.mxu0
        %v560 = vadd.f32 0.0, %v559
        %561 = vmatmul.f32.gmra.mxu0 %v444
        %v562 = vpop.f32.mrf.mxu0
        %v563 = vadd.f32 0.0, %v562
        %564 = vmatmul.f32.gmra.mxu0 %v447
        %v565 = vpop.f32.mrf.mxu0
        %v566 = vadd.f32 0.0, %v565
        %567 = vmatmul.f32.gmra.mxu0 %v450
        %v568 = vpop.f32.mrf.mxu0
        %v569 = vadd.f32 0.0, %v568
        %570 = vmatmul.f32.gmra.mxu0 %v453
        %v571 = vpop.f32.mrf.mxu0
        %v572 = vadd.f32 0.0, %v571
        %573 = vmatmul.f32.gmra.mxu0 %v456
        %v574 = vpop.f32.mrf.mxu0
        %v575 = vadd.f32 0.0, %v574
        %576 = vmatmul.f32.gmra.mxu0 %v459
        %v577 = vpop.f32.mrf.mxu0
        %v578 = vadd.f32 0.0, %v577
        %579 = vmatmul.f32.gmra.mxu0 %v462
        %v580 = vpop.f32.mrf.mxu0
        %v581 = vadd.f32 0.0, %v580
        %582 = vmatmul.f32.gmra.mxu0 %v465
        %v583 = vpop.f32.mrf.mxu0
        %v584 = vadd.f32 0.0, %v583
        %585 = vmatmul.f32.gmra.mxu0 %v468
        %v586 = vpop.f32.mrf.mxu0
        %v587 = vadd.f32 0.0, %v586
        %588 = vmatmul.f32.gmra.mxu0 %v471
        %v589 = vpop.f32.mrf.mxu0
        %v590 = vadd.f32 0.0, %v589
        %591 = vmatmul.f32.gmra.mxu0 %v474
        %v592 = vpop.f32.mrf.mxu0
        %v593 = vadd.f32 0.0, %v592
        %594 = vmatmul.f32.gmra.mxu0 %v477
        %v595 = vpop.f32.mrf.mxu0
        %v596 = vadd.f32 0.0, %v595
        %597 = vmatmul.f32.gmra.mxu0 %v480
        %v598 = vpop.f32.mrf.mxu0
        %v599 = vadd.f32 0.0, %v598
        %600 = vmatmul.f32.gmra.mxu0 %v483
        %v601 = vpop.f32.mrf.mxu0
        %v602 = vadd.f32 0.0, %v601
        %603 = vmatmul.f32.gmra.mxu0 %v486
        %v604 = vpop.f32.mrf.mxu0
        %v605 = vadd.f32 0.0, %v604
        %606 = vmatmul.f32.gmra.mxu0 %v489
        %v607 = vpop.f32.mrf.mxu0
        %v608 = vadd.f32 0.0, %v607
        %609 = vdwg.mxu0
        %v611 = vsel %vm388, %v303, 0
        %v614 = vsel %vm388, %v304, 0
        %v617 = vsel %vm388, %v305, 0
        %v620 = vsel %vm388, %v306, 0
        %v623 = vsel %vm388, %v307, 0
        %v626 = vsel %vm388, %v308, 0
        %v629 = vsel %vm388, %v309, 0
        %v632 = vsel %vm388, %v310, 0
        %v635 = vsel %vm388, %v311, 0
        %v638 = vsel %vm388, %v312, 0
        %v641 = vsel %vm388, %v313, 0
        %v644 = vsel %vm388, %v314, 0
        %v647 = vsel %vm388, %v315, 0
        %v650 = vsel %vm388, %v316, 0
        %v653 = vsel %vm388, %v317, 0
        %v656 = vsel %vm388, %v318, 0
        %v659 = vsel %vm388, %v319, 0
        %v662 = vsel %vm388, %v320, 0
        %v665 = vsel %vm388, %v321, 0
        %v668 = vsel %vm388, %v322, 0
        %v671 = vsel %vm388, %v323, 0
        %v674 = vsel %vm388, %v324, 0
        %v677 = vsel %vm388, %v325, 0
        %v680 = vsel %vm388, %v326, 0
        %v683 = vsel %vm388, %v327, 0
        %v686 = vsel %vm388, %v328, 0
        %v689 = vsel %vm388, %v329, 0
        %v692 = vsel %vm388, %v330, 0
        %v695 = vsel %vm388, %v331, 0
        %v698 = vsel %vm388, %v332, 0
        %v701 = vsel %vm388, %v333, 0
        %v704 = vsel %vm388, %v334, 0
        %v707 = vsel %vm388, %v335, 0
        %v710 = vsel %vm388, %v336, 0
        %712 = vmatpush.msra.mxu0 0.0
        %713 = vmatpush.msra.mxu0 0.0
        %714 = vmatpush.msra.mxu0 0.0
        %715 = vmatpush.msra.mxu0 0.0
        %716 = vmatpush.msra.mxu0 0.0
        %717 = vmatpush.msra.mxu0 0.0
        %718 = vmatpush.msra.mxu0 0.0
        %719 = vmatpush.msra.mxu0 0.0
        %720 = vmatpush.msra.mxu0 %v344
        %721 = vmatpush.msra.mxu0 %v343
        %722 = vmatpush.msra.mxu0 %v342
        %723 = vmatpush.msra.mxu0 %v341
        %724 = vmatpush.msra.mxu0 %v340
        %725 = vmatpush.msra.mxu0 %v339
        %726 = vmatpush.msra.mxu0 %v338
        %727 = vmatpush.msra.mxu0 %v337
        %728 = vmatmul.f32.gmra.mxu0 %v611
        %v729 = vpop.f32.mrf.mxu0
        %v730 = vadd.f32 %v509, %v729
        %731 = vmatmul.f32.gmra.mxu0 %v614
        %v732 = vpop.f32.mrf.mxu0
        %v733 = vadd.f32 %v512, %v732
        %734 = vmatmul.f32.gmra.mxu0 %v617
        %v735 = vpop.f32.mrf.mxu0
        %v736 = vadd.f32 %v515, %v735
        %737 = vmatmul.f32.gmra.mxu0 %v620
        %v738 = vpop.f32.mrf.mxu0
        %v739 = vadd.f32 %v518, %v738
        %740 = vmatmul.f32.gmra.mxu0 %v623
        %v741 = vpop.f32.mrf.mxu0
        %v742 = vadd.f32 %v521, %v741
        %743 = vmatmul.f32.gmra.mxu0 %v626
        %v744 = vpop.f32.mrf.mxu0
        %v745 = vadd.f32 %v524, %v744
        %746 = vmatmul.f32.gmra.mxu0 %v629
        %v747 = vpop.f32.mrf.mxu0
        %v748 = vadd.f32 %v527, %v747
        %749 = vmatmul.f32.gmra.mxu0 %v632
        %v750 = vpop.f32.mrf.mxu0
        %v751 = vadd.f32 %v530, %v750
        %752 = vmatmul.f32.gmra.mxu0 %v635
        %v753 = vpop.f32.mrf.mxu0
        %v754 = vadd.f32 %v533, %v753
        %755 = vmatmul.f32.gmra.mxu0 %v638
        %v756 = vpop.f32.mrf.mxu0
        %v757 = vadd.f32 %v536, %v756
        %758 = vmatmul.f32.gmra.mxu0 %v641
        %v759 = vpop.f32.mrf.mxu0
        %v760 = vadd.f32 %v539, %v759
        %761 = vmatmul.f32.gmra.mxu0 %v644
        %v762 = vpop.f32.mrf.mxu0
        %v763 = vadd.f32 %v542, %v762
        %764 = vmatmul.f32.gmra.mxu0 %v647
        %v765 = vpop.f32.mrf.mxu0
        %v766 = vadd.f32 %v545, %v765
        %767 = vmatmul.f32.gmra.mxu0 %v650
        %v768 = vpop.f32.mrf.mxu0
        %v769 = vadd.f32 %v548, %v768
        %770 = vmatmul.f32.gmra.mxu0 %v653
        %v771 = vpop.f32.mrf.mxu0
        %v772 = vadd.f32 %v551, %v771
        %773 = vmatmul.f32.gmra.mxu0 %v656
        %v774 = vpop.f32.mrf.mxu0
        %v775 = vadd.f32 %v554, %v774
        %776 = vmatmul.f32.gmra.mxu0 %v659
        %v777 = vpop.f32.mrf.mxu0
        %v778 = vadd.f32 %v557, %v777
        %779 = vmatmul.f32.gmra.mxu0 %v662
        %v780 = vpop.f32.mrf.mxu0
        %v781 = vadd.f32 %v560, %v780
        %782 = vmatmul.f32.gmra.mxu0 %v665
        %v783 = vpop.f32.mrf.mxu0
        %v784 = vadd.f32 %v563, %v783
        %785 = vmatmul.f32.gmra.mxu0 %v668
        %v786 = vpop.f32.mrf.mxu0
        %v787 = vadd.f32 %v566, %v786
        %788 = vmatmul.f32.gmra.mxu0 %v671
        %v789 = vpop.f32.mrf.mxu0
        %v790 = vadd.f32 %v569, %v789
        %791 = vmatmul.f32.gmra.mxu0 %v674
        %v792 = vpop.f32.mrf.mxu0
        %v793 = vadd.f32 %v572, %v792
        %794 = vmatmul.f32.gmra.mxu0 %v677
        %v795 = vpop.f32.mrf.mxu0
        %v796 = vadd.f32 %v575, %v795
        %797 = vmatmul.f32.gmra.mxu0 %v680
        %v798 = vpop.f32.mrf.mxu0
        %v799 = vadd.f32 %v578, %v798
        %800 = vmatmul.f32.gmra.mxu0 %v683
        %v801 = vpop.f32.mrf.mxu0
        %v802 = vadd.f32 %v581, %v801
        %803 = vmatmul.f32.gmra.mxu0 %v686
        %v804 = vpop.f32.mrf.mxu0
        %v805 = vadd.f32 %v584, %v804
        %806 = vmatmul.f32.gmra.mxu0 %v689
        %v807 = vpop.f32.mrf.mxu0
        %v808 = vadd.f32 %v587, %v807
        %809 = vmatmul.f32.gmra.mxu0 %v692
        %v810 = vpop.f32.mrf.mxu0
        %v811 = vadd.f32 %v590, %v810
        %812 = vmatmul.f32.gmra.mxu0 %v695
        %v813 = vpop.f32.mrf.mxu0
        %v814 = vadd.f32 %v593, %v813
        %815 = vmatmul.f32.gmra.mxu0 %v698
        %v816 = vpop.f32.mrf.mxu0
        %v817 = vadd.f32 %v596, %v816
        %818 = vmatmul.f32.gmra.mxu0 %v701
        %v819 = vpop.f32.mrf.mxu0
        %v820 = vadd.f32 %v599, %v819
        %821 = vmatmul.f32.gmra.mxu0 %v704
        %v822 = vpop.f32.mrf.mxu0
        %v823 = vadd.f32 %v602, %v822
        %824 = vmatmul.f32.gmra.mxu0 %v707
        %v825 = vpop.f32.mrf.mxu0
        %v826 = vadd.f32 %v605, %v825
        %827 = vmatmul.f32.gmra.mxu0 %v710
        %v828 = vpop.f32.mrf.mxu0
        %v829 = vadd.f32 %v608, %v828
        %830 = vdwg.mxu0
        %v831 = vld [vmem:[%s302 + $0x2] sm:$0xff]
        %v832 = vld [vmem:[%s302 + $0xa] sm:$0xff]
        %v833 = vld [vmem:[%s302 + $0x12] sm:$0xff]
        %v834 = vld [vmem:[%s302 + $0x1a] sm:$0xff]
        %v835 = vld [vmem:[%s302 + $0x22] sm:$0xff]
        %v836 = vld [vmem:[%s302 + $0x2a] sm:$0xff]
        %v837 = vld [vmem:[%s302 + $0x32] sm:$0xff]
        %v838 = vld [vmem:[%s302 + $0x3a] sm:$0xff]
        %v839 = vld [vmem:[%s302 + $0x42] sm:$0xff]
        %v840 = vld [vmem:[%s302 + $0x4a] sm:$0xff]
        %v841 = vld [vmem:[%s302 + $0x52] sm:$0xff]
        %v842 = vld [vmem:[%s302 + $0x5a] sm:$0xff]
        %v843 = vld [vmem:[%s302 + $0x62] sm:$0xff]
        %v844 = vld [vmem:[%s302 + $0x6a] sm:$0xff]
        %v845 = vld [vmem:[%s302 + $0x72] sm:$0xff]
        %v846 = vld [vmem:[%s302 + $0x7a] sm:$0xff]
        %v847 = vld [vmem:[%s302 + $0x82] sm:$0xff]
        %v848 = vld [vmem:[%s302 + $0x8a] sm:$0xff]
        %v849 = vld [vmem:[%s302 + $0x92] sm:$0xff]
        %v850 = vld [vmem:[%s302 + $0x9a] sm:$0xff]
        %v851 = vld [vmem:[%s302 + $0xa2] sm:$0xff]
        %v852 = vld [vmem:[%s302 + $0xaa] sm:$0xff]
        %v853 = vld [vmem:[%s302 + $0xb2] sm:$0xff]
        %v854 = vld [vmem:[%s302 + $0xba] sm:$0xff]
        %v855 = vld [vmem:[%s302 + $0xc2] sm:$0xff]
        %v856 = vld [vmem:[%s302 + $0xca] sm:$0xff]
        %v857 = vld [vmem:[%s302 + $0xd2] sm:$0xff]
        %v858 = vld [vmem:[%s302 + $0xda] sm:$0xff]
        %v859 = vld [vmem:[%s302 + $0xe2] sm:$0xff]
        %v860 = vld [vmem:[%s302 + $0xea] sm:$0xff]
        %v861 = vld [vmem:[%s302 + $0xf2] sm:$0xff]
        %v862 = vld [vmem:[%s302 + $0xfa] sm:$0xff]
        %v863 = vld [vmem:[%s302 + $0x102] sm:$0xff]
        %v864 = vld [vmem:[%s302 + $0x10a] sm:$0x3f]
        %s865 = scalar_lea.vmem %s1, 128
        %v866 = vld [vmem:[%s865] sm:$0xff]
        %v867 = vld [vmem:[%s865 + $0x8] sm:$0xff]
        %v868 = vld [vmem:[%s865 + $0x10] sm:$0xff]
        %v869 = vld [vmem:[%s865 + $0x18] sm:$0xff]
        %v870 = vld [vmem:[%s865 + $0x20] sm:$0xff]
        %v871 = vld [vmem:[%s865 + $0x28] sm:$0xff]
        %v872 = vld [vmem:[%s865 + $0x30] sm:$0xff]
        %v873 = vld [vmem:[%s865 + $0x38] sm:$0xff]
        %v875 = vsel %vm388, %v831, 0
        %v878 = vsel %vm388, %v832, 0
        %v881 = vsel %vm388, %v833, 0
        %v884 = vsel %vm388, %v834, 0
        %v887 = vsel %vm388, %v835, 0
        %v890 = vsel %vm388, %v836, 0
        %v893 = vsel %vm388, %v837, 0
        %v896 = vsel %vm388, %v838, 0
        %v899 = vsel %vm388, %v839, 0
        %v902 = vsel %vm388, %v840, 0
        %v905 = vsel %vm388, %v841, 0
        %v908 = vsel %vm388, %v842, 0
        %v911 = vsel %vm388, %v843, 0
        %v914 = vsel %vm388, %v844, 0
        %v917 = vsel %vm388, %v845, 0
        %v920 = vsel %vm388, %v846, 0
        %v923 = vsel %vm388, %v847, 0
        %v926 = vsel %vm388, %v848, 0
        %v929 = vsel %vm388, %v849, 0
        %v932 = vsel %vm388, %v850, 0
        %v935 = vsel %vm388, %v851, 0
        %v938 = vsel %vm388, %v852, 0
        %v941 = vsel %vm388, %v853, 0
        %v944 = vsel %vm388, %v854, 0
        %v947 = vsel %vm388, %v855, 0
        %v950 = vsel %vm388, %v856, 0
        %v953 = vsel %vm388, %v857, 0
        %v956 = vsel %vm388, %v858, 0
        %v959 = vsel %vm388, %v859, 0
        %v962 = vsel %vm388, %v860, 0
        %v965 = vsel %vm388, %v861, 0
        %v968 = vsel %vm388, %v862, 0
        %v971 = vsel %vm388, %v863, 0
        %v974 = vsel %vm388, %v864, 0
        %976 = vmatpush.msra.mxu0 0.0
        %977 = vmatpush.msra.mxu0 0.0
        %978 = vmatpush.msra.mxu0 0.0
        %979 = vmatpush.msra.mxu0 0.0
        %980 = vmatpush.msra.mxu0 0.0
        %981 = vmatpush.msra.mxu0 0.0
        %982 = vmatpush.msra.mxu0 0.0
        %983 = vmatpush.msra.mxu0 0.0
        %984 = vmatpush.msra.mxu0 %v873
        %985 = vmatpush.msra.mxu0 %v872
        %986 = vmatpush.msra.mxu0 %v871
        %987 = vmatpush.msra.mxu0 %v870
        %988 = vmatpush.msra.mxu0 %v869
        %989 = vmatpush.msra.mxu0 %v868
        %990 = vmatpush.msra.mxu0 %v867
        %991 = vmatpush.msra.mxu0 %v866
        %992 = vmatmul.f32.gmra.mxu0 %v875
        %v993 = vpop.f32.mrf.mxu0
        %v994 = vadd.f32 0.0, %v993
        %995 = vmatmul.f32.gmra.mxu0 %v878
        %v996 = vpop.f32.mrf.mxu0
        %v997 = vadd.f32 0.0, %v996
        %998 = vmatmul.f32.gmra.mxu0 %v881
        %v999 = vpop.f32.mrf.mxu0
        %v1000 = vadd.f32 0.0, %v999
        %1001 = vmatmul.f32.gmra.mxu0 %v884
        %v1002 = vpop.f32.mrf.mxu0
        %v1003 = vadd.f32 0.0, %v1002
        %1004 = vmatmul.f32.gmra.mxu0 %v887
        %v1005 = vpop.f32.mrf.mxu0
        %v1006 = vadd.f32 0.0, %v1005
        %1007 = vmatmul.f32.gmra.mxu0 %v890
        %v1008 = vpop.f32.mrf.mxu0
        %v1009 = vadd.f32 0.0, %v1008
        %1010 = vmatmul.f32.gmra.mxu0 %v893
        %v1011 = vpop.f32.mrf.mxu0
        %v1012 = vadd.f32 0.0, %v1011
        %1013 = vmatmul.f32.gmra.mxu0 %v896
        %v1014 = vpop.f32.mrf.mxu0
        %v1015 = vadd.f32 0.0, %v1014
        %1016 = vmatmul.f32.gmra.mxu0 %v899
        %v1017 = vpop.f32.mrf.mxu0
        %v1018 = vadd.f32 0.0, %v1017
        %1019 = vmatmul.f32.gmra.mxu0 %v902
        %v1020 = vpop.f32.mrf.mxu0
        %v1021 = vadd.f32 0.0, %v1020
        %1022 = vmatmul.f32.gmra.mxu0 %v905
        %v1023 = vpop.f32.mrf.mxu0
        %v1024 = vadd.f32 0.0, %v1023
        %1025 = vmatmul.f32.gmra.mxu0 %v908
        %v1026 = vpop.f32.mrf.mxu0
        %v1027 = vadd.f32 0.0, %v1026
        %1028 = vmatmul.f32.gmra.mxu0 %v911
        %v1029 = vpop.f32.mrf.mxu0
        %v1030 = vadd.f32 0.0, %v1029
        %1031 = vmatmul.f32.gmra.mxu0 %v914
        %v1032 = vpop.f32.mrf.mxu0
        %v1033 = vadd.f32 0.0, %v1032
        %1034 = vmatmul.f32.gmra.mxu0 %v917
        %v1035 = vpop.f32.mrf.mxu0
        %v1036 = vadd.f32 0.0, %v1035
        %1037 = vmatmul.f32.gmra.mxu0 %v920
        %v1038 = vpop.f32.mrf.mxu0
        %v1039 = vadd.f32 0.0, %v1038
        %1040 = vmatmul.f32.gmra.mxu0 %v923
        %v1041 = vpop.f32.mrf.mxu0
        %v1042 = vadd.f32 0.0, %v1041
        %1043 = vmatmul.f32.gmra.mxu0 %v926
        %v1044 = vpop.f32.mrf.mxu0
        %v1045 = vadd.f32 0.0, %v1044
        %1046 = vmatmul.f32.gmra.mxu0 %v929
        %v1047 = vpop.f32.mrf.mxu0
        %v1048 = vadd.f32 0.0, %v1047
        %1049 = vmatmul.f32.gmra.mxu0 %v932
        %v1050 = vpop.f32.mrf.mxu0
        %v1051 = vadd.f32 0.0, %v1050
        %1052 = vmatmul.f32.gmra.mxu0 %v935
        %v1053 = vpop.f32.mrf.mxu0
        %v1054 = vadd.f32 0.0, %v1053
        %1055 = vmatmul.f32.gmra.mxu0 %v938
        %v1056 = vpop.f32.mrf.mxu0
        %v1057 = vadd.f32 0.0, %v1056
        %1058 = vmatmul.f32.gmra.mxu0 %v941
        %v1059 = vpop.f32.mrf.mxu0
        %v1060 = vadd.f32 0.0, %v1059
        %1061 = vmatmul.f32.gmra.mxu0 %v944
        %v1062 = vpop.f32.mrf.mxu0
        %v1063 = vadd.f32 0.0, %v1062
        %1064 = vmatmul.f32.gmra.mxu0 %v947
        %v1065 = vpop.f32.mrf.mxu0
        %v1066 = vadd.f32 0.0, %v1065
        %1067 = vmatmul.f32.gmra.mxu0 %v950
        %v1068 = vpop.f32.mrf.mxu0
        %v1069 = vadd.f32 0.0, %v1068
        %1070 = vmatmul.f32.gmra.mxu0 %v953
        %v1071 = vpop.f32.mrf.mxu0
        %v1072 = vadd.f32 0.0, %v1071
        %1073 = vmatmul.f32.gmra.mxu0 %v956
        %v1074 = vpop.f32.mrf.mxu0
        %v1075 = vadd.f32 0.0, %v1074
        %1076 = vmatmul.f32.gmra.mxu0 %v959
        %v1077 = vpop.f32.mrf.mxu0
        %v1078 = vadd.f32 0.0, %v1077
        %1079 = vmatmul.f32.gmra.mxu0 %v962
        %v1080 = vpop.f32.mrf.mxu0
        %v1081 = vadd.f32 0.0, %v1080
        %1082 = vmatmul.f32.gmra.mxu0 %v965
        %v1083 = vpop.f32.mrf.mxu0
        %v1084 = vadd.f32 0.0, %v1083
        %1085 = vmatmul.f32.gmra.mxu0 %v968
        %v1086 = vpop.f32.mrf.mxu0
        %v1087 = vadd.f32 0.0, %v1086
        %1088 = vmatmul.f32.gmra.mxu0 %v971
        %v1089 = vpop.f32.mrf.mxu0
        %v1090 = vadd.f32 0.0, %v1089
        %1091 = vmatmul.f32.gmra.mxu0 %v974
        %v1092 = vpop.f32.mrf.mxu0
        %v1093 = vadd.f32 0.0, %v1092
        %1094 = vdwg.mxu0
        %v1095 = vadd.f32 %v730, %v994
        %v1096 = vadd.f32 %v733, %v997
        %v1097 = vadd.f32 %v736, %v1000
        %v1098 = vadd.f32 %v739, %v1003
        %v1099 = vadd.f32 %v742, %v1006
        %v1100 = vadd.f32 %v745, %v1009
        %v1101 = vadd.f32 %v748, %v1012
        %v1102 = vadd.f32 %v751, %v1015
        %v1103 = vadd.f32 %v754, %v1018
        %v1104 = vadd.f32 %v757, %v1021
        %v1105 = vadd.f32 %v760, %v1024
        %v1106 = vadd.f32 %v763, %v1027
        %v1107 = vadd.f32 %v766, %v1030
        %v1108 = vadd.f32 %v769, %v1033
        %v1109 = vadd.f32 %v772, %v1036
        %v1110 = vadd.f32 %v775, %v1039
        %v1111 = vadd.f32 %v778, %v1042
        %v1112 = vadd.f32 %v781, %v1045
        %v1113 = vadd.f32 %v784, %v1048
        %v1114 = vadd.f32 %v787, %v1051
        %v1115 = vadd.f32 %v790, %v1054
        %v1116 = vadd.f32 %v793, %v1057
        %v1117 = vadd.f32 %v796, %v1060
        %v1118 = vadd.f32 %v799, %v1063
        %v1119 = vadd.f32 %v802, %v1066
        %v1120 = vadd.f32 %v805, %v1069
        %v1121 = vadd.f32 %v808, %v1072
        %v1122 = vadd.f32 %v811, %v1075
        %v1123 = vadd.f32 %v814, %v1078
        %v1124 = vadd.f32 %v817, %v1081
        %v1125 = vadd.f32 %v820, %v1084
        %v1126 = vadd.f32 %v823, %v1087
        %v1127 = vadd.f32 %v826, %v1090
        %v1128 = vadd.f32 %v829, %v1093
        %v1129 = vld [vmem:[%s302 + $0x11] sm:$0xff]
        %v1130 = vld [vmem:[%s302 + $0x19] sm:$0xff]
        %v1131 = vld [vmem:[%s302 + $0x21] sm:$0xff]
        %v1132 = vld [vmem:[%s302 + $0x29] sm:$0xff]
        %v1133 = vld [vmem:[%s302 + $0x31] sm:$0xff]
        %v1134 = vld [vmem:[%s302 + $0x39] sm:$0xff]
        %v1135 = vld [vmem:[%s302 + $0x41] sm:$0xff]
        %v1136 = vld [vmem:[%s302 + $0x49] sm:$0xff]
        %v1137 = vld [vmem:[%s302 + $0x51] sm:$0xff]
        %v1138 = vld [vmem:[%s302 + $0x59] sm:$0xff]
        %v1139 = vld [vmem:[%s302 + $0x61] sm:$0xff]
        %v1140 = vld [vmem:[%s302 + $0x69] sm:$0xff]
        %v1141 = vld [vmem:[%s302 + $0x71] sm:$0xff]
        %v1142 = vld [vmem:[%s302 + $0x79] sm:$0xff]
        %v1143 = vld [vmem:[%s302 + $0x81] sm:$0xff]
        %v1144 = vld [vmem:[%s302 + $0x89] sm:$0xff]
        %v1145 = vld [vmem:[%s302 + $0x91] sm:$0xff]
        %v1146 = vld [vmem:[%s302 + $0x99] sm:$0xff]
        %v1147 = vld [vmem:[%s302 + $0xa1] sm:$0xff]
        %v1148 = vld [vmem:[%s302 + $0xa9] sm:$0xff]
        %v1149 = vld [vmem:[%s302 + $0xb1] sm:$0xff]
        %v1150 = vld [vmem:[%s302 + $0xb9] sm:$0xff]
        %v1151 = vld [vmem:[%s302 + $0xc1] sm:$0xff]
        %v1152 = vld [vmem:[%s302 + $0xc9] sm:$0xff]
        %v1153 = vld [vmem:[%s302 + $0xd1] sm:$0xff]
        %v1154 = vld [vmem:[%s302 + $0xd9] sm:$0xff]
        %v1155 = vld [vmem:[%s302 + $0xe1] sm:$0xff]
        %v1156 = vld [vmem:[%s302 + $0xe9] sm:$0xff]
        %v1157 = vld [vmem:[%s302 + $0xf1] sm:$0xff]
        %v1158 = vld [vmem:[%s302 + $0xf9] sm:$0xff]
        %v1159 = vld [vmem:[%s302 + $0x101] sm:$0xff]
        %v1160 = vld [vmem:[%s302 + $0x109] sm:$0xff]
        %v1161 = vld [vmem:[%s302 + $0x111] sm:$0xff]
        %v1162 = vld [vmem:[%s302 + $0x119] sm:$0x3f]
        %s1163 = scalar_lea.vmem %s1, 192
        %v1164 = vld [vmem:[%s1163] sm:$0xff]
        %v1165 = vld [vmem:[%s1163 + $0x8] sm:$0xff]
        %v1166 = vld [vmem:[%s1163 + $0x10] sm:$0xff]
        %v1167 = vld [vmem:[%s1163 + $0x18] sm:$0xff]
        %v1168 = vld [vmem:[%s1163 + $0x20] sm:$0xff]
        %v1169 = vld [vmem:[%s1163 + $0x28] sm:$0xff]
        %v1170 = vld [vmem:[%s1163 + $0x30] sm:$0xff]
        %v1171 = vld [vmem:[%s1163 + $0x38] sm:$0xff]
        %v1173 = vsel %vm388, %v1129, 0
        %v1176 = vsel %vm388, %v1130, 0
        %v1179 = vsel %vm388, %v1131, 0
        %v1182 = vsel %vm388, %v1132, 0
        %v1185 = vsel %vm388, %v1133, 0
        %v1188 = vsel %vm388, %v1134, 0
        %v1191 = vsel %vm388, %v1135, 0
        %v1194 = vsel %vm388, %v1136, 0
        %v1197 = vsel %vm388, %v1137, 0
        %v1200 = vsel %vm388, %v1138, 0
        %v1203 = vsel %vm388, %v1139, 0
        %v1206 = vsel %vm388, %v1140, 0
        %v1209 = vsel %vm388, %v1141, 0
        %v1212 = vsel %vm388, %v1142, 0
        %v1215 = vsel %vm388, %v1143, 0
        %v1218 = vsel %vm388, %v1144, 0
        %v1221 = vsel %vm388, %v1145, 0
        %v1224 = vsel %vm388, %v1146, 0
        %v1227 = vsel %vm388, %v1147, 0
        %v1230 = vsel %vm388, %v1148, 0
        %v1233 = vsel %vm388, %v1149, 0
        %v1236 = vsel %vm388, %v1150, 0
        %v1239 = vsel %vm388, %v1151, 0
        %v1242 = vsel %vm388, %v1152, 0
        %v1245 = vsel %vm388, %v1153, 0
        %v1248 = vsel %vm388, %v1154, 0
        %v1251 = vsel %vm388, %v1155, 0
        %v1254 = vsel %vm388, %v1156, 0
        %v1257 = vsel %vm388, %v1157, 0
        %v1260 = vsel %vm388, %v1158, 0
        %v1263 = vsel %vm388, %v1159, 0
        %v1266 = vsel %vm388, %v1160, 0
        %v1269 = vsel %vm388, %v1161, 0
        %v1272 = vsel %vm388, %v1162, 0
        %1274 = vmatpush.msra.mxu0 0.0
        %1275 = vmatpush.msra.mxu0 0.0
        %1276 = vmatpush.msra.mxu0 0.0
        %1277 = vmatpush.msra.mxu0 0.0
        %1278 = vmatpush.msra.mxu0 0.0
        %1279 = vmatpush.msra.mxu0 0.0
        %1280 = vmatpush.msra.mxu0 0.0
        %1281 = vmatpush.msra.mxu0 0.0
        %1282 = vmatpush.msra.mxu0 %v1171
        %1283 = vmatpush.msra.mxu0 %v1170
        %1284 = vmatpush.msra.mxu0 %v1169
        %1285 = vmatpush.msra.mxu0 %v1168
        %1286 = vmatpush.msra.mxu0 %v1167
        %1287 = vmatpush.msra.mxu0 %v1166
        %1288 = vmatpush.msra.mxu0 %v1165
        %1289 = vmatpush.msra.mxu0 %v1164
        %1290 = vmatmul.f32.gmra.mxu0 %v1173
        %v1291 = vpop.f32.mrf.mxu0
        %v1292 = vadd.f32 0.0, %v1291
        %1293 = vmatmul.f32.gmra.mxu0 %v1176
        %v1294 = vpop.f32.mrf.mxu0
        %v1295 = vadd.f32 0.0, %v1294
        %1296 = vmatmul.f32.gmra.mxu0 %v1179
        %v1297 = vpop.f32.mrf.mxu0
        %v1298 = vadd.f32 0.0, %v1297
        %1299 = vmatmul.f32.gmra.mxu0 %v1182
        %v1300 = vpop.f32.mrf.mxu0
        %v1301 = vadd.f32 0.0, %v1300
        %1302 = vmatmul.f32.gmra.mxu0 %v1185
        %v1303 = vpop.f32.mrf.mxu0
        %v1304 = vadd.f32 0.0, %v1303
        %1305 = vmatmul.f32.gmra.mxu0 %v1188
        %v1306 = vpop.f32.mrf.mxu0
        %v1307 = vadd.f32 0.0, %v1306
        %1308 = vmatmul.f32.gmra.mxu0 %v1191
        %v1309 = vpop.f32.mrf.mxu0
        %v1310 = vadd.f32 0.0, %v1309
        %1311 = vmatmul.f32.gmra.mxu0 %v1194
        %v1312 = vpop.f32.mrf.mxu0
        %v1313 = vadd.f32 0.0, %v1312
        %1314 = vmatmul.f32.gmra.mxu0 %v1197
        %v1315 = vpop.f32.mrf.mxu0
        %v1316 = vadd.f32 0.0, %v1315
        %1317 = vmatmul.f32.gmra.mxu0 %v1200
        %v1318 = vpop.f32.mrf.mxu0
        %v1319 = vadd.f32 0.0, %v1318
        %1320 = vmatmul.f32.gmra.mxu0 %v1203
        %v1321 = vpop.f32.mrf.mxu0
        %v1322 = vadd.f32 0.0, %v1321
        %1323 = vmatmul.f32.gmra.mxu0 %v1206
        %v1324 = vpop.f32.mrf.mxu0
        %v1325 = vadd.f32 0.0, %v1324
        %1326 = vmatmul.f32.gmra.mxu0 %v1209
        %v1327 = vpop.f32.mrf.mxu0
        %v1328 = vadd.f32 0.0, %v1327
        %1329 = vmatmul.f32.gmra.mxu0 %v1212
        %v1330 = vpop.f32.mrf.mxu0
        %v1331 = vadd.f32 0.0, %v1330
        %1332 = vmatmul.f32.gmra.mxu0 %v1215
        %v1333 = vpop.f32.mrf.mxu0
        %v1334 = vadd.f32 0.0, %v1333
        %1335 = vmatmul.f32.gmra.mxu0 %v1218
        %v1336 = vpop.f32.mrf.mxu0
        %v1337 = vadd.f32 0.0, %v1336
        %1338 = vmatmul.f32.gmra.mxu0 %v1221
        %v1339 = vpop.f32.mrf.mxu0
        %v1340 = vadd.f32 0.0, %v1339
        %1341 = vmatmul.f32.gmra.mxu0 %v1224
        %v1342 = vpop.f32.mrf.mxu0
        %v1343 = vadd.f32 0.0, %v1342
        %1344 = vmatmul.f32.gmra.mxu0 %v1227
        %v1345 = vpop.f32.mrf.mxu0
        %v1346 = vadd.f32 0.0, %v1345
        %1347 = vmatmul.f32.gmra.mxu0 %v1230
        %v1348 = vpop.f32.mrf.mxu0
        %v1349 = vadd.f32 0.0, %v1348
        %1350 = vmatmul.f32.gmra.mxu0 %v1233
        %v1351 = vpop.f32.mrf.mxu0
        %v1352 = vadd.f32 0.0, %v1351
        %1353 = vmatmul.f32.gmra.mxu0 %v1236
        %v1354 = vpop.f32.mrf.mxu0
        %v1355 = vadd.f32 0.0, %v1354
        %1356 = vmatmul.f32.gmra.mxu0 %v1239
        %v1357 = vpop.f32.mrf.mxu0
        %v1358 = vadd.f32 0.0, %v1357
        %1359 = vmatmul.f32.gmra.mxu0 %v1242
        %v1360 = vpop.f32.mrf.mxu0
        %v1361 = vadd.f32 0.0, %v1360
        %1362 = vmatmul.f32.gmra.mxu0 %v1245
        %v1363 = vpop.f32.mrf.mxu0
        %v1364 = vadd.f32 0.0, %v1363
        %1365 = vmatmul.f32.gmra.mxu0 %v1248
        %v1366 = vpop.f32.mrf.mxu0
        %v1367 = vadd.f32 0.0, %v1366
        %1368 = vmatmul.f32.gmra.mxu0 %v1251
        %v1369 = vpop.f32.mrf.mxu0
        %v1370 = vadd.f32 0.0, %v1369
        %1371 = vmatmul.f32.gmra.mxu0 %v1254
        %v1372 = vpop.f32.mrf.mxu0
        %v1373 = vadd.f32 0.0, %v1372
        %1374 = vmatmul.f32.gmra.mxu0 %v1257
        %v1375 = vpop.f32.mrf.mxu0
        %v1376 = vadd.f32 0.0, %v1375
        %1377 = vmatmul.f32.gmra.mxu0 %v1260
        %v1378 = vpop.f32.mrf.mxu0
        %v1379 = vadd.f32 0.0, %v1378
        %1380 = vmatmul.f32.gmra.mxu0 %v1263
        %v1381 = vpop.f32.mrf.mxu0
        %v1382 = vadd.f32 0.0, %v1381
        %1383 = vmatmul.f32.gmra.mxu0 %v1266
        %v1384 = vpop.f32.mrf.mxu0
        %v1385 = vadd.f32 0.0, %v1384
        %1386 = vmatmul.f32.gmra.mxu0 %v1269
        %v1387 = vpop.f32.mrf.mxu0
        %v1388 = vadd.f32 0.0, %v1387
        %1389 = vmatmul.f32.gmra.mxu0 %v1272
        %v1390 = vpop.f32.mrf.mxu0
        %v1391 = vadd.f32 0.0, %v1390
        %1392 = vdwg.mxu0
        %v1393 = vadd.f32 %v1095, %v1292
        %v1394 = vadd.f32 %v1096, %v1295
        %v1395 = vadd.f32 %v1097, %v1298
        %v1396 = vadd.f32 %v1098, %v1301
        %v1397 = vadd.f32 %v1099, %v1304
        %v1398 = vadd.f32 %v1100, %v1307
        %v1399 = vadd.f32 %v1101, %v1310
        %v1400 = vadd.f32 %v1102, %v1313
        %v1401 = vadd.f32 %v1103, %v1316
        %v1402 = vadd.f32 %v1104, %v1319
        %v1403 = vadd.f32 %v1105, %v1322
        %v1404 = vadd.f32 %v1106, %v1325
        %v1405 = vadd.f32 %v1107, %v1328
        %v1406 = vadd.f32 %v1108, %v1331
        %v1407 = vadd.f32 %v1109, %v1334
        %v1408 = vadd.f32 %v1110, %v1337
        %v1409 = vadd.f32 %v1111, %v1340
        %v1410 = vadd.f32 %v1112, %v1343
        %v1411 = vadd.f32 %v1113, %v1346
        %v1412 = vadd.f32 %v1114, %v1349
        %v1413 = vadd.f32 %v1115, %v1352
        %v1414 = vadd.f32 %v1116, %v1355
        %v1415 = vadd.f32 %v1117, %v1358
        %v1416 = vadd.f32 %v1118, %v1361
        %v1417 = vadd.f32 %v1119, %v1364
        %v1418 = vadd.f32 %v1120, %v1367
        %v1419 = vadd.f32 %v1121, %v1370
        %v1420 = vadd.f32 %v1122, %v1373
        %v1421 = vadd.f32 %v1123, %v1376
        %v1422 = vadd.f32 %v1124, %v1379
        %v1423 = vadd.f32 %v1125, %v1382
        %v1424 = vadd.f32 %v1126, %v1385
        %v1425 = vadd.f32 %v1127, %v1388
        %v1426 = vadd.f32 %v1128, %v1391
        %v1427 = vld [vmem:[%s302 + $0x12] sm:$0xff]
        %v1428 = vld [vmem:[%s302 + $0x1a] sm:$0xff]
        %v1429 = vld [vmem:[%s302 + $0x22] sm:$0xff]
        %v1430 = vld [vmem:[%s302 + $0x2a] sm:$0xff]
        %v1431 = vld [vmem:[%s302 + $0x32] sm:$0xff]
        %v1432 = vld [vmem:[%s302 + $0x3a] sm:$0xff]
        %v1433 = vld [vmem:[%s302 + $0x42] sm:$0xff]
        %v1434 = vld [vmem:[%s302 + $0x4a] sm:$0xff]
        %v1435 = vld [vmem:[%s302 + $0x52] sm:$0xff]
        %v1436 = vld [vmem:[%s302 + $0x5a] sm:$0xff]
        %v1437 = vld [vmem:[%s302 + $0x62] sm:$0xff]
        %v1438 = vld [vmem:[%s302 + $0x6a] sm:$0xff]
        %v1439 = vld [vmem:[%s302 + $0x72] sm:$0xff]
        %v1440 = vld [vmem:[%s302 + $0x7a] sm:$0xff]
        %v1441 = vld [vmem:[%s302 + $0x82] sm:$0xff]
        %v1442 = vld [vmem:[%s302 + $0x8a] sm:$0xff]
        %v1443 = vld [vmem:[%s302 + $0x92] sm:$0xff]
        %v1444 = vld [vmem:[%s302 + $0x9a] sm:$0xff]
        %v1445 = vld [vmem:[%s302 + $0xa2] sm:$0xff]
        %v1446 = vld [vmem:[%s302 + $0xaa] sm:$0xff]
        %v1447 = vld [vmem:[%s302 + $0xb2] sm:$0xff]
        %v1448 = vld [vmem:[%s302 + $0xba] sm:$0xff]
        %v1449 = vld [vmem:[%s302 + $0xc2] sm:$0xff]
        %v1450 = vld [vmem:[%s302 + $0xca] sm:$0xff]
        %v1451 = vld [vmem:[%s302 + $0xd2] sm:$0xff]
        %v1452 = vld [vmem:[%s302 + $0xda] sm:$0xff]
        %v1453 = vld [vmem:[%s302 + $0xe2] sm:$0xff]
        %v1454 = vld [vmem:[%s302 + $0xea] sm:$0xff]
        %v1455 = vld [vmem:[%s302 + $0xf2] sm:$0xff]
        %v1456 = vld [vmem:[%s302 + $0xfa] sm:$0xff]
        %v1457 = vld [vmem:[%s302 + $0x102] sm:$0xff]
        %v1458 = vld [vmem:[%s302 + $0x10a] sm:$0xff]
        %v1459 = vld [vmem:[%s302 + $0x112] sm:$0xff]
        %v1460 = vld [vmem:[%s302 + $0x11a] sm:$0x3f]
        %s1461 = scalar_lea.vmem %s1, 256
        %v1462 = vld [vmem:[%s1461] sm:$0xff]
        %v1463 = vld [vmem:[%s1461 + $0x8] sm:$0xff]
        %v1464 = vld [vmem:[%s1461 + $0x10] sm:$0xff]
        %v1465 = vld [vmem:[%s1461 + $0x18] sm:$0xff]
        %v1466 = vld [vmem:[%s1461 + $0x20] sm:$0xff]
        %v1467 = vld [vmem:[%s1461 + $0x28] sm:$0xff]
        %v1468 = vld [vmem:[%s1461 + $0x30] sm:$0xff]
        %v1469 = vld [vmem:[%s1461 + $0x38] sm:$0xff]
        %v1471 = vsel %vm388, %v1427, 0
        %v1474 = vsel %vm388, %v1428, 0
        %v1477 = vsel %vm388, %v1429, 0
        %v1480 = vsel %vm388, %v1430, 0
        %v1483 = vsel %vm388, %v1431, 0
        %v1486 = vsel %vm388, %v1432, 0
        %v1489 = vsel %vm388, %v1433, 0
        %v1492 = vsel %vm388, %v1434, 0
        %v1495 = vsel %vm388, %v1435, 0
        %v1498 = vsel %vm388, %v1436, 0
        %v1501 = vsel %vm388, %v1437, 0
        %v1504 = vsel %vm388, %v1438, 0
        %v1507 = vsel %vm388, %v1439, 0
        %v1510 = vsel %vm388, %v1440, 0
        %v1513 = vsel %vm388, %v1441, 0
        %v1516 = vsel %vm388, %v1442, 0
        %v1519 = vsel %vm388, %v1443, 0
        %v1522 = vsel %vm388, %v1444, 0
        %v1525 = vsel %vm388, %v1445, 0
        %v1528 = vsel %vm388, %v1446, 0
        %v1531 = vsel %vm388, %v1447, 0
        %v1534 = vsel %vm388, %v1448, 0
        %v1537 = vsel %vm388, %v1449, 0
        %v1540 = vsel %vm388, %v1450, 0
        %v1543 = vsel %vm388, %v1451, 0
        %v1546 = vsel %vm388, %v1452, 0
        %v1549 = vsel %vm388, %v1453, 0
        %v1552 = vsel %vm388, %v1454, 0
        %v1555 = vsel %vm388, %v1455, 0
        %v1558 = vsel %vm388, %v1456, 0
        %v1561 = vsel %vm388, %v1457, 0
        %v1564 = vsel %vm388, %v1458, 0
        %v1567 = vsel %vm388, %v1459, 0
        %v1570 = vsel %vm388, %v1460, 0
        %1572 = vmatpush.msra.mxu0 0.0
        %1573 = vmatpush.msra.mxu0 0.0
        %1574 = vmatpush.msra.mxu0 0.0
        %1575 = vmatpush.msra.mxu0 0.0
        %1576 = vmatpush.msra.mxu0 0.0
        %1577 = vmatpush.msra.mxu0 0.0
        %1578 = vmatpush.msra.mxu0 0.0
        %1579 = vmatpush.msra.mxu0 0.0
        %1580 = vmatpush.msra.mxu0 %v1469
        %1581 = vmatpush.msra.mxu0 %v1468
        %1582 = vmatpush.msra.mxu0 %v1467
        %1583 = vmatpush.msra.mxu0 %v1466
        %1584 = vmatpush.msra.mxu0 %v1465
        %1585 = vmatpush.msra.mxu0 %v1464
        %1586 = vmatpush.msra.mxu0 %v1463
        %1587 = vmatpush.msra.mxu0 %v1462
        %1588 = vmatmul.f32.gmra.mxu0 %v1471
        %v1589 = vpop.f32.mrf.mxu0
        %v1590 = vadd.f32 0.0, %v1589
        %1591 = vmatmul.f32.gmra.mxu0 %v1474
        %v1592 = vpop.f32.mrf.mxu0
        %v1593 = vadd.f32 0.0, %v1592
        %1594 = vmatmul.f32.gmra.mxu0 %v1477
        %v1595 = vpop.f32.mrf.mxu0
        %v1596 = vadd.f32 0.0, %v1595
        %1597 = vmatmul.f32.gmra.mxu0 %v1480
        %v1598 = vpop.f32.mrf.mxu0
        %v1599 = vadd.f32 0.0, %v1598
        %1600 = vmatmul.f32.gmra.mxu0 %v1483
        %v1601 = vpop.f32.mrf.mxu0
        %v1602 = vadd.f32 0.0, %v1601
        %1603 = vmatmul.f32.gmra.mxu0 %v1486
        %v1604 = vpop.f32.mrf.mxu0
        %v1605 = vadd.f32 0.0, %v1604
        %1606 = vmatmul.f32.gmra.mxu0 %v1489
        %v1607 = vpop.f32.mrf.mxu0
        %v1608 = vadd.f32 0.0, %v1607
        %1609 = vmatmul.f32.gmra.mxu0 %v1492
        %v1610 = vpop.f32.mrf.mxu0
        %v1611 = vadd.f32 0.0, %v1610
        %1612 = vmatmul.f32.gmra.mxu0 %v1495
        %v1613 = vpop.f32.mrf.mxu0
        %v1614 = vadd.f32 0.0, %v1613
        %1615 = vmatmul.f32.gmra.mxu0 %v1498
        %v1616 = vpop.f32.mrf.mxu0
        %v1617 = vadd.f32 0.0, %v1616
        %1618 = vmatmul.f32.gmra.mxu0 %v1501
        %v1619 = vpop.f32.mrf.mxu0
        %v1620 = vadd.f32 0.0, %v1619
        %1621 = vmatmul.f32.gmra.mxu0 %v1504
        %v1622 = vpop.f32.mrf.mxu0
        %v1623 = vadd.f32 0.0, %v1622
        %1624 = vmatmul.f32.gmra.mxu0 %v1507
        %v1625 = vpop.f32.mrf.mxu0
        %v1626 = vadd.f32 0.0, %v1625
        %1627 = vmatmul.f32.gmra.mxu0 %v1510
        %v1628 = vpop.f32.mrf.mxu0
        %v1629 = vadd.f32 0.0, %v1628
        %1630 = vmatmul.f32.gmra.mxu0 %v1513
        %v1631 = vpop.f32.mrf.mxu0
        %v1632 = vadd.f32 0.0, %v1631
        %1633 = vmatmul.f32.gmra.mxu0 %v1516
        %v1634 = vpop.f32.mrf.mxu0
        %v1635 = vadd.f32 0.0, %v1634
        %1636 = vmatmul.f32.gmra.mxu0 %v1519
        %v1637 = vpop.f32.mrf.mxu0
        %v1638 = vadd.f32 0.0, %v1637
        %1639 = vmatmul.f32.gmra.mxu0 %v1522
        %v1640 = vpop.f32.mrf.mxu0
        %v1641 = vadd.f32 0.0, %v1640
        %1642 = vmatmul.f32.gmra.mxu0 %v1525
        %v1643 = vpop.f32.mrf.mxu0
        %v1644 = vadd.f32 0.0, %v1643
        %1645 = vmatmul.f32.gmra.mxu0 %v1528
        %v1646 = vpop.f32.mrf.mxu0
        %v1647 = vadd.f32 0.0, %v1646
        %1648 = vmatmul.f32.gmra.mxu0 %v1531
        %v1649 = vpop.f32.mrf.mxu0
        %v1650 = vadd.f32 0.0, %v1649
        %1651 = vmatmul.f32.gmra.mxu0 %v1534
        %v1652 = vpop.f32.mrf.mxu0
        %v1653 = vadd.f32 0.0, %v1652
        %1654 = vmatmul.f32.gmra.mxu0 %v1537
        %v1655 = vpop.f32.mrf.mxu0
        %v1656 = vadd.f32 0.0, %v1655
        %1657 = vmatmul.f32.gmra.mxu0 %v1540
        %v1658 = vpop.f32.mrf.mxu0
        %v1659 = vadd.f32 0.0, %v1658
        %1660 = vmatmul.f32.gmra.mxu0 %v1543
        %v1661 = vpop.f32.mrf.mxu0
        %v1662 = vadd.f32 0.0, %v1661
        %1663 = vmatmul.f32.gmra.mxu0 %v1546
        %v1664 = vpop.f32.mrf.mxu0
        %v1665 = vadd.f32 0.0, %v1664
        %1666 = vmatmul.f32.gmra.mxu0 %v1549
        %v1667 = vpop.f32.mrf.mxu0
        %v1668 = vadd.f32 0.0, %v1667
        %1669 = vmatmul.f32.gmra.mxu0 %v1552
        %v1670 = vpop.f32.mrf.mxu0
        %v1671 = vadd.f32 0.0, %v1670
        %1672 = vmatmul.f32.gmra.mxu0 %v1555
        %v1673 = vpop.f32.mrf.mxu0
        %v1674 = vadd.f32 0.0, %v1673
        %1675 = vmatmul.f32.gmra.mxu0 %v1558
        %v1676 = vpop.f32.mrf.mxu0
        %v1677 = vadd.f32 0.0, %v1676
        %1678 = vmatmul.f32.gmra.mxu0 %v1561
        %v1679 = vpop.f32.mrf.mxu0
        %v1680 = vadd.f32 0.0, %v1679
        %1681 = vmatmul.f32.gmra.mxu0 %v1564
        %v1682 = vpop.f32.mrf.mxu0
        %v1683 = vadd.f32 0.0, %v1682
        %1684 = vmatmul.f32.gmra.mxu0 %v1567
        %v1685 = vpop.f32.mrf.mxu0
        %v1686 = vadd.f32 0.0, %v1685
        %1687 = vmatmul.f32.gmra.mxu0 %v1570
        %v1688 = vpop.f32.mrf.mxu0
        %v1689 = vadd.f32 0.0, %v1688
        %1690 = vdwg.mxu0
        %v1691 = vadd.f32 %v1393, %v1590
        %v1692 = vadd.f32 %v1394, %v1593
        %v1693 = vadd.f32 %v1395, %v1596
        %v1694 = vadd.f32 %v1396, %v1599
        %v1695 = vadd.f32 %v1397, %v1602
        %v1696 = vadd.f32 %v1398, %v1605
        %v1697 = vadd.f32 %v1399, %v1608
        %v1698 = vadd.f32 %v1400, %v1611
        %v1699 = vadd.f32 %v1401, %v1614
        %v1700 = vadd.f32 %v1402, %v1617
        %v1701 = vadd.f32 %v1403, %v1620
        %v1702 = vadd.f32 %v1404, %v1623
        %v1703 = vadd.f32 %v1405, %v1626
        %v1704 = vadd.f32 %v1406, %v1629
        %v1705 = vadd.f32 %v1407, %v1632
        %v1706 = vadd.f32 %v1408, %v1635
        %v1707 = vadd.f32 %v1409, %v1638
        %v1708 = vadd.f32 %v1410, %v1641
        %v1709 = vadd.f32 %v1411, %v1644
        %v1710 = vadd.f32 %v1412, %v1647
        %v1711 = vadd.f32 %v1413, %v1650
        %v1712 = vadd.f32 %v1414, %v1653
        %v1713 = vadd.f32 %v1415, %v1656
        %v1714 = vadd.f32 %v1416, %v1659
        %v1715 = vadd.f32 %v1417, %v1662
        %v1716 = vadd.f32 %v1418, %v1665
        %v1717 = vadd.f32 %v1419, %v1668
        %v1718 = vadd.f32 %v1420, %v1671
        %v1719 = vadd.f32 %v1421, %v1674
        %v1720 = vadd.f32 %v1422, %v1677
        %v1721 = vadd.f32 %v1423, %v1680
        %v1722 = vadd.f32 %v1424, %v1683
        %v1723 = vadd.f32 %v1425, %v1686
        %v1724 = vadd.f32 %v1426, %v1689
        %v1725 = vld [vmem:[%s302 + $0x13] sm:$0xff]
        %v1726 = vld [vmem:[%s302 + $0x1b] sm:$0xff]
        %v1727 = vld [vmem:[%s302 + $0x23] sm:$0xff]
        %v1728 = vld [vmem:[%s302 + $0x2b] sm:$0xff]
        %v1729 = vld [vmem:[%s302 + $0x33] sm:$0xff]
        %v1730 = vld [vmem:[%s302 + $0x3b] sm:$0xff]
        %v1731 = vld [vmem:[%s302 + $0x43] sm:$0xff]
        %v1732 = vld [vmem:[%s302 + $0x4b] sm:$0xff]
        %v1733 = vld [vmem:[%s302 + $0x53] sm:$0xff]
        %v1734 = vld [vmem:[%s302 + $0x5b] sm:$0xff]
        %v1735 = vld [vmem:[%s302 + $0x63] sm:$0xff]
        %v1736 = vld [vmem:[%s302 + $0x6b] sm:$0xff]
        %v1737 = vld [vmem:[%s302 + $0x73] sm:$0xff]
        %v1738 = vld [vmem:[%s302 + $0x7b] sm:$0xff]
        %v1739 = vld [vmem:[%s302 + $0x83] sm:$0xff]
        %v1740 = vld [vmem:[%s302 + $0x8b] sm:$0xff]
        %v1741 = vld [vmem:[%s302 + $0x93] sm:$0xff]
        %v1742 = vld [vmem:[%s302 + $0x9b] sm:$0xff]
        %v1743 = vld [vmem:[%s302 + $0xa3] sm:$0xff]
        %v1744 = vld [vmem:[%s302 + $0xab] sm:$0xff]
        %v1745 = vld [vmem:[%s302 + $0xb3] sm:$0xff]
        %v1746 = vld [vmem:[%s302 + $0xbb] sm:$0xff]
        %v1747 = vld [vmem:[%s302 + $0xc3] sm:$0xff]
        %v1748 = vld [vmem:[%s302 + $0xcb] sm:$0xff]
        %v1749 = vld [vmem:[%s302 + $0xd3] sm:$0xff]
        %v1750 = vld [vmem:[%s302 + $0xdb] sm:$0xff]
        %v1751 = vld [vmem:[%s302 + $0xe3] sm:$0xff]
        %v1752 = vld [vmem:[%s302 + $0xeb] sm:$0xff]
        %v1753 = vld [vmem:[%s302 + $0xf3] sm:$0xff]
        %v1754 = vld [vmem:[%s302 + $0xfb] sm:$0xff]
        %v1755 = vld [vmem:[%s302 + $0x103] sm:$0xff]
        %v1756 = vld [vmem:[%s302 + $0x10b] sm:$0xff]
        %v1757 = vld [vmem:[%s302 + $0x113] sm:$0xff]
        %v1758 = vld [vmem:[%s302 + $0x11b] sm:$0x3f]
        %s1759 = scalar_lea.vmem %s1, 320
        %v1760 = vld [vmem:[%s1759] sm:$0xff]
        %v1761 = vld [vmem:[%s1759 + $0x8] sm:$0xff]
        %v1762 = vld [vmem:[%s1759 + $0x10] sm:$0xff]
        %v1763 = vld [vmem:[%s1759 + $0x18] sm:$0xff]
        %v1764 = vld [vmem:[%s1759 + $0x20] sm:$0xff]
        %v1765 = vld [vmem:[%s1759 + $0x28] sm:$0xff]
        %v1766 = vld [vmem:[%s1759 + $0x30] sm:$0xff]
        %v1767 = vld [vmem:[%s1759 + $0x38] sm:$0xff]
        %v1769 = vsel %vm388, %v1725, 0
        %v1772 = vsel %vm388, %v1726, 0
        %v1775 = vsel %vm388, %v1727, 0
        %v1778 = vsel %vm388, %v1728, 0
        %v1781 = vsel %vm388, %v1729, 0
        %v1784 = vsel %vm388, %v1730, 0
        %v1787 = vsel %vm388, %v1731, 0
        %v1790 = vsel %vm388, %v1732, 0
        %v1793 = vsel %vm388, %v1733, 0
        %v1796 = vsel %vm388, %v1734, 0
        %v1799 = vsel %vm388, %v1735, 0
        %v1802 = vsel %vm388, %v1736, 0
        %v1805 = vsel %vm388, %v1737, 0
        %v1808 = vsel %vm388, %v1738, 0
        %v1811 = vsel %vm388, %v1739, 0
        %v1814 = vsel %vm388, %v1740, 0
        %v1817 = vsel %vm388, %v1741, 0
        %v1820 = vsel %vm388, %v1742, 0
        %v1823 = vsel %vm388, %v1743, 0
        %v1826 = vsel %vm388, %v1744, 0
        %v1829 = vsel %vm388, %v1745, 0
        %v1832 = vsel %vm388, %v1746, 0
        %v1835 = vsel %vm388, %v1747, 0
        %v1838 = vsel %vm388, %v1748, 0
        %v1841 = vsel %vm388, %v1749, 0
        %v1844 = vsel %vm388, %v1750, 0
        %v1847 = vsel %vm388, %v1751, 0
        %v1850 = vsel %vm388, %v1752, 0
        %v1853 = vsel %vm388, %v1753, 0
        %v1856 = vsel %vm388, %v1754, 0
        %v1859 = vsel %vm388, %v1755, 0
        %v1862 = vsel %vm388, %v1756, 0
        %v1865 = vsel %vm388, %v1757, 0
        %v1868 = vsel %vm388, %v1758, 0
        %1870 = vmatpush.msra.mxu0 0.0
        %1871 = vmatpush.msra.mxu0 0.0
        %1872 = vmatpush.msra.mxu0 0.0
        %1873 = vmatpush.msra.mxu0 0.0
        %1874 = vmatpush.msra.mxu0 0.0
        %1875 = vmatpush.msra.mxu0 0.0
        %1876 = vmatpush.msra.mxu0 0.0
        %1877 = vmatpush.msra.mxu0 0.0
        %1878 = vmatpush.msra.mxu0 %v1767
        %1879 = vmatpush.msra.mxu0 %v1766
        %1880 = vmatpush.msra.mxu0 %v1765
        %1881 = vmatpush.msra.mxu0 %v1764
        %1882 = vmatpush.msra.mxu0 %v1763
        %1883 = vmatpush.msra.mxu0 %v1762
        %1884 = vmatpush.msra.mxu0 %v1761
        %1885 = vmatpush.msra.mxu0 %v1760
        %1886 = vmatmul.f32.gmra.mxu0 %v1769
        %v1887 = vpop.f32.mrf.mxu0
        %v1888 = vadd.f32 0.0, %v1887
        %1889 = vmatmul.f32.gmra.mxu0 %v1772
        %v1890 = vpop.f32.mrf.mxu0
        %v1891 = vadd.f32 0.0, %v1890
        %1892 = vmatmul.f32.gmra.mxu0 %v1775
        %v1893 = vpop.f32.mrf.mxu0
        %v1894 = vadd.f32 0.0, %v1893
        %1895 = vmatmul.f32.gmra.mxu0 %v1778
        %v1896 = vpop.f32.mrf.mxu0
        %v1897 = vadd.f32 0.0, %v1896
        %1898 = vmatmul.f32.gmra.mxu0 %v1781
        %v1899 = vpop.f32.mrf.mxu0
        %v1900 = vadd.f32 0.0, %v1899
        %1901 = vmatmul.f32.gmra.mxu0 %v1784
        %v1902 = vpop.f32.mrf.mxu0
        %v1903 = vadd.f32 0.0, %v1902
        %1904 = vmatmul.f32.gmra.mxu0 %v1787
        %v1905 = vpop.f32.mrf.mxu0
        %v1906 = vadd.f32 0.0, %v1905
        %1907 = vmatmul.f32.gmra.mxu0 %v1790
        %v1908 = vpop.f32.mrf.mxu0
        %v1909 = vadd.f32 0.0, %v1908
        %1910 = vmatmul.f32.gmra.mxu0 %v1793
        %v1911 = vpop.f32.mrf.mxu0
        %v1912 = vadd.f32 0.0, %v1911
        %1913 = vmatmul.f32.gmra.mxu0 %v1796
        %v1914 = vpop.f32.mrf.mxu0
        %v1915 = vadd.f32 0.0, %v1914
        %1916 = vmatmul.f32.gmra.mxu0 %v1799
        %v1917 = vpop.f32.mrf.mxu0
        %v1918 = vadd.f32 0.0, %v1917
        %1919 = vmatmul.f32.gmra.mxu0 %v1802
        %v1920 = vpop.f32.mrf.mxu0
        %v1921 = vadd.f32 0.0, %v1920
        %1922 = vmatmul.f32.gmra.mxu0 %v1805
        %v1923 = vpop.f32.mrf.mxu0
        %v1924 = vadd.f32 0.0, %v1923
        %1925 = vmatmul.f32.gmra.mxu0 %v1808
        %v1926 = vpop.f32.mrf.mxu0
        %v1927 = vadd.f32 0.0, %v1926
        %1928 = vmatmul.f32.gmra.mxu0 %v1811
        %v1929 = vpop.f32.mrf.mxu0
        %v1930 = vadd.f32 0.0, %v1929
        %1931 = vmatmul.f32.gmra.mxu0 %v1814
        %v1932 = vpop.f32.mrf.mxu0
        %v1933 = vadd.f32 0.0, %v1932
        %1934 = vmatmul.f32.gmra.mxu0 %v1817
        %v1935 = vpop.f32.mrf.mxu0
        %v1936 = vadd.f32 0.0, %v1935
        %1937 = vmatmul.f32.gmra.mxu0 %v1820
        %v1938 = vpop.f32.mrf.mxu0
        %v1939 = vadd.f32 0.0, %v1938
        %1940 = vmatmul.f32.gmra.mxu0 %v1823
        %v1941 = vpop.f32.mrf.mxu0
        %v1942 = vadd.f32 0.0, %v1941
        %1943 = vmatmul.f32.gmra.mxu0 %v1826
        %v1944 = vpop.f32.mrf.mxu0
        %v1945 = vadd.f32 0.0, %v1944
        %1946 = vmatmul.f32.gmra.mxu0 %v1829
        %v1947 = vpop.f32.mrf.mxu0
        %v1948 = vadd.f32 0.0, %v1947
        %1949 = vmatmul.f32.gmra.mxu0 %v1832
        %v1950 = vpop.f32.mrf.mxu0
        %v1951 = vadd.f32 0.0, %v1950
        %1952 = vmatmul.f32.gmra.mxu0 %v1835
        %v1953 = vpop.f32.mrf.mxu0
        %v1954 = vadd.f32 0.0, %v1953
        %1955 = vmatmul.f32.gmra.mxu0 %v1838
        %v1956 = vpop.f32.mrf.mxu0
        %v1957 = vadd.f32 0.0, %v1956
        %1958 = vmatmul.f32.gmra.mxu0 %v1841
        %v1959 = vpop.f32.mrf.mxu0
        %v1960 = vadd.f32 0.0, %v1959
        %1961 = vmatmul.f32.gmra.mxu0 %v1844
        %v1962 = vpop.f32.mrf.mxu0
        %v1963 = vadd.f32 0.0, %v1962
        %1964 = vmatmul.f32.gmra.mxu0 %v1847
        %v1965 = vpop.f32.mrf.mxu0
        %v1966 = vadd.f32 0.0, %v1965
        %1967 = vmatmul.f32.gmra.mxu0 %v1850
        %v1968 = vpop.f32.mrf.mxu0
        %v1969 = vadd.f32 0.0, %v1968
        %1970 = vmatmul.f32.gmra.mxu0 %v1853
        %v1971 = vpop.f32.mrf.mxu0
        %v1972 = vadd.f32 0.0, %v1971
        %1973 = vmatmul.f32.gmra.mxu0 %v1856
        %v1974 = vpop.f32.mrf.mxu0
        %v1975 = vadd.f32 0.0, %v1974
        %1976 = vmatmul.f32.gmra.mxu0 %v1859
        %v1977 = vpop.f32.mrf.mxu0
        %v1978 = vadd.f32 0.0, %v1977
        %1979 = vmatmul.f32.gmra.mxu0 %v1862
        %v1980 = vpop.f32.mrf.mxu0
        %v1981 = vadd.f32 0.0, %v1980
        %1982 = vmatmul.f32.gmra.mxu0 %v1865
        %v1983 = vpop.f32.mrf.mxu0
        %v1984 = vadd.f32 0.0, %v1983
        %1985 = vmatmul.f32.gmra.mxu0 %v1868
        %v1986 = vpop.f32.mrf.mxu0
        %v1987 = vadd.f32 0.0, %v1986
        %1988 = vdwg.mxu0
        %v1989 = vadd.f32 %v1691, %v1888
        %v1990 = vadd.f32 %v1692, %v1891
        %v1991 = vadd.f32 %v1693, %v1894
        %v1992 = vadd.f32 %v1694, %v1897
        %v1993 = vadd.f32 %v1695, %v1900
        %v1994 = vadd.f32 %v1696, %v1903
        %v1995 = vadd.f32 %v1697, %v1906
        %v1996 = vadd.f32 %v1698, %v1909
        %v1997 = vadd.f32 %v1699, %v1912
        %v1998 = vadd.f32 %v1700, %v1915
        %v1999 = vadd.f32 %v1701, %v1918
        %v2000 = vadd.f32 %v1702, %v1921
        %v2001 = vadd.f32 %v1703, %v1924
        %v2002 = vadd.f32 %v1704, %v1927
        %v2003 = vadd.f32 %v1705, %v1930
        %v2004 = vadd.f32 %v1706, %v1933
        %v2005 = vadd.f32 %v1707, %v1936
        %v2006 = vadd.f32 %v1708, %v1939
        %v2007 = vadd.f32 %v1709, %v1942
        %v2008 = vadd.f32 %v1710, %v1945
        %v2009 = vadd.f32 %v1711, %v1948
        %v2010 = vadd.f32 %v1712, %v1951
        %v2011 = vadd.f32 %v1713, %v1954
        %v2012 = vadd.f32 %v1714, %v1957
        %v2013 = vadd.f32 %v1715, %v1960
        %v2014 = vadd.f32 %v1716, %v1963
        %v2015 = vadd.f32 %v1717, %v1966
        %v2016 = vadd.f32 %v1718, %v1969
        %v2017 = vadd.f32 %v1719, %v1972
        %v2018 = vadd.f32 %v1720, %v1975
        %v2019 = vadd.f32 %v1721, %v1978
        %v2020 = vadd.f32 %v1722, %v1981
        %v2021 = vadd.f32 %v1723, %v1984
        %v2022 = vadd.f32 %v1724, %v1987
        %v2023 = vld [vmem:[%s302 + $0x22] sm:$0xff]
        %v2024 = vld [vmem:[%s302 + $0x2a] sm:$0xff]
        %v2025 = vld [vmem:[%s302 + $0x32] sm:$0xff]
        %v2026 = vld [vmem:[%s302 + $0x3a] sm:$0xff]
        %v2027 = vld [vmem:[%s302 + $0x42] sm:$0xff]
        %v2028 = vld [vmem:[%s302 + $0x4a] sm:$0xff]
        %v2029 = vld [vmem:[%s302 + $0x52] sm:$0xff]
        %v2030 = vld [vmem:[%s302 + $0x5a] sm:$0xff]
        %v2031 = vld [vmem:[%s302 + $0x62] sm:$0xff]
        %v2032 = vld [vmem:[%s302 + $0x6a] sm:$0xff]
        %v2033 = vld [vmem:[%s302 + $0x72] sm:$0xff]
        %v2034 = vld [vmem:[%s302 + $0x7a] sm:$0xff]
        %v2035 = vld [vmem:[%s302 + $0x82] sm:$0xff]
        %v2036 = vld [vmem:[%s302 + $0x8a] sm:$0xff]
        %v2037 = vld [vmem:[%s302 + $0x92] sm:$0xff]
        %v2038 = vld [vmem:[%s302 + $0x9a] sm:$0xff]
        %v2039 = vld [vmem:[%s302 + $0xa2] sm:$0xff]
        %v2040 = vld [vmem:[%s302 + $0xaa] sm:$0xff]
        %v2041 = vld [vmem:[%s302 + $0xb2] sm:$0xff]
        %v2042 = vld [vmem:[%s302 + $0xba] sm:$0xff]
        %v2043 = vld [vmem:[%s302 + $0xc2] sm:$0xff]
        %v2044 = vld [vmem:[%s302 + $0xca] sm:$0xff]
        %v2045 = vld [vmem:[%s302 + $0xd2] sm:$0xff]
        %v2046 = vld [vmem:[%s302 + $0xda] sm:$0xff]
        %v2047 = vld [vmem:[%s302 + $0xe2] sm:$0xff]
        %v2048 = vld [vmem:[%s302 + $0xea] sm:$0xff]
        %v2049 = vld [vmem:[%s302 + $0xf2] sm:$0xff]
        %v2050 = vld [vmem:[%s302 + $0xfa] sm:$0xff]
        %v2051 = vld [vmem:[%s302 + $0x102] sm:$0xff]
        %v2052 = vld [vmem:[%s302 + $0x10a] sm:$0xff]
        %v2053 = vld [vmem:[%s302 + $0x112] sm:$0xff]
        %v2054 = vld [vmem:[%s302 + $0x11a] sm:$0xff]
        %v2055 = vld [vmem:[%s302 + $0x122] sm:$0xff]
        %v2056 = vld [vmem:[%s302 + $0x12a] sm:$0x3f]
        %s2057 = scalar_lea.vmem %s1, 384
        %v2058 = vld [vmem:[%s2057] sm:$0xff]
        %v2059 = vld [vmem:[%s2057 + $0x8] sm:$0xff]
        %v2060 = vld [vmem:[%s2057 + $0x10] sm:$0xff]
        %v2061 = vld [vmem:[%s2057 + $0x18] sm:$0xff]
        %v2062 = vld [vmem:[%s2057 + $0x20] sm:$0xff]
        %v2063 = vld [vmem:[%s2057 + $0x28] sm:$0xff]
        %v2064 = vld [vmem:[%s2057 + $0x30] sm:$0xff]
        %v2065 = vld [vmem:[%s2057 + $0x38] sm:$0xff]
        %v2067 = vsel %vm388, %v2023, 0
        %v2070 = vsel %vm388, %v2024, 0
        %v2073 = vsel %vm388, %v2025, 0
        %v2076 = vsel %vm388, %v2026, 0
        %v2079 = vsel %vm388, %v2027, 0
        %v2082 = vsel %vm388, %v2028, 0
        %v2085 = vsel %vm388, %v2029, 0
        %v2088 = vsel %vm388, %v2030, 0
        %v2091 = vsel %vm388, %v2031, 0
        %v2094 = vsel %vm388, %v2032, 0
        %v2097 = vsel %vm388, %v2033, 0
        %v2100 = vsel %vm388, %v2034, 0
        %v2103 = vsel %vm388, %v2035, 0
        %v2106 = vsel %vm388, %v2036, 0
        %v2109 = vsel %vm388, %v2037, 0
        %v2112 = vsel %vm388, %v2038, 0
        %v2115 = vsel %vm388, %v2039, 0
        %v2118 = vsel %vm388, %v2040, 0
        %v2121 = vsel %vm388, %v2041, 0
        %v2124 = vsel %vm388, %v2042, 0
        %v2127 = vsel %vm388, %v2043, 0
        %v2130 = vsel %vm388, %v2044, 0
        %v2133 = vsel %vm388, %v2045, 0
        %v2136 = vsel %vm388, %v2046, 0
        %v2139 = vsel %vm388, %v2047, 0
        %v2142 = vsel %vm388, %v2048, 0
        %v2145 = vsel %vm388, %v2049, 0
        %v2148 = vsel %vm388, %v2050, 0
        %v2151 = vsel %vm388, %v2051, 0
        %v2154 = vsel %vm388, %v2052, 0
        %v2157 = vsel %vm388, %v2053, 0
        %v2160 = vsel %vm388, %v2054, 0
        %v2163 = vsel %vm388, %v2055, 0
        %v2166 = vsel %vm388, %v2056, 0
        %2168 = vmatpush.msra.mxu0 0.0
        %2169 = vmatpush.msra.mxu0 0.0
        %2170 = vmatpush.msra.mxu0 0.0
        %2171 = vmatpush.msra.mxu0 0.0
        %2172 = vmatpush.msra.mxu0 0.0
        %2173 = vmatpush.msra.mxu0 0.0
        %2174 = vmatpush.msra.mxu0 0.0
        %2175 = vmatpush.msra.mxu0 0.0
        %2176 = vmatpush.msra.mxu0 %v2065
        %2177 = vmatpush.msra.mxu0 %v2064
        %2178 = vmatpush.msra.mxu0 %v2063
        %2179 = vmatpush.msra.mxu0 %v2062
        %2180 = vmatpush.msra.mxu0 %v2061
        %2181 = vmatpush.msra.mxu0 %v2060
        %2182 = vmatpush.msra.mxu0 %v2059
        %2183 = vmatpush.msra.mxu0 %v2058
        %2184 = vmatmul.f32.gmra.mxu0 %v2067
        %v2185 = vpop.f32.mrf.mxu0
        %v2186 = vadd.f32 0.0, %v2185
        %2187 = vmatmul.f32.gmra.mxu0 %v2070
        %v2188 = vpop.f32.mrf.mxu0
        %v2189 = vadd.f32 0.0, %v2188
        %2190 = vmatmul.f32.gmra.mxu0 %v2073
        %v2191 = vpop.f32.mrf.mxu0
        %v2192 = vadd.f32 0.0, %v2191
        %2193 = vmatmul.f32.gmra.mxu0 %v2076
        %v2194 = vpop.f32.mrf.mxu0
        %v2195 = vadd.f32 0.0, %v2194
        %2196 = vmatmul.f32.gmra.mxu0 %v2079
        %v2197 = vpop.f32.mrf.mxu0
        %v2198 = vadd.f32 0.0, %v2197
        %2199 = vmatmul.f32.gmra.mxu0 %v2082
        %v2200 = vpop.f32.mrf.mxu0
        %v2201 = vadd.f32 0.0, %v2200
        %2202 = vmatmul.f32.gmra.mxu0 %v2085
        %v2203 = vpop.f32.mrf.mxu0
        %v2204 = vadd.f32 0.0, %v2203
        %2205 = vmatmul.f32.gmra.mxu0 %v2088
        %v2206 = vpop.f32.mrf.mxu0
        %v2207 = vadd.f32 0.0, %v2206
        %2208 = vmatmul.f32.gmra.mxu0 %v2091
        %v2209 = vpop.f32.mrf.mxu0
        %v2210 = vadd.f32 0.0, %v2209
        %2211 = vmatmul.f32.gmra.mxu0 %v2094
        %v2212 = vpop.f32.mrf.mxu0
        %v2213 = vadd.f32 0.0, %v2212
        %2214 = vmatmul.f32.gmra.mxu0 %v2097
        %v2215 = vpop.f32.mrf.mxu0
        %v2216 = vadd.f32 0.0, %v2215
        %2217 = vmatmul.f32.gmra.mxu0 %v2100
        %v2218 = vpop.f32.mrf.mxu0
        %v2219 = vadd.f32 0.0, %v2218
        %2220 = vmatmul.f32.gmra.mxu0 %v2103
        %v2221 = vpop.f32.mrf.mxu0
        %v2222 = vadd.f32 0.0, %v2221
        %2223 = vmatmul.f32.gmra.mxu0 %v2106
        %v2224 = vpop.f32.mrf.mxu0
        %v2225 = vadd.f32 0.0, %v2224
        %2226 = vmatmul.f32.gmra.mxu0 %v2109
        %v2227 = vpop.f32.mrf.mxu0
        %v2228 = vadd.f32 0.0, %v2227
        %2229 = vmatmul.f32.gmra.mxu0 %v2112
        %v2230 = vpop.f32.mrf.mxu0
        %v2231 = vadd.f32 0.0, %v2230
        %2232 = vmatmul.f32.gmra.mxu0 %v2115
        %v2233 = vpop.f32.mrf.mxu0
        %v2234 = vadd.f32 0.0, %v2233
        %2235 = vmatmul.f32.gmra.mxu0 %v2118
        %v2236 = vpop.f32.mrf.mxu0
        %v2237 = vadd.f32 0.0, %v2236
        %2238 = vmatmul.f32.gmra.mxu0 %v2121
        %v2239 = vpop.f32.mrf.mxu0
        %v2240 = vadd.f32 0.0, %v2239
        %2241 = vmatmul.f32.gmra.mxu0 %v2124
        %v2242 = vpop.f32.mrf.mxu0
        %v2243 = vadd.f32 0.0, %v2242
        %2244 = vmatmul.f32.gmra.mxu0 %v2127
        %v2245 = vpop.f32.mrf.mxu0
        %v2246 = vadd.f32 0.0, %v2245
        %2247 = vmatmul.f32.gmra.mxu0 %v2130
        %v2248 = vpop.f32.mrf.mxu0
        %v2249 = vadd.f32 0.0, %v2248
        %2250 = vmatmul.f32.gmra.mxu0 %v2133
        %v2251 = vpop.f32.mrf.mxu0
        %v2252 = vadd.f32 0.0, %v2251
        %2253 = vmatmul.f32.gmra.mxu0 %v2136
        %v2254 = vpop.f32.mrf.mxu0
        %v2255 = vadd.f32 0.0, %v2254
        %2256 = vmatmul.f32.gmra.mxu0 %v2139
        %v2257 = vpop.f32.mrf.mxu0
        %v2258 = vadd.f32 0.0, %v2257
        %2259 = vmatmul.f32.gmra.mxu0 %v2142
        %v2260 = vpop.f32.mrf.mxu0
        %v2261 = vadd.f32 0.0, %v2260
        %2262 = vmatmul.f32.gmra.mxu0 %v2145
        %v2263 = vpop.f32.mrf.mxu0
        %v2264 = vadd.f32 0.0, %v2263
        %2265 = vmatmul.f32.gmra.mxu0 %v2148
        %v2266 = vpop.f32.mrf.mxu0
        %v2267 = vadd.f32 0.0, %v2266
        %2268 = vmatmul.f32.gmra.mxu0 %v2151
        %v2269 = vpop.f32.mrf.mxu0
        %v2270 = vadd.f32 0.0, %v2269
        %2271 = vmatmul.f32.gmra.mxu0 %v2154
        %v2272 = vpop.f32.mrf.mxu0
        %v2273 = vadd.f32 0.0, %v2272
        %2274 = vmatmul.f32.gmra.mxu0 %v2157
        %v2275 = vpop.f32.mrf.mxu0
        %v2276 = vadd.f32 0.0, %v2275
        %2277 = vmatmul.f32.gmra.mxu0 %v2160
        %v2278 = vpop.f32.mrf.mxu0
        %v2279 = vadd.f32 0.0, %v2278
        %2280 = vmatmul.f32.gmra.mxu0 %v2163
        %v2281 = vpop.f32.mrf.mxu0
        %v2282 = vadd.f32 0.0, %v2281
        %2283 = vmatmul.f32.gmra.mxu0 %v2166
        %v2284 = vpop.f32.mrf.mxu0
        %v2285 = vadd.f32 0.0, %v2284
        %2286 = vdwg.mxu0
        %v2287 = vadd.f32 %v1989, %v2186
        %v2288 = vadd.f32 %v1990, %v2189
        %v2289 = vadd.f32 %v1991, %v2192
        %v2290 = vadd.f32 %v1992, %v2195
        %v2291 = vadd.f32 %v1993, %v2198
        %v2292 = vadd.f32 %v1994, %v2201
        %v2293 = vadd.f32 %v1995, %v2204
        %v2294 = vadd.f32 %v1996, %v2207
        %v2295 = vadd.f32 %v1997, %v2210
        %v2296 = vadd.f32 %v1998, %v2213
        %v2297 = vadd.f32 %v1999, %v2216
        %v2298 = vadd.f32 %v2000, %v2219
        %v2299 = vadd.f32 %v2001, %v2222
        %v2300 = vadd.f32 %v2002, %v2225
        %v2301 = vadd.f32 %v2003, %v2228
        %v2302 = vadd.f32 %v2004, %v2231
        %v2303 = vadd.f32 %v2005, %v2234
        %v2304 = vadd.f32 %v2006, %v2237
        %v2305 = vadd.f32 %v2007, %v2240
        %v2306 = vadd.f32 %v2008, %v2243
        %v2307 = vadd.f32 %v2009, %v2246
        %v2308 = vadd.f32 %v2010, %v2249
        %v2309 = vadd.f32 %v2011, %v2252
        %v2310 = vadd.f32 %v2012, %v2255
        %v2311 = vadd.f32 %v2013, %v2258
        %v2312 = vadd.f32 %v2014, %v2261
        %v2313 = vadd.f32 %v2015, %v2264
        %v2314 = vadd.f32 %v2016, %v2267
        %v2315 = vadd.f32 %v2017, %v2270
        %v2316 = vadd.f32 %v2018, %v2273
        %v2317 = vadd.f32 %v2019, %v2276
        %v2318 = vadd.f32 %v2020, %v2279
        %v2319 = vadd.f32 %v2021, %v2282
        %v2320 = vadd.f32 %v2022, %v2285
        %v2321 = vld [vmem:[%s302 + $0x23] sm:$0xff]
        %v2322 = vld [vmem:[%s302 + $0x2b] sm:$0xff]
        %v2323 = vld [vmem:[%s302 + $0x33] sm:$0xff]
        %v2324 = vld [vmem:[%s302 + $0x3b] sm:$0xff]
        %v2325 = vld [vmem:[%s302 + $0x43] sm:$0xff]
        %v2326 = vld [vmem:[%s302 + $0x4b] sm:$0xff]
        %v2327 = vld [vmem:[%s302 + $0x53] sm:$0xff]
        %v2328 = vld [vmem:[%s302 + $0x5b] sm:$0xff]
        %v2329 = vld [vmem:[%s302 + $0x63] sm:$0xff]
        %v2330 = vld [vmem:[%s302 + $0x6b] sm:$0xff]
        %v2331 = vld [vmem:[%s302 + $0x73] sm:$0xff]
        %v2332 = vld [vmem:[%s302 + $0x7b] sm:$0xff]
        %v2333 = vld [vmem:[%s302 + $0x83] sm:$0xff]
        %v2334 = vld [vmem:[%s302 + $0x8b] sm:$0xff]
        %v2335 = vld [vmem:[%s302 + $0x93] sm:$0xff]
        %v2336 = vld [vmem:[%s302 + $0x9b] sm:$0xff]
        %v2337 = vld [vmem:[%s302 + $0xa3] sm:$0xff]
        %v2338 = vld [vmem:[%s302 + $0xab] sm:$0xff]
        %v2339 = vld [vmem:[%s302 + $0xb3] sm:$0xff]
        %v2340 = vld [vmem:[%s302 + $0xbb] sm:$0xff]
        %v2341 = vld [vmem:[%s302 + $0xc3] sm:$0xff]
        %v2342 = vld [vmem:[%s302 + $0xcb] sm:$0xff]
        %v2343 = vld [vmem:[%s302 + $0xd3] sm:$0xff]
        %v2344 = vld [vmem:[%s302 + $0xdb] sm:$0xff]
        %v2345 = vld [vmem:[%s302 + $0xe3] sm:$0xff]
        %v2346 = vld [vmem:[%s302 + $0xeb] sm:$0xff]
        %v2347 = vld [vmem:[%s302 + $0xf3] sm:$0xff]
        %v2348 = vld [vmem:[%s302 + $0xfb] sm:$0xff]
        %v2349 = vld [vmem:[%s302 + $0x103] sm:$0xff]
        %v2350 = vld [vmem:[%s302 + $0x10b] sm:$0xff]
        %v2351 = vld [vmem:[%s302 + $0x113] sm:$0xff]
        %v2352 = vld [vmem:[%s302 + $0x11b] sm:$0xff]
        %v2353 = vld [vmem:[%s302 + $0x123] sm:$0xff]
        %v2354 = vld [vmem:[%s302 + $0x12b] sm:$0x3f]
        %s2355 = scalar_lea.vmem %s1, 448
        %v2356 = vld [vmem:[%s2355] sm:$0xff]
        %v2357 = vld [vmem:[%s2355 + $0x8] sm:$0xff]
        %v2358 = vld [vmem:[%s2355 + $0x10] sm:$0xff]
        %v2359 = vld [vmem:[%s2355 + $0x18] sm:$0xff]
        %v2360 = vld [vmem:[%s2355 + $0x20] sm:$0xff]
        %v2361 = vld [vmem:[%s2355 + $0x28] sm:$0xff]
        %v2362 = vld [vmem:[%s2355 + $0x30] sm:$0xff]
        %v2363 = vld [vmem:[%s2355 + $0x38] sm:$0xff]
        %v2365 = vsel %vm388, %v2321, 0
        %v2368 = vsel %vm388, %v2322, 0
        %v2371 = vsel %vm388, %v2323, 0
        %v2374 = vsel %vm388, %v2324, 0
        %v2377 = vsel %vm388, %v2325, 0
        %v2380 = vsel %vm388, %v2326, 0
        %v2383 = vsel %vm388, %v2327, 0
        %v2386 = vsel %vm388, %v2328, 0
        %v2389 = vsel %vm388, %v2329, 0
        %v2392 = vsel %vm388, %v2330, 0
        %v2395 = vsel %vm388, %v2331, 0
        %v2398 = vsel %vm388, %v2332, 0
        %v2401 = vsel %vm388, %v2333, 0
        %v2404 = vsel %vm388, %v2334, 0
        %v2407 = vsel %vm388, %v2335, 0
        %v2410 = vsel %vm388, %v2336, 0
        %v2413 = vsel %vm388, %v2337, 0
        %v2416 = vsel %vm388, %v2338, 0
        %v2419 = vsel %vm388, %v2339, 0
        %v2422 = vsel %vm388, %v2340, 0
        %v2425 = vsel %vm388, %v2341, 0
        %v2428 = vsel %vm388, %v2342, 0
        %v2431 = vsel %vm388, %v2343, 0
        %v2434 = vsel %vm388, %v2344, 0
        %v2437 = vsel %vm388, %v2345, 0
        %v2440 = vsel %vm388, %v2346, 0
        %v2443 = vsel %vm388, %v2347, 0
        %v2446 = vsel %vm388, %v2348, 0
        %v2449 = vsel %vm388, %v2349, 0
        %v2452 = vsel %vm388, %v2350, 0
        %v2455 = vsel %vm388, %v2351, 0
        %v2458 = vsel %vm388, %v2352, 0
        %v2461 = vsel %vm388, %v2353, 0
        %v2464 = vsel %vm388, %v2354, 0
        %2466 = vmatpush.msra.mxu0 0.0
        %2467 = vmatpush.msra.mxu0 0.0
        %2468 = vmatpush.msra.mxu0 0.0
        %2469 = vmatpush.msra.mxu0 0.0
        %2470 = vmatpush.msra.mxu0 0.0
        %2471 = vmatpush.msra.mxu0 0.0
        %2472 = vmatpush.msra.mxu0 0.0
        %2473 = vmatpush.msra.mxu0 0.0
        %2474 = vmatpush.msra.mxu0 %v2363
        %2475 = vmatpush.msra.mxu0 %v2362
        %2476 = vmatpush.msra.mxu0 %v2361
        %2477 = vmatpush.msra.mxu0 %v2360
        %2478 = vmatpush.msra.mxu0 %v2359
        %2479 = vmatpush.msra.mxu0 %v2358
        %2480 = vmatpush.msra.mxu0 %v2357
        %2481 = vmatpush.msra.mxu0 %v2356
        %2482 = vmatmul.f32.gmra.mxu0 %v2365
        %v2483 = vpop.f32.mrf.mxu0
        %v2484 = vadd.f32 0.0, %v2483
        %2485 = vmatmul.f32.gmra.mxu0 %v2368
        %v2486 = vpop.f32.mrf.mxu0
        %v2487 = vadd.f32 0.0, %v2486
        %2488 = vmatmul.f32.gmra.mxu0 %v2371
        %v2489 = vpop.f32.mrf.mxu0
        %v2490 = vadd.f32 0.0, %v2489
        %2491 = vmatmul.f32.gmra.mxu0 %v2374
        %v2492 = vpop.f32.mrf.mxu0
        %v2493 = vadd.f32 0.0, %v2492
        %2494 = vmatmul.f32.gmra.mxu0 %v2377
        %v2495 = vpop.f32.mrf.mxu0
        %v2496 = vadd.f32 0.0, %v2495
        %2497 = vmatmul.f32.gmra.mxu0 %v2380
        %v2498 = vpop.f32.mrf.mxu0
        %v2499 = vadd.f32 0.0, %v2498
        %2500 = vmatmul.f32.gmra.mxu0 %v2383
        %v2501 = vpop.f32.mrf.mxu0
        %v2502 = vadd.f32 0.0, %v2501
        %2503 = vmatmul.f32.gmra.mxu0 %v2386
        %v2504 = vpop.f32.mrf.mxu0
        %v2505 = vadd.f32 0.0, %v2504
        %2506 = vmatmul.f32.gmra.mxu0 %v2389
        %v2507 = vpop.f32.mrf.mxu0
        %v2508 = vadd.f32 0.0, %v2507
        %2509 = vmatmul.f32.gmra.mxu0 %v2392
        %v2510 = vpop.f32.mrf.mxu0
        %v2511 = vadd.f32 0.0, %v2510
        %2512 = vmatmul.f32.gmra.mxu0 %v2395
        %v2513 = vpop.f32.mrf.mxu0
        %v2514 = vadd.f32 0.0, %v2513
        %2515 = vmatmul.f32.gmra.mxu0 %v2398
        %v2516 = vpop.f32.mrf.mxu0
        %v2517 = vadd.f32 0.0, %v2516
        %2518 = vmatmul.f32.gmra.mxu0 %v2401
        %v2519 = vpop.f32.mrf.mxu0
        %v2520 = vadd.f32 0.0, %v2519
        %2521 = vmatmul.f32.gmra.mxu0 %v2404
        %v2522 = vpop.f32.mrf.mxu0
        %v2523 = vadd.f32 0.0, %v2522
        %2524 = vmatmul.f32.gmra.mxu0 %v2407
        %v2525 = vpop.f32.mrf.mxu0
        %v2526 = vadd.f32 0.0, %v2525
        %2527 = vmatmul.f32.gmra.mxu0 %v2410
        %v2528 = vpop.f32.mrf.mxu0
        %v2529 = vadd.f32 0.0, %v2528
        %2530 = vmatmul.f32.gmra.mxu0 %v2413
        %v2531 = vpop.f32.mrf.mxu0
        %v2532 = vadd.f32 0.0, %v2531
        %2533 = vmatmul.f32.gmra.mxu0 %v2416
        %v2534 = vpop.f32.mrf.mxu0
        %v2535 = vadd.f32 0.0, %v2534
        %2536 = vmatmul.f32.gmra.mxu0 %v2419
        %v2537 = vpop.f32.mrf.mxu0
        %v2538 = vadd.f32 0.0, %v2537
        %2539 = vmatmul.f32.gmra.mxu0 %v2422
        %v2540 = vpop.f32.mrf.mxu0
        %v2541 = vadd.f32 0.0, %v2540
        %2542 = vmatmul.f32.gmra.mxu0 %v2425
        %v2543 = vpop.f32.mrf.mxu0
        %v2544 = vadd.f32 0.0, %v2543
        %2545 = vmatmul.f32.gmra.mxu0 %v2428
        %v2546 = vpop.f32.mrf.mxu0
        %v2547 = vadd.f32 0.0, %v2546
        %2548 = vmatmul.f32.gmra.mxu0 %v2431
        %v2549 = vpop.f32.mrf.mxu0
        %v2550 = vadd.f32 0.0, %v2549
        %2551 = vmatmul.f32.gmra.mxu0 %v2434
        %v2552 = vpop.f32.mrf.mxu0
        %v2553 = vadd.f32 0.0, %v2552
        %2554 = vmatmul.f32.gmra.mxu0 %v2437
        %v2555 = vpop.f32.mrf.mxu0
        %v2556 = vadd.f32 0.0, %v2555
        %2557 = vmatmul.f32.gmra.mxu0 %v2440
        %v2558 = vpop.f32.mrf.mxu0
        %v2559 = vadd.f32 0.0, %v2558
        %2560 = vmatmul.f32.gmra.mxu0 %v2443
        %v2561 = vpop.f32.mrf.mxu0
        %v2562 = vadd.f32 0.0, %v2561
        %2563 = vmatmul.f32.gmra.mxu0 %v2446
        %v2564 = vpop.f32.mrf.mxu0
        %v2565 = vadd.f32 0.0, %v2564
        %2566 = vmatmul.f32.gmra.mxu0 %v2449
        %v2567 = vpop.f32.mrf.mxu0
        %v2568 = vadd.f32 0.0, %v2567
        %2569 = vmatmul.f32.gmra.mxu0 %v2452
        %v2570 = vpop.f32.mrf.mxu0
        %v2571 = vadd.f32 0.0, %v2570
        %2572 = vmatmul.f32.gmra.mxu0 %v2455
        %v2573 = vpop.f32.mrf.mxu0
        %v2574 = vadd.f32 0.0, %v2573
        %2575 = vmatmul.f32.gmra.mxu0 %v2458
        %v2576 = vpop.f32.mrf.mxu0
        %v2577 = vadd.f32 0.0, %v2576
        %2578 = vmatmul.f32.gmra.mxu0 %v2461
        %v2579 = vpop.f32.mrf.mxu0
        %v2580 = vadd.f32 0.0, %v2579
        %2581 = vmatmul.f32.gmra.mxu0 %v2464
        %v2582 = vpop.f32.mrf.mxu0
        %v2583 = vadd.f32 0.0, %v2582
        %2584 = vdwg.mxu0
        %v2585 = vadd.f32 %v2287, %v2484
        %v2586 = vadd.f32 %v2288, %v2487
        %v2587 = vadd.f32 %v2289, %v2490
        %v2588 = vadd.f32 %v2290, %v2493
        %v2589 = vadd.f32 %v2291, %v2496
        %v2590 = vadd.f32 %v2292, %v2499
        %v2591 = vadd.f32 %v2293, %v2502
        %v2592 = vadd.f32 %v2294, %v2505
        %v2593 = vadd.f32 %v2295, %v2508
        %v2594 = vadd.f32 %v2296, %v2511
        %v2595 = vadd.f32 %v2297, %v2514
        %v2596 = vadd.f32 %v2298, %v2517
        %v2597 = vadd.f32 %v2299, %v2520
        %v2598 = vadd.f32 %v2300, %v2523
        %v2599 = vadd.f32 %v2301, %v2526
        %v2600 = vadd.f32 %v2302, %v2529
        %v2601 = vadd.f32 %v2303, %v2532
        %v2602 = vadd.f32 %v2304, %v2535
        %v2603 = vadd.f32 %v2305, %v2538
        %v2604 = vadd.f32 %v2306, %v2541
        %v2605 = vadd.f32 %v2307, %v2544
        %v2606 = vadd.f32 %v2308, %v2547
        %v2607 = vadd.f32 %v2309, %v2550
        %v2608 = vadd.f32 %v2310, %v2553
        %v2609 = vadd.f32 %v2311, %v2556
        %v2610 = vadd.f32 %v2312, %v2559
        %v2611 = vadd.f32 %v2313, %v2562
        %v2612 = vadd.f32 %v2314, %v2565
        %v2613 = vadd.f32 %v2315, %v2568
        %v2614 = vadd.f32 %v2316, %v2571
        %v2615 = vadd.f32 %v2317, %v2574
        %v2616 = vadd.f32 %v2318, %v2577
        %v2617 = vadd.f32 %v2319, %v2580
        %v2618 = vadd.f32 %v2320, %v2583
        %v2619 = vld [vmem:[%s302 + $0x24] sm:$0xff]
        %v2620 = vld [vmem:[%s302 + $0x2c] sm:$0xff]
        %v2621 = vld [vmem:[%s302 + $0x34] sm:$0xff]
        %v2622 = vld [vmem:[%s302 + $0x3c] sm:$0xff]
        %v2623 = vld [vmem:[%s302 + $0x44] sm:$0xff]
        %v2624 = vld [vmem:[%s302 + $0x4c] sm:$0xff]
        %v2625 = vld [vmem:[%s302 + $0x54] sm:$0xff]
        %v2626 = vld [vmem:[%s302 + $0x5c] sm:$0xff]
        %v2627 = vld [vmem:[%s302 + $0x64] sm:$0xff]
        %v2628 = vld [vmem:[%s302 + $0x6c] sm:$0xff]
        %v2629 = vld [vmem:[%s302 + $0x74] sm:$0xff]
        %v2630 = vld [vmem:[%s302 + $0x7c] sm:$0xff]
        %v2631 = vld [vmem:[%s302 + $0x84] sm:$0xff]
        %v2632 = vld [vmem:[%s302 + $0x8c] sm:$0xff]
        %v2633 = vld [vmem:[%s302 + $0x94] sm:$0xff]
        %v2634 = vld [vmem:[%s302 + $0x9c] sm:$0xff]
        %v2635 = vld [vmem:[%s302 + $0xa4] sm:$0xff]
        %v2636 = vld [vmem:[%s302 + $0xac] sm:$0xff]
        %v2637 = vld [vmem:[%s302 + $0xb4] sm:$0xff]
        %v2638 = vld [vmem:[%s302 + $0xbc] sm:$0xff]
        %v2639 = vld [vmem:[%s302 + $0xc4] sm:$0xff]
        %v2640 = vld [vmem:[%s302 + $0xcc] sm:$0xff]
        %v2641 = vld [vmem:[%s302 + $0xd4] sm:$0xff]
        %v2642 = vld [vmem:[%s302 + $0xdc] sm:$0xff]
        %v2643 = vld [vmem:[%s302 + $0xe4] sm:$0xff]
        %v2644 = vld [vmem:[%s302 + $0xec] sm:$0xff]
        %v2645 = vld [vmem:[%s302 + $0xf4] sm:$0xff]
        %v2646 = vld [vmem:[%s302 + $0xfc] sm:$0xff]
        %v2647 = vld [vmem:[%s302 + $0x104] sm:$0xff]
        %v2648 = vld [vmem:[%s302 + $0x10c] sm:$0xff]
        %v2649 = vld [vmem:[%s302 + $0x114] sm:$0xff]
        %v2650 = vld [vmem:[%s302 + $0x11c] sm:$0xff]
        %v2651 = vld [vmem:[%s302 + $0x124] sm:$0xff]
        %v2652 = vld [vmem:[%s302 + $0x12c] sm:$0x3f]
        %s2653 = scalar_lea.vmem %s1, 512
        %v2654 = vld [vmem:[%s2653] sm:$0xff]
        %v2655 = vld [vmem:[%s2653 + $0x8] sm:$0xff]
        %v2656 = vld [vmem:[%s2653 + $0x10] sm:$0xff]
        %v2657 = vld [vmem:[%s2653 + $0x18] sm:$0xff]
        %v2658 = vld [vmem:[%s2653 + $0x20] sm:$0xff]
        %v2659 = vld [vmem:[%s2653 + $0x28] sm:$0xff]
        %v2660 = vld [vmem:[%s2653 + $0x30] sm:$0xff]
        %v2661 = vld [vmem:[%s2653 + $0x38] sm:$0xff]
        %v2663 = vsel %vm388, %v2619, 0
        %v2666 = vsel %vm388, %v2620, 0
        %v2669 = vsel %vm388, %v2621, 0
        %v2672 = vsel %vm388, %v2622, 0
        %v2675 = vsel %vm388, %v2623, 0
        %v2678 = vsel %vm388, %v2624, 0
        %v2681 = vsel %vm388, %v2625, 0
        %v2684 = vsel %vm388, %v2626, 0
        %v2687 = vsel %vm388, %v2627, 0
        %v2690 = vsel %vm388, %v2628, 0
        %v2693 = vsel %vm388, %v2629, 0
        %v2696 = vsel %vm388, %v2630, 0
        %v2699 = vsel %vm388, %v2631, 0
        %v2702 = vsel %vm388, %v2632, 0
        %v2705 = vsel %vm388, %v2633, 0
        %v2708 = vsel %vm388, %v2634, 0
        %v2711 = vsel %vm388, %v2635, 0
        %v2714 = vsel %vm388, %v2636, 0
        %v2717 = vsel %vm388, %v2637, 0
        %v2720 = vsel %vm388, %v2638, 0
        %v2723 = vsel %vm388, %v2639, 0
        %v2726 = vsel %vm388, %v2640, 0
        %v2729 = vsel %vm388, %v2641, 0
        %v2732 = vsel %vm388, %v2642, 0
        %v2735 = vsel %vm388, %v2643, 0
        %v2738 = vsel %vm388, %v2644, 0
        %v2741 = vsel %vm388, %v2645, 0
        %v2744 = vsel %vm388, %v2646, 0
        %v2747 = vsel %vm388, %v2647, 0
        %v2750 = vsel %vm388, %v2648, 0
        %v2753 = vsel %vm388, %v2649, 0
        %v2756 = vsel %vm388, %v2650, 0
        %v2759 = vsel %vm388, %v2651, 0
        %v2762 = vsel %vm388, %v2652, 0
        %2764 = vmatpush.msra.mxu0 0.0
        %2765 = vmatpush.msra.mxu0 0.0
        %2766 = vmatpush.msra.mxu0 0.0
        %2767 = vmatpush.msra.mxu0 0.0
        %2768 = vmatpush.msra.mxu0 0.0
        %2769 = vmatpush.msra.mxu0 0.0
        %2770 = vmatpush.msra.mxu0 0.0
        %2771 = vmatpush.msra.mxu0 0.0
        %2772 = vmatpush.msra.mxu0 %v2661
        %2773 = vmatpush.msra.mxu0 %v2660
        %2774 = vmatpush.msra.mxu0 %v2659
        %2775 = vmatpush.msra.mxu0 %v2658
        %2776 = vmatpush.msra.mxu0 %v2657
        %2777 = vmatpush.msra.mxu0 %v2656
        %2778 = vmatpush.msra.mxu0 %v2655
        %2779 = vmatpush.msra.mxu0 %v2654
        %2780 = vmatmul.f32.gmra.mxu0 %v2663
        %v2781 = vpop.f32.mrf.mxu0
        %v2782 = vadd.f32 0.0, %v2781
        %2783 = vmatmul.f32.gmra.mxu0 %v2666
        %v2784 = vpop.f32.mrf.mxu0
        %v2785 = vadd.f32 0.0, %v2784
        %2786 = vmatmul.f32.gmra.mxu0 %v2669
        %v2787 = vpop.f32.mrf.mxu0
        %v2788 = vadd.f32 0.0, %v2787
        %2789 = vmatmul.f32.gmra.mxu0 %v2672
        %v2790 = vpop.f32.mrf.mxu0
        %v2791 = vadd.f32 0.0, %v2790
        %2792 = vmatmul.f32.gmra.mxu0 %v2675
        %v2793 = vpop.f32.mrf.mxu0
        %v2794 = vadd.f32 0.0, %v2793
        %2795 = vmatmul.f32.gmra.mxu0 %v2678
        %v2796 = vpop.f32.mrf.mxu0
        %v2797 = vadd.f32 0.0, %v2796
        %2798 = vmatmul.f32.gmra.mxu0 %v2681
        %v2799 = vpop.f32.mrf.mxu0
        %v2800 = vadd.f32 0.0, %v2799
        %2801 = vmatmul.f32.gmra.mxu0 %v2684
        %v2802 = vpop.f32.mrf.mxu0
        %v2803 = vadd.f32 0.0, %v2802
        %2804 = vmatmul.f32.gmra.mxu0 %v2687
        %v2805 = vpop.f32.mrf.mxu0
        %v2806 = vadd.f32 0.0, %v2805
        %2807 = vmatmul.f32.gmra.mxu0 %v2690
        %v2808 = vpop.f32.mrf.mxu0
        %v2809 = vadd.f32 0.0, %v2808
        %2810 = vmatmul.f32.gmra.mxu0 %v2693
        %v2811 = vpop.f32.mrf.mxu0
        %v2812 = vadd.f32 0.0, %v2811
        %2813 = vmatmul.f32.gmra.mxu0 %v2696
        %v2814 = vpop.f32.mrf.mxu0
        %v2815 = vadd.f32 0.0, %v2814
        %2816 = vmatmul.f32.gmra.mxu0 %v2699
        %v2817 = vpop.f32.mrf.mxu0
        %v2818 = vadd.f32 0.0, %v2817
        %2819 = vmatmul.f32.gmra.mxu0 %v2702
        %v2820 = vpop.f32.mrf.mxu0
        %v2821 = vadd.f32 0.0, %v2820
        %2822 = vmatmul.f32.gmra.mxu0 %v2705
        %v2823 = vpop.f32.mrf.mxu0
        %v2824 = vadd.f32 0.0, %v2823
        %2825 = vmatmul.f32.gmra.mxu0 %v2708
        %v2826 = vpop.f32.mrf.mxu0
        %v2827 = vadd.f32 0.0, %v2826
        %2828 = vmatmul.f32.gmra.mxu0 %v2711
        %v2829 = vpop.f32.mrf.mxu0
        %v2830 = vadd.f32 0.0, %v2829
        %2831 = vmatmul.f32.gmra.mxu0 %v2714
        %v2832 = vpop.f32.mrf.mxu0
        %v2833 = vadd.f32 0.0, %v2832
        %2834 = vmatmul.f32.gmra.mxu0 %v2717
        %v2835 = vpop.f32.mrf.mxu0
        %v2836 = vadd.f32 0.0, %v2835
        %2837 = vmatmul.f32.gmra.mxu0 %v2720
        %v2838 = vpop.f32.mrf.mxu0
        %v2839 = vadd.f32 0.0, %v2838
        %2840 = vmatmul.f32.gmra.mxu0 %v2723
        %v2841 = vpop.f32.mrf.mxu0
        %v2842 = vadd.f32 0.0, %v2841
        %2843 = vmatmul.f32.gmra.mxu0 %v2726
        %v2844 = vpop.f32.mrf.mxu0
        %v2845 = vadd.f32 0.0, %v2844
        %2846 = vmatmul.f32.gmra.mxu0 %v2729
        %v2847 = vpop.f32.mrf.mxu0
        %v2848 = vadd.f32 0.0, %v2847
        %2849 = vmatmul.f32.gmra.mxu0 %v2732
        %v2850 = vpop.f32.mrf.mxu0
        %v2851 = vadd.f32 0.0, %v2850
        %2852 = vmatmul.f32.gmra.mxu0 %v2735
        %v2853 = vpop.f32.mrf.mxu0
        %v2854 = vadd.f32 0.0, %v2853
        %2855 = vmatmul.f32.gmra.mxu0 %v2738
        %v2856 = vpop.f32.mrf.mxu0
        %v2857 = vadd.f32 0.0, %v2856
        %2858 = vmatmul.f32.gmra.mxu0 %v2741
        %v2859 = vpop.f32.mrf.mxu0
        %v2860 = vadd.f32 0.0, %v2859
        %2861 = vmatmul.f32.gmra.mxu0 %v2744
        %v2862 = vpop.f32.mrf.mxu0
        %v2863 = vadd.f32 0.0, %v2862
        %2864 = vmatmul.f32.gmra.mxu0 %v2747
        %v2865 = vpop.f32.mrf.mxu0
        %v2866 = vadd.f32 0.0, %v2865
        %2867 = vmatmul.f32.gmra.mxu0 %v2750
        %v2868 = vpop.f32.mrf.mxu0
        %v2869 = vadd.f32 0.0, %v2868
        %2870 = vmatmul.f32.gmra.mxu0 %v2753
        %v2871 = vpop.f32.mrf.mxu0
        %v2872 = vadd.f32 0.0, %v2871
        %2873 = vmatmul.f32.gmra.mxu0 %v2756
        %v2874 = vpop.f32.mrf.mxu0
        %v2875 = vadd.f32 0.0, %v2874
        %2876 = vmatmul.f32.gmra.mxu0 %v2759
        %v2877 = vpop.f32.mrf.mxu0
        %v2878 = vadd.f32 0.0, %v2877
        %2879 = vmatmul.f32.gmra.mxu0 %v2762
        %v2880 = vpop.f32.mrf.mxu0
        %v2881 = vadd.f32 0.0, %v2880
        %2882 = vdwg.mxu0
        %v2883 = vadd.f32 %v2585, %v2782
        %v2884 = vadd.f32 %v2586, %v2785
        %v2885 = vadd.f32 %v2587, %v2788
        %v2886 = vadd.f32 %v2588, %v2791
        %v2887 = vadd.f32 %v2589, %v2794
        %v2888 = vadd.f32 %v2590, %v2797
        %v2889 = vadd.f32 %v2591, %v2800
        %v2890 = vadd.f32 %v2592, %v2803
        %v2891 = vadd.f32 %v2593, %v2806
        %v2892 = vadd.f32 %v2594, %v2809
        %v2893 = vadd.f32 %v2595, %v2812
        %v2894 = vadd.f32 %v2596, %v2815
        %v2895 = vadd.f32 %v2597, %v2818
        %v2896 = vadd.f32 %v2598, %v2821
        %v2897 = vadd.f32 %v2599, %v2824
        %v2898 = vadd.f32 %v2600, %v2827
        %v2899 = vadd.f32 %v2601, %v2830
        %v2900 = vadd.f32 %v2602, %v2833
        %v2901 = vadd.f32 %v2603, %v2836
        %v2902 = vadd.f32 %v2604, %v2839
        %v2903 = vadd.f32 %v2605, %v2842
        %v2904 = vadd.f32 %v2606, %v2845
        %v2905 = vadd.f32 %v2607, %v2848
        %v2906 = vadd.f32 %v2608, %v2851
        %v2907 = vadd.f32 %v2609, %v2854
        %v2908 = vadd.f32 %v2610, %v2857
        %v2909 = vadd.f32 %v2611, %v2860
        %v2910 = vadd.f32 %v2612, %v2863
        %v2911 = vadd.f32 %v2613, %v2866
        %v2912 = vadd.f32 %v2614, %v2869
        %v2913 = vadd.f32 %v2615, %v2872
        %v2914 = vadd.f32 %v2616, %v2875
        %v2915 = vadd.f32 %v2617, %v2878
        %v2916 = vadd.f32 %v2618, %v2881
        %v2917 = vld [vmem:[%s302 + $0x33] sm:$0xff]
        %v2918 = vld [vmem:[%s302 + $0x3b] sm:$0xff]
        %v2919 = vld [vmem:[%s302 + $0x43] sm:$0xff]
        %v2920 = vld [vmem:[%s302 + $0x4b] sm:$0xff]
        %v2921 = vld [vmem:[%s302 + $0x53] sm:$0xff]
        %v2922 = vld [vmem:[%s302 + $0x5b] sm:$0xff]
        %v2923 = vld [vmem:[%s302 + $0x63] sm:$0xff]
        %v2924 = vld [vmem:[%s302 + $0x6b] sm:$0xff]
        %v2925 = vld [vmem:[%s302 + $0x73] sm:$0xff]
        %v2926 = vld [vmem:[%s302 + $0x7b] sm:$0xff]
        %v2927 = vld [vmem:[%s302 + $0x83] sm:$0xff]
        %v2928 = vld [vmem:[%s302 + $0x8b] sm:$0xff]
        %v2929 = vld [vmem:[%s302 + $0x93] sm:$0xff]
        %v2930 = vld [vmem:[%s302 + $0x9b] sm:$0xff]
        %v2931 = vld [vmem:[%s302 + $0xa3] sm:$0xff]
        %v2932 = vld [vmem:[%s302 + $0xab] sm:$0xff]
        %v2933 = vld [vmem:[%s302 + $0xb3] sm:$0xff]
        %v2934 = vld [vmem:[%s302 + $0xbb] sm:$0xff]
        %v2935 = vld [vmem:[%s302 + $0xc3] sm:$0xff]
        %v2936 = vld [vmem:[%s302 + $0xcb] sm:$0xff]
        %v2937 = vld [vmem:[%s302 + $0xd3] sm:$0xff]
        %v2938 = vld [vmem:[%s302 + $0xdb] sm:$0xff]
        %v2939 = vld [vmem:[%s302 + $0xe3] sm:$0xff]
        %v2940 = vld [vmem:[%s302 + $0xeb] sm:$0xff]
        %v2941 = vld [vmem:[%s302 + $0xf3] sm:$0xff]
        %v2942 = vld [vmem:[%s302 + $0xfb] sm:$0xff]
        %v2943 = vld [vmem:[%s302 + $0x103] sm:$0xff]
        %v2944 = vld [vmem:[%s302 + $0x10b] sm:$0xff]
        %v2945 = vld [vmem:[%s302 + $0x113] sm:$0xff]
        %v2946 = vld [vmem:[%s302 + $0x11b] sm:$0xff]
        %v2947 = vld [vmem:[%s302 + $0x123] sm:$0xff]
        %v2948 = vld [vmem:[%s302 + $0x12b] sm:$0xff]
        %v2949 = vld [vmem:[%s302 + $0x133] sm:$0xff]
        %v2950 = vld [vmem:[%s302 + $0x13b] sm:$0x3f]
        %s2951 = scalar_lea.vmem %s1, 576
        %v2952 = vld [vmem:[%s2951] sm:$0xff]
        %v2953 = vld [vmem:[%s2951 + $0x8] sm:$0xff]
        %v2954 = vld [vmem:[%s2951 + $0x10] sm:$0xff]
        %v2955 = vld [vmem:[%s2951 + $0x18] sm:$0xff]
        %v2956 = vld [vmem:[%s2951 + $0x20] sm:$0xff]
        %v2957 = vld [vmem:[%s2951 + $0x28] sm:$0xff]
        %v2958 = vld [vmem:[%s2951 + $0x30] sm:$0xff]
        %v2959 = vld [vmem:[%s2951 + $0x38] sm:$0xff]
        %v2961 = vsel %vm388, %v2917, 0
        %v2964 = vsel %vm388, %v2918, 0
        %v2967 = vsel %vm388, %v2919, 0
        %v2970 = vsel %vm388, %v2920, 0
        %v2973 = vsel %vm388, %v2921, 0
        %v2976 = vsel %vm388, %v2922, 0
        %v2979 = vsel %vm388, %v2923, 0
        %v2982 = vsel %vm388, %v2924, 0
        %v2985 = vsel %vm388, %v2925, 0
        %v2988 = vsel %vm388, %v2926, 0
        %v2991 = vsel %vm388, %v2927, 0
        %v2994 = vsel %vm388, %v2928, 0
        %v2997 = vsel %vm388, %v2929, 0
        %v3000 = vsel %vm388, %v2930, 0
        %v3003 = vsel %vm388, %v2931, 0
        %v3006 = vsel %vm388, %v2932, 0
        %v3009 = vsel %vm388, %v2933, 0
        %v3012 = vsel %vm388, %v2934, 0
        %v3015 = vsel %vm388, %v2935, 0
        %v3018 = vsel %vm388, %v2936, 0
        %v3021 = vsel %vm388, %v2937, 0
        %v3024 = vsel %vm388, %v2938, 0
        %v3027 = vsel %vm388, %v2939, 0
        %v3030 = vsel %vm388, %v2940, 0
        %v3033 = vsel %vm388, %v2941, 0
        %v3036 = vsel %vm388, %v2942, 0
        %v3039 = vsel %vm388, %v2943, 0
        %v3042 = vsel %vm388, %v2944, 0
        %v3045 = vsel %vm388, %v2945, 0
        %v3048 = vsel %vm388, %v2946, 0
        %v3051 = vsel %vm388, %v2947, 0
        %v3054 = vsel %vm388, %v2948, 0
        %v3057 = vsel %vm388, %v2949, 0
        %v3060 = vsel %vm388, %v2950, 0
        %3062 = vmatpush.msra.mxu0 0.0
        %3063 = vmatpush.msra.mxu0 0.0
        %3064 = vmatpush.msra.mxu0 0.0
        %3065 = vmatpush.msra.mxu0 0.0
        %3066 = vmatpush.msra.mxu0 0.0
        %3067 = vmatpush.msra.mxu0 0.0
        %3068 = vmatpush.msra.mxu0 0.0
        %3069 = vmatpush.msra.mxu0 0.0
        %3070 = vmatpush.msra.mxu0 %v2959
        %3071 = vmatpush.msra.mxu0 %v2958
        %3072 = vmatpush.msra.mxu0 %v2957
        %3073 = vmatpush.msra.mxu0 %v2956
        %3074 = vmatpush.msra.mxu0 %v2955
        %3075 = vmatpush.msra.mxu0 %v2954
        %3076 = vmatpush.msra.mxu0 %v2953
        %3077 = vmatpush.msra.mxu0 %v2952
        %3078 = vmatmul.f32.gmra.mxu0 %v2961
        %v3079 = vpop.f32.mrf.mxu0
        %v3080 = vadd.f32 0.0, %v3079
        %3081 = vmatmul.f32.gmra.mxu0 %v2964
        %v3082 = vpop.f32.mrf.mxu0
        %v3083 = vadd.f32 0.0, %v3082
        %3084 = vmatmul.f32.gmra.mxu0 %v2967
        %v3085 = vpop.f32.mrf.mxu0
        %v3086 = vadd.f32 0.0, %v3085
        %3087 = vmatmul.f32.gmra.mxu0 %v2970
        %v3088 = vpop.f32.mrf.mxu0
        %v3089 = vadd.f32 0.0, %v3088
        %3090 = vmatmul.f32.gmra.mxu0 %v2973
        %v3091 = vpop.f32.mrf.mxu0
        %v3092 = vadd.f32 0.0, %v3091
        %3093 = vmatmul.f32.gmra.mxu0 %v2976
        %v3094 = vpop.f32.mrf.mxu0
        %v3095 = vadd.f32 0.0, %v3094
        %3096 = vmatmul.f32.gmra.mxu0 %v2979
        %v3097 = vpop.f32.mrf.mxu0
        %v3098 = vadd.f32 0.0, %v3097
        %3099 = vmatmul.f32.gmra.mxu0 %v2982
        %v3100 = vpop.f32.mrf.mxu0
        %v3101 = vadd.f32 0.0, %v3100
        %3102 = vmatmul.f32.gmra.mxu0 %v2985
        %v3103 = vpop.f32.mrf.mxu0
        %v3104 = vadd.f32 0.0, %v3103
        %3105 = vmatmul.f32.gmra.mxu0 %v2988
        %v3106 = vpop.f32.mrf.mxu0
        %v3107 = vadd.f32 0.0, %v3106
        %3108 = vmatmul.f32.gmra.mxu0 %v2991
        %v3109 = vpop.f32.mrf.mxu0
        %v3110 = vadd.f32 0.0, %v3109
        %3111 = vmatmul.f32.gmra.mxu0 %v2994
        %v3112 = vpop.f32.mrf.mxu0
        %v3113 = vadd.f32 0.0, %v3112
        %3114 = vmatmul.f32.gmra.mxu0 %v2997
        %v3115 = vpop.f32.mrf.mxu0
        %v3116 = vadd.f32 0.0, %v3115
        %3117 = vmatmul.f32.gmra.mxu0 %v3000
        %v3118 = vpop.f32.mrf.mxu0
        %v3119 = vadd.f32 0.0, %v3118
        %3120 = vmatmul.f32.gmra.mxu0 %v3003
        %v3121 = vpop.f32.mrf.mxu0
        %v3122 = vadd.f32 0.0, %v3121
        %3123 = vmatmul.f32.gmra.mxu0 %v3006
        %v3124 = vpop.f32.mrf.mxu0
        %v3125 = vadd.f32 0.0, %v3124
        %3126 = vmatmul.f32.gmra.mxu0 %v3009
        %v3127 = vpop.f32.mrf.mxu0
        %v3128 = vadd.f32 0.0, %v3127
        %3129 = vmatmul.f32.gmra.mxu0 %v3012
        %v3130 = vpop.f32.mrf.mxu0
        %v3131 = vadd.f32 0.0, %v3130
        %3132 = vmatmul.f32.gmra.mxu0 %v3015
        %v3133 = vpop.f32.mrf.mxu0
        %v3134 = vadd.f32 0.0, %v3133
        %3135 = vmatmul.f32.gmra.mxu0 %v3018
        %v3136 = vpop.f32.mrf.mxu0
        %v3137 = vadd.f32 0.0, %v3136
        %3138 = vmatmul.f32.gmra.mxu0 %v3021
        %v3139 = vpop.f32.mrf.mxu0
        %v3140 = vadd.f32 0.0, %v3139
        %3141 = vmatmul.f32.gmra.mxu0 %v3024
        %v3142 = vpop.f32.mrf.mxu0
        %v3143 = vadd.f32 0.0, %v3142
        %3144 = vmatmul.f32.gmra.mxu0 %v3027
        %v3145 = vpop.f32.mrf.mxu0
        %v3146 = vadd.f32 0.0, %v3145
        %3147 = vmatmul.f32.gmra.mxu0 %v3030
        %v3148 = vpop.f32.mrf.mxu0
        %v3149 = vadd.f32 0.0, %v3148
        %3150 = vmatmul.f32.gmra.mxu0 %v3033
        %v3151 = vpop.f32.mrf.mxu0
        %v3152 = vadd.f32 0.0, %v3151
        %3153 = vmatmul.f32.gmra.mxu0 %v3036
        %v3154 = vpop.f32.mrf.mxu0
        %v3155 = vadd.f32 0.0, %v3154
        %3156 = vmatmul.f32.gmra.mxu0 %v3039
        %v3157 = vpop.f32.mrf.mxu0
        %v3158 = vadd.f32 0.0, %v3157
        %3159 = vmatmul.f32.gmra.mxu0 %v3042
        %v3160 = vpop.f32.mrf.mxu0
        %v3161 = vadd.f32 0.0, %v3160
        %3162 = vmatmul.f32.gmra.mxu0 %v3045
        %v3163 = vpop.f32.mrf.mxu0
        %v3164 = vadd.f32 0.0, %v3163
        %3165 = vmatmul.f32.gmra.mxu0 %v3048
        %v3166 = vpop.f32.mrf.mxu0
        %v3167 = vadd.f32 0.0, %v3166
        %3168 = vmatmul.f32.gmra.mxu0 %v3051
        %v3169 = vpop.f32.mrf.mxu0
        %v3170 = vadd.f32 0.0, %v3169
        %3171 = vmatmul.f32.gmra.mxu0 %v3054
        %v3172 = vpop.f32.mrf.mxu0
        %v3173 = vadd.f32 0.0, %v3172
        %3174 = vmatmul.f32.gmra.mxu0 %v3057
        %v3175 = vpop.f32.mrf.mxu0
        %v3176 = vadd.f32 0.0, %v3175
        %3177 = vmatmul.f32.gmra.mxu0 %v3060
        %v3178 = vpop.f32.mrf.mxu0
        %v3179 = vadd.f32 0.0, %v3178
        %3180 = vdwg.mxu0
        %v3181 = vadd.f32 %v2883, %v3080
        %v3182 = vadd.f32 %v2884, %v3083
        %v3183 = vadd.f32 %v2885, %v3086
        %v3184 = vadd.f32 %v2886, %v3089
        %v3185 = vadd.f32 %v2887, %v3092
        %v3186 = vadd.f32 %v2888, %v3095
        %v3187 = vadd.f32 %v2889, %v3098
        %v3188 = vadd.f32 %v2890, %v3101
        %v3189 = vadd.f32 %v2891, %v3104
        %v3190 = vadd.f32 %v2892, %v3107
        %v3191 = vadd.f32 %v2893, %v3110
        %v3192 = vadd.f32 %v2894, %v3113
        %v3193 = vadd.f32 %v2895, %v3116
        %v3194 = vadd.f32 %v2896, %v3119
        %v3195 = vadd.f32 %v2897, %v3122
        %v3196 = vadd.f32 %v2898, %v3125
        %v3197 = vadd.f32 %v2899, %v3128
        %v3198 = vadd.f32 %v2900, %v3131
        %v3199 = vadd.f32 %v2901, %v3134
        %v3200 = vadd.f32 %v2902, %v3137
        %v3201 = vadd.f32 %v2903, %v3140
        %v3202 = vadd.f32 %v2904, %v3143
        %v3203 = vadd.f32 %v2905, %v3146
        %v3204 = vadd.f32 %v2906, %v3149
        %v3205 = vadd.f32 %v2907, %v3152
        %v3206 = vadd.f32 %v2908, %v3155
        %v3207 = vadd.f32 %v2909, %v3158
        %v3208 = vadd.f32 %v2910, %v3161
        %v3209 = vadd.f32 %v2911, %v3164
        %v3210 = vadd.f32 %v2912, %v3167
        %v3211 = vadd.f32 %v2913, %v3170
        %v3212 = vadd.f32 %v2914, %v3173
        %v3213 = vadd.f32 %v2915, %v3176
        %v3214 = vadd.f32 %v2916, %v3179
        %v3215 = vld [vmem:[%s302 + $0x34] sm:$0xff]
        %v3216 = vld [vmem:[%s302 + $0x3c] sm:$0xff]
        %v3217 = vld [vmem:[%s302 + $0x44] sm:$0xff]
        %v3218 = vld [vmem:[%s302 + $0x4c] sm:$0xff]
        %v3219 = vld [vmem:[%s302 + $0x54] sm:$0xff]
        %v3220 = vld [vmem:[%s302 + $0x5c] sm:$0xff]
        %v3221 = vld [vmem:[%s302 + $0x64] sm:$0xff]
        %v3222 = vld [vmem:[%s302 + $0x6c] sm:$0xff]
        %v3223 = vld [vmem:[%s302 + $0x74] sm:$0xff]
        %v3224 = vld [vmem:[%s302 + $0x7c] sm:$0xff]
        %v3225 = vld [vmem:[%s302 + $0x84] sm:$0xff]
        %v3226 = vld [vmem:[%s302 + $0x8c] sm:$0xff]
        %v3227 = vld [vmem:[%s302 + $0x94] sm:$0xff]
        %v3228 = vld [vmem:[%s302 + $0x9c] sm:$0xff]
        %v3229 = vld [vmem:[%s302 + $0xa4] sm:$0xff]
        %v3230 = vld [vmem:[%s302 + $0xac] sm:$0xff]
        %v3231 = vld [vmem:[%s302 + $0xb4] sm:$0xff]
        %v3232 = vld [vmem:[%s302 + $0xbc] sm:$0xff]
        %v3233 = vld [vmem:[%s302 + $0xc4] sm:$0xff]
        %v3234 = vld [vmem:[%s302 + $0xcc] sm:$0xff]
        %v3235 = vld [vmem:[%s302 + $0xd4] sm:$0xff]
        %v3236 = vld [vmem:[%s302 + $0xdc] sm:$0xff]
        %v3237 = vld [vmem:[%s302 + $0xe4] sm:$0xff]
        %v3238 = vld [vmem:[%s302 + $0xec] sm:$0xff]
        %v3239 = vld [vmem:[%s302 + $0xf4] sm:$0xff]
        %v3240 = vld [vmem:[%s302 + $0xfc] sm:$0xff]
        %v3241 = vld [vmem:[%s302 + $0x104] sm:$0xff]
        %v3242 = vld [vmem:[%s302 + $0x10c] sm:$0xff]
        %v3243 = vld [vmem:[%s302 + $0x114] sm:$0xff]
        %v3244 = vld [vmem:[%s302 + $0x11c] sm:$0xff]
        %v3245 = vld [vmem:[%s302 + $0x124] sm:$0xff]
        %v3246 = vld [vmem:[%s302 + $0x12c] sm:$0xff]
        %v3247 = vld [vmem:[%s302 + $0x134] sm:$0xff]
        %v3248 = vld [vmem:[%s302 + $0x13c] sm:$0x3f]
        %s3249 = scalar_lea.vmem %s1, 640
        %v3250 = vld [vmem:[%s3249] sm:$0xff]
        %v3251 = vld [vmem:[%s3249 + $0x8] sm:$0xff]
        %v3252 = vld [vmem:[%s3249 + $0x10] sm:$0xff]
        %v3253 = vld [vmem:[%s3249 + $0x18] sm:$0xff]
        %v3254 = vld [vmem:[%s3249 + $0x20] sm:$0xff]
        %v3255 = vld [vmem:[%s3249 + $0x28] sm:$0xff]
        %v3256 = vld [vmem:[%s3249 + $0x30] sm:$0xff]
        %v3257 = vld [vmem:[%s3249 + $0x38] sm:$0xff]
        %v3259 = vsel %vm388, %v3215, 0
        %v3262 = vsel %vm388, %v3216, 0
        %v3265 = vsel %vm388, %v3217, 0
        %v3268 = vsel %vm388, %v3218, 0
        %v3271 = vsel %vm388, %v3219, 0
        %v3274 = vsel %vm388, %v3220, 0
        %v3277 = vsel %vm388, %v3221, 0
        %v3280 = vsel %vm388, %v3222, 0
        %v3283 = vsel %vm388, %v3223, 0
        %v3286 = vsel %vm388, %v3224, 0
        %v3289 = vsel %vm388, %v3225, 0
        %v3292 = vsel %vm388, %v3226, 0
        %v3295 = vsel %vm388, %v3227, 0
        %v3298 = vsel %vm388, %v3228, 0
        %v3301 = vsel %vm388, %v3229, 0
        %v3304 = vsel %vm388, %v3230, 0
        %v3307 = vsel %vm388, %v3231, 0
        %v3310 = vsel %vm388, %v3232, 0
        %v3313 = vsel %vm388, %v3233, 0
        %v3316 = vsel %vm388, %v3234, 0
        %v3319 = vsel %vm388, %v3235, 0
        %v3322 = vsel %vm388, %v3236, 0
        %v3325 = vsel %vm388, %v3237, 0
        %v3328 = vsel %vm388, %v3238, 0
        %v3331 = vsel %vm388, %v3239, 0
        %v3334 = vsel %vm388, %v3240, 0
        %v3337 = vsel %vm388, %v3241, 0
        %v3340 = vsel %vm388, %v3242, 0
        %v3343 = vsel %vm388, %v3243, 0
        %v3346 = vsel %vm388, %v3244, 0
        %v3349 = vsel %vm388, %v3245, 0
        %v3352 = vsel %vm388, %v3246, 0
        %v3355 = vsel %vm388, %v3247, 0
        %v3358 = vsel %vm388, %v3248, 0
        %3360 = vmatpush.msra.mxu0 0.0
        %3361 = vmatpush.msra.mxu0 0.0
        %3362 = vmatpush.msra.mxu0 0.0
        %3363 = vmatpush.msra.mxu0 0.0
        %3364 = vmatpush.msra.mxu0 0.0
        %3365 = vmatpush.msra.mxu0 0.0
        %3366 = vmatpush.msra.mxu0 0.0
        %3367 = vmatpush.msra.mxu0 0.0
        %3368 = vmatpush.msra.mxu0 %v3257
        %3369 = vmatpush.msra.mxu0 %v3256
        %3370 = vmatpush.msra.mxu0 %v3255
        %3371 = vmatpush.msra.mxu0 %v3254
        %3372 = vmatpush.msra.mxu0 %v3253
        %3373 = vmatpush.msra.mxu0 %v3252
        %3374 = vmatpush.msra.mxu0 %v3251
        %3375 = vmatpush.msra.mxu0 %v3250
        %3376 = vmatmul.f32.gmra.mxu0 %v3259
        %v3377 = vpop.f32.mrf.mxu0
        %v3378 = vadd.f32 0.0, %v3377
        %3379 = vmatmul.f32.gmra.mxu0 %v3262
        %v3380 = vpop.f32.mrf.mxu0
        %v3381 = vadd.f32 0.0, %v3380
        %3382 = vmatmul.f32.gmra.mxu0 %v3265
        %v3383 = vpop.f32.mrf.mxu0
        %v3384 = vadd.f32 0.0, %v3383
        %3385 = vmatmul.f32.gmra.mxu0 %v3268
        %v3386 = vpop.f32.mrf.mxu0
        %v3387 = vadd.f32 0.0, %v3386
        %3388 = vmatmul.f32.gmra.mxu0 %v3271
        %v3389 = vpop.f32.mrf.mxu0
        %v3390 = vadd.f32 0.0, %v3389
        %3391 = vmatmul.f32.gmra.mxu0 %v3274
        %v3392 = vpop.f32.mrf.mxu0
        %v3393 = vadd.f32 0.0, %v3392
        %3394 = vmatmul.f32.gmra.mxu0 %v3277
        %v3395 = vpop.f32.mrf.mxu0
        %v3396 = vadd.f32 0.0, %v3395
        %3397 = vmatmul.f32.gmra.mxu0 %v3280
        %v3398 = vpop.f32.mrf.mxu0
        %v3399 = vadd.f32 0.0, %v3398
        %3400 = vmatmul.f32.gmra.mxu0 %v3283
        %v3401 = vpop.f32.mrf.mxu0
        %v3402 = vadd.f32 0.0, %v3401
        %3403 = vmatmul.f32.gmra.mxu0 %v3286
        %v3404 = vpop.f32.mrf.mxu0
        %v3405 = vadd.f32 0.0, %v3404
        %3406 = vmatmul.f32.gmra.mxu0 %v3289
        %v3407 = vpop.f32.mrf.mxu0
        %v3408 = vadd.f32 0.0, %v3407
        %3409 = vmatmul.f32.gmra.mxu0 %v3292
        %v3410 = vpop.f32.mrf.mxu0
        %v3411 = vadd.f32 0.0, %v3410
        %3412 = vmatmul.f32.gmra.mxu0 %v3295
        %v3413 = vpop.f32.mrf.mxu0
        %v3414 = vadd.f32 0.0, %v3413
        %3415 = vmatmul.f32.gmra.mxu0 %v3298
        %v3416 = vpop.f32.mrf.mxu0
        %v3417 = vadd.f32 0.0, %v3416
        %3418 = vmatmul.f32.gmra.mxu0 %v3301
        %v3419 = vpop.f32.mrf.mxu0
        %v3420 = vadd.f32 0.0, %v3419
        %3421 = vmatmul.f32.gmra.mxu0 %v3304
        %v3422 = vpop.f32.mrf.mxu0
        %v3423 = vadd.f32 0.0, %v3422
        %3424 = vmatmul.f32.gmra.mxu0 %v3307
        %v3425 = vpop.f32.mrf.mxu0
        %v3426 = vadd.f32 0.0, %v3425
        %3427 = vmatmul.f32.gmra.mxu0 %v3310
        %v3428 = vpop.f32.mrf.mxu0
        %v3429 = vadd.f32 0.0, %v3428
        %3430 = vmatmul.f32.gmra.mxu0 %v3313
        %v3431 = vpop.f32.mrf.mxu0
        %v3432 = vadd.f32 0.0, %v3431
        %3433 = vmatmul.f32.gmra.mxu0 %v3316
        %v3434 = vpop.f32.mrf.mxu0
        %v3435 = vadd.f32 0.0, %v3434
        %3436 = vmatmul.f32.gmra.mxu0 %v3319
        %v3437 = vpop.f32.mrf.mxu0
        %v3438 = vadd.f32 0.0, %v3437
        %3439 = vmatmul.f32.gmra.mxu0 %v3322
        %v3440 = vpop.f32.mrf.mxu0
        %v3441 = vadd.f32 0.0, %v3440
        %3442 = vmatmul.f32.gmra.mxu0 %v3325
        %v3443 = vpop.f32.mrf.mxu0
        %v3444 = vadd.f32 0.0, %v3443
        %3445 = vmatmul.f32.gmra.mxu0 %v3328
        %v3446 = vpop.f32.mrf.mxu0
        %v3447 = vadd.f32 0.0, %v3446
        %3448 = vmatmul.f32.gmra.mxu0 %v3331
        %v3449 = vpop.f32.mrf.mxu0
        %v3450 = vadd.f32 0.0, %v3449
        %3451 = vmatmul.f32.gmra.mxu0 %v3334
        %v3452 = vpop.f32.mrf.mxu0
        %v3453 = vadd.f32 0.0, %v3452
        %3454 = vmatmul.f32.gmra.mxu0 %v3337
        %v3455 = vpop.f32.mrf.mxu0
        %v3456 = vadd.f32 0.0, %v3455
        %3457 = vmatmul.f32.gmra.mxu0 %v3340
        %v3458 = vpop.f32.mrf.mxu0
        %v3459 = vadd.f32 0.0, %v3458
        %3460 = vmatmul.f32.gmra.mxu0 %v3343
        %v3461 = vpop.f32.mrf.mxu0
        %v3462 = vadd.f32 0.0, %v3461
        %3463 = vmatmul.f32.gmra.mxu0 %v3346
        %v3464 = vpop.f32.mrf.mxu0
        %v3465 = vadd.f32 0.0, %v3464
        %3466 = vmatmul.f32.gmra.mxu0 %v3349
        %v3467 = vpop.f32.mrf.mxu0
        %v3468 = vadd.f32 0.0, %v3467
        %3469 = vmatmul.f32.gmra.mxu0 %v3352
        %v3470 = vpop.f32.mrf.mxu0
        %v3471 = vadd.f32 0.0, %v3470
        %3472 = vmatmul.f32.gmra.mxu0 %v3355
        %v3473 = vpop.f32.mrf.mxu0
        %v3474 = vadd.f32 0.0, %v3473
        %3475 = vmatmul.f32.gmra.mxu0 %v3358
        %v3476 = vpop.f32.mrf.mxu0
        %v3477 = vadd.f32 0.0, %v3476
        %3478 = vdwg.mxu0
        %v3479 = vadd.f32 %v3181, %v3378
        %v3480 = vadd.f32 %v3182, %v3381
        %v3481 = vadd.f32 %v3183, %v3384
        %v3482 = vadd.f32 %v3184, %v3387
        %v3483 = vadd.f32 %v3185, %v3390
        %v3484 = vadd.f32 %v3186, %v3393
        %v3485 = vadd.f32 %v3187, %v3396
        %v3486 = vadd.f32 %v3188, %v3399
        %v3487 = vadd.f32 %v3189, %v3402
        %v3488 = vadd.f32 %v3190, %v3405
        %v3489 = vadd.f32 %v3191, %v3408
        %v3490 = vadd.f32 %v3192, %v3411
        %v3491 = vadd.f32 %v3193, %v3414
        %v3492 = vadd.f32 %v3194, %v3417
        %v3493 = vadd.f32 %v3195, %v3420
        %v3494 = vadd.f32 %v3196, %v3423
        %v3495 = vadd.f32 %v3197, %v3426
        %v3496 = vadd.f32 %v3198, %v3429
        %v3497 = vadd.f32 %v3199, %v3432
        %v3498 = vadd.f32 %v3200, %v3435
        %v3499 = vadd.f32 %v3201, %v3438
        %v3500 = vadd.f32 %v3202, %v3441
        %v3501 = vadd.f32 %v3203, %v3444
        %v3502 = vadd.f32 %v3204, %v3447
        %v3503 = vadd.f32 %v3205, %v3450
        %v3504 = vadd.f32 %v3206, %v3453
        %v3505 = vadd.f32 %v3207, %v3456
        %v3506 = vadd.f32 %v3208, %v3459
        %v3507 = vadd.f32 %v3209, %v3462
        %v3508 = vadd.f32 %v3210, %v3465
        %v3509 = vadd.f32 %v3211, %v3468
        %v3510 = vadd.f32 %v3212, %v3471
        %v3511 = vadd.f32 %v3213, %v3474
        %v3512 = vadd.f32 %v3214, %v3477
        %v3513 = vld [vmem:[%s302 + $0x35] sm:$0xff]
        %v3514 = vld [vmem:[%s302 + $0x3d] sm:$0xff]
        %v3515 = vld [vmem:[%s302 + $0x45] sm:$0xff]
        %v3516 = vld [vmem:[%s302 + $0x4d] sm:$0xff]
        %v3517 = vld [vmem:[%s302 + $0x55] sm:$0xff]
        %v3518 = vld [vmem:[%s302 + $0x5d] sm:$0xff]
        %v3519 = vld [vmem:[%s302 + $0x65] sm:$0xff]
        %v3520 = vld [vmem:[%s302 + $0x6d] sm:$0xff]
        %v3521 = vld [vmem:[%s302 + $0x75] sm:$0xff]
        %v3522 = vld [vmem:[%s302 + $0x7d] sm:$0xff]
        %v3523 = vld [vmem:[%s302 + $0x85] sm:$0xff]
        %v3524 = vld [vmem:[%s302 + $0x8d] sm:$0xff]
        %v3525 = vld [vmem:[%s302 + $0x95] sm:$0xff]
        %v3526 = vld [vmem:[%s302 + $0x9d] sm:$0xff]
        %v3527 = vld [vmem:[%s302 + $0xa5] sm:$0xff]
        %v3528 = vld [vmem:[%s302 + $0xad] sm:$0xff]
        %v3529 = vld [vmem:[%s302 + $0xb5] sm:$0xff]
        %v3530 = vld [vmem:[%s302 + $0xbd] sm:$0xff]
        %v3531 = vld [vmem:[%s302 + $0xc5] sm:$0xff]
        %v3532 = vld [vmem:[%s302 + $0xcd] sm:$0xff]
        %v3533 = vld [vmem:[%s302 + $0xd5] sm:$0xff]
        %v3534 = vld [vmem:[%s302 + $0xdd] sm:$0xff]
        %v3535 = vld [vmem:[%s302 + $0xe5] sm:$0xff]
        %v3536 = vld [vmem:[%s302 + $0xed] sm:$0xff]
        %v3537 = vld [vmem:[%s302 + $0xf5] sm:$0xff]
        %v3538 = vld [vmem:[%s302 + $0xfd] sm:$0xff]
        %v3539 = vld [vmem:[%s302 + $0x105] sm:$0xff]
        %v3540 = vld [vmem:[%s302 + $0x10d] sm:$0xff]
        %v3541 = vld [vmem:[%s302 + $0x115] sm:$0xff]
        %v3542 = vld [vmem:[%s302 + $0x11d] sm:$0xff]
        %v3543 = vld [vmem:[%s302 + $0x125] sm:$0xff]
        %v3544 = vld [vmem:[%s302 + $0x12d] sm:$0xff]
        %v3545 = vld [vmem:[%s302 + $0x135] sm:$0xff]
        %v3546 = vld [vmem:[%s302 + $0x13d] sm:$0x3f]
        %s3547 = scalar_lea.vmem %s1, 704
        %v3548 = vld [vmem:[%s3547] sm:$0xff]
        %v3549 = vld [vmem:[%s3547 + $0x8] sm:$0xff]
        %v3550 = vld [vmem:[%s3547 + $0x10] sm:$0xff]
        %v3551 = vld [vmem:[%s3547 + $0x18] sm:$0xff]
        %v3552 = vld [vmem:[%s3547 + $0x20] sm:$0xff]
        %v3553 = vld [vmem:[%s3547 + $0x28] sm:$0xff]
        %v3554 = vld [vmem:[%s3547 + $0x30] sm:$0xff]
        %v3555 = vld [vmem:[%s3547 + $0x38] sm:$0xff]
        %v3557 = vsel %vm388, %v3513, 0
        %v3560 = vsel %vm388, %v3514, 0
        %v3563 = vsel %vm388, %v3515, 0
        %v3566 = vsel %vm388, %v3516, 0
        %v3569 = vsel %vm388, %v3517, 0
        %v3572 = vsel %vm388, %v3518, 0
        %v3575 = vsel %vm388, %v3519, 0
        %v3578 = vsel %vm388, %v3520, 0
        %v3581 = vsel %vm388, %v3521, 0
        %v3584 = vsel %vm388, %v3522, 0
        %v3587 = vsel %vm388, %v3523, 0
        %v3590 = vsel %vm388, %v3524, 0
        %v3593 = vsel %vm388, %v3525, 0
        %v3596 = vsel %vm388, %v3526, 0
        %v3599 = vsel %vm388, %v3527, 0
        %v3602 = vsel %vm388, %v3528, 0
        %v3605 = vsel %vm388, %v3529, 0
        %v3608 = vsel %vm388, %v3530, 0
        %v3611 = vsel %vm388, %v3531, 0
        %v3614 = vsel %vm388, %v3532, 0
        %v3617 = vsel %vm388, %v3533, 0
        %v3620 = vsel %vm388, %v3534, 0
        %v3623 = vsel %vm388, %v3535, 0
        %v3626 = vsel %vm388, %v3536, 0
        %v3629 = vsel %vm388, %v3537, 0
        %v3632 = vsel %vm388, %v3538, 0
        %v3635 = vsel %vm388, %v3539, 0
        %v3638 = vsel %vm388, %v3540, 0
        %v3641 = vsel %vm388, %v3541, 0
        %v3644 = vsel %vm388, %v3542, 0
        %v3647 = vsel %vm388, %v3543, 0
        %v3650 = vsel %vm388, %v3544, 0
        %v3653 = vsel %vm388, %v3545, 0
        %v3656 = vsel %vm388, %v3546, 0
        %3658 = vmatpush.msra.mxu0 0.0
        %3659 = vmatpush.msra.mxu0 0.0
        %3660 = vmatpush.msra.mxu0 0.0
        %3661 = vmatpush.msra.mxu0 0.0
        %3662 = vmatpush.msra.mxu0 0.0
        %3663 = vmatpush.msra.mxu0 0.0
        %3664 = vmatpush.msra.mxu0 0.0
        %3665 = vmatpush.msra.mxu0 0.0
        %3666 = vmatpush.msra.mxu0 %v3555
        %3667 = vmatpush.msra.mxu0 %v3554
        %3668 = vmatpush.msra.mxu0 %v3553
        %3669 = vmatpush.msra.mxu0 %v3552
        %3670 = vmatpush.msra.mxu0 %v3551
        %3671 = vmatpush.msra.mxu0 %v3550
        %3672 = vmatpush.msra.mxu0 %v3549
        %3673 = vmatpush.msra.mxu0 %v3548
        %3674 = vmatmul.f32.gmra.mxu0 %v3557
        %v3675 = vpop.f32.mrf.mxu0
        %v3676 = vadd.f32 0.0, %v3675
        %3677 = vmatmul.f32.gmra.mxu0 %v3560
        %v3678 = vpop.f32.mrf.mxu0
        %v3679 = vadd.f32 0.0, %v3678
        %3680 = vmatmul.f32.gmra.mxu0 %v3563
        %v3681 = vpop.f32.mrf.mxu0
        %v3682 = vadd.f32 0.0, %v3681
        %3683 = vmatmul.f32.gmra.mxu0 %v3566
        %v3684 = vpop.f32.mrf.mxu0
        %v3685 = vadd.f32 0.0, %v3684
        %3686 = vmatmul.f32.gmra.mxu0 %v3569
        %v3687 = vpop.f32.mrf.mxu0
        %v3688 = vadd.f32 0.0, %v3687
        %3689 = vmatmul.f32.gmra.mxu0 %v3572
        %v3690 = vpop.f32.mrf.mxu0
        %v3691 = vadd.f32 0.0, %v3690
        %3692 = vmatmul.f32.gmra.mxu0 %v3575
        %v3693 = vpop.f32.mrf.mxu0
        %v3694 = vadd.f32 0.0, %v3693
        %3695 = vmatmul.f32.gmra.mxu0 %v3578
        %v3696 = vpop.f32.mrf.mxu0
        %v3697 = vadd.f32 0.0, %v3696
        %3698 = vmatmul.f32.gmra.mxu0 %v3581
        %v3699 = vpop.f32.mrf.mxu0
        %v3700 = vadd.f32 0.0, %v3699
        %3701 = vmatmul.f32.gmra.mxu0 %v3584
        %v3702 = vpop.f32.mrf.mxu0
        %v3703 = vadd.f32 0.0, %v3702
        %3704 = vmatmul.f32.gmra.mxu0 %v3587
        %v3705 = vpop.f32.mrf.mxu0
        %v3706 = vadd.f32 0.0, %v3705
        %3707 = vmatmul.f32.gmra.mxu0 %v3590
        %v3708 = vpop.f32.mrf.mxu0
        %v3709 = vadd.f32 0.0, %v3708
        %3710 = vmatmul.f32.gmra.mxu0 %v3593
        %v3711 = vpop.f32.mrf.mxu0
        %v3712 = vadd.f32 0.0, %v3711
        %3713 = vmatmul.f32.gmra.mxu0 %v3596
        %v3714 = vpop.f32.mrf.mxu0
        %v3715 = vadd.f32 0.0, %v3714
        %3716 = vmatmul.f32.gmra.mxu0 %v3599
        %v3717 = vpop.f32.mrf.mxu0
        %v3718 = vadd.f32 0.0, %v3717
        %3719 = vmatmul.f32.gmra.mxu0 %v3602
        %v3720 = vpop.f32.mrf.mxu0
        %v3721 = vadd.f32 0.0, %v3720
        %3722 = vmatmul.f32.gmra.mxu0 %v3605
        %v3723 = vpop.f32.mrf.mxu0
        %v3724 = vadd.f32 0.0, %v3723
        %3725 = vmatmul.f32.gmra.mxu0 %v3608
        %v3726 = vpop.f32.mrf.mxu0
        %v3727 = vadd.f32 0.0, %v3726
        %3728 = vmatmul.f32.gmra.mxu0 %v3611
        %v3729 = vpop.f32.mrf.mxu0
        %v3730 = vadd.f32 0.0, %v3729
        %3731 = vmatmul.f32.gmra.mxu0 %v3614
        %v3732 = vpop.f32.mrf.mxu0
        %v3733 = vadd.f32 0.0, %v3732
        %3734 = vmatmul.f32.gmra.mxu0 %v3617
        %v3735 = vpop.f32.mrf.mxu0
        %v3736 = vadd.f32 0.0, %v3735
        %3737 = vmatmul.f32.gmra.mxu0 %v3620
        %v3738 = vpop.f32.mrf.mxu0
        %v3739 = vadd.f32 0.0, %v3738
        %3740 = vmatmul.f32.gmra.mxu0 %v3623
        %v3741 = vpop.f32.mrf.mxu0
        %v3742 = vadd.f32 0.0, %v3741
        %3743 = vmatmul.f32.gmra.mxu0 %v3626
        %v3744 = vpop.f32.mrf.mxu0
        %v3745 = vadd.f32 0.0, %v3744
        %3746 = vmatmul.f32.gmra.mxu0 %v3629
        %v3747 = vpop.f32.mrf.mxu0
        %v3748 = vadd.f32 0.0, %v3747
        %3749 = vmatmul.f32.gmra.mxu0 %v3632
        %v3750 = vpop.f32.mrf.mxu0
        %v3751 = vadd.f32 0.0, %v3750
        %3752 = vmatmul.f32.gmra.mxu0 %v3635
        %v3753 = vpop.f32.mrf.mxu0
        %v3754 = vadd.f32 0.0, %v3753
        %3755 = vmatmul.f32.gmra.mxu0 %v3638
        %v3756 = vpop.f32.mrf.mxu0
        %v3757 = vadd.f32 0.0, %v3756
        %3758 = vmatmul.f32.gmra.mxu0 %v3641
        %v3759 = vpop.f32.mrf.mxu0
        %v3760 = vadd.f32 0.0, %v3759
        %3761 = vmatmul.f32.gmra.mxu0 %v3644
        %v3762 = vpop.f32.mrf.mxu0
        %v3763 = vadd.f32 0.0, %v3762
        %3764 = vmatmul.f32.gmra.mxu0 %v3647
        %v3765 = vpop.f32.mrf.mxu0
        %v3766 = vadd.f32 0.0, %v3765
        %3767 = vmatmul.f32.gmra.mxu0 %v3650
        %v3768 = vpop.f32.mrf.mxu0
        %v3769 = vadd.f32 0.0, %v3768
        %3770 = vmatmul.f32.gmra.mxu0 %v3653
        %v3771 = vpop.f32.mrf.mxu0
        %v3772 = vadd.f32 0.0, %v3771
        %3773 = vmatmul.f32.gmra.mxu0 %v3656
        %v3774 = vpop.f32.mrf.mxu0
        %v3775 = vadd.f32 0.0, %v3774
        %3776 = vdwg.mxu0
        %v3777 = vadd.f32 %v3479, %v3676
        %v3778 = vadd.f32 %v3480, %v3679
        %v3779 = vadd.f32 %v3481, %v3682
        %v3780 = vadd.f32 %v3482, %v3685
        %v3781 = vadd.f32 %v3483, %v3688
        %v3782 = vadd.f32 %v3484, %v3691
        %v3783 = vadd.f32 %v3485, %v3694
        %v3784 = vadd.f32 %v3486, %v3697
        %v3785 = vadd.f32 %v3487, %v3700
        %v3786 = vadd.f32 %v3488, %v3703
        %v3787 = vadd.f32 %v3489, %v3706
        %v3788 = vadd.f32 %v3490, %v3709
        %v3789 = vadd.f32 %v3491, %v3712
        %v3790 = vadd.f32 %v3492, %v3715
        %v3791 = vadd.f32 %v3493, %v3718
        %v3792 = vadd.f32 %v3494, %v3721
        %v3793 = vadd.f32 %v3495, %v3724
        %v3794 = vadd.f32 %v3496, %v3727
        %v3795 = vadd.f32 %v3497, %v3730
        %v3796 = vadd.f32 %v3498, %v3733
        %v3797 = vadd.f32 %v3499, %v3736
        %v3798 = vadd.f32 %v3500, %v3739
        %v3799 = vadd.f32 %v3501, %v3742
        %v3800 = vadd.f32 %v3502, %v3745
        %v3801 = vadd.f32 %v3503, %v3748
        %v3802 = vadd.f32 %v3504, %v3751
        %v3803 = vadd.f32 %v3505, %v3754
        %v3804 = vadd.f32 %v3506, %v3757
        %v3805 = vadd.f32 %v3507, %v3760
        %v3806 = vadd.f32 %v3508, %v3763
        %v3807 = vadd.f32 %v3509, %v3766
        %v3808 = vadd.f32 %v3510, %v3769
        %v3809 = vadd.f32 %v3511, %v3772
        %v3810 = vadd.f32 %v3512, %v3775
        %v3811 = vld [vmem:[%s302 + $0x44] sm:$0xff]
        %v3812 = vld [vmem:[%s302 + $0x4c] sm:$0xff]
        %v3813 = vld [vmem:[%s302 + $0x54] sm:$0xff]
        %v3814 = vld [vmem:[%s302 + $0x5c] sm:$0xff]
        %v3815 = vld [vmem:[%s302 + $0x64] sm:$0xff]
        %v3816 = vld [vmem:[%s302 + $0x6c] sm:$0xff]
        %v3817 = vld [vmem:[%s302 + $0x74] sm:$0xff]
        %v3818 = vld [vmem:[%s302 + $0x7c] sm:$0xff]
        %v3819 = vld [vmem:[%s302 + $0x84] sm:$0xff]
        %v3820 = vld [vmem:[%s302 + $0x8c] sm:$0xff]
        %v3821 = vld [vmem:[%s302 + $0x94] sm:$0xff]
        %v3822 = vld [vmem:[%s302 + $0x9c] sm:$0xff]
        %v3823 = vld [vmem:[%s302 + $0xa4] sm:$0xff]
        %v3824 = vld [vmem:[%s302 + $0xac] sm:$0xff]
        %v3825 = vld [vmem:[%s302 + $0xb4] sm:$0xff]
        %v3826 = vld [vmem:[%s302 + $0xbc] sm:$0xff]
        %v3827 = vld [vmem:[%s302 + $0xc4] sm:$0xff]
        %v3828 = vld [vmem:[%s302 + $0xcc] sm:$0xff]
        %v3829 = vld [vmem:[%s302 + $0xd4] sm:$0xff]
        %v3830 = vld [vmem:[%s302 + $0xdc] sm:$0xff]
        %v3831 = vld [vmem:[%s302 + $0xe4] sm:$0xff]
        %v3832 = vld [vmem:[%s302 + $0xec] sm:$0xff]
        %v3833 = vld [vmem:[%s302 + $0xf4] sm:$0xff]
        %v3834 = vld [vmem:[%s302 + $0xfc] sm:$0xff]
        %v3835 = vld [vmem:[%s302 + $0x104] sm:$0xff]
        %v3836 = vld [vmem:[%s302 + $0x10c] sm:$0xff]
        %v3837 = vld [vmem:[%s302 + $0x114] sm:$0xff]
        %v3838 = vld [vmem:[%s302 + $0x11c] sm:$0xff]
        %v3839 = vld [vmem:[%s302 + $0x124] sm:$0xff]
        %v3840 = vld [vmem:[%s302 + $0x12c] sm:$0xff]
        %v3841 = vld [vmem:[%s302 + $0x134] sm:$0xff]
        %v3842 = vld [vmem:[%s302 + $0x13c] sm:$0xff]
        %v3843 = vld [vmem:[%s302 + $0x144] sm:$0xff]
        %v3844 = vld [vmem:[%s302 + $0x14c] sm:$0x3f]
        %s3845 = scalar_lea.vmem %s1, 768
        %v3846 = vld [vmem:[%s3845] sm:$0xff]
        %v3847 = vld [vmem:[%s3845 + $0x8] sm:$0xff]
        %v3848 = vld [vmem:[%s3845 + $0x10] sm:$0xff]
        %v3849 = vld [vmem:[%s3845 + $0x18] sm:$0xff]
        %v3850 = vld [vmem:[%s3845 + $0x20] sm:$0xff]
        %v3851 = vld [vmem:[%s3845 + $0x28] sm:$0xff]
        %v3852 = vld [vmem:[%s3845 + $0x30] sm:$0xff]
        %v3853 = vld [vmem:[%s3845 + $0x38] sm:$0xff]
        %v3855 = vsel %vm388, %v3811, 0
        %v3858 = vsel %vm388, %v3812, 0
        %v3861 = vsel %vm388, %v3813, 0
        %v3864 = vsel %vm388, %v3814, 0
        %v3867 = vsel %vm388, %v3815, 0
        %v3870 = vsel %vm388, %v3816, 0
        %v3873 = vsel %vm388, %v3817, 0
        %v3876 = vsel %vm388, %v3818, 0
        %v3879 = vsel %vm388, %v3819, 0
        %v3882 = vsel %vm388, %v3820, 0
        %v3885 = vsel %vm388, %v3821, 0
        %v3888 = vsel %vm388, %v3822, 0
        %v3891 = vsel %vm388, %v3823, 0
        %v3894 = vsel %vm388, %v3824, 0
        %v3897 = vsel %vm388, %v3825, 0
        %v3900 = vsel %vm388, %v3826, 0
        %v3903 = vsel %vm388, %v3827, 0
        %v3906 = vsel %vm388, %v3828, 0
        %v3909 = vsel %vm388, %v3829, 0
        %v3912 = vsel %vm388, %v3830, 0
        %v3915 = vsel %vm388, %v3831, 0
        %v3918 = vsel %vm388, %v3832, 0
        %v3921 = vsel %vm388, %v3833, 0
        %v3924 = vsel %vm388, %v3834, 0
        %v3927 = vsel %vm388, %v3835, 0
        %v3930 = vsel %vm388, %v3836, 0
        %v3933 = vsel %vm388, %v3837, 0
        %v3936 = vsel %vm388, %v3838, 0
        %v3939 = vsel %vm388, %v3839, 0
        %v3942 = vsel %vm388, %v3840, 0
        %v3945 = vsel %vm388, %v3841, 0
        %v3948 = vsel %vm388, %v3842, 0
        %v3951 = vsel %vm388, %v3843, 0
        %v3954 = vsel %vm388, %v3844, 0
        %3956 = vmatpush.msra.mxu0 0.0
        %3957 = vmatpush.msra.mxu0 0.0
        %3958 = vmatpush.msra.mxu0 0.0
        %3959 = vmatpush.msra.mxu0 0.0
        %3960 = vmatpush.msra.mxu0 0.0
        %3961 = vmatpush.msra.mxu0 0.0
        %3962 = vmatpush.msra.mxu0 0.0
        %3963 = vmatpush.msra.mxu0 0.0
        %3964 = vmatpush.msra.mxu0 %v3853
        %3965 = vmatpush.msra.mxu0 %v3852
        %3966 = vmatpush.msra.mxu0 %v3851
        %3967 = vmatpush.msra.mxu0 %v3850
        %3968 = vmatpush.msra.mxu0 %v3849
        %3969 = vmatpush.msra.mxu0 %v3848
        %3970 = vmatpush.msra.mxu0 %v3847
        %3971 = vmatpush.msra.mxu0 %v3846
        %3972 = vmatmul.f32.gmra.mxu0 %v3855
        %v3973 = vpop.f32.mrf.mxu0
        %v3974 = vadd.f32 0.0, %v3973
        %3975 = vmatmul.f32.gmra.mxu0 %v3858
        %v3976 = vpop.f32.mrf.mxu0
        %v3977 = vadd.f32 0.0, %v3976
        %3978 = vmatmul.f32.gmra.mxu0 %v3861
        %v3979 = vpop.f32.mrf.mxu0
        %v3980 = vadd.f32 0.0, %v3979
        %3981 = vmatmul.f32.gmra.mxu0 %v3864
        %v3982 = vpop.f32.mrf.mxu0
        %v3983 = vadd.f32 0.0, %v3982
        %3984 = vmatmul.f32.gmra.mxu0 %v3867
        %v3985 = vpop.f32.mrf.mxu0
        %v3986 = vadd.f32 0.0, %v3985
        %3987 = vmatmul.f32.gmra.mxu0 %v3870
        %v3988 = vpop.f32.mrf.mxu0
        %v3989 = vadd.f32 0.0, %v3988
        %3990 = vmatmul.f32.gmra.mxu0 %v3873
        %v3991 = vpop.f32.mrf.mxu0
        %v3992 = vadd.f32 0.0, %v3991
        %3993 = vmatmul.f32.gmra.mxu0 %v3876
        %v3994 = vpop.f32.mrf.mxu0
        %v3995 = vadd.f32 0.0, %v3994
        %3996 = vmatmul.f32.gmra.mxu0 %v3879
        %v3997 = vpop.f32.mrf.mxu0
        %v3998 = vadd.f32 0.0, %v3997
        %3999 = vmatmul.f32.gmra.mxu0 %v3882
        %v4000 = vpop.f32.mrf.mxu0
        %v4001 = vadd.f32 0.0, %v4000
        %4002 = vmatmul.f32.gmra.mxu0 %v3885
        %v4003 = vpop.f32.mrf.mxu0
        %v4004 = vadd.f32 0.0, %v4003
        %4005 = vmatmul.f32.gmra.mxu0 %v3888
        %v4006 = vpop.f32.mrf.mxu0
        %v4007 = vadd.f32 0.0, %v4006
        %4008 = vmatmul.f32.gmra.mxu0 %v3891
        %v4009 = vpop.f32.mrf.mxu0
        %v4010 = vadd.f32 0.0, %v4009
        %4011 = vmatmul.f32.gmra.mxu0 %v3894
        %v4012 = vpop.f32.mrf.mxu0
        %v4013 = vadd.f32 0.0, %v4012
        %4014 = vmatmul.f32.gmra.mxu0 %v3897
        %v4015 = vpop.f32.mrf.mxu0
        %v4016 = vadd.f32 0.0, %v4015
        %4017 = vmatmul.f32.gmra.mxu0 %v3900
        %v4018 = vpop.f32.mrf.mxu0
        %v4019 = vadd.f32 0.0, %v4018
        %4020 = vmatmul.f32.gmra.mxu0 %v3903
        %v4021 = vpop.f32.mrf.mxu0
        %v4022 = vadd.f32 0.0, %v4021
        %4023 = vmatmul.f32.gmra.mxu0 %v3906
        %v4024 = vpop.f32.mrf.mxu0
        %v4025 = vadd.f32 0.0, %v4024
        %4026 = vmatmul.f32.gmra.mxu0 %v3909
        %v4027 = vpop.f32.mrf.mxu0
        %v4028 = vadd.f32 0.0, %v4027
        %4029 = vmatmul.f32.gmra.mxu0 %v3912
        %v4030 = vpop.f32.mrf.mxu0
        %v4031 = vadd.f32 0.0, %v4030
        %4032 = vmatmul.f32.gmra.mxu0 %v3915
        %v4033 = vpop.f32.mrf.mxu0
        %v4034 = vadd.f32 0.0, %v4033
        %4035 = vmatmul.f32.gmra.mxu0 %v3918
        %v4036 = vpop.f32.mrf.mxu0
        %v4037 = vadd.f32 0.0, %v4036
        %4038 = vmatmul.f32.gmra.mxu0 %v3921
        %v4039 = vpop.f32.mrf.mxu0
        %v4040 = vadd.f32 0.0, %v4039
        %4041 = vmatmul.f32.gmra.mxu0 %v3924
        %v4042 = vpop.f32.mrf.mxu0
        %v4043 = vadd.f32 0.0, %v4042
        %4044 = vmatmul.f32.gmra.mxu0 %v3927
        %v4045 = vpop.f32.mrf.mxu0
        %v4046 = vadd.f32 0.0, %v4045
        %4047 = vmatmul.f32.gmra.mxu0 %v3930
        %v4048 = vpop.f32.mrf.mxu0
        %v4049 = vadd.f32 0.0, %v4048
        %4050 = vmatmul.f32.gmra.mxu0 %v3933
        %v4051 = vpop.f32.mrf.mxu0
        %v4052 = vadd.f32 0.0, %v4051
        %4053 = vmatmul.f32.gmra.mxu0 %v3936
        %v4054 = vpop.f32.mrf.mxu0
        %v4055 = vadd.f32 0.0, %v4054
        %4056 = vmatmul.f32.gmra.mxu0 %v3939
        %v4057 = vpop.f32.mrf.mxu0
        %v4058 = vadd.f32 0.0, %v4057
        %4059 = vmatmul.f32.gmra.mxu0 %v3942
        %v4060 = vpop.f32.mrf.mxu0
        %v4061 = vadd.f32 0.0, %v4060
        %4062 = vmatmul.f32.gmra.mxu0 %v3945
        %v4063 = vpop.f32.mrf.mxu0
        %v4064 = vadd.f32 0.0, %v4063
        %4065 = vmatmul.f32.gmra.mxu0 %v3948
        %v4066 = vpop.f32.mrf.mxu0
        %v4067 = vadd.f32 0.0, %v4066
        %4068 = vmatmul.f32.gmra.mxu0 %v3951
        %v4069 = vpop.f32.mrf.mxu0
        %v4070 = vadd.f32 0.0, %v4069
        %4071 = vmatmul.f32.gmra.mxu0 %v3954
        %v4072 = vpop.f32.mrf.mxu0
        %v4073 = vadd.f32 0.0, %v4072
        %4074 = vdwg.mxu0
        %v4075 = vadd.f32 %v3777, %v3974
        %v4076 = vadd.f32 %v3778, %v3977
        %v4077 = vadd.f32 %v3779, %v3980
        %v4078 = vadd.f32 %v3780, %v3983
        %v4079 = vadd.f32 %v3781, %v3986
        %v4080 = vadd.f32 %v3782, %v3989
        %v4081 = vadd.f32 %v3783, %v3992
        %v4082 = vadd.f32 %v3784, %v3995
        %v4083 = vadd.f32 %v3785, %v3998
        %v4084 = vadd.f32 %v3786, %v4001
        %v4085 = vadd.f32 %v3787, %v4004
        %v4086 = vadd.f32 %v3788, %v4007
        %v4087 = vadd.f32 %v3789, %v4010
        %v4088 = vadd.f32 %v3790, %v4013
        %v4089 = vadd.f32 %v3791, %v4016
        %v4090 = vadd.f32 %v3792, %v4019
        %v4091 = vadd.f32 %v3793, %v4022
        %v4092 = vadd.f32 %v3794, %v4025
        %v4093 = vadd.f32 %v3795, %v4028
        %v4094 = vadd.f32 %v3796, %v4031
        %v4095 = vadd.f32 %v3797, %v4034
        %v4096 = vadd.f32 %v3798, %v4037
        %v4097 = vadd.f32 %v3799, %v4040
        %v4098 = vadd.f32 %v3800, %v4043
        %v4099 = vadd.f32 %v3801, %v4046
        %v4100 = vadd.f32 %v3802, %v4049
        %v4101 = vadd.f32 %v3803, %v4052
        %v4102 = vadd.f32 %v3804, %v4055
        %v4103 = vadd.f32 %v3805, %v4058
        %v4104 = vadd.f32 %v3806, %v4061
        %v4105 = vadd.f32 %v3807, %v4064
        %v4106 = vadd.f32 %v3808, %v4067
        %v4107 = vadd.f32 %v3809, %v4070
        %v4108 = vadd.f32 %v3810, %v4073
        %v4109 = vld [vmem:[%s302 + $0x45] sm:$0xff]
        %v4110 = vld [vmem:[%s302 + $0x4d] sm:$0xff]
        %v4111 = vld [vmem:[%s302 + $0x55] sm:$0xff]
        %v4112 = vld [vmem:[%s302 + $0x5d] sm:$0xff]
        %v4113 = vld [vmem:[%s302 + $0x65] sm:$0xff]
        %v4114 = vld [vmem:[%s302 + $0x6d] sm:$0xff]
        %v4115 = vld [vmem:[%s302 + $0x75] sm:$0xff]
        %v4116 = vld [vmem:[%s302 + $0x7d] sm:$0xff]
        %v4117 = vld [vmem:[%s302 + $0x85] sm:$0xff]
        %v4118 = vld [vmem:[%s302 + $0x8d] sm:$0xff]
        %v4119 = vld [vmem:[%s302 + $0x95] sm:$0xff]
        %v4120 = vld [vmem:[%s302 + $0x9d] sm:$0xff]
        %v4121 = vld [vmem:[%s302 + $0xa5] sm:$0xff]
        %v4122 = vld [vmem:[%s302 + $0xad] sm:$0xff]
        %v4123 = vld [vmem:[%s302 + $0xb5] sm:$0xff]
        %v4124 = vld [vmem:[%s302 + $0xbd] sm:$0xff]
        %v4125 = vld [vmem:[%s302 + $0xc5] sm:$0xff]
        %v4126 = vld [vmem:[%s302 + $0xcd] sm:$0xff]
        %v4127 = vld [vmem:[%s302 + $0xd5] sm:$0xff]
        %v4128 = vld [vmem:[%s302 + $0xdd] sm:$0xff]
        %v4129 = vld [vmem:[%s302 + $0xe5] sm:$0xff]
        %v4130 = vld [vmem:[%s302 + $0xed] sm:$0xff]
        %v4131 = vld [vmem:[%s302 + $0xf5] sm:$0xff]
        %v4132 = vld [vmem:[%s302 + $0xfd] sm:$0xff]
        %v4133 = vld [vmem:[%s302 + $0x105] sm:$0xff]
        %v4134 = vld [vmem:[%s302 + $0x10d] sm:$0xff]
        %v4135 = vld [vmem:[%s302 + $0x115] sm:$0xff]
        %v4136 = vld [vmem:[%s302 + $0x11d] sm:$0xff]
        %v4137 = vld [vmem:[%s302 + $0x125] sm:$0xff]
        %v4138 = vld [vmem:[%s302 + $0x12d] sm:$0xff]
        %v4139 = vld [vmem:[%s302 + $0x135] sm:$0xff]
        %v4140 = vld [vmem:[%s302 + $0x13d] sm:$0xff]
        %v4141 = vld [vmem:[%s302 + $0x145] sm:$0xff]
        %v4142 = vld [vmem:[%s302 + $0x14d] sm:$0x3f]
        %s4143 = scalar_lea.vmem %s1, 832
        %v4144 = vld [vmem:[%s4143] sm:$0xff]
        %v4145 = vld [vmem:[%s4143 + $0x8] sm:$0xff]
        %v4146 = vld [vmem:[%s4143 + $0x10] sm:$0xff]
        %v4147 = vld [vmem:[%s4143 + $0x18] sm:$0xff]
        %v4148 = vld [vmem:[%s4143 + $0x20] sm:$0xff]
        %v4149 = vld [vmem:[%s4143 + $0x28] sm:$0xff]
        %v4150 = vld [vmem:[%s4143 + $0x30] sm:$0xff]
        %v4151 = vld [vmem:[%s4143 + $0x38] sm:$0xff]
        %v4153 = vsel %vm388, %v4109, 0
        %v4156 = vsel %vm388, %v4110, 0
        %v4159 = vsel %vm388, %v4111, 0
        %v4162 = vsel %vm388, %v4112, 0
        %v4165 = vsel %vm388, %v4113, 0
        %v4168 = vsel %vm388, %v4114, 0
        %v4171 = vsel %vm388, %v4115, 0
        %v4174 = vsel %vm388, %v4116, 0
        %v4177 = vsel %vm388, %v4117, 0
        %v4180 = vsel %vm388, %v4118, 0
        %v4183 = vsel %vm388, %v4119, 0
        %v4186 = vsel %vm388, %v4120, 0
        %v4189 = vsel %vm388, %v4121, 0
        %v4192 = vsel %vm388, %v4122, 0
        %v4195 = vsel %vm388, %v4123, 0
        %v4198 = vsel %vm388, %v4124, 0
        %v4201 = vsel %vm388, %v4125, 0
        %v4204 = vsel %vm388, %v4126, 0
        %v4207 = vsel %vm388, %v4127, 0
        %v4210 = vsel %vm388, %v4128, 0
        %v4213 = vsel %vm388, %v4129, 0
        %v4216 = vsel %vm388, %v4130, 0
        %v4219 = vsel %vm388, %v4131, 0
        %v4222 = vsel %vm388, %v4132, 0
        %v4225 = vsel %vm388, %v4133, 0
        %v4228 = vsel %vm388, %v4134, 0
        %v4231 = vsel %vm388, %v4135, 0
        %v4234 = vsel %vm388, %v4136, 0
        %v4237 = vsel %vm388, %v4137, 0
        %v4240 = vsel %vm388, %v4138, 0
        %v4243 = vsel %vm388, %v4139, 0
        %v4246 = vsel %vm388, %v4140, 0
        %v4249 = vsel %vm388, %v4141, 0
        %v4252 = vsel %vm388, %v4142, 0
        %4254 = vmatpush.msra.mxu0 0.0
        %4255 = vmatpush.msra.mxu0 0.0
        %4256 = vmatpush.msra.mxu0 0.0
        %4257 = vmatpush.msra.mxu0 0.0
        %4258 = vmatpush.msra.mxu0 0.0
        %4259 = vmatpush.msra.mxu0 0.0
        %4260 = vmatpush.msra.mxu0 0.0
        %4261 = vmatpush.msra.mxu0 0.0
        %4262 = vmatpush.msra.mxu0 %v4151
        %4263 = vmatpush.msra.mxu0 %v4150
        %4264 = vmatpush.msra.mxu0 %v4149
        %4265 = vmatpush.msra.mxu0 %v4148
        %4266 = vmatpush.msra.mxu0 %v4147
        %4267 = vmatpush.msra.mxu0 %v4146
        %4268 = vmatpush.msra.mxu0 %v4145
        %4269 = vmatpush.msra.mxu0 %v4144
        %4270 = vmatmul.f32.gmra.mxu0 %v4153
        %v4271 = vpop.f32.mrf.mxu0
        %v4272 = vadd.f32 0.0, %v4271
        %4273 = vmatmul.f32.gmra.mxu0 %v4156
        %v4274 = vpop.f32.mrf.mxu0
        %v4275 = vadd.f32 0.0, %v4274
        %4276 = vmatmul.f32.gmra.mxu0 %v4159
        %v4277 = vpop.f32.mrf.mxu0
        %v4278 = vadd.f32 0.0, %v4277
        %4279 = vmatmul.f32.gmra.mxu0 %v4162
        %v4280 = vpop.f32.mrf.mxu0
        %v4281 = vadd.f32 0.0, %v4280
        %4282 = vmatmul.f32.gmra.mxu0 %v4165
        %v4283 = vpop.f32.mrf.mxu0
        %v4284 = vadd.f32 0.0, %v4283
        %4285 = vmatmul.f32.gmra.mxu0 %v4168
        %v4286 = vpop.f32.mrf.mxu0
        %v4287 = vadd.f32 0.0, %v4286
        %4288 = vmatmul.f32.gmra.mxu0 %v4171
        %v4289 = vpop.f32.mrf.mxu0
        %v4290 = vadd.f32 0.0, %v4289
        %4291 = vmatmul.f32.gmra.mxu0 %v4174
        %v4292 = vpop.f32.mrf.mxu0
        %v4293 = vadd.f32 0.0, %v4292
        %4294 = vmatmul.f32.gmra.mxu0 %v4177
        %v4295 = vpop.f32.mrf.mxu0
        %v4296 = vadd.f32 0.0, %v4295
        %4297 = vmatmul.f32.gmra.mxu0 %v4180
        %v4298 = vpop.f32.mrf.mxu0
        %v4299 = vadd.f32 0.0, %v4298
        %4300 = vmatmul.f32.gmra.mxu0 %v4183
        %v4301 = vpop.f32.mrf.mxu0
        %v4302 = vadd.f32 0.0, %v4301
        %4303 = vmatmul.f32.gmra.mxu0 %v4186
        %v4304 = vpop.f32.mrf.mxu0
        %v4305 = vadd.f32 0.0, %v4304
        %4306 = vmatmul.f32.gmra.mxu0 %v4189
        %v4307 = vpop.f32.mrf.mxu0
        %v4308 = vadd.f32 0.0, %v4307
        %4309 = vmatmul.f32.gmra.mxu0 %v4192
        %v4310 = vpop.f32.mrf.mxu0
        %v4311 = vadd.f32 0.0, %v4310
        %4312 = vmatmul.f32.gmra.mxu0 %v4195
        %v4313 = vpop.f32.mrf.mxu0
        %v4314 = vadd.f32 0.0, %v4313
        %4315 = vmatmul.f32.gmra.mxu0 %v4198
        %v4316 = vpop.f32.mrf.mxu0
        %v4317 = vadd.f32 0.0, %v4316
        %4318 = vmatmul.f32.gmra.mxu0 %v4201
        %v4319 = vpop.f32.mrf.mxu0
        %v4320 = vadd.f32 0.0, %v4319
        %4321 = vmatmul.f32.gmra.mxu0 %v4204
        %v4322 = vpop.f32.mrf.mxu0
        %v4323 = vadd.f32 0.0, %v4322
        %4324 = vmatmul.f32.gmra.mxu0 %v4207
        %v4325 = vpop.f32.mrf.mxu0
        %v4326 = vadd.f32 0.0, %v4325
        %4327 = vmatmul.f32.gmra.mxu0 %v4210
        %v4328 = vpop.f32.mrf.mxu0
        %v4329 = vadd.f32 0.0, %v4328
        %4330 = vmatmul.f32.gmra.mxu0 %v4213
        %v4331 = vpop.f32.mrf.mxu0
        %v4332 = vadd.f32 0.0, %v4331
        %4333 = vmatmul.f32.gmra.mxu0 %v4216
        %v4334 = vpop.f32.mrf.mxu0
        %v4335 = vadd.f32 0.0, %v4334
        %4336 = vmatmul.f32.gmra.mxu0 %v4219
        %v4337 = vpop.f32.mrf.mxu0
        %v4338 = vadd.f32 0.0, %v4337
        %4339 = vmatmul.f32.gmra.mxu0 %v4222
        %v4340 = vpop.f32.mrf.mxu0
        %v4341 = vadd.f32 0.0, %v4340
        %4342 = vmatmul.f32.gmra.mxu0 %v4225
        %v4343 = vpop.f32.mrf.mxu0
        %v4344 = vadd.f32 0.0, %v4343
        %4345 = vmatmul.f32.gmra.mxu0 %v4228
        %v4346 = vpop.f32.mrf.mxu0
        %v4347 = vadd.f32 0.0, %v4346
        %4348 = vmatmul.f32.gmra.mxu0 %v4231
        %v4349 = vpop.f32.mrf.mxu0
        %v4350 = vadd.f32 0.0, %v4349
        %4351 = vmatmul.f32.gmra.mxu0 %v4234
        %v4352 = vpop.f32.mrf.mxu0
        %v4353 = vadd.f32 0.0, %v4352
        %4354 = vmatmul.f32.gmra.mxu0 %v4237
        %v4355 = vpop.f32.mrf.mxu0
        %v4356 = vadd.f32 0.0, %v4355
        %4357 = vmatmul.f32.gmra.mxu0 %v4240
        %v4358 = vpop.f32.mrf.mxu0
        %v4359 = vadd.f32 0.0, %v4358
        %4360 = vmatmul.f32.gmra.mxu0 %v4243
        %v4361 = vpop.f32.mrf.mxu0
        %v4362 = vadd.f32 0.0, %v4361
        %4363 = vmatmul.f32.gmra.mxu0 %v4246
        %v4364 = vpop.f32.mrf.mxu0
        %v4365 = vadd.f32 0.0, %v4364
        %4366 = vmatmul.f32.gmra.mxu0 %v4249
        %v4367 = vpop.f32.mrf.mxu0
        %v4368 = vadd.f32 0.0, %v4367
        %4369 = vmatmul.f32.gmra.mxu0 %v4252
        %v4370 = vpop.f32.mrf.mxu0
        %v4371 = vadd.f32 0.0, %v4370
        %4372 = vdwg.mxu0
        %v4373 = vadd.f32 %v4075, %v4272
        %v4374 = vadd.f32 %v4076, %v4275
        %v4375 = vadd.f32 %v4077, %v4278
        %v4376 = vadd.f32 %v4078, %v4281
        %v4377 = vadd.f32 %v4079, %v4284
        %v4378 = vadd.f32 %v4080, %v4287
        %v4379 = vadd.f32 %v4081, %v4290
        %v4380 = vadd.f32 %v4082, %v4293
        %v4381 = vadd.f32 %v4083, %v4296
        %v4382 = vadd.f32 %v4084, %v4299
        %v4383 = vadd.f32 %v4085, %v4302
        %v4384 = vadd.f32 %v4086, %v4305
        %v4385 = vadd.f32 %v4087, %v4308
        %v4386 = vadd.f32 %v4088, %v4311
        %v4387 = vadd.f32 %v4089, %v4314
        %v4388 = vadd.f32 %v4090, %v4317
        %v4389 = vadd.f32 %v4091, %v4320
        %v4390 = vadd.f32 %v4092, %v4323
        %v4391 = vadd.f32 %v4093, %v4326
        %v4392 = vadd.f32 %v4094, %v4329
        %v4393 = vadd.f32 %v4095, %v4332
        %v4394 = vadd.f32 %v4096, %v4335
        %v4395 = vadd.f32 %v4097, %v4338
        %v4396 = vadd.f32 %v4098, %v4341
        %v4397 = vadd.f32 %v4099, %v4344
        %v4398 = vadd.f32 %v4100, %v4347
        %v4399 = vadd.f32 %v4101, %v4350
        %v4400 = vadd.f32 %v4102, %v4353
        %v4401 = vadd.f32 %v4103, %v4356
        %v4402 = vadd.f32 %v4104, %v4359
        %v4403 = vadd.f32 %v4105, %v4362
        %v4404 = vadd.f32 %v4106, %v4365
        %v4405 = vadd.f32 %v4107, %v4368
        %v4406 = vadd.f32 %v4108, %v4371
        %v4407 = vld [vmem:[%s302 + $0x46] sm:$0xff]
        %v4408 = vld [vmem:[%s302 + $0x4e] sm:$0xff]
        %v4409 = vld [vmem:[%s302 + $0x56] sm:$0xff]
        %v4410 = vld [vmem:[%s302 + $0x5e] sm:$0xff]
        %v4411 = vld [vmem:[%s302 + $0x66] sm:$0xff]
        %v4412 = vld [vmem:[%s302 + $0x6e] sm:$0xff]
        %v4413 = vld [vmem:[%s302 + $0x76] sm:$0xff]
        %v4414 = vld [vmem:[%s302 + $0x7e] sm:$0xff]
        %v4415 = vld [vmem:[%s302 + $0x86] sm:$0xff]
        %v4416 = vld [vmem:[%s302 + $0x8e] sm:$0xff]
        %v4417 = vld [vmem:[%s302 + $0x96] sm:$0xff]
        %v4418 = vld [vmem:[%s302 + $0x9e] sm:$0xff]
        %v4419 = vld [vmem:[%s302 + $0xa6] sm:$0xff]
        %v4420 = vld [vmem:[%s302 + $0xae] sm:$0xff]
        %v4421 = vld [vmem:[%s302 + $0xb6] sm:$0xff]
        %v4422 = vld [vmem:[%s302 + $0xbe] sm:$0xff]
        %v4423 = vld [vmem:[%s302 + $0xc6] sm:$0xff]
        %v4424 = vld [vmem:[%s302 + $0xce] sm:$0xff]
        %v4425 = vld [vmem:[%s302 + $0xd6] sm:$0xff]
        %v4426 = vld [vmem:[%s302 + $0xde] sm:$0xff]
        %v4427 = vld [vmem:[%s302 + $0xe6] sm:$0xff]
        %v4428 = vld [vmem:[%s302 + $0xee] sm:$0xff]
        %v4429 = vld [vmem:[%s302 + $0xf6] sm:$0xff]
        %v4430 = vld [vmem:[%s302 + $0xfe] sm:$0xff]
        %v4431 = vld [vmem:[%s302 + $0x106] sm:$0xff]
        %v4432 = vld [vmem:[%s302 + $0x10e] sm:$0xff]
        %v4433 = vld [vmem:[%s302 + $0x116] sm:$0xff]
        %v4434 = vld [vmem:[%s302 + $0x11e] sm:$0xff]
        %v4435 = vld [vmem:[%s302 + $0x126] sm:$0xff]
        %v4436 = vld [vmem:[%s302 + $0x12e] sm:$0xff]
        %v4437 = vld [vmem:[%s302 + $0x136] sm:$0xff]
        %v4438 = vld [vmem:[%s302 + $0x13e] sm:$0xff]
        %v4439 = vld [vmem:[%s302 + $0x146] sm:$0xff]
        %v4440 = vld [vmem:[%s302 + $0x14e] sm:$0x3f]
        %s4441 = scalar_lea.vmem %s1, 896
        %v4442 = vld [vmem:[%s4441] sm:$0xff]
        %v4443 = vld [vmem:[%s4441 + $0x8] sm:$0xff]
        %v4444 = vld [vmem:[%s4441 + $0x10] sm:$0xff]
        %v4445 = vld [vmem:[%s4441 + $0x18] sm:$0xff]
        %v4446 = vld [vmem:[%s4441 + $0x20] sm:$0xff]
        %v4447 = vld [vmem:[%s4441 + $0x28] sm:$0xff]
        %v4448 = vld [vmem:[%s4441 + $0x30] sm:$0xff]
        %v4449 = vld [vmem:[%s4441 + $0x38] sm:$0xff]
        %v4451 = vsel %vm388, %v4407, 0
        %v4454 = vsel %vm388, %v4408, 0
        %v4457 = vsel %vm388, %v4409, 0
        %v4460 = vsel %vm388, %v4410, 0
        %v4463 = vsel %vm388, %v4411, 0
        %v4466 = vsel %vm388, %v4412, 0
        %v4469 = vsel %vm388, %v4413, 0
        %v4472 = vsel %vm388, %v4414, 0
        %v4475 = vsel %vm388, %v4415, 0
        %v4478 = vsel %vm388, %v4416, 0
        %v4481 = vsel %vm388, %v4417, 0
        %v4484 = vsel %vm388, %v4418, 0
        %v4487 = vsel %vm388, %v4419, 0
        %v4490 = vsel %vm388, %v4420, 0
        %v4493 = vsel %vm388, %v4421, 0
        %v4496 = vsel %vm388, %v4422, 0
        %v4499 = vsel %vm388, %v4423, 0
        %v4502 = vsel %vm388, %v4424, 0
        %v4505 = vsel %vm388, %v4425, 0
        %v4508 = vsel %vm388, %v4426, 0
        %v4511 = vsel %vm388, %v4427, 0
        %v4514 = vsel %vm388, %v4428, 0
        %v4517 = vsel %vm388, %v4429, 0
        %v4520 = vsel %vm388, %v4430, 0
        %v4523 = vsel %vm388, %v4431, 0
        %v4526 = vsel %vm388, %v4432, 0
        %v4529 = vsel %vm388, %v4433, 0
        %v4532 = vsel %vm388, %v4434, 0
        %v4535 = vsel %vm388, %v4435, 0
        %v4538 = vsel %vm388, %v4436, 0
        %v4541 = vsel %vm388, %v4437, 0
        %v4544 = vsel %vm388, %v4438, 0
        %v4547 = vsel %vm388, %v4439, 0
        %v4550 = vsel %vm388, %v4440, 0
        %4552 = vmatpush.msra.mxu0 0.0
        %4553 = vmatpush.msra.mxu0 0.0
        %4554 = vmatpush.msra.mxu0 0.0
        %4555 = vmatpush.msra.mxu0 0.0
        %4556 = vmatpush.msra.mxu0 0.0
        %4557 = vmatpush.msra.mxu0 0.0
        %4558 = vmatpush.msra.mxu0 0.0
        %4559 = vmatpush.msra.mxu0 0.0
        %4560 = vmatpush.msra.mxu0 %v4449
        %4561 = vmatpush.msra.mxu0 %v4448
        %4562 = vmatpush.msra.mxu0 %v4447
        %4563 = vmatpush.msra.mxu0 %v4446
        %4564 = vmatpush.msra.mxu0 %v4445
        %4565 = vmatpush.msra.mxu0 %v4444
        %4566 = vmatpush.msra.mxu0 %v4443
        %4567 = vmatpush.msra.mxu0 %v4442
        %4568 = vmatmul.f32.gmra.mxu0 %v4451
        %v4569 = vpop.f32.mrf.mxu0
        %v4570 = vadd.f32 0.0, %v4569
        %4571 = vmatmul.f32.gmra.mxu0 %v4454
        %v4572 = vpop.f32.mrf.mxu0
        %v4573 = vadd.f32 0.0, %v4572
        %4574 = vmatmul.f32.gmra.mxu0 %v4457
        %v4575 = vpop.f32.mrf.mxu0
        %v4576 = vadd.f32 0.0, %v4575
        %4577 = vmatmul.f32.gmra.mxu0 %v4460
        %v4578 = vpop.f32.mrf.mxu0
        %v4579 = vadd.f32 0.0, %v4578
        %4580 = vmatmul.f32.gmra.mxu0 %v4463
        %v4581 = vpop.f32.mrf.mxu0
        %v4582 = vadd.f32 0.0, %v4581
        %4583 = vmatmul.f32.gmra.mxu0 %v4466
        %v4584 = vpop.f32.mrf.mxu0
        %v4585 = vadd.f32 0.0, %v4584
        %4586 = vmatmul.f32.gmra.mxu0 %v4469
        %v4587 = vpop.f32.mrf.mxu0
        %v4588 = vadd.f32 0.0, %v4587
        %4589 = vmatmul.f32.gmra.mxu0 %v4472
        %v4590 = vpop.f32.mrf.mxu0
        %v4591 = vadd.f32 0.0, %v4590
        %4592 = vmatmul.f32.gmra.mxu0 %v4475
        %v4593 = vpop.f32.mrf.mxu0
        %v4594 = vadd.f32 0.0, %v4593
        %4595 = vmatmul.f32.gmra.mxu0 %v4478
        %v4596 = vpop.f32.mrf.mxu0
        %v4597 = vadd.f32 0.0, %v4596
        %4598 = vmatmul.f32.gmra.mxu0 %v4481
        %v4599 = vpop.f32.mrf.mxu0
        %v4600 = vadd.f32 0.0, %v4599
        %4601 = vmatmul.f32.gmra.mxu0 %v4484
        %v4602 = vpop.f32.mrf.mxu0
        %v4603 = vadd.f32 0.0, %v4602
        %4604 = vmatmul.f32.gmra.mxu0 %v4487
        %v4605 = vpop.f32.mrf.mxu0
        %v4606 = vadd.f32 0.0, %v4605
        %4607 = vmatmul.f32.gmra.mxu0 %v4490
        %v4608 = vpop.f32.mrf.mxu0
        %v4609 = vadd.f32 0.0, %v4608
        %4610 = vmatmul.f32.gmra.mxu0 %v4493
        %v4611 = vpop.f32.mrf.mxu0
        %v4612 = vadd.f32 0.0, %v4611
        %4613 = vmatmul.f32.gmra.mxu0 %v4496
        %v4614 = vpop.f32.mrf.mxu0
        %v4615 = vadd.f32 0.0, %v4614
        %4616 = vmatmul.f32.gmra.mxu0 %v4499
        %v4617 = vpop.f32.mrf.mxu0
        %v4618 = vadd.f32 0.0, %v4617
        %4619 = vmatmul.f32.gmra.mxu0 %v4502
        %v4620 = vpop.f32.mrf.mxu0
        %v4621 = vadd.f32 0.0, %v4620
        %4622 = vmatmul.f32.gmra.mxu0 %v4505
        %v4623 = vpop.f32.mrf.mxu0
        %v4624 = vadd.f32 0.0, %v4623
        %4625 = vmatmul.f32.gmra.mxu0 %v4508
        %v4626 = vpop.f32.mrf.mxu0
        %v4627 = vadd.f32 0.0, %v4626
        %4628 = vmatmul.f32.gmra.mxu0 %v4511
        %v4629 = vpop.f32.mrf.mxu0
        %v4630 = vadd.f32 0.0, %v4629
        %4631 = vmatmul.f32.gmra.mxu0 %v4514
        %v4632 = vpop.f32.mrf.mxu0
        %v4633 = vadd.f32 0.0, %v4632
        %4634 = vmatmul.f32.gmra.mxu0 %v4517
        %v4635 = vpop.f32.mrf.mxu0
        %v4636 = vadd.f32 0.0, %v4635
        %4637 = vmatmul.f32.gmra.mxu0 %v4520
        %v4638 = vpop.f32.mrf.mxu0
        %v4639 = vadd.f32 0.0, %v4638
        %4640 = vmatmul.f32.gmra.mxu0 %v4523
        %v4641 = vpop.f32.mrf.mxu0
        %v4642 = vadd.f32 0.0, %v4641
        %4643 = vmatmul.f32.gmra.mxu0 %v4526
        %v4644 = vpop.f32.mrf.mxu0
        %v4645 = vadd.f32 0.0, %v4644
        %4646 = vmatmul.f32.gmra.mxu0 %v4529
        %v4647 = vpop.f32.mrf.mxu0
        %v4648 = vadd.f32 0.0, %v4647
        %4649 = vmatmul.f32.gmra.mxu0 %v4532
        %v4650 = vpop.f32.mrf.mxu0
        %v4651 = vadd.f32 0.0, %v4650
        %4652 = vmatmul.f32.gmra.mxu0 %v4535
        %v4653 = vpop.f32.mrf.mxu0
        %v4654 = vadd.f32 0.0, %v4653
        %4655 = vmatmul.f32.gmra.mxu0 %v4538
        %v4656 = vpop.f32.mrf.mxu0
        %v4657 = vadd.f32 0.0, %v4656
        %4658 = vmatmul.f32.gmra.mxu0 %v4541
        %v4659 = vpop.f32.mrf.mxu0
        %v4660 = vadd.f32 0.0, %v4659
        %4661 = vmatmul.f32.gmra.mxu0 %v4544
        %v4662 = vpop.f32.mrf.mxu0
        %v4663 = vadd.f32 0.0, %v4662
        %4664 = vmatmul.f32.gmra.mxu0 %v4547
        %v4665 = vpop.f32.mrf.mxu0
        %v4666 = vadd.f32 0.0, %v4665
        %4667 = vmatmul.f32.gmra.mxu0 %v4550
        %v4668 = vpop.f32.mrf.mxu0
        %v4669 = vadd.f32 0.0, %v4668
        %4670 = vdwg.mxu0
        %v4671 = vadd.f32 %v4373, %v4570
        %v4672 = vadd.f32 %v4374, %v4573
        %v4673 = vadd.f32 %v4375, %v4576
        %v4674 = vadd.f32 %v4376, %v4579
        %v4675 = vadd.f32 %v4377, %v4582
        %v4676 = vadd.f32 %v4378, %v4585
        %v4677 = vadd.f32 %v4379, %v4588
        %v4678 = vadd.f32 %v4380, %v4591
        %v4679 = vadd.f32 %v4381, %v4594
        %v4680 = vadd.f32 %v4382, %v4597
        %v4681 = vadd.f32 %v4383, %v4600
        %v4682 = vadd.f32 %v4384, %v4603
        %v4683 = vadd.f32 %v4385, %v4606
        %v4684 = vadd.f32 %v4386, %v4609
        %v4685 = vadd.f32 %v4387, %v4612
        %v4686 = vadd.f32 %v4388, %v4615
        %v4687 = vadd.f32 %v4389, %v4618
        %v4688 = vadd.f32 %v4390, %v4621
        %v4689 = vadd.f32 %v4391, %v4624
        %v4690 = vadd.f32 %v4392, %v4627
        %v4691 = vadd.f32 %v4393, %v4630
        %v4692 = vadd.f32 %v4394, %v4633
        %v4693 = vadd.f32 %v4395, %v4636
        %v4694 = vadd.f32 %v4396, %v4639
        %v4695 = vadd.f32 %v4397, %v4642
        %v4696 = vadd.f32 %v4398, %v4645
        %v4697 = vadd.f32 %v4399, %v4648
        %v4698 = vadd.f32 %v4400, %v4651
        %v4699 = vadd.f32 %v4401, %v4654
        %v4700 = vadd.f32 %v4402, %v4657
        %v4701 = vadd.f32 %v4403, %v4660
        %v4702 = vadd.f32 %v4404, %v4663
        %v4703 = vadd.f32 %v4405, %v4666
        %v4704 = vadd.f32 %v4406, %v4669
        %v4705 = vld [vmem:[%s2] sm:$0x1]
        %v4707 = vperm.slane %v4705, 0
        %v4709 = vadd.f32 %v4671, %v4707
        %v4710 = vadd.f32 %v4672, %v4707
        %v4711 = vadd.f32 %v4673, %v4707
        %v4712 = vadd.f32 %v4674, %v4707
        %v4713 = vadd.f32 %v4675, %v4707
        %v4714 = vadd.f32 %v4676, %v4707
        %v4715 = vadd.f32 %v4677, %v4707
        %v4716 = vadd.f32 %v4678, %v4707
        %v4717 = vadd.f32 %v4679, %v4707
        %v4718 = vadd.f32 %v4680, %v4707
        %v4719 = vadd.f32 %v4681, %v4707
        %v4720 = vadd.f32 %v4682, %v4707
        %v4721 = vadd.f32 %v4683, %v4707
        %v4722 = vadd.f32 %v4684, %v4707
        %v4723 = vadd.f32 %v4685, %v4707
        %v4724 = vadd.f32 %v4686, %v4707
        %v4725 = vadd.f32 %v4687, %v4707
        %v4726 = vadd.f32 %v4688, %v4707
        %v4727 = vadd.f32 %v4689, %v4707
        %v4728 = vadd.f32 %v4690, %v4707
        %v4729 = vadd.f32 %v4691, %v4707
        %v4730 = vadd.f32 %v4692, %v4707
        %v4731 = vadd.f32 %v4693, %v4707
        %v4732 = vadd.f32 %v4694, %v4707
        %v4733 = vadd.f32 %v4695, %v4707
        %v4734 = vadd.f32 %v4696, %v4707
        %v4735 = vadd.f32 %v4697, %v4707
        %v4736 = vadd.f32 %v4698, %v4707
        %v4737 = vadd.f32 %v4699, %v4707
        %v4738 = vadd.f32 %v4700, %v4707
        %v4739 = vadd.f32 %v4701, %v4707
        %v4740 = vadd.f32 %v4702, %v4707
        %v4741 = vadd.f32 %v4703, %v4707
        %v4742 = vadd.f32 %v4704, %v4707
        %vm4743 = vcmp.gt.f32.partialorder %v4709, 0.0
        %vm4744 = vcmp.gt.f32.partialorder %v4710, 0.0
        %vm4745 = vcmp.gt.f32.partialorder %v4711, 0.0
        %vm4746 = vcmp.gt.f32.partialorder %v4712, 0.0
        %vm4747 = vcmp.gt.f32.partialorder %v4713, 0.0
        %vm4748 = vcmp.gt.f32.partialorder %v4714, 0.0
        %vm4749 = vcmp.gt.f32.partialorder %v4715, 0.0
        %vm4750 = vcmp.gt.f32.partialorder %v4716, 0.0
        %vm4751 = vcmp.gt.f32.partialorder %v4717, 0.0
        %vm4752 = vcmp.gt.f32.partialorder %v4718, 0.0
        %vm4753 = vcmp.gt.f32.partialorder %v4719, 0.0
        %vm4754 = vcmp.gt.f32.partialorder %v4720, 0.0
        %vm4755 = vcmp.gt.f32.partialorder %v4721, 0.0
        %vm4756 = vcmp.gt.f32.partialorder %v4722, 0.0
        %vm4757 = vcmp.gt.f32.partialorder %v4723, 0.0
        %vm4758 = vcmp.gt.f32.partialorder %v4724, 0.0
        %vm4759 = vcmp.gt.f32.partialorder %v4725, 0.0
        %vm4760 = vcmp.gt.f32.partialorder %v4726, 0.0
        %vm4761 = vcmp.gt.f32.partialorder %v4727, 0.0
        %vm4762 = vcmp.gt.f32.partialorder %v4728, 0.0
        %vm4763 = vcmp.gt.f32.partialorder %v4729, 0.0
        %vm4764 = vcmp.gt.f32.partialorder %v4730, 0.0
        %vm4765 = vcmp.gt.f32.partialorder %v4731, 0.0
        %vm4766 = vcmp.gt.f32.partialorder %v4732, 0.0
        %vm4767 = vcmp.gt.f32.partialorder %v4733, 0.0
        %vm4768 = vcmp.gt.f32.partialorder %v4734, 0.0
        %vm4769 = vcmp.gt.f32.partialorder %v4735, 0.0
        %vm4770 = vcmp.gt.f32.partialorder %v4736, 0.0
        %vm4771 = vcmp.gt.f32.partialorder %v4737, 0.0
        %vm4772 = vcmp.gt.f32.partialorder %v4738, 0.0
        %vm4773 = vcmp.gt.f32.partialorder %v4739, 0.0
        %vm4774 = vcmp.gt.f32.partialorder %v4740, 0.0
        %vm4775 = vcmp.gt.f32.partialorder %v4741, 0.0
        %vm4776 = vcmp.gt.f32.partialorder %v4742, 0.0
        %v4777 = vmul.f32 %v4709, 0.01
        %v4778 = vmul.f32 %v4710, 0.01
        %v4779 = vmul.f32 %v4711, 0.01
        %v4780 = vmul.f32 %v4712, 0.01
        %v4781 = vmul.f32 %v4713, 0.01
        %v4782 = vmul.f32 %v4714, 0.01
        %v4783 = vmul.f32 %v4715, 0.01
        %v4784 = vmul.f32 %v4716, 0.01
        %v4785 = vmul.f32 %v4717, 0.01
        %v4786 = vmul.f32 %v4718, 0.01
        %v4787 = vmul.f32 %v4719, 0.01
        %v4788 = vmul.f32 %v4720, 0.01
        %v4789 = vmul.f32 %v4721, 0.01
        %v4790 = vmul.f32 %v4722, 0.01
        %v4791 = vmul.f32 %v4723, 0.01
        %v4792 = vmul.f32 %v4724, 0.01
        %v4793 = vmul.f32 %v4725, 0.01
        %v4794 = vmul.f32 %v4726, 0.01
        %v4795 = vmul.f32 %v4727, 0.01
        %v4796 = vmul.f32 %v4728, 0.01
        %v4797 = vmul.f32 %v4729, 0.01
        %v4798 = vmul.f32 %v4730, 0.01
        %v4799 = vmul.f32 %v4731, 0.01
        %v4800 = vmul.f32 %v4732, 0.01
        %v4801 = vmul.f32 %v4733, 0.01
        %v4802 = vmul.f32 %v4734, 0.01
        %v4803 = vmul.f32 %v4735, 0.01
        %v4804 = vmul.f32 %v4736, 0.01
        %v4805 = vmul.f32 %v4737, 0.01
        %v4806 = vmul.f32 %v4738, 0.01
        %v4807 = vmul.f32 %v4739, 0.01
        %v4808 = vmul.f32 %v4740, 0.01
        %v4809 = vmul.f32 %v4741, 0.01
        %v4810 = vmul.f32 %v4742, 0.01
        %v4811 = vsel %vm4743, %v4709, %v4777
        %v4812 = vsel %vm4744, %v4710, %v4778
        %v4813 = vsel %vm4745, %v4711, %v4779
        %v4814 = vsel %vm4746, %v4712, %v4780
        %v4815 = vsel %vm4747, %v4713, %v4781
        %v4816 = vsel %vm4748, %v4714, %v4782
        %v4817 = vsel %vm4749, %v4715, %v4783
        %v4818 = vsel %vm4750, %v4716, %v4784
        %v4819 = vsel %vm4751, %v4717, %v4785
        %v4820 = vsel %vm4752, %v4718, %v4786
        %v4821 = vsel %vm4753, %v4719, %v4787
        %v4822 = vsel %vm4754, %v4720, %v4788
        %v4823 = vsel %vm4755, %v4721, %v4789
        %v4824 = vsel %vm4756, %v4722, %v4790
        %v4825 = vsel %vm4757, %v4723, %v4791
        %v4826 = vsel %vm4758, %v4724, %v4792
        %v4827 = vsel %vm4759, %v4725, %v4793
        %v4828 = vsel %vm4760, %v4726, %v4794
        %v4829 = vsel %vm4761, %v4727, %v4795
        %v4830 = vsel %vm4762, %v4728, %v4796
        %v4831 = vsel %vm4763, %v4729, %v4797
        %v4832 = vsel %vm4764, %v4730, %v4798
        %v4833 = vsel %vm4765, %v4731, %v4799
        %v4834 = vsel %vm4766, %v4732, %v4800
        %v4835 = vsel %vm4767, %v4733, %v4801
        %v4836 = vsel %vm4768, %v4734, %v4802
        %v4837 = vsel %vm4769, %v4735, %v4803
        %v4838 = vsel %vm4770, %v4736, %v4804
        %v4839 = vsel %vm4771, %v4737, %v4805
        %v4840 = vsel %vm4772, %v4738, %v4806
        %v4841 = vsel %vm4773, %v4739, %v4807
        %v4842 = vsel %vm4774, %v4740, %v4808
        %v4843 = vsel %vm4775, %v4741, %v4809
        %v4844 = vsel %vm4776, %v4742, %v4810
        %v4845 = vld [vmem:[%s5] sm:$0xff]
        %v4846 = vld [vmem:[%s5 + $0x8] sm:$0xff]
        %v4847 = vld [vmem:[%s5 + $0x10] sm:$0xff]
        %v4848 = vld [vmem:[%s5 + $0x18] sm:$0xff]
        %v4849 = vld [vmem:[%s5 + $0x20] sm:$0xff]
        %v4850 = vld [vmem:[%s5 + $0x28] sm:$0xff]
        %v4851 = vld [vmem:[%s5 + $0x30] sm:$0xff]
        %v4852 = vld [vmem:[%s5 + $0x38] sm:$0xff]
        %v4853 = vld [vmem:[%s5 + $0x40] sm:$0xff]
        %v4854 = vld [vmem:[%s5 + $0x48] sm:$0xff]
        %v4855 = vld [vmem:[%s5 + $0x50] sm:$0xff]
        %v4856 = vld [vmem:[%s5 + $0x58] sm:$0xff]
        %v4857 = vld [vmem:[%s5 + $0x60] sm:$0xff]
        %v4858 = vld [vmem:[%s5 + $0x68] sm:$0xff]
        %v4859 = vld [vmem:[%s5 + $0x70] sm:$0xff]
        %v4860 = vld [vmem:[%s5 + $0x78] sm:$0xff]
        %v4861 = vld [vmem:[%s5 + $0x80] sm:$0xff]
        %v4862 = vld [vmem:[%s5 + $0x88] sm:$0xff]
        %v4863 = vld [vmem:[%s5 + $0x90] sm:$0xff]
        %v4864 = vld [vmem:[%s5 + $0x98] sm:$0xff]
        %v4865 = vld [vmem:[%s5 + $0xa0] sm:$0xff]
        %v4866 = vld [vmem:[%s5 + $0xa8] sm:$0xff]
        %v4867 = vld [vmem:[%s5 + $0xb0] sm:$0xff]
        %v4868 = vld [vmem:[%s5 + $0xb8] sm:$0xff]
        %v4869 = vld [vmem:[%s5 + $0xc0] sm:$0xff]
        %v4870 = vld [vmem:[%s5 + $0xc8] sm:$0xff]
        %v4871 = vld [vmem:[%s5 + $0xd0] sm:$0xff]
        %v4872 = vld [vmem:[%s5 + $0xd8] sm:$0xff]
        %v4873 = vld [vmem:[%s5 + $0xe0] sm:$0xff]
        %v4874 = vld [vmem:[%s5 + $0xe8] sm:$0xff]
        %v4875 = vld [vmem:[%s5 + $0xf0] sm:$0xff]
        %v4876 = vld [vmem:[%s5 + $0xf8] sm:$0xff]
        %v4877 = vld [vmem:[%s5 + $0x100] sm:$0xff]
        %v4878 = vld [vmem:[%s5 + $0x108] sm:$0x3f]
        %4880 = vset.pattern.permute.xlu0 0
        %4881 = vperm.xlu0 %4880, %v4845
        %v4882 = vpop.permute.xlu0 %4881
        %4885 = vset.pattern.permute.xlu0 0
        %4886 = vperm.xlu0 %4885, %v4846
        %v4887 = vpop.permute.xlu0 %4886
        %4890 = vset.pattern.permute.xlu0 0
        %4891 = vperm.xlu0 %4890, %v4847
        %v4892 = vpop.permute.xlu0 %4891
        %4895 = vset.pattern.permute.xlu0 0
        %4896 = vperm.xlu0 %4895, %v4848
        %v4897 = vpop.permute.xlu0 %4896
        %4900 = vset.pattern.permute.xlu0 0
        %4901 = vperm.xlu0 %4900, %v4849
        %v4902 = vpop.permute.xlu0 %4901
        %4905 = vset.pattern.permute.xlu0 0
        %4906 = vperm.xlu0 %4905, %v4850
        %v4907 = vpop.permute.xlu0 %4906
        %4910 = vset.pattern.permute.xlu0 0
        %4911 = vperm.xlu0 %4910, %v4851
        %v4912 = vpop.permute.xlu0 %4911
        %4915 = vset.pattern.permute.xlu0 0
        %4916 = vperm.xlu0 %4915, %v4852
        %v4917 = vpop.permute.xlu0 %4916
        %4920 = vset.pattern.permute.xlu0 0
        %4921 = vperm.xlu0 %4920, %v4853
        %v4922 = vpop.permute.xlu0 %4921
        %4925 = vset.pattern.permute.xlu0 0
        %4926 = vperm.xlu0 %4925, %v4854
        %v4927 = vpop.permute.xlu0 %4926
        %4930 = vset.pattern.permute.xlu0 0
        %4931 = vperm.xlu0 %4930, %v4855
        %v4932 = vpop.permute.xlu0 %4931
        %4935 = vset.pattern.permute.xlu0 0
        %4936 = vperm.xlu0 %4935, %v4856
        %v4937 = vpop.permute.xlu0 %4936
        %4940 = vset.pattern.permute.xlu0 0
        %4941 = vperm.xlu0 %4940, %v4857
        %v4942 = vpop.permute.xlu0 %4941
        %4945 = vset.pattern.permute.xlu0 0
        %4946 = vperm.xlu0 %4945, %v4858
        %v4947 = vpop.permute.xlu0 %4946
        %4950 = vset.pattern.permute.xlu0 0
        %4951 = vperm.xlu0 %4950, %v4859
        %v4952 = vpop.permute.xlu0 %4951
        %4955 = vset.pattern.permute.xlu0 0
        %4956 = vperm.xlu0 %4955, %v4860
        %v4957 = vpop.permute.xlu0 %4956
        %4960 = vset.pattern.permute.xlu0 0
        %4961 = vperm.xlu0 %4960, %v4861
        %v4962 = vpop.permute.xlu0 %4961
        %4965 = vset.pattern.permute.xlu0 0
        %4966 = vperm.xlu0 %4965, %v4862
        %v4967 = vpop.permute.xlu0 %4966
        %4970 = vset.pattern.permute.xlu0 0
        %4971 = vperm.xlu0 %4970, %v4863
        %v4972 = vpop.permute.xlu0 %4971
        %4975 = vset.pattern.permute.xlu0 0
        %4976 = vperm.xlu0 %4975, %v4864
        %v4977 = vpop.permute.xlu0 %4976
        %4980 = vset.pattern.permute.xlu0 0
        %4981 = vperm.xlu0 %4980, %v4865
        %v4982 = vpop.permute.xlu0 %4981
        %4985 = vset.pattern.permute.xlu0 0
        %4986 = vperm.xlu0 %4985, %v4866
        %v4987 = vpop.permute.xlu0 %4986
        %4990 = vset.pattern.permute.xlu0 0
        %4991 = vperm.xlu0 %4990, %v4867
        %v4992 = vpop.permute.xlu0 %4991
        %4995 = vset.pattern.permute.xlu0 0
        %4996 = vperm.xlu0 %4995, %v4868
        %v4997 = vpop.permute.xlu0 %4996
        %5000 = vset.pattern.permute.xlu0 0
        %5001 = vperm.xlu0 %5000, %v4869
        %v5002 = vpop.permute.xlu0 %5001
        %5005 = vset.pattern.permute.xlu0 0
        %5006 = vperm.xlu0 %5005, %v4870
        %v5007 = vpop.permute.xlu0 %5006
        %5010 = vset.pattern.permute.xlu0 0
        %5011 = vperm.xlu0 %5010, %v4871
        %v5012 = vpop.permute.xlu0 %5011
        %5015 = vset.pattern.permute.xlu0 0
        %5016 = vperm.xlu0 %5015, %v4872
        %v5017 = vpop.permute.xlu0 %5016
        %5020 = vset.pattern.permute.xlu0 0
        %5021 = vperm.xlu0 %5020, %v4873
        %v5022 = vpop.permute.xlu0 %5021
        %5025 = vset.pattern.permute.xlu0 0
        %5026 = vperm.xlu0 %5025, %v4874
        %v5027 = vpop.permute.xlu0 %5026
        %5030 = vset.pattern.permute.xlu0 0
        %5031 = vperm.xlu0 %5030, %v4875
        %v5032 = vpop.permute.xlu0 %5031
        %5035 = vset.pattern.permute.xlu0 0
        %5036 = vperm.xlu0 %5035, %v4876
        %v5037 = vpop.permute.xlu0 %5036
        %5040 = vset.pattern.permute.xlu0 0
        %5041 = vperm.xlu0 %5040, %v4877
        %v5042 = vpop.permute.xlu0 %5041
        %5045 = vset.pattern.permute.xlu0 0
        %5046 = vperm.xlu0 %5045, %v4878
        %v5047 = vpop.permute.xlu0 %5046
        %v5049 = vmul.f32 %v4811, %v4882
        %v5050 = vmul.f32 %v4812, %v4887
        %v5051 = vmul.f32 %v4813, %v4892
        %v5052 = vmul.f32 %v4814, %v4897
        %v5053 = vmul.f32 %v4815, %v4902
        %v5054 = vmul.f32 %v4816, %v4907
        %v5055 = vmul.f32 %v4817, %v4912
        %v5056 = vmul.f32 %v4818, %v4917
        %v5057 = vmul.f32 %v4819, %v4922
        %v5058 = vmul.f32 %v4820, %v4927
        %v5059 = vmul.f32 %v4821, %v4932
        %v5060 = vmul.f32 %v4822, %v4937
        %v5061 = vmul.f32 %v4823, %v4942
        %v5062 = vmul.f32 %v4824, %v4947
        %v5063 = vmul.f32 %v4825, %v4952
        %v5064 = vmul.f32 %v4826, %v4957
        %v5065 = vmul.f32 %v4827, %v4962
        %v5066 = vmul.f32 %v4828, %v4967
        %v5067 = vmul.f32 %v4829, %v4972
        %v5068 = vmul.f32 %v4830, %v4977
        %v5069 = vmul.f32 %v4831, %v4982
        %v5070 = vmul.f32 %v4832, %v4987
        %v5071 = vmul.f32 %v4833, %v4992
        %v5072 = vmul.f32 %v4834, %v4997
        %v5073 = vmul.f32 %v4835, %v5002
        %v5074 = vmul.f32 %v4836, %v5007
        %v5075 = vmul.f32 %v4837, %v5012
        %v5076 = vmul.f32 %v4838, %v5017
        %v5077 = vmul.f32 %v4839, %v5022
        %v5078 = vmul.f32 %v4840, %v5027
        %v5079 = vmul.f32 %v4841, %v5032
        %v5080 = vmul.f32 %v4842, %v5037
        %v5081 = vmul.f32 %v4843, %v5042
        %v5082 = vmul.f32 %v4844, %v5047
        %v5083 = vadd.f32 %v5049, %v5050
        %v5084 = vadd.f32 %v5083, %v5051
        %v5085 = vadd.f32 %v5084, %v5052
        %v5086 = vadd.f32 %v5085, %v5053
        %v5087 = vadd.f32 %v5086, %v5054
        %v5088 = vadd.f32 %v5087, %v5055
        %v5089 = vadd.f32 %v5088, %v5056
        %v5090 = vadd.f32 %v5089, %v5057
        %v5091 = vadd.f32 %v5090, %v5058
        %v5092 = vadd.f32 %v5091, %v5059
        %v5093 = vadd.f32 %v5092, %v5060
        %v5094 = vadd.f32 %v5093, %v5061
        %v5095 = vadd.f32 %v5094, %v5062
        %v5096 = vadd.f32 %v5095, %v5063
        %v5097 = vadd.f32 %v5096, %v5064
        %v5098 = vadd.f32 %v5097, %v5065
        %v5099 = vadd.f32 %v5098, %v5066
        %v5100 = vadd.f32 %v5099, %v5067
        %v5101 = vadd.f32 %v5100, %v5068
        %v5102 = vadd.f32 %v5101, %v5069
        %v5103 = vadd.f32 %v5102, %v5070
        %v5104 = vadd.f32 %v5103, %v5071
        %v5105 = vadd.f32 %v5104, %v5072
        %v5106 = vadd.f32 %v5105, %v5073
        %v5107 = vadd.f32 %v5106, %v5074
        %v5108 = vadd.f32 %v5107, %v5075
        %v5109 = vadd.f32 %v5108, %v5076
        %v5110 = vadd.f32 %v5109, %v5077
        %v5111 = vadd.f32 %v5110, %v5078
        %v5112 = vadd.f32 %v5111, %v5079
        %v5113 = vadd.f32 %v5112, %v5080
        %v5114 = vadd.f32 %v5113, %v5081
        %vm5115 = vcmask 1045504
        %v5116 = vsel %vm5115, %v5082, 0.0
        %v5117 = vadd.f32 %v5114, %v5116
        %v5118 = vrot.slane %v5117, 4
        %v5119 = vadd.f32 %v5117, %v5118
        %v5120 = vrot.slane %v5119, 2
        %v5121 = vadd.f32 %v5119, %v5120
        %v5122 = vrot.slane %v5121, 1
        %v5123 = vadd.f32 %v5121, %v5122
        %v5124 = vld [vmem:[%s3] sm:$0xff]
        %v5125 = vmul.f32 %v5124, %v5123
        %5126 = vadd.xlane.f32.xlu0 %v5125
        %v5127 = vpop.xlane.xlu0 %5126
        %v5128 = vmax.f32 %v5127, 0.0
        %v5129 = vld [vmem:[%s4] sm:$0xff]
        %v5130 = vmul.f32 %v5129, %v5128
        %v5131 = vrot.slane %v5130, 4
        %v5132 = vadd.f32 %v5130, %v5131
        %v5133 = vrot.slane %v5132, 2
        %v5134 = vadd.f32 %v5132, %v5133
        %v5135 = vrot.slane %v5134, 1
        %v5136 = vadd.f32 %v5134, %v5135
        %v5137 = vsub.f32 0.0, %v5136
        %v5138 = vmul.f32 %v5137, 1.442695
        %v5139 = vpow.pop %v5138
        %v5140 = vadd.f32 %v5139, 1.0
        %v5141 = vrcp.pop %v5140
        %v5142 = vmul.f32 %v4811, %v5141
        %v5143 = vmul.f32 %v4812, %v5141
        %v5144 = vmul.f32 %v4813, %v5141
        %v5145 = vmul.f32 %v4814, %v5141
        %v5146 = vmul.f32 %v4815, %v5141
        %v5147 = vmul.f32 %v4816, %v5141
        %v5148 = vmul.f32 %v4817, %v5141
        %v5149 = vmul.f32 %v4818, %v5141
        %v5150 = vmul.f32 %v4819, %v5141
        %v5151 = vmul.f32 %v4820, %v5141
        %v5152 = vmul.f32 %v4821, %v5141
        %v5153 = vmul.f32 %v4822, %v5141
        %v5154 = vmul.f32 %v4823, %v5141
        %v5155 = vmul.f32 %v4824, %v5141
        %v5156 = vmul.f32 %v4825, %v5141
        %v5157 = vmul.f32 %v4826, %v5141
        %v5158 = vmul.f32 %v4827, %v5141
        %v5159 = vmul.f32 %v4828, %v5141
        %v5160 = vmul.f32 %v4829, %v5141
        %v5161 = vmul.f32 %v4830, %v5141
        %v5162 = vmul.f32 %v4831, %v5141
        %v5163 = vmul.f32 %v4832, %v5141
        %v5164 = vmul.f32 %v4833, %v5141
        %v5165 = vmul.f32 %v4834, %v5141
        %v5166 = vmul.f32 %v4835, %v5141
        %v5167 = vmul.f32 %v4836, %v5141
        %v5168 = vmul.f32 %v4837, %v5141
        %v5169 = vmul.f32 %v4838, %v5141
        %v5170 = vmul.f32 %v4839, %v5141
        %v5171 = vmul.f32 %v4840, %v5141
        %v5172 = vmul.f32 %v4841, %v5141
        %v5173 = vmul.f32 %v4842, %v5141
        %v5174 = vmul.f32 %v4843, %v5141
        %v5175 = vmul.f32 %v4844, %v5141
        %5176 = vst [vmem:[#allocation2] sm:$0xff] %v5142
        %5177 = vst [vmem:[#allocation2 + $0x8] sm:$0xff] %v5143
        %5178 = vst [vmem:[#allocation2 + $0x10] sm:$0xff] %v5144
        %5179 = vst [vmem:[#allocation2 + $0x18] sm:$0xff] %v5145
        %5180 = vst [vmem:[#allocation2 + $0x20] sm:$0xff] %v5146
        %5181 = vst [vmem:[#allocation2 + $0x28] sm:$0xff] %v5147
        %5182 = vst [vmem:[#allocation2 + $0x30] sm:$0xff] %v5148
        %5183 = vst [vmem:[#allocation2 + $0x38] sm:$0xff] %v5149
        %5184 = vst [vmem:[#allocation2 + $0x40] sm:$0xff] %v5150
        %5185 = vst [vmem:[#allocation2 + $0x48] sm:$0xff] %v5151
        %5186 = vst [vmem:[#allocation2 + $0x50] sm:$0xff] %v5152
        %5187 = vst [vmem:[#allocation2 + $0x58] sm:$0xff] %v5153
        %5188 = vst [vmem:[#allocation2 + $0x60] sm:$0xff] %v5154
        %5189 = vst [vmem:[#allocation2 + $0x68] sm:$0xff] %v5155
        %5190 = vst [vmem:[#allocation2 + $0x70] sm:$0xff] %v5156
        %5191 = vst [vmem:[#allocation2 + $0x78] sm:$0xff] %v5157
        %5192 = vst [vmem:[#allocation2 + $0x80] sm:$0xff] %v5158
        %5193 = vst [vmem:[#allocation2 + $0x88] sm:$0xff] %v5159
        %5194 = vst [vmem:[#allocation2 + $0x90] sm:$0xff] %v5160
        %5195 = vst [vmem:[#allocation2 + $0x98] sm:$0xff] %v5161
        %5196 = vst [vmem:[#allocation2 + $0xa0] sm:$0xff] %v5162
        %5197 = vst [vmem:[#allocation2 + $0xa8] sm:$0xff] %v5163
        %5198 = vst [vmem:[#allocation2 + $0xb0] sm:$0xff] %v5164
        %5199 = vst [vmem:[#allocation2 + $0xb8] sm:$0xff] %v5165
        %5200 = vst [vmem:[#allocation2 + $0xc0] sm:$0xff] %v5166
        %5201 = vst [vmem:[#allocation2 + $0xc8] sm:$0xff] %v5167
        %5202 = vst [vmem:[#allocation2 + $0xd0] sm:$0xff] %v5168
        %5203 = vst [vmem:[#allocation2 + $0xd8] sm:$0xff] %v5169
        %5204 = vst [vmem:[#allocation2 + $0xe0] sm:$0xff] %v5170
        %5205 = vst [vmem:[#allocation2 + $0xe8] sm:$0xff] %v5171
        %5206 = vst [vmem:[#allocation2 + $0xf0] sm:$0xff] %v5172
        %5207 = vst [vmem:[#allocation2 + $0xf8] sm:$0xff] %v5173
        %5208 = vst [vmem:[#allocation2 + $0x100] sm:$0xff] %v5174
        %5209 = vst [vmem:[#allocation2 + $0x108] sm:$0x3f] %v5175
        %v5210 = vld [vmem:[#allocation2] sm:$0xff]
        %v5211 = vld [vmem:[#allocation2 + $0x8] sm:$0xff]
        %v5212 = vld [vmem:[#allocation2 + $0x10] sm:$0xff]
        %v5213 = vld [vmem:[#allocation2 + $0x18] sm:$0xff]
        %v5214 = vld [vmem:[#allocation2 + $0x20] sm:$0xff]
        %v5215 = vld [vmem:[#allocation2 + $0x28] sm:$0xff]
        %v5216 = vld [vmem:[#allocation2 + $0x30] sm:$0xff]
        %v5217 = vld [vmem:[#allocation2 + $0x38] sm:$0xff]
        %v5218 = vld [vmem:[#allocation2 + $0x40] sm:$0xff]
        %v5219 = vld [vmem:[#allocation2 + $0x48] sm:$0xff]
        %v5220 = vld [vmem:[#allocation2 + $0x50] sm:$0xff]
        %v5221 = vld [vmem:[#allocation2 + $0x58] sm:$0xff]
        %v5222 = vld [vmem:[#allocation2 + $0x60] sm:$0xff]
        %v5223 = vld [vmem:[#allocation2 + $0x68] sm:$0xff]
        %v5224 = vld [vmem:[#allocation2 + $0x70] sm:$0xff]
        %v5225 = vld [vmem:[#allocation2 + $0x78] sm:$0xff]
        %v5226 = vld [vmem:[#allocation2 + $0x80] sm:$0xff]
        %v5227 = vld [vmem:[#allocation2 + $0x88] sm:$0xff]
        %v5228 = vld [vmem:[#allocation2 + $0x90] sm:$0xff]
        %v5229 = vld [vmem:[#allocation2 + $0x98] sm:$0xff]
        %v5230 = vld [vmem:[#allocation2 + $0xa0] sm:$0xff]
        %v5231 = vld [vmem:[#allocation2 + $0xa8] sm:$0xff]
        %v5232 = vld [vmem:[#allocation2 + $0xb0] sm:$0xff]
        %v5233 = vld [vmem:[#allocation2 + $0xb8] sm:$0xff]
        %v5234 = vld [vmem:[#allocation2 + $0xc0] sm:$0xff]
        %v5235 = vld [vmem:[#allocation2 + $0xc8] sm:$0xff]
        %v5236 = vld [vmem:[#allocation2 + $0xd0] sm:$0xff]
        %v5237 = vld [vmem:[#allocation2 + $0xd8] sm:$0xff]
        %v5238 = vld [vmem:[#allocation2 + $0xe0] sm:$0xff]
        %v5239 = vld [vmem:[#allocation2 + $0xe8] sm:$0xff]
        %v5240 = vld [vmem:[#allocation2 + $0xf0] sm:$0xff]
        %v5241 = vld [vmem:[#allocation2 + $0xf8] sm:$0x1f]
        %v5242 = vld [vmem:[#allocation2 + $0x11] sm:$0xff]
        %v5243 = vld [vmem:[#allocation2 + $0x19] sm:$0xff]
        %v5244 = vld [vmem:[#allocation2 + $0x21] sm:$0xff]
        %v5245 = vld [vmem:[#allocation2 + $0x29] sm:$0xff]
        %v5246 = vld [vmem:[#allocation2 + $0x31] sm:$0xff]
        %v5247 = vld [vmem:[#allocation2 + $0x39] sm:$0xff]
        %v5248 = vld [vmem:[#allocation2 + $0x41] sm:$0xff]
        %v5249 = vld [vmem:[#allocation2 + $0x49] sm:$0xff]
        %v5250 = vld [vmem:[#allocation2 + $0x51] sm:$0xff]
        %v5251 = vld [vmem:[#allocation2 + $0x59] sm:$0xff]
        %v5252 = vld [vmem:[#allocation2 + $0x61] sm:$0xff]
        %v5253 = vld [vmem:[#allocation2 + $0x69] sm:$0xff]
        %v5254 = vld [vmem:[#allocation2 + $0x71] sm:$0xff]
        %v5255 = vld [vmem:[#allocation2 + $0x79] sm:$0xff]
        %v5256 = vld [vmem:[#allocation2 + $0x81] sm:$0xff]
        %v5257 = vld [vmem:[#allocation2 + $0x89] sm:$0xff]
        %v5258 = vld [vmem:[#allocation2 + $0x91] sm:$0xff]
        %v5259 = vld [vmem:[#allocation2 + $0x99] sm:$0xff]
        %v5260 = vld [vmem:[#allocation2 + $0xa1] sm:$0xff]
        %v5261 = vld [vmem:[#allocation2 + $0xa9] sm:$0xff]
        %v5262 = vld [vmem:[#allocation2 + $0xb1] sm:$0xff]
        %v5263 = vld [vmem:[#allocation2 + $0xb9] sm:$0xff]
        %v5264 = vld [vmem:[#allocation2 + $0xc1] sm:$0xff]
        %v5265 = vld [vmem:[#allocation2 + $0xc9] sm:$0xff]
        %v5266 = vld [vmem:[#allocation2 + $0xd1] sm:$0xff]
        %v5267 = vld [vmem:[#allocation2 + $0xd9] sm:$0xff]
        %v5268 = vld [vmem:[#allocation2 + $0xe1] sm:$0xff]
        %v5269 = vld [vmem:[#allocation2 + $0xe9] sm:$0xff]
        %v5270 = vld [vmem:[#allocation2 + $0xf1] sm:$0xff]
        %v5271 = vld [vmem:[#allocation2 + $0xf9] sm:$0xff]
        %v5272 = vld [vmem:[#allocation2 + $0x101] sm:$0xff]
        %v5273 = vld [vmem:[#allocation2 + $0x109] sm:$0x1f]
        %v5274 = vmax.f32 %v5210, %v5242
        %v5275 = vmax.f32 %v5211, %v5243
        %v5276 = vmax.f32 %v5212, %v5244
        %v5277 = vmax.f32 %v5213, %v5245
        %v5278 = vmax.f32 %v5214, %v5246
        %v5279 = vmax.f32 %v5215, %v5247
        %v5280 = vmax.f32 %v5216, %v5248
        %v5281 = vmax.f32 %v5217, %v5249
        %v5282 = vmax.f32 %v5218, %v5250
        %v5283 = vmax.f32 %v5219, %v5251
        %v5284 = vmax.f32 %v5220, %v5252
        %v5285 = vmax.f32 %v5221, %v5253
        %v5286 = vmax.f32 %v5222, %v5254
        %v5287 = vmax.f32 %v5223, %v5255
        %v5288 = vmax.f32 %v5224, %v5256
        %v5289 = vmax.f32 %v5225, %v5257
        %v5290 = vmax.f32 %v5226, %v5258
        %v5291 = vmax.f32 %v5227, %v5259
        %v5292 = vmax.f32 %v5228, %v5260
        %v5293 = vmax.f32 %v5229, %v5261
        %v5294 = vmax.f32 %v5230, %v5262
        %v5295 = vmax.f32 %v5231, %v5263
        %v5296 = vmax.f32 %v5232, %v5264
        %v5297 = vmax.f32 %v5233, %v5265
        %v5298 = vmax.f32 %v5234, %v5266
        %v5299 = vmax.f32 %v5235, %v5267
        %v5300 = vmax.f32 %v5236, %v5268
        %v5301 = vmax.f32 %v5237, %v5269
        %v5302 = vmax.f32 %v5238, %v5270
        %v5303 = vmax.f32 %v5239, %v5271
        %v5304 = vmax.f32 %v5240, %v5272
        %v5305 = vmax.f32 %v5241, %v5273
        %v5306 = vld [vmem:[%s6] sm:$0xff]
        %v5307 = vld [vmem:[%s6 + $0x8] sm:$0xff]
        %v5308 = vld [vmem:[%s6 + $0x10] sm:$0xff]
        %v5309 = vld [vmem:[%s6 + $0x18] sm:$0xff]
        %v5310 = vld [vmem:[%s6 + $0x20] sm:$0xff]
        %v5311 = vld [vmem:[%s6 + $0x28] sm:$0xff]
        %v5312 = vld [vmem:[%s6 + $0x30] sm:$0xff]
        %v5313 = vld [vmem:[%s6 + $0x38] sm:$0xff]
        %v5314 = vld [vmem:[%s6 + $0x40] sm:$0xff]
        %v5315 = vld [vmem:[%s6 + $0x48] sm:$0xff]
        %v5316 = vld [vmem:[%s6 + $0x50] sm:$0xff]
        %v5317 = vld [vmem:[%s6 + $0x58] sm:$0xff]
        %v5318 = vld [vmem:[%s6 + $0x60] sm:$0xff]
        %v5319 = vld [vmem:[%s6 + $0x68] sm:$0xff]
        %v5320 = vld [vmem:[%s6 + $0x70] sm:$0xff]
        %v5321 = vld [vmem:[%s6 + $0x78] sm:$0xff]
        %v5322 = vld [vmem:[%s6 + $0x80] sm:$0xff]
        %v5323 = vld [vmem:[%s6 + $0x88] sm:$0xff]
        %v5324 = vld [vmem:[%s6 + $0x90] sm:$0xff]
        %v5325 = vld [vmem:[%s6 + $0x98] sm:$0xff]
        %v5326 = vld [vmem:[%s6 + $0xa0] sm:$0xff]
        %v5327 = vld [vmem:[%s6 + $0xa8] sm:$0xff]
        %v5328 = vld [vmem:[%s6 + $0xb0] sm:$0xff]
        %v5329 = vld [vmem:[%s6 + $0xb8] sm:$0xff]
        %v5330 = vld [vmem:[%s6 + $0xc0] sm:$0xff]
        %v5331 = vld [vmem:[%s6 + $0xc8] sm:$0xff]
        %v5332 = vld [vmem:[%s6 + $0xd0] sm:$0xff]
        %v5333 = vld [vmem:[%s6 + $0xd8] sm:$0xff]
        %v5334 = vld [vmem:[%s6 + $0xe0] sm:$0xff]
        %v5335 = vld [vmem:[%s6 + $0xe8] sm:$0xff]
        %v5336 = vld [vmem:[%s6 + $0xf0] sm:$0xff]
        %v5337 = vld [vmem:[%s6 + $0xf8] sm:$0x1f]
        %v5338 = vmul.f32 %v5274, %v5306
        %v5339 = vmul.f32 %v5275, %v5307
        %v5340 = vmul.f32 %v5276, %v5308
        %v5341 = vmul.f32 %v5277, %v5309
        %v5342 = vmul.f32 %v5278, %v5310
        %v5343 = vmul.f32 %v5279, %v5311
        %v5344 = vmul.f32 %v5280, %v5312
        %v5345 = vmul.f32 %v5281, %v5313
        %v5346 = vmul.f32 %v5282, %v5314
        %v5347 = vmul.f32 %v5283, %v5315
        %v5348 = vmul.f32 %v5284, %v5316
        %v5349 = vmul.f32 %v5285, %v5317
        %v5350 = vmul.f32 %v5286, %v5318
        %v5351 = vmul.f32 %v5287, %v5319
        %v5352 = vmul.f32 %v5288, %v5320
        %v5353 = vmul.f32 %v5289, %v5321
        %v5354 = vmul.f32 %v5290, %v5322
        %v5355 = vmul.f32 %v5291, %v5323
        %v5356 = vmul.f32 %v5292, %v5324
        %v5357 = vmul.f32 %v5293, %v5325
        %v5358 = vmul.f32 %v5294, %v5326
        %v5359 = vmul.f32 %v5295, %v5327
        %v5360 = vmul.f32 %v5296, %v5328
        %v5361 = vmul.f32 %v5297, %v5329
        %v5362 = vmul.f32 %v5298, %v5330
        %v5363 = vmul.f32 %v5299, %v5331
        %v5364 = vmul.f32 %v5300, %v5332
        %v5365 = vmul.f32 %v5301, %v5333
        %v5366 = vmul.f32 %v5302, %v5334
        %v5367 = vmul.f32 %v5303, %v5335
        %v5368 = vmul.f32 %v5304, %v5336
        %v5369 = vmul.f32 %v5305, %v5337
        %5370 = vadd.xlane.f32.xlu0 %v5338
        %v5371 = vpop.xlane.xlu0 %5370
        %5372 = vadd.xlane.f32.xlu0 %v5339
        %v5373 = vpop.xlane.xlu0 %5372
        %5374 = vadd.xlane.f32.xlu0 %v5340
        %v5375 = vpop.xlane.xlu0 %5374
        %5376 = vadd.xlane.f32.xlu0 %v5341
        %v5377 = vpop.xlane.xlu0 %5376
        %5378 = vadd.xlane.f32.xlu0 %v5342
        %v5379 = vpop.xlane.xlu0 %5378
        %5380 = vadd.xlane.f32.xlu0 %v5343
        %v5381 = vpop.xlane.xlu0 %5380
        %5382 = vadd.xlane.f32.xlu0 %v5344
        %v5383 = vpop.xlane.xlu0 %5382
        %5384 = vadd.xlane.f32.xlu0 %v5345
        %v5385 = vpop.xlane.xlu0 %5384
        %5386 = vadd.xlane.f32.xlu0 %v5346
        %v5387 = vpop.xlane.xlu0 %5386
        %5388 = vadd.xlane.f32.xlu0 %v5347
        %v5389 = vpop.xlane.xlu0 %5388
        %5390 = vadd.xlane.f32.xlu0 %v5348
        %v5391 = vpop.xlane.xlu0 %5390
        %5392 = vadd.xlane.f32.xlu0 %v5349
        %v5393 = vpop.xlane.xlu0 %5392
        %5394 = vadd.xlane.f32.xlu0 %v5350
        %v5395 = vpop.xlane.xlu0 %5394
        %5396 = vadd.xlane.f32.xlu0 %v5351
        %v5397 = vpop.xlane.xlu0 %5396
        %5398 = vadd.xlane.f32.xlu0 %v5352
        %v5399 = vpop.xlane.xlu0 %5398
        %5400 = vadd.xlane.f32.xlu0 %v5353
        %v5401 = vpop.xlane.xlu0 %5400
        %5402 = vadd.xlane.f32.xlu0 %v5354
        %v5403 = vpop.xlane.xlu0 %5402
        %5404 = vadd.xlane.f32.xlu0 %v5355
        %v5405 = vpop.xlane.xlu0 %5404
        %5406 = vadd.xlane.f32.xlu0 %v5356
        %v5407 = vpop.xlane.xlu0 %5406
        %5408 = vadd.xlane.f32.xlu0 %v5357
        %v5409 = vpop.xlane.xlu0 %5408
        %5410 = vadd.xlane.f32.xlu0 %v5358
        %v5411 = vpop.xlane.xlu0 %5410
        %5412 = vadd.xlane.f32.xlu0 %v5359
        %v5413 = vpop.xlane.xlu0 %5412
        %5414 = vadd.xlane.f32.xlu0 %v5360
        %v5415 = vpop.xlane.xlu0 %5414
        %5416 = vadd.xlane.f32.xlu0 %v5361
        %v5417 = vpop.xlane.xlu0 %5416
        %5418 = vadd.xlane.f32.xlu0 %v5362
        %v5419 = vpop.xlane.xlu0 %5418
        %5420 = vadd.xlane.f32.xlu0 %v5363
        %v5421 = vpop.xlane.xlu0 %5420
        %5422 = vadd.xlane.f32.xlu0 %v5364
        %v5423 = vpop.xlane.xlu0 %5422
        %5424 = vadd.xlane.f32.xlu0 %v5365
        %v5425 = vpop.xlane.xlu0 %5424
        %5426 = vadd.xlane.f32.xlu0 %v5366
        %v5427 = vpop.xlane.xlu0 %5426
        %5428 = vadd.xlane.f32.xlu0 %v5367
        %v5429 = vpop.xlane.xlu0 %5428
        %5430 = vadd.xlane.f32.xlu0 %v5368
        %v5431 = vpop.xlane.xlu0 %5430
        %vm5432 = vcmask 1044480
        %v5433 = vsel %vm5432, %v5369, 0.0
        %5434 = vadd.xlane.f32.xlu0 %v5433
        %v5435 = vpop.xlane.xlu0 %5434
        %v5436 = vadd.f32 %v5371, %v5373
        %v5437 = vadd.f32 %v5436, %v5375
        %v5438 = vadd.f32 %v5437, %v5377
        %v5439 = vadd.f32 %v5438, %v5379
        %v5440 = vadd.f32 %v5439, %v5381
        %v5441 = vadd.f32 %v5440, %v5383
        %v5442 = vadd.f32 %v5441, %v5385
        %v5443 = vadd.f32 %v5442, %v5387
        %v5444 = vadd.f32 %v5443, %v5389
        %v5445 = vadd.f32 %v5444, %v5391
        %v5446 = vadd.f32 %v5445, %v5393
        %v5447 = vadd.f32 %v5446, %v5395
        %v5448 = vadd.f32 %v5447, %v5397
        %v5449 = vadd.f32 %v5448, %v5399
        %v5450 = vadd.f32 %v5449, %v5401
        %v5451 = vadd.f32 %v5450, %v5403
        %v5452 = vadd.f32 %v5451, %v5405
        %v5453 = vadd.f32 %v5452, %v5407
        %v5454 = vadd.f32 %v5453, %v5409
        %v5455 = vadd.f32 %v5454, %v5411
        %v5456 = vadd.f32 %v5455, %v5413
        %v5457 = vadd.f32 %v5456, %v5415
        %v5458 = vadd.f32 %v5457, %v5417
        %v5459 = vadd.f32 %v5458, %v5419
        %v5460 = vadd.f32 %v5459, %v5421
        %v5461 = vadd.f32 %v5460, %v5423
        %v5462 = vadd.f32 %v5461, %v5425
        %v5463 = vadd.f32 %v5462, %v5427
        %v5464 = vadd.f32 %v5463, %v5429
        %v5465 = vadd.f32 %v5464, %v5431
        %v5466 = vsel %vm5432, %v5435, 0.0
        %v5467 = vadd.f32 %v5465, %v5466
        %v5468 = vrot.slane %v5467, 4
        %v5469 = vadd.f32 %v5467, %v5468
        %v5470 = vrot.slane %v5469, 2
        %v5471 = vadd.f32 %v5469, %v5470
        %v5472 = vrot.slane %v5471, 1
        %v5473 = vadd.f32 %v5471, %v5472
        %s5474 = scalar_lea.vmem %s6, 256
        %v5475 = vld [vmem:[%s5474] sm:$0xff]
        %v5476 = vld [vmem:[%s5474 + $0x8] sm:$0xff]
        %v5477 = vld [vmem:[%s5474 + $0x10] sm:$0xff]
        %v5478 = vld [vmem:[%s5474 + $0x18] sm:$0xff]
        %v5479 = vld [vmem:[%s5474 + $0x20] sm:$0xff]
        %v5480 = vld [vmem:[%s5474 + $0x28] sm:$0xff]
        %v5481 = vld [vmem:[%s5474 + $0x30] sm:$0xff]
        %v5482 = vld [vmem:[%s5474 + $0x38] sm:$0xff]
        %v5483 = vld [vmem:[%s5474 + $0x40] sm:$0xff]
        %v5484 = vld [vmem:[%s5474 + $0x48] sm:$0xff]
        %v5485 = vld [vmem:[%s5474 + $0x50] sm:$0xff]
        %v5486 = vld [vmem:[%s5474 + $0x58] sm:$0xff]
        %v5487 = vld [vmem:[%s5474 + $0x60] sm:$0xff]
        %v5488 = vld [vmem:[%s5474 + $0x68] sm:$0xff]
        %v5489 = vld [vmem:[%s5474 + $0x70] sm:$0xff]
        %v5490 = vld [vmem:[%s5474 + $0x78] sm:$0xff]
        %v5491 = vld [vmem:[%s5474 + $0x80] sm:$0xff]
        %v5492 = vld [vmem:[%s5474 + $0x88] sm:$0xff]
        %v5493 = vld [vmem:[%s5474 + $0x90] sm:$0xff]
        %v5494 = vld [vmem:[%s5474 + $0x98] sm:$0xff]
        %v5495 = vld [vmem:[%s5474 + $0xa0] sm:$0xff]
        %v5496 = vld [vmem:[%s5474 + $0xa8] sm:$0xff]
        %v5497 = vld [vmem:[%s5474 + $0xb0] sm:$0xff]
        %v5498 = vld [vmem:[%s5474 + $0xb8] sm:$0xff]
        %v5499 = vld [vmem:[%s5474 + $0xc0] sm:$0xff]
        %v5500 = vld [vmem:[%s5474 + $0xc8] sm:$0xff]
        %v5501 = vld [vmem:[%s5474 + $0xd0] sm:$0xff]
        %v5502 = vld [vmem:[%s5474 + $0xd8] sm:$0xff]
        %v5503 = vld [vmem:[%s5474 + $0xe0] sm:$0xff]
        %v5504 = vld [vmem:[%s5474 + $0xe8] sm:$0xff]
        %v5505 = vld [vmem:[%s5474 + $0xf0] sm:$0xff]
        %v5506 = vld [vmem:[%s5474 + $0xf8] sm:$0x1f]
        %v5507 = vmul.f32 %v5274, %v5475
        %v5508 = vmul.f32 %v5275, %v5476
        %v5509 = vmul.f32 %v5276, %v5477
        %v5510 = vmul.f32 %v5277, %v5478
        %v5511 = vmul.f32 %v5278, %v5479
        %v5512 = vmul.f32 %v5279, %v5480
        %v5513 = vmul.f32 %v5280, %v5481
        %v5514 = vmul.f32 %v5281, %v5482
        %v5515 = vmul.f32 %v5282, %v5483
        %v5516 = vmul.f32 %v5283, %v5484
        %v5517 = vmul.f32 %v5284, %v5485
        %v5518 = vmul.f32 %v5285, %v5486
        %v5519 = vmul.f32 %v5286, %v5487
        %v5520 = vmul.f32 %v5287, %v5488
        %v5521 = vmul.f32 %v5288, %v5489
        %v5522 = vmul.f32 %v5289, %v5490
        %v5523 = vmul.f32 %v5290, %v5491
        %v5524 = vmul.f32 %v5291, %v5492
        %v5525 = vmul.f32 %v5292, %v5493
        %v5526 = vmul.f32 %v5293, %v5494
        %v5527 = vmul.f32 %v5294, %v5495
        %v5528 = vmul.f32 %v5295, %v5496
        %v5529 = vmul.f32 %v5296, %v5497
        %v5530 = vmul.f32 %v5297, %v5498
        %v5531 = vmul.f32 %v5298, %v5499
        %v5532 = vmul.f32 %v5299, %v5500
        %v5533 = vmul.f32 %v5300, %v5501
        %v5534 = vmul.f32 %v5301, %v5502
        %v5535 = vmul.f32 %v5302, %v5503
        %v5536 = vmul.f32 %v5303, %v5504
        %v5537 = vmul.f32 %v5304, %v5505
        %v5538 = vmul.f32 %v5305, %v5506
        %5539 = vadd.xlane.f32.xlu0 %v5507
        %v5540 = vpop.xlane.xlu0 %5539
        %5541 = vadd.xlane.f32.xlu0 %v5508
        %v5542 = vpop.xlane.xlu0 %5541
        %5543 = vadd.xlane.f32.xlu0 %v5509
        %v5544 = vpop.xlane.xlu0 %5543
        %5545 = vadd.xlane.f32.xlu0 %v5510
        %v5546 = vpop.xlane.xlu0 %5545
        %5547 = vadd.xlane.f32.xlu0 %v5511
        %v5548 = vpop.xlane.xlu0 %5547
        %5549 = vadd.xlane.f32.xlu0 %v5512
        %v5550 = vpop.xlane.xlu0 %5549
        %5551 = vadd.xlane.f32.xlu0 %v5513
        %v5552 = vpop.xlane.xlu0 %5551
        %5553 = vadd.xlane.f32.xlu0 %v5514
        %v5554 = vpop.xlane.xlu0 %5553
        %5555 = vadd.xlane.f32.xlu0 %v5515
        %v5556 = vpop.xlane.xlu0 %5555
        %5557 = vadd.xlane.f32.xlu0 %v5516
        %v5558 = vpop.xlane.xlu0 %5557
        %5559 = vadd.xlane.f32.xlu0 %v5517
        %v5560 = vpop.xlane.xlu0 %5559
        %5561 = vadd.xlane.f32.xlu0 %v5518
        %v5562 = vpop.xlane.xlu0 %5561
        %5563 = vadd.xlane.f32.xlu0 %v5519
        %v5564 = vpop.xlane.xlu0 %5563
        %5565 = vadd.xlane.f32.xlu0 %v5520
        %v5566 = vpop.xlane.xlu0 %5565
        %5567 = vadd.xlane.f32.xlu0 %v5521
        %v5568 = vpop.xlane.xlu0 %5567
        %5569 = vadd.xlane.f32.xlu0 %v5522
        %v5570 = vpop.xlane.xlu0 %5569
        %5571 = vadd.xlane.f32.xlu0 %v5523
        %v5572 = vpop.xlane.xlu0 %5571
        %5573 = vadd.xlane.f32.xlu0 %v5524
        %v5574 = vpop.xlane.xlu0 %5573
        %5575 = vadd.xlane.f32.xlu0 %v5525
        %v5576 = vpop.xlane.xlu0 %5575
        %5577 = vadd.xlane.f32.xlu0 %v5526
        %v5578 = vpop.xlane.xlu0 %5577
        %5579 = vadd.xlane.f32.xlu0 %v5527
        %v5580 = vpop.xlane.xlu0 %5579
        %5581 = vadd.xlane.f32.xlu0 %v5528
        %v5582 = vpop.xlane.xlu0 %5581
        %5583 = vadd.xlane.f32.xlu0 %v5529
        %v5584 = vpop.xlane.xlu0 %5583
        %5585 = vadd.xlane.f32.xlu0 %v5530
        %v5586 = vpop.xlane.xlu0 %5585
        %5587 = vadd.xlane.f32.xlu0 %v5531
        %v5588 = vpop.xlane.xlu0 %5587
        %5589 = vadd.xlane.f32.xlu0 %v5532
        %v5590 = vpop.xlane.xlu0 %5589
        %5591 = vadd.xlane.f32.xlu0 %v5533
        %v5592 = vpop.xlane.xlu0 %5591
        %5593 = vadd.xlane.f32.xlu0 %v5534
        %v5594 = vpop.xlane.xlu0 %5593
        %5595 = vadd.xlane.f32.xlu0 %v5535
        %v5596 = vpop.xlane.xlu0 %5595
        %5597 = vadd.xlane.f32.xlu0 %v5536
        %v5598 = vpop.xlane.xlu0 %5597
        %5599 = vadd.xlane.f32.xlu0 %v5537
        %v5600 = vpop.xlane.xlu0 %5599
        %v5601 = vsel %vm5432, %v5538, 0.0
        %5602 = vadd.xlane.f32.xlu0 %v5601
        %v5603 = vpop.xlane.xlu0 %5602
        %v5604 = vadd.f32 %v5540, %v5542
        %v5605 = vadd.f32 %v5604, %v5544
        %v5606 = vadd.f32 %v5605, %v5546
        %v5607 = vadd.f32 %v5606, %v5548
        %v5608 = vadd.f32 %v5607, %v5550
        %v5609 = vadd.f32 %v5608, %v5552
        %v5610 = vadd.f32 %v5609, %v5554
        %v5611 = vadd.f32 %v5610, %v5556
        %v5612 = vadd.f32 %v5611, %v5558
        %v5613 = vadd.f32 %v5612, %v5560
        %v5614 = vadd.f32 %v5613, %v5562
        %v5615 = vadd.f32 %v5614, %v5564
        %v5616 = vadd.f32 %v5615, %v5566
        %v5617 = vadd.f32 %v5616, %v5568
        %v5618 = vadd.f32 %v5617, %v5570
        %v5619 = vadd.f32 %v5618, %v5572
        %v5620 = vadd.f32 %v5619, %v5574
        %v5621 = vadd.f32 %v5620, %v5576
        %v5622 = vadd.f32 %v5621, %v5578
        %v5623 = vadd.f32 %v5622, %v5580
        %v5624 = vadd.f32 %v5623, %v5582
        %v5625 = vadd.f32 %v5624, %v5584
        %v5626 = vadd.f32 %v5625, %v5586
        %v5627 = vadd.f32 %v5626, %v5588
        %v5628 = vadd.f32 %v5627, %v5590
        %v5629 = vadd.f32 %v5628, %v5592
        %v5630 = vadd.f32 %v5629, %v5594
        %v5631 = vadd.f32 %v5630, %v5596
        %v5632 = vadd.f32 %v5631, %v5598
        %v5633 = vadd.f32 %v5632, %v5600
        %v5634 = vsel %vm5432, %v5603, 0.0
        %v5635 = vadd.f32 %v5633, %v5634
        %v5636 = vrot.slane %v5635, 4
        %v5637 = vadd.f32 %v5635, %v5636
        %v5638 = vrot.slane %v5637, 2
        %v5639 = vadd.f32 %v5637, %v5638
        %v5640 = vrot.slane %v5639, 1
        %v5641 = vadd.f32 %v5639, %v5640
        %v5642 = vlaneseq
        %v5643 = vand.u32 %v5642, 127
        %vm5644 = vcmp.eq.s32.totalorder %v5643, 0
        %v5645 = vsel %vm5644, %v5473, %v5641
        %v5646 = vld [vmem:[%s7] sm:$0x1]
        %v5647 = vadd.f32 %v5645, %v5646
        %vm5648 = vcmask 8192
        %5649 = vst.msk [vmem:[%s297] sm:$0x1] %vm5648, %v5647
        %s5650 = sand.u32 %s203, 1
        %s5651 = scalar_lea.sflag [#allocation4], %s5650
        %s5652 = sand.u32 %s203, 1
        %s5653 = scalar_lea.vmem [#allocation3], %s5652
        // Predicated region
        $region53: #{senet_cnn_5day_forward.3} parent=51 // pred_check
          %p5654 = pneg %p213
        $region54: #{senet_cnn_5day_forward.3} parent=51 // pred_check_branch
          %5656 = sbr.rel (%p5654) target = $region56
        $region55: #{senet_cnn_5day_forward.3} parent=51 // pred_region
          %5658 = vsyncadd %s5651, 0
          %s5659 = scalar_lea.hbm %s8, %s22
          %s5661 = sshll.u32 %s5653, 4
          %s5662 = int_to_ptr.vmem [resolvable:$true] %s5661
          %s5663 = sshll.u32 %s5659, 4
          %s5664 = int_to_ptr.hbm [resolvable:$true] %s5663
          %5666 = dma.vmem_to_hbm [thread:$0]  %s5662, 16, %s5664, %s5651
        $region56: #{senet_cnn_5day_forward.3} parent=51 // pred_fallthru
          _
      $region52: #{senet_cnn_5day_forward.3} parent=5 // pred_fallthru
        _
      %p5667 = scmp.le.s32.totalorder 2, %s17
      // Predicated region
      $region57: #{senet_cnn_5day_forward.3} parent=5 // pred_check
        %p5668 = pneg %p5667
      $region58: #{senet_cnn_5day_forward.3} parent=5 // pred_check_branch
        %5670 = sbr.rel (%p5668) target = $region60
      $region59: #{senet_cnn_5day_forward.3} parent=5 // pred_region
        %s5671 = ssub.s32 %s17, 2
        // Predicated region
        $region61: #{senet_cnn_5day_forward.3} parent=59 // pred_check
          %p5672 = pneg %p219
        $region62: #{senet_cnn_5day_forward.3} parent=59 // pred_check_branch
          %5674 = sbr.rel (%p5672) target = $region64
        $region63: #{senet_cnn_5day_forward.3} parent=59 // pred_region
          %s5675 = sand.u32 %s204, 1
          %s5676 = scalar_lea.sflag [#allocation4], %s5675
          %s5677 = sand.u32 %s204, 1
          %s5678 = scalar_lea.vmem [#allocation3], %s5677
          %5680 = dma.done %s5676, 16
        $region64: #{senet_cnn_5day_forward.3} parent=59 // pred_fallthru
          _
      $region60: #{senet_cnn_5day_forward.3} parent=5 // pred_fallthru
        _
    $region6: #{senet_cnn_5day_forward.3} parent=1 // loop_footer
      %s21 = sadd.s32 1, %s17
    $region7: #{senet_cnn_5day_forward.3} parent=1 // loop_footer_branch
      %16 = sbr.rel target = $region3
    $region8: #{senet_cnn_5day_forward.3} parent=1 // loop_exit
      _
    %5681 = vsyncpa [#allocation4], 1
    %s5682 = scalar_lea.sflag [#allocation4], 1
    %5683 = vsyncpa %s5682, 1

</llo_original>
